<compile_context>
chip_gen: v6e
topology: v6e:2x2x1
jax: 0.10.0
libtpu: 0.0.40
codegen_flags: <defaults>
</compile_context>

<pallas_src>
import functools

import jax
import jax.numpy as jnp
from jax.experimental import pallas as pl
from jax.experimental.pallas import tpu as pltpu


# ----------------------------------------------------------------------------
# Fused kernel: 4 LSTM layers (enc0, enc1, dec0, dec1) in one invocation.
# ----------------------------------------------------------------------------
def _lstm_ae_kernel(x_ref, w_ih_ref, w_hh_ref, b_ref, out_ref,
                    h_scr, c_scr, seq_scr, xproj_scr):
    """Fused LSTM autoencoder.

    x_ref:     (T, B, P)    padded, time-major input (VMEM resident)
    w_ih_ref:  (4, P, 4P)   per-layer input->hidden weights (gate-padded)
    w_hh_ref:  (4, P, 4P)   per-layer hidden->hidden weights (gate-padded)
    b_ref:     (4, 1, 4P)   per-layer fused bias (b_ih + b_hh, gate-padded)
    out_ref:   (T, B, P)    decoder layer-1 hidden sequence (lane-dense slab)
    h_scr:     (B, P)       recurrent hidden state scratch
    c_scr:     (B, P)       recurrent cell state scratch
    seq_scr:   (T, B, P)    inter-layer hidden-sequence buffer
    xproj_scr: (T, B, 4P)   precomputed per-timestep input projections
    """
    T, B, P = x_ref.shape
    G = 4 * P
    f32 = jnp.float32

    def project_sequence(layer, src):
        # One big MXU matmul for all T timesteps; bias folded in here, once.
        flat = src.reshape(T * B, P)
        proj = jnp.dot(flat, w_ih_ref[layer], preferred_element_type=f32)
        proj = proj + b_ref[layer]                       # (T*B, 4P) + (1, 4P)
        xproj_scr[...] = proj.reshape(T, B, G)

    def run_layer(layer, get_pre, dst_ref):
        h_scr[...] = jnp.zeros_like(h_scr)
        c_scr[...] = jnp.zeros_like(c_scr)
        w_hh = w_hh_ref[layer]                           # (P, 4P)
        # Trace-time unroll: T is static & small; static indices => lane-dense
        # static stores (equivalent to lax.fori_loop(..., unroll=True)).
        for t in range(T):
            gates = get_pre(t) + jnp.dot(h_scr[...], w_hh,
                                         preferred_element_type=f32)  # (B, 4P)
            # Lane-aligned gate slices (each exactly one 8x128 vreg chunk).
            i_g = jax.nn.sigmoid(gates[:, 0 * P:1 * P])
            f_g = jax.nn.sigmoid(gates[:, 1 * P:2 * P])
            g_g = jnp.tanh(gates[:, 2 * P:3 * P])
            o_g = jax.nn.sigmoid(gates[:, 3 * P:4 * P])
            c_new = f_g * c_scr[...] + i_g * g_g
            h_new = o_g * jnp.tanh(c_new)
            c_scr[...] = c_new
            h_scr[...] = h_new
            dst_ref[t] = h_new.astype(dst_ref.dtype)

    from_xproj = lambda t: xproj_scr[t]

    # --- Encoder layer 0: input = x -----------------------------------------
    project_sequence(0, x_ref[...])
    run_layer(0, from_xproj, seq_scr)

    # --- Encoder layer 1: input = layer-0 output ----------------------------
    project_sequence(1, seq_scr[...])
    run_layer(1, from_xproj, seq_scr)

    # --- Decoder layer 0: input = encoder final hidden, repeated over T -----
    # The input is constant across timesteps, so its projection is computed
    # once and reused as a loop-invariant (no broadcast materialization).
    h_final = h_scr[...]                                 # (B, P), enc final h
    dec_pre = (jnp.dot(h_final, w_ih_ref[2], preferred_element_type=f32)
               + b_ref[2])                               # (B, 4P)
    run_layer(2, lambda t: dec_pre, seq_scr)

    # --- Decoder layer 1: input = dec layer-0 output; write final output ----
    project_sequence(3, seq_scr[...])
    run_layer(3, from_xproj, out_ref)


# ----------------------------------------------------------------------------
# Parameter packing: zero-pad weights into lane-aligned (P, 4P) gate layout.
# ----------------------------------------------------------------------------
def _round_up(x, m):
    return ((x + m - 1) // m) * m


def _pad_gate_matrix(mat, P):
    """(in_sz, 4H) -> (P, 4P); gate k occupies lanes [k*P, k*P + H)."""
    in_sz, four_h = mat.shape
    H = four_h // 4
    out = jnp.zeros((P, 4 * P), jnp.float32)
    for k in range(4):
        out = out.at[:in_sz, k * P:k * P + H].set(mat[:, k * H:(k + 1) * H])
    return out


def _pad_gate_bias(vec, P):
    """(1, 4H) -> (1, 4P); gate k occupies lanes [k*P, k*P + H)."""
    _, four_h = vec.shape
    H = four_h // 4
    out = jnp.zeros((1, 4 * P), jnp.float32)
    for k in range(4):
        out = out.at[:, k * P:k * P + H].set(vec[:, k * H:(k + 1) * H])
    return out


def pack_lstm_ae_params(enc_params, dec_params, P):
    layers = list(enc_params) + list(dec_params)       # enc0, enc1, dec0, dec1
    w_ih = jnp.stack([_pad_gate_matrix(p["w_ih_t"], P) for p in layers])
    w_hh = jnp.stack([_pad_gate_matrix(p["w_hh_t"], P) for p in layers])
    bias = jnp.stack([_pad_gate_bias(p["bias"], P) for p in layers])
    return w_ih, w_hh, bias


# ----------------------------------------------------------------------------
# Parameter construction (deterministic, mirrors nn.LSTM shapes).
# ----------------------------------------------------------------------------
def make_lstm_params(key, input_size, hidden_size, num_layers):
    """Per-layer dicts with transposed weights + fused bias (unpadded)."""
    params = []
    k = 1.0 / jnp.sqrt(hidden_size)
    for layer in range(num_layers):
        in_sz = input_size if layer == 0 else hidden_size
        key, k1, k2, k3, k4 = jax.random.split(key, 5)
        w_ih = jax.random.uniform(k1, (4 * hidden_size, in_sz), jnp.float32, -k, k)
        w_hh = jax.random.uniform(k2, (4 * hidden_size, hidden_size), jnp.float32, -k, k)
        b_ih = jax.random.uniform(k3, (4 * hidden_size,), jnp.float32, -k, k)
        b_hh = jax.random.uniform(k4, (4 * hidden_size,), jnp.float32, -k, k)
        params.append({
            "w_ih_t": jnp.transpose(w_ih),               # (in, 4H)
            "w_hh_t": jnp.transpose(w_hh),               # (H, 4H)
            "bias": (b_ih + b_hh)[None, :],              # (1, 4H)
        })
    return params, key


# ----------------------------------------------------------------------------
# Forward: one fused pallas_call for the whole autoencoder.
# ----------------------------------------------------------------------------
def lstm_autoencoder_forward(x_btd, enc_params, dec_params, seq_length):
    """x_btd: (B, T, input_dim), batch_first like the PyTorch module."""
    B, T, D_in = x_btd.shape
    H_enc = enc_params[0]["w_hh_t"].shape[0]
    H_dec = dec_params[0]["w_hh_t"].shape[0]             # == input_dim
    # Fused kernel assumes decoder length == encoder length (autoencoder use).
    assert T == seq_length

    P = _round_up(max(D_in, H_enc, H_dec, 128), 128)      # lane-dense width
    B_pad = _round_up(max(B, 8), 8)                       # fill all 8 sublanes

    w_ih, w_hh, bias = pack_lstm_ae_params(enc_params, dec_params, P)

    # Time-major, zero-pad batch & feature dims.  Padded gate lanes see zero
    # pre-activations, so padded h/c lanes stay exactly zero every step.
    x_tbd = jnp.transpose(x_btd, (1, 0, 2)).astype(jnp.float32)
    x_pad = jnp.zeros((T, B_pad, P), jnp.float32)
    x_pad = x_pad.at[:, :B, :D_in].set(x_tbd)

    out_pad = pl.pallas_call(
        _lstm_ae_kernel,
        out_shape=jax.ShapeDtypeStruct((T, B_pad, P), jnp.float32),
        in_specs=[pl.BlockSpec(memory_space=pltpu.MemorySpace.VMEM)] * 4,
        out_specs=pl.BlockSpec(memory_space=pltpu.MemorySpace.VMEM),
        scratch_shapes=[
            pltpu.VMEM((B_pad, P), jnp.float32),          # h state
            pltpu.VMEM((B_pad, P), jnp.float32),          # c state
            pltpu.VMEM((T, B_pad, P), jnp.float32),       # inter-layer sequence
            pltpu.VMEM((T, B_pad, 4 * P), jnp.float32),   # hoisted x-projections
        ],
    )(x_pad, w_ih, w_hh, bias)

    # Un-pad: decoder hidden size == input_dim.
    return jnp.transpose(out_pad[:, :B, :H_dec], (1, 0, 2))


# ----------------------------------------------------------------------------
# Pure-JAX reference (lax.scan, unpadded) for correctness check.
# ----------------------------------------------------------------------------
def _lstm_layer_ref(x_tbd, p):
    H = p["w_hh_t"].shape[0]

    def step(carry, x_t):
        h, c = carry
        gates = x_t @ p["w_ih_t"] + h @ p["w_hh_t"] + p["bias"]
        i = jax.nn.sigmoid(gates[:, 0 * H:1 * H])
        f = jax.nn.sigmoid(gates[:, 1 * H:2 * H])
        g = jnp.tanh(gates[:, 2 * H:3 * H])
        o = jax.nn.sigmoid(gates[:, 3 * H:4 * H])
        c = f * c + i * g
        h = o * jnp.tanh(c)
        return (h, c), h

    B = x_tbd.shape[1]
    init = (jnp.zeros((B, H), jnp.float32), jnp.zeros((B, H), jnp.float32))
    _, h_seq = jax.lax.scan(step, init, x_tbd)
    return h_seq


def lstm_autoencoder_ref(x_btd, enc_params, dec_params, seq_length):
    h_seq = jnp.transpose(x_btd, (1, 0, 2)).astype(jnp.float32)
    for p in enc_params:
        h_seq = _lstm_layer_ref(h_seq, p)
    h_final = h_seq[-1]
    d_seq = jnp.broadcast_to(h_final[None], (seq_length,) + h_final.shape)
    for p in dec_params:
        d_seq = _lstm_layer_ref(d_seq, p)
    return jnp.transpose(d_seq, (1, 0, 2))


# ----------------------------------------------------------------------------
if __name__ == "__main__":
    batch = 2
    input_dim = 8
    hidden_dim = 32
    seq_length = 8
    num_layers = 2

    key = jax.random.PRNGKey(0)
    enc_params, key = make_lstm_params(key, input_dim, hidden_dim, num_layers)
    dec_params, key = make_lstm_params(key, hidden_dim, input_dim, num_layers)
    key, xk = jax.random.split(key)
    x = jax.random.normal(xk, (batch, seq_length, input_dim), jnp.float32)

    fwd = jax.jit(functools.partial(lstm_autoencoder_forward,
                                    seq_length=seq_length))
    out = fwd(x, enc_params, dec_params)
    out = jax.block_until_ready(out)

    assert out.shape == (batch, seq_length, input_dim), out.shape
    assert out.dtype == jnp.float32

    ref = lstm_autoencoder_ref(x, enc_params, dec_params, seq_length)
    ref = jax.block_until_ready(ref)
    max_err = float(jnp.max(jnp.abs(out - ref)))
    assert jnp.allclose(out, ref, atol=1e-4, rtol=1e-4), max_err

    print("KERNEL_OK")
</pallas_src>

<mosaic_0001>
module attributes {stable_mosaic.version = 11 : i64} {
  func.func @_lstm_ae_kernel(%arg0: memref<8x8x128xf32, #tpu.memory_space<vmem>>, %arg1: memref<4x128x512xf32, #tpu.memory_space<vmem>>, %arg2: memref<4x128x512xf32, #tpu.memory_space<vmem>>, %arg3: memref<4x1x512xf32, #tpu.memory_space<vmem>>, %arg4: memref<8x8x128xf32, #tpu.memory_space<vmem>>, %arg5: memref<8x128xf32, #tpu.memory_space<vmem>>, %arg6: memref<8x128xf32, #tpu.memory_space<vmem>>, %arg7: memref<8x8x128xf32, #tpu.memory_space<vmem>>, %arg8: memref<8x8x512xf32, #tpu.memory_space<vmem>>) attributes {dimension_semantics = [], scalar_prefetch = 0 : i64, scratch_operands = 4 : i64, tpu.core_type = #tpu.core_type<tc>} {
    %c0 = arith.constant 0 : index
    %c0_0 = arith.constant 0 : index
    %c0_1 = arith.constant 0 : index
    %0 = vector.load %arg0[%c0, %c0_0, %c0_1] : memref<8x8x128xf32, #tpu.memory_space<vmem>>, vector<8x8x128xf32>
    %1 = vector.shape_cast %0 : vector<8x8x128xf32> to vector<64x128xf32>
    %c0_2 = arith.constant 0 : index
    %c0_3 = arith.constant 0 : index
    %c0_4 = arith.constant 0 : index
    %2 = vector.load %arg1[%c0_2, %c0_3, %c0_4] : memref<4x128x512xf32, #tpu.memory_space<vmem>>, vector<1x128x512xf32>
    %3 = vector.shape_cast %2 : vector<1x128x512xf32> to vector<128x512xf32>
    %cst = arith.constant dense<0.000000e+00> : vector<64x512xf32>
    %4 = tpu.matmul %1, %3, %cst {dimension_numbers = #tpu.dot_dimension_numbers<[1], [0], [0], [1], [0, 0, 1, 1], [], []>} : vector<64x128xf32>, vector<128x512xf32>, vector<64x512xf32> -> vector<64x512xf32>
    %c0_5 = arith.constant 0 : index
    %c0_6 = arith.constant 0 : index
    %c0_7 = arith.constant 0 : index
    %5 = vector.load %arg3[%c0_5, %c0_6, %c0_7] : memref<4x1x512xf32, #tpu.memory_space<vmem>>, vector<1x1x512xf32>
    %6 = vector.shape_cast %5 : vector<1x1x512xf32> to vector<1x512xf32>
    %7 = vector.broadcast %6 : vector<1x512xf32> to vector<64x512xf32>
    %8 = arith.addf %4, %7 : vector<64x512xf32>
    %9 = vector.shape_cast %8 : vector<64x512xf32> to vector<8x8x512xf32>
    %c0_8 = arith.constant 0 : index
    %c0_9 = arith.constant 0 : index
    %c0_10 = arith.constant 0 : index
    %10 = vector.load %arg8[%c0_8, %c0_9, %c0_10] : memref<8x8x512xf32, #tpu.memory_space<vmem>>, vector<8x8x512xf32>
    tpu.vector_store %arg8[%c0_8, %c0_9, %c0_10], %9 {strides = array<i32>} : memref<8x8x512xf32, #tpu.memory_space<vmem>>, vector<8x8x512xf32>,
    %cst_11 = arith.constant 0.000000e+00 : f32
    %11 = vector.broadcast %cst_11 : f32 to vector<8x128xf32>
    %c0_12 = arith.constant 0 : index
    %c0_13 = arith.constant 0 : index
    %12 = vector.load %arg5[%c0_12, %c0_13] : memref<8x128xf32, #tpu.memory_space<vmem>>, vector<8x128xf32>
    tpu.vector_store %arg5[%c0_12, %c0_13], %11 {strides = array<i32>} : memref<8x128xf32, #tpu.memory_space<vmem>>, vector<8x128xf32>,
    %cst_14 = arith.constant 0.000000e+00 : f32
    %13 = vector.broadcast %cst_14 : f32 to vector<8x128xf32>
    %c0_15 = arith.constant 0 : index
    %c0_16 = arith.constant 0 : index
    %14 = vector.load %arg6[%c0_15, %c0_16] : memref<8x128xf32, #tpu.memory_space<vmem>>, vector<8x128xf32>
    tpu.vector_store %arg6[%c0_15, %c0_16], %13 {strides = array<i32>} : memref<8x128xf32, #tpu.memory_space<vmem>>, vector<8x128xf32>,
    %c0_17 = arith.constant 0 : index
    %c0_18 = arith.constant 0 : index
    %c0_19 = arith.constant 0 : index
    %15 = vector.load %arg2[%c0_17, %c0_18, %c0_19] : memref<4x128x512xf32, #tpu.memory_space<vmem>>, vector<1x128x512xf32>
    %16 = vector.shape_cast %15 : vector<1x128x512xf32> to vector<128x512xf32>
    %c0_20 = arith.constant 0 : index
    %c0_21 = arith.constant 0 : index
    %c0_22 = arith.constant 0 : index
    %17 = vector.load %arg8[%c0_20, %c0_21, %c0_22] : memref<8x8x512xf32, #tpu.memory_space<vmem>>, vector<1x8x512xf32>
    %18 = vector.shape_cast %17 : vector<1x8x512xf32> to vector<8x512xf32>
    %c0_23 = arith.constant 0 : index
    %c0_24 = arith.constant 0 : index
    %19 = vector.load %arg5[%c0_23, %c0_24] : memref<8x128xf32, #tpu.memory_space<vmem>>, vector<8x128xf32>
    %cst_25 = arith.constant dense<0.000000e+00> : vector<8x512xf32>
    %20 = tpu.matmul %19, %16, %cst_25 {dimension_numbers = #tpu.dot_dimension_numbers<[1], [0], [0], [1], [0, 0, 1, 1], [], []>} : vector<8x128xf32>, vector<128x512xf32>, vector<8x512xf32> -> vector<8x512xf32>
    %21 = arith.addf %18, %20 : vector<8x512xf32>
    %22 = vector.extract_strided_slice %21 {offsets = [0, 0], sizes = [8, 128], strides = [1, 1]} : vector<8x512xf32> to vector<8x128xf32>
    %23 = arith.negf %22 : vector<8x128xf32>
    %24 = math.exp %23 : vector<8x128xf32>
    %cst_26 = arith.constant 1.000000e+00 : f32
    %25 = vector.broadcast %cst_26 : f32 to vector<8x128xf32>
    %26 = arith.addf %25, %24 : vector<8x128xf32>
    %27 = arith.divf %25, %26 : vector<8x128xf32>
    %28 = vector.extract_strided_slice %21 {offsets = [0, 128], sizes = [8, 128], strides = [1, 1]} : vector<8x512xf32> to vector<8x128xf32>
    %29 = arith.negf %28 : vector<8x128xf32>
    %30 = math.exp %29 : vector<8x128xf32>
    %cst_27 = arith.constant 1.000000e+00 : f32
    %31 = vector.broadcast %cst_27 : f32 to vector<8x128xf32>
    %32 = arith.addf %31, %30 : vector<8x128xf32>
    %33 = arith.divf %31, %32 : vector<8x128xf32>
    %34 = vector.extract_strided_slice %21 {offsets = [0, 256], sizes = [8, 128], strides = [1, 1]} : vector<8x512xf32> to vector<8x128xf32>
    %35 = math.tanh %34 : vector<8x128xf32>
    %36 = vector.extract_strided_slice %21 {offsets = [0, 384], sizes = [8, 128], strides = [1, 1]} : vector<8x512xf32> to vector<8x128xf32>
    %37 = arith.negf %36 : vector<8x128xf32>
    %38 = math.exp %37 : vector<8x128xf32>
    %cst_28 = arith.constant 1.000000e+00 : f32
    %39 = vector.broadcast %cst_28 : f32 to vector<8x128xf32>
    %40 = arith.addf %39, %38 : vector<8x128xf32>
    %41 = arith.divf %39, %40 : vector<8x128xf32>
    %c0_29 = arith.constant 0 : index
    %c0_30 = arith.constant 0 : index
    %42 = vector.load %arg6[%c0_29, %c0_30] : memref<8x128xf32, #tpu.memory_space<vmem>>, vector<8x128xf32>
    %43 = arith.mulf %33, %42 : vector<8x128xf32>
    %44 = arith.mulf %27, %35 : vector<8x128xf32>
    %45 = arith.addf %43, %44 : vector<8x128xf32>
    %46 = math.tanh %45 : vector<8x128xf32>
    %47 = arith.mulf %41, %46 : vector<8x128xf32>
    %c0_31 = arith.constant 0 : index
    %c0_32 = arith.constant 0 : index
    %48 = vector.load %arg6[%c0_31, %c0_32] : memref<8x128xf32, #tpu.memory_space<vmem>>, vector<8x128xf32>
    tpu.vector_store %arg6[%c0_31, %c0_32], %45 {strides = array<i32>} : memref<8x128xf32, #tpu.memory_space<vmem>>, vector<8x128xf32>,
    %c0_33 = arith.constant 0 : index
    %c0_34 = arith.constant 0 : index
    %49 = vector.load %arg5[%c0_33, %c0_34] : memref<8x128xf32, #tpu.memory_space<vmem>>, vector<8x128xf32>
    tpu.vector_store %arg5[%c0_33, %c0_34], %47 {strides = array<i32>} : memref<8x128xf32, #tpu.memory_space<vmem>>, vector<8x128xf32>,
    %c0_35 = arith.constant 0 : index
    %c0_36 = arith.constant 0 : index
    %c0_37 = arith.constant 0 : index
    %50 = vector.load %arg7[%c0_35, %c0_36, %c0_37] : memref<8x8x128xf32, #tpu.memory_space<vmem>>, vector<1x8x128xf32>
    %51 = vector.shape_cast %50 : vector<1x8x128xf32> to vector<8x128xf32>
    %52 = vector.shape_cast %47 : vector<8x128xf32> to vector<1x8x128xf32>
    tpu.vector_store %arg7[%c0_35, %c0_36, %c0_37], %52 {strides = array<i32>} : memref<8x8x128xf32, #tpu.memory_space<vmem>>, vector<1x8x128xf32>,
    %c1 = arith.constant 1 : index
    %c0_38 = arith.constant 0 : index
    %c0_39 = arith.constant 0 : index
    %53 = vector.load %arg8[%c1, %c0_38, %c0_39] : memref<8x8x512xf32, #tpu.memory_space<vmem>>, vector<1x8x512xf32>
    %54 = vector.shape_cast %53 : vector<1x8x512xf32> to vector<8x512xf32>
    %c0_40 = arith.constant 0 : index
    %c0_41 = arith.constant 0 : index
    %55 = vector.load %arg5[%c0_40, %c0_41] : memref<8x128xf32, #tpu.memory_space<vmem>>, vector<8x128xf32>
    %cst_42 = arith.constant dense<0.000000e+00> : vector<8x512xf32>
    %56 = tpu.matmul %55, %16, %cst_42 {dimension_numbers = #tpu.dot_dimension_numbers<[1], [0], [0], [1], [0, 0, 1, 1], [], []>} : vector<8x128xf32>, vector<128x512xf32>, vector<8x512xf32> -> vector<8x512xf32>
    %57 = arith.addf %54, %56 : vector<8x512xf32>
    %58 = vector.extract_strided_slice %57 {offsets = [0, 0], sizes = [8, 128], strides = [1, 1]} : vector<8x512xf32> to vector<8x128xf32>
    %59 = arith.negf %58 : vector<8x128xf32>
    %60 = math.exp %59 : vector<8x128xf32>
    %cst_43 = arith.constant 1.000000e+00 : f32
    %61 = vector.broadcast %cst_43 : f32 to vector<8x128xf32>
    %62 = arith.addf %61, %60 : vector<8x128xf32>
    %63 = arith.divf %61, %62 : vector<8x128xf32>
    %64 = vector.extract_strided_slice %57 {offsets = [0, 128], sizes = [8, 128], strides = [1, 1]} : vector<8x512xf32> to vector<8x128xf32>
    %65 = arith.negf %64 : vector<8x128xf32>
    %66 = math.exp %65 : vector<8x128xf32>
    %cst_44 = arith.constant 1.000000e+00 : f32
    %67 = vector.broadcast %cst_44 : f32 to vector<8x128xf32>
    %68 = arith.addf %67, %66 : vector<8x128xf32>
    %69 = arith.divf %67, %68 : vector<8x128xf32>
    %70 = vector.extract_strided_slice %57 {offsets = [0, 256], sizes = [8, 128], strides = [1, 1]} : vector<8x512xf32> to vector<8x128xf32>
    %71 = math.tanh %70 : vector<8x128xf32>
    %72 = vector.extract_strided_slice %57 {offsets = [0, 384], sizes = [8, 128], strides = [1, 1]} : vector<8x512xf32> to vector<8x128xf32>
    %73 = arith.negf %72 : vector<8x128xf32>
    %74 = math.exp %73 : vector<8x128xf32>
    %cst_45 = arith.constant 1.000000e+00 : f32
    %75 = vector.broadcast %cst_45 : f32 to vector<8x128xf32>
    %76 = arith.addf %75, %74 : vector<8x128xf32>
    %77 = arith.divf %75, %76 : vector<8x128xf32>
    %c0_46 = arith.constant 0 : index
    %c0_47 = arith.constant 0 : index
    %78 = vector.load %arg6[%c0_46, %c0_47] : memref<8x128xf32, #tpu.memory_space<vmem>>, vector<8x128xf32>
    %79 = arith.mulf %69, %78 : vector<8x128xf32>
    %80 = arith.mulf %63, %71 : vector<8x128xf32>
    %81 = arith.addf %79, %80 : vector<8x128xf32>
    %82 = math.tanh %81 : vector<8x128xf32>
    %83 = arith.mulf %77, %82 : vector<8x128xf32>
    %c0_48 = arith.constant 0 : index
    %c0_49 = arith.constant 0 : index
    %84 = vector.load %arg6[%c0_48, %c0_49] : memref<8x128xf32, #tpu.memory_space<vmem>>, vector<8x128xf32>
    tpu.vector_store %arg6[%c0_48, %c0_49], %81 {strides = array<i32>} : memref<8x128xf32, #tpu.memory_space<vmem>>, vector<8x128xf32>,
    %c0_50 = arith.constant 0 : index
    %c0_51 = arith.constant 0 : index
    %85 = vector.load %arg5[%c0_50, %c0_51] : memref<8x128xf32, #tpu.memory_space<vmem>>, vector<8x128xf32>
    tpu.vector_store %arg5[%c0_50, %c0_51], %83 {strides = array<i32>} : memref<8x128xf32, #tpu.memory_space<vmem>>, vector<8x128xf32>,
    %c1_52 = arith.constant 1 : index
    %c0_53 = arith.constant 0 : index
    %c0_54 = arith.constant 0 : index
    %86 = vector.load %arg7[%c1_52, %c0_53, %c0_54] : memref<8x8x128xf32, #tpu.memory_space<vmem>>, vector<1x8x128xf32>
    %87 = vector.shape_cast %86 : vector<1x8x128xf32> to vector<8x128xf32>
    %88 = vector.shape_cast %83 : vector<8x128xf32> to vector<1x8x128xf32>
    tpu.vector_store %arg7[%c1_52, %c0_53, %c0_54], %88 {strides = array<i32>} : memref<8x8x128xf32, #tpu.memory_space<vmem>>, vector<1x8x128xf32>,
    %c2 = arith.constant 2 : index
    %c0_55 = arith.constant 0 : index
    %c0_56 = arith.constant 0 : index
    %89 = vector.load %arg8[%c2, %c0_55, %c0_56] : memref<8x8x512xf32, #tpu.memory_space<vmem>>, vector<1x8x512xf32>
    %90 = vector.shape_cast %89 : vector<1x8x512xf32> to vector<8x512xf32>
    %c0_57 = arith.constant 0 : index
    %c0_58 = arith.constant 0 : index
    %91 = vector.load %arg5[%c0_57, %c0_58] : memref<8x128xf32, #tpu.memory_space<vmem>>, vector<8x128xf32>
    %cst_59 = arith.constant dense<0.000000e+00> : vector<8x512xf32>
    %92 = tpu.matmul %91, %16, %cst_59 {dimension_numbers = #tpu.dot_dimension_numbers<[1], [0], [0], [1], [0, 0, 1, 1], [], []>} : vector<8x128xf32>, vector<128x512xf32>, vector<8x512xf32> -> vector<8x512xf32>
    %93 = arith.addf %90, %92 : vector<8x512xf32>
    %94 = vector.extract_strided_slice %93 {offsets = [0, 0], sizes = [8, 128], strides = [1, 1]} : vector<8x512xf32> to vector<8x128xf32>
    %95 = arith.negf %94 : vector<8x128xf32>
    %96 = math.exp %95 : vector<8x128xf32>
    %cst_60 = arith.constant 1.000000e+00 : f32
    %97 = vector.broadcast %cst_60 : f32 to vector<8x128xf32>
    %98 = arith.addf %97, %96 : vector<8x128xf32>
    %99 = arith.divf %97, %98 : vector<8x128xf32>
    %100 = vector.extract_strided_slice %93 {offsets = [0, 128], sizes = [8, 128], strides = [1, 1]} : vector<8x512xf32> to vector<8x128xf32>
    %101 = arith.negf %100 : vector<8x128xf32>
    %102 = math.exp %101 : vector<8x128xf32>
    %cst_61 = arith.constant 1.000000e+00 : f32
    %103 = vector.broadcast %cst_61 : f32 to vector<8x128xf32>
    %104 = arith.addf %103, %102 : vector<8x128xf32>
    %105 = arith.divf %103, %104 : vector<8x128xf32>
    %106 = vector.extract_strided_slice %93 {offsets = [0, 256], sizes = [8, 128], strides = [1, 1]} : vector<8x512xf32> to vector<8x128xf32>
    %107 = math.tanh %106 : vector<8x128xf32>
    %108 = vector.extract_strided_slice %93 {offsets = [0, 384], sizes = [8, 128], strides = [1, 1]} : vector<8x512xf32> to vector<8x128xf32>
    %109 = arith.negf %108 : vector<8x128xf32>
    %110 = math.exp %109 : vector<8x128xf32>
    %cst_62 = arith.constant 1.000000e+00 : f32
    %111 = vector.broadcast %cst_62 : f32 to vector<8x128xf32>
    %112 = arith.addf %111, %110 : vector<8x128xf32>
    %113 = arith.divf %111, %112 : vector<8x128xf32>
    %c0_63 = arith.constant 0 : index
    %c0_64 = arith.constant 0 : index
    %114 = vector.load %arg6[%c0_63, %c0_64] : memref<8x128xf32, #tpu.memory_space<vmem>>, vector<8x128xf32>
    %115 = arith.mulf %105, %114 : vector<8x128xf32>
    %116 = arith.mulf %99, %107 : vector<8x128xf32>
    %117 = arith.addf %115, %116 : vector<8x128xf32>
    %118 = math.tanh %117 : vector<8x128xf32>
    %119 = arith.mulf %113, %118 : vector<8x128xf32>
    %c0_65 = arith.constant 0 : index
    %c0_66 = arith.constant 0 : index
    %120 = vector.load %arg6[%c0_65, %c0_66] : memref<8x128xf32, #tpu.memory_space<vmem>>, vector<8x128xf32>
    tpu.vector_store %arg6[%c0_65, %c0_66], %117 {strides = array<i32>} : memref<8x128xf32, #tpu.memory_space<vmem>>, vector<8x128xf32>,
    %c0_67 = arith.constant 0 : index
    %c0_68 = arith.constant 0 : index
    %121 = vector.load %arg5[%c0_67, %c0_68] : memref<8x128xf32, #tpu.memory_space<vmem>>, vector<8x128xf32>
    tpu.vector_store %arg5[%c0_67, %c0_68], %119 {strides = array<i32>} : memref<8x128xf32, #tpu.memory_space<vmem>>, vector<8x128xf32>,
    %c2_69 = arith.constant 2 : index
    %c0_70 = arith.constant 0 : index
    %c0_71 = arith.constant 0 : index
    %122 = vector.load %arg7[%c2_69, %c0_70, %c0_71] : memref<8x8x128xf32, #tpu.memory_space<vmem>>, vector<1x8x128xf32>
    %123 = vector.shape_cast %122 : vector<1x8x128xf32> to vector<8x128xf32>
    %124 = vector.shape_cast %119 : vector<8x128xf32> to vector<1x8x128xf32>
    tpu.vector_store %arg7[%c2_69, %c0_70, %c0_71], %124 {strides = array<i32>} : memref<8x8x128xf32, #tpu.memory_space<vmem>>, vector<1x8x128xf32>,
    %c3 = arith.constant 3 : index
    %c0_72 = arith.constant 0 : index
    %c0_73 = arith.constant 0 : index
    %125 = vector.load %arg8[%c3, %c0_72, %c0_73] : memref<8x8x512xf32, #tpu.memory_space<vmem>>, vector<1x8x512xf32>
    %126 = vector.shape_cast %125 : vector<1x8x512xf32> to vector<8x512xf32>
    %c0_74 = arith.constant 0 : index
    %c0_75 = arith.constant 0 : index
    %127 = vector.load %arg5[%c0_74, %c0_75] : memref<8x128xf32, #tpu.memory_space<vmem>>, vector<8x128xf32>
    %cst_76 = arith.constant dense<0.000000e+00> : vector<8x512xf32>
    %128 = tpu.matmul %127, %16, %cst_76 {dimension_numbers = #tpu.dot_dimension_numbers<[1], [0], [0], [1], [0, 0, 1, 1], [], []>} : vector<8x128xf32>, vector<128x512xf32>, vector<8x512xf32> -> vector<8x512xf32>
    %129 = arith.addf %126, %128 : vector<8x512xf32>
    %130 = vector.extract_strided_slice %129 {offsets = [0, 0], sizes = [8, 128], strides = [1, 1]} : vector<8x512xf32> to vector<8x128xf32>
    %131 = arith.negf %130 : vector<8x128xf32>
    %132 = math.exp %131 : vector<8x128xf32>
    %cst_77 = arith.constant 1.000000e+00 : f32
    %133 = vector.broadcast %cst_77 : f32 to vector<8x128xf32>
    %134 = arith.addf %133, %132 : vector<8x128xf32>
    %135 = arith.divf %133, %134 : vector<8x128xf32>
    %136 = vector.extract_strided_slice %129 {offsets = [0, 128], sizes = [8, 128], strides = [1, 1]} : vector<8x512xf32> to vector<8x128xf32>
    %137 = arith.negf %136 : vector<8x128xf32>
    %138 = math.exp %137 : vector<8x128xf32>
    %cst_78 = arith.constant 1.000000e+00 : f32
    %139 = vector.broadcast %cst_78 : f32 to vector<8x128xf32>
    %140 = arith.addf %139, %138 : vector<8x128xf32>
    %141 = arith.divf %139, %140 : vector<8x128xf32>
    %142 = vector.extract_strided_slice %129 {offsets = [0, 256], sizes = [8, 128], strides = [1, 1]} : vector<8x512xf32> to vector<8x128xf32>
    %143 = math.tanh %142 : vector<8x128xf32>
    %144 = vector.extract_strided_slice %129 {offsets = [0, 384], sizes = [8, 128], strides = [1, 1]} : vector<8x512xf32> to vector<8x128xf32>
    %145 = arith.negf %144 : vector<8x128xf32>
    %146 = math.exp %145 : vector<8x128xf32>
    %cst_79 = arith.constant 1.000000e+00 : f32
    %147 = vector.broadcast %cst_79 : f32 to vector<8x128xf32>
    %148 = arith.addf %147, %146 : vector<8x128xf32>
    %149 = arith.divf %147, %148 : vector<8x128xf32>
    %c0_80 = arith.constant 0 : index
    %c0_81 = arith.constant 0 : index
    %150 = vector.load %arg6[%c0_80, %c0_81] : memref<8x128xf32, #tpu.memory_space<vmem>>, vector<8x128xf32>
    %151 = arith.mulf %141, %150 : vector<8x128xf32>
    %152 = arith.mulf %135, %143 : vector<8x128xf32>
    %153 = arith.addf %151, %152 : vector<8x128xf32>
    %154 = math.tanh %153 : vector<8x128xf32>
    %155 = arith.mulf %149, %154 : vector<8x128xf32>
    %c0_82 = arith.constant 0 : index
    %c0_83 = arith.constant 0 : index
    %156 = vector.load %arg6[%c0_82, %c0_83] : memref<8x128xf32, #tpu.memory_space<vmem>>, vector<8x128xf32>
    tpu.vector_store %arg6[%c0_82, %c0_83], %153 {strides = array<i32>} : memref<8x128xf32, #tpu.memory_space<vmem>>, vector<8x128xf32>,
    %c0_84 = arith.constant 0 : index
    %c0_85 = arith.constant 0 : index
    %157 = vector.load %arg5[%c0_84, %c0_85] : memref<8x128xf32, #tpu.memory_space<vmem>>, vector<8x128xf32>
    tpu.vector_store %arg5[%c0_84, %c0_85], %155 {strides = array<i32>} : memref<8x128xf32, #tpu.memory_space<vmem>>, vector<8x128xf32>,
    %c3_86 = arith.constant 3 : index
    %c0_87 = arith.constant 0 : index
    %c0_88 = arith.constant 0 : index
    %158 = vector.load %arg7[%c3_86, %c0_87, %c0_88] : memref<8x8x128xf32, #tpu.memory_space<vmem>>, vector<1x8x128xf32>
    %159 = vector.shape_cast %158 : vector<1x8x128xf32> to vector<8x128xf32>
    %160 = vector.shape_cast %155 : vector<8x128xf32> to vector<1x8x128xf32>
    tpu.vector_store %arg7[%c3_86, %c0_87, %c0_88], %160 {strides = array<i32>} : memref<8x8x128xf32, #tpu.memory_space<vmem>>, vector<1x8x128xf32>,
    %c4 = arith.constant 4 : index
    %c0_89 = arith.constant 0 : index
    %c0_90 = arith.constant 0 : index
    %161 = vector.load %arg8[%c4, %c0_89, %c0_90] : memref<8x8x512xf32, #tpu.memory_space<vmem>>, vector<1x8x512xf32>
    %162 = vector.shape_cast %161 : vector<1x8x512xf32> to vector<8x512xf32>
    %c0_91 = arith.constant 0 : index
    %c0_92 = arith.constant 0 : index
    %163 = vector.load %arg5[%c0_91, %c0_92] : memref<8x128xf32, #tpu.memory_space<vmem>>, vector<8x128xf32>
    %cst_93 = arith.constant dense<0.000000e+00> : vector<8x512xf32>
    %164 = tpu.matmul %163, %16, %cst_93 {dimension_numbers = #tpu.dot_dimension_numbers<[1], [0], [0], [1], [0, 0, 1, 1], [], []>} : vector<8x128xf32>, vector<128x512xf32>, vector<8x512xf32> -> vector<8x512xf32>
    %165 = arith.addf %162, %164 : vector<8x512xf32>
    %166 = vector.extract_strided_slice %165 {offsets = [0, 0], sizes = [8, 128], strides = [1, 1]} : vector<8x512xf32> to vector<8x128xf32>
    %167 = arith.negf %166 : vector<8x128xf32>
    %168 = math.exp %167 : vector<8x128xf32>
    %cst_94 = arith.constant 1.000000e+00 : f32
    %169 = vector.broadcast %cst_94 : f32 to vector<8x128xf32>
    %170 = arith.addf %169, %168 : vector<8x128xf32>
    %171 = arith.divf %169, %170 : vector<8x128xf32>
    %172 = vector.extract_strided_slice %165 {offsets = [0, 128], sizes = [8, 128], strides = [1, 1]} : vector<8x512xf32> to vector<8x128xf32>
    %173 = arith.negf %172 : vector<8x128xf32>
    %174 = math.exp %173 : vector<8x128xf32>
    %cst_95 = arith.constant 1.000000e+00 : f32
    %175 = vector.broadcast %cst_95 : f32 to vector<8x128xf32>
    %176 = arith.addf %175, %174 : vector<8x128xf32>
    %177 = arith.divf %175, %176 : vector<8x128xf32>
    %178 = vector.extract_strided_slice %165 {offsets = [0, 256], sizes = [8, 128], strides = [1, 1]} : vector<8x512xf32> to vector<8x128xf32>
    %179 = math.tanh %178 : vector<8x128xf32>
    %180 = vector.extract_strided_slice %165 {offsets = [0, 384], sizes = [8, 128], strides = [1, 1]} : vector<8x512xf32> to vector<8x128xf32>
    %181 = arith.negf %180 : vector<8x128xf32>
    %182 = math.exp %181 : vector<8x128xf32>
    %cst_96 = arith.constant 1.000000e+00 : f32
    %183 = vector.broadcast %cst_96 : f32 to vector<8x128xf32>
    %184 = arith.addf %183, %182 : vector<8x128xf32>
    %185 = arith.divf %183, %184 : vector<8x128xf32>
    %c0_97 = arith.constant 0 : index
    %c0_98 = arith.constant 0 : index
    %186 = vector.load %arg6[%c0_97, %c0_98] : memref<8x128xf32, #tpu.memory_space<vmem>>, vector<8x128xf32>
    %187 = arith.mulf %177, %186 : vector<8x128xf32>
    %188 = arith.mulf %171, %179 : vector<8x128xf32>
    %189 = arith.addf %187, %188 : vector<8x128xf32>
    %190 = math.tanh %189 : vector<8x128xf32>
    %191 = arith.mulf %185, %190 : vector<8x128xf32>
    %c0_99 = arith.constant 0 : index
    %c0_100 = arith.constant 0 : index
    %192 = vector.load %arg6[%c0_99, %c0_100] : memref<8x128xf32, #tpu.memory_space<vmem>>, vector<8x128xf32>
    tpu.vector_store %arg6[%c0_99, %c0_100], %189 {strides = array<i32>} : memref<8x128xf32, #tpu.memory_space<vmem>>, vector<8x128xf32>,
    %c0_101 = arith.constant 0 : index
    %c0_102 = arith.constant 0 : index
    %193 = vector.load %arg5[%c0_101, %c0_102] : memref<8x128xf32, #tpu.memory_space<vmem>>, vector<8x128xf32>
    tpu.vector_store %arg5[%c0_101, %c0_102], %191 {strides = array<i32>} : memref<8x128xf32, #tpu.memory_space<vmem>>, vector<8x128xf32>,
    %c4_103 = arith.constant 4 : index
    %c0_104 = arith.constant 0 : index
    %c0_105 = arith.constant 0 : index
    %194 = vector.load %arg7[%c4_103, %c0_104, %c0_105] : memref<8x8x128xf32, #tpu.memory_space<vmem>>, vector<1x8x128xf32>
    %195 = vector.shape_cast %194 : vector<1x8x128xf32> to vector<8x128xf32>
    %196 = vector.shape_cast %191 : vector<8x128xf32> to vector<1x8x128xf32>
    tpu.vector_store %arg7[%c4_103, %c0_104, %c0_105], %196 {strides = array<i32>} : memref<8x8x128xf32, #tpu.memory_space<vmem>>, vector<1x8x128xf32>,
    %c5 = arith.constant 5 : index
    %c0_106 = arith.constant 0 : index
    %c0_107 = arith.constant 0 : index
    %197 = vector.load %arg8[%c5, %c0_106, %c0_107] : memref<8x8x512xf32, #tpu.memory_space<vmem>>, vector<1x8x512xf32>
    %198 = vector.shape_cast %197 : vector<1x8x512xf32> to vector<8x512xf32>
    %c0_108 = arith.constant 0 : index
    %c0_109 = arith.constant 0 : index
    %199 = vector.load %arg5[%c0_108, %c0_109] : memref<8x128xf32, #tpu.memory_space<vmem>>, vector<8x128xf32>
    %cst_110 = arith.constant dense<0.000000e+00> : vector<8x512xf32>
    %200 = tpu.matmul %199, %16, %cst_110 {dimension_numbers = #tpu.dot_dimension_numbers<[1], [0], [0], [1], [0, 0, 1, 1], [], []>} : vector<8x128xf32>, vector<128x512xf32>, vector<8x512xf32> -> vector<8x512xf32>
    %201 = arith.addf %198, %200 : vector<8x512xf32>
    %202 = vector.extract_strided_slice %201 {offsets = [0, 0], sizes = [8, 128], strides = [1, 1]} : vector<8x512xf32> to vector<8x128xf32>
    %203 = arith.negf %202 : vector<8x128xf32>
    %204 = math.exp %203 : vector<8x128xf32>
    %cst_111 = arith.constant 1.000000e+00 : f32
    %205 = vector.broadcast %cst_111 : f32 to vector<8x128xf32>
    %206 = arith.addf %205, %204 : vector<8x128xf32>
    %207 = arith.divf %205, %206 : vector<8x128xf32>
    %208 = vector.extract_strided_slice %201 {offsets = [0, 128], sizes = [8, 128], strides = [1, 1]} : vector<8x512xf32> to vector<8x128xf32>
    %209 = arith.negf %208 : vector<8x128xf32>
    %210 = math.exp %209 : vector<8x128xf32>
    %cst_112 = arith.constant 1.000000e+00 : f32
    %211 = vector.broadcast %cst_112 : f32 to vector<8x128xf32>
    %212 = arith.addf %211, %210 : vector<8x128xf32>
    %213 = arith.divf %211, %212 : vector<8x128xf32>
    %214 = vector.extract_strided_slice %201 {offsets = [0, 256], sizes = [8, 128], strides = [1, 1]} : vector<8x512xf32> to vector<8x128xf32>
    %215 = math.tanh %214 : vector<8x128xf32>
    %216 = vector.extract_strided_slice %201 {offsets = [0, 384], sizes = [8, 128], strides = [1, 1]} : vector<8x512xf32> to vector<8x128xf32>
    %217 = arith.negf %216 : vector<8x128xf32>
    %218 = math.exp %217 : vector<8x128xf32>
    %cst_113 = arith.constant 1.000000e+00 : f32
    %219 = vector.broadcast %cst_113 : f32 to vector<8x128xf32>
    %220 = arith.addf %219, %218 : vector<8x128xf32>
    %221 = arith.divf %219, %220 : vector<8x128xf32>
    %c0_114 = arith.constant 0 : index
    %c0_115 = arith.constant 0 : index
    %222 = vector.load %arg6[%c0_114, %c0_115] : memref<8x128xf32, #tpu.memory_space<vmem>>, vector<8x128xf32>
    %223 = arith.mulf %213, %222 : vector<8x128xf32>
    %224 = arith.mulf %207, %215 : vector<8x128xf32>
    %225 = arith.addf %223, %224 : vector<8x128xf32>
    %226 = math.tanh %225 : vector<8x128xf32>
    %227 = arith.mulf %221, %226 : vector<8x128xf32>
    %c0_116 = arith.constant 0 : index
    %c0_117 = arith.constant 0 : index
    %228 = vector.load %arg6[%c0_116, %c0_117] : memref<8x128xf32, #tpu.memory_space<vmem>>, vector<8x128xf32>
    tpu.vector_store %arg6[%c0_116, %c0_117], %225 {strides = array<i32>} : memref<8x128xf32, #tpu.memory_space<vmem>>, vector<8x128xf32>,
    %c0_118 = arith.constant 0 : index
    %c0_119 = arith.constant 0 : index
    %229 = vector.load %arg5[%c0_118, %c0_119] : memref<8x128xf32, #tpu.memory_space<vmem>>, vector<8x128xf32>
    tpu.vector_store %arg5[%c0_118, %c0_119], %227 {strides = array<i32>} : memref<8x128xf32, #tpu.memory_space<vmem>>, vector<8x128xf32>,
    %c5_120 = arith.constant 5 : index
    %c0_121 = arith.constant 0 : index
    %c0_122 = arith.constant 0 : index
    %230 = vector.load %arg7[%c5_120, %c0_121, %c0_122] : memref<8x8x128xf32, #tpu.memory_space<vmem>>, vector<1x8x128xf32>
    %231 = vector.shape_cast %230 : vector<1x8x128xf32> to vector<8x128xf32>
    %232 = vector.shape_cast %227 : vector<8x128xf32> to vector<1x8x128xf32>
    tpu.vector_store %arg7[%c5_120, %c0_121, %c0_122], %232 {strides = array<i32>} : memref<8x8x128xf32, #tpu.memory_space<vmem>>, vector<1x8x128xf32>,
    %c6 = arith.constant 6 : index
    %c0_123 = arith.constant 0 : index
    %c0_124 = arith.constant 0 : index
    %233 = vector.load %arg8[%c6, %c0_123, %c0_124] : memref<8x8x512xf32, #tpu.memory_space<vmem>>, vector<1x8x512xf32>
    %234 = vector.shape_cast %233 : vector<1x8x512xf32> to vector<8x512xf32>
    %c0_125 = arith.constant 0 : index
    %c0_126 = arith.constant 0 : index
    %235 = vector.load %arg5[%c0_125, %c0_126] : memref<8x128xf32, #tpu.memory_space<vmem>>, vector<8x128xf32>
    %cst_127 = arith.constant dense<0.000000e+00> : vector<8x512xf32>
    %236 = tpu.matmul %235, %16, %cst_127 {dimension_numbers = #tpu.dot_dimension_numbers<[1], [0], [0], [1], [0, 0, 1, 1], [], []>} : vector<8x128xf32>, vector<128x512xf32>, vector<8x512xf32> -> vector<8x512xf32>
    %237 = arith.addf %234, %236 : vector<8x512xf32>
    %238 = vector.extract_strided_slice %237 {offsets = [0, 0], sizes = [8, 128], strides = [1, 1]} : vector<8x512xf32> to vector<8x128xf32>
    %239 = arith.negf %238 : vector<8x128xf32>
    %240 = math.exp %239 : vector<8x128xf32>
    %cst_128 = arith.constant 1.000000e+00 : f32
    %241 = vector.broadcast %cst_128 : f32 to vector<8x128xf32>
    %242 = arith.addf %241, %240 : vector<8x128xf32>
    %243 = arith.divf %241, %242 : vector<8x128xf32>
    %244 = vector.extract_strided_slice %237 {offsets = [0, 128], sizes = [8, 128], strides = [1, 1]} : vector<8x512xf32> to vector<8x128xf32>
    %245 = arith.negf %244 : vector<8x128xf32>
    %246 = math.exp %245 : vector<8x128xf32>
    %cst_129 = arith.constant 1.000000e+00 : f32
    %247 = vector.broadcast %cst_129 : f32 to vector<8x128xf32>
    %248 = arith.addf %247, %246 : vector<8x128xf32>
    %249 = arith.divf %247, %248 : vector<8x128xf32>
    %250 = vector.extract_strided_slice %237 {offsets = [0, 256], sizes = [8, 128], strides = [1, 1]} : vector<8x512xf32> to vector<8x128xf32>
    %251 = math.tanh %250 : vector<8x128xf32>
    %252 = vector.extract_strided_slice %237 {offsets = [0, 384], sizes = [8, 128], strides = [1, 1]} : vector<8x512xf32> to vector<8x128xf32>
    %253 = arith.negf %252 : vector<8x128xf32>
    %254 = math.exp %253 : vector<8x128xf32>
    %cst_130 = arith.constant 1.000000e+00 : f32
    %255 = vector.broadcast %cst_130 : f32 to vector<8x128xf32>
    %256 = arith.addf %255, %254 : vector<8x128xf32>
    %257 = arith.divf %255, %256 : vector<8x128xf32>
    %c0_131 = arith.constant 0 : index
    %c0_132 = arith.constant 0 : index
    %258 = vector.load %arg6[%c0_131, %c0_132] : memref<8x128xf32, #tpu.memory_space<vmem>>, vector<8x128xf32>
    %259 = arith.mulf %249, %258 : vector<8x128xf32>
    %260 = arith.mulf %243, %251 : vector<8x128xf32>
    %261 = arith.addf %259, %260 : vector<8x128xf32>
    %262 = math.tanh %261 : vector<8x128xf32>
    %263 = arith.mulf %257, %262 : vector<8x128xf32>
    %c0_133 = arith.constant 0 : index
    %c0_134 = arith.constant 0 : index
    %264 = vector.load %arg6[%c0_133, %c0_134] : memref<8x128xf32, #tpu.memory_space<vmem>>, vector<8x128xf32>
    tpu.vector_store %arg6[%c0_133, %c0_134], %261 {strides = array<i32>} : memref<8x128xf32, #tpu.memory_space<vmem>>, vector<8x128xf32>,
    %c0_135 = arith.constant 0 : index
    %c0_136 = arith.constant 0 : index
    %265 = vector.load %arg5[%c0_135, %c0_136] : memref<8x128xf32, #tpu.memory_space<vmem>>, vector<8x128xf32>
    tpu.vector_store %arg5[%c0_135, %c0_136], %263 {strides = array<i32>} : memref<8x128xf32, #tpu.memory_space<vmem>>, vector<8x128xf32>,
    %c6_137 = arith.constant 6 : index
    %c0_138 = arith.constant 0 : index
    %c0_139 = arith.constant 0 : index
    %266 = vector.load %arg7[%c6_137, %c0_138, %c0_139] : memref<8x8x128xf32, #tpu.memory_space<vmem>>, vector<1x8x128xf32>
    %267 = vector.shape_cast %266 : vector<1x8x128xf32> to vector<8x128xf32>
    %268 = vector.shape_cast %263 : vector<8x128xf32> to vector<1x8x128xf32>
    tpu.vector_store %arg7[%c6_137, %c0_138, %c0_139], %268 {strides = array<i32>} : memref<8x8x128xf32, #tpu.memory_space<vmem>>, vector<1x8x128xf32>,
    %c7 = arith.constant 7 : index
    %c0_140 = arith.constant 0 : index
    %c0_141 = arith.constant 0 : index
    %269 = vector.load %arg8[%c7, %c0_140, %c0_141] : memref<8x8x512xf32, #tpu.memory_space<vmem>>, vector<1x8x512xf32>
    %270 = vector.shape_cast %269 : vector<1x8x512xf32> to vector<8x512xf32>
    %c0_142 = arith.constant 0 : index
    %c0_143 = arith.constant 0 : index
    %271 = vector.load %arg5[%c0_142, %c0_143] : memref<8x128xf32, #tpu.memory_space<vmem>>, vector<8x128xf32>
    %cst_144 = arith.constant dense<0.000000e+00> : vector<8x512xf32>
    %272 = tpu.matmul %271, %16, %cst_144 {dimension_numbers = #tpu.dot_dimension_numbers<[1], [0], [0], [1], [0, 0, 1, 1], [], []>} : vector<8x128xf32>, vector<128x512xf32>, vector<8x512xf32> -> vector<8x512xf32>
    %273 = arith.addf %270, %272 : vector<8x512xf32>
    %274 = vector.extract_strided_slice %273 {offsets = [0, 0], sizes = [8, 128], strides = [1, 1]} : vector<8x512xf32> to vector<8x128xf32>
    %275 = arith.negf %274 : vector<8x128xf32>
    %276 = math.exp %275 : vector<8x128xf32>
    %cst_145 = arith.constant 1.000000e+00 : f32
    %277 = vector.broadcast %cst_145 : f32 to vector<8x128xf32>
    %278 = arith.addf %277, %276 : vector<8x128xf32>
    %279 = arith.divf %277, %278 : vector<8x128xf32>
    %280 = vector.extract_strided_slice %273 {offsets = [0, 128], sizes = [8, 128], strides = [1, 1]} : vector<8x512xf32> to vector<8x128xf32>
    %281 = arith.negf %280 : vector<8x128xf32>
    %282 = math.exp %281 : vector<8x128xf32>
    %cst_146 = arith.constant 1.000000e+00 : f32
    %283 = vector.broadcast %cst_146 : f32 to vector<8x128xf32>
    %284 = arith.addf %283, %282 : vector<8x128xf32>
    %285 = arith.divf %283, %284 : vector<8x128xf32>
    %286 = vector.extract_strided_slice %273 {offsets = [0, 256], sizes = [8, 128], strides = [1, 1]} : vector<8x512xf32> to vector<8x128xf32>
    %287 = math.tanh %286 : vector<8x128xf32>
    %288 = vector.extract_strided_slice %273 {offsets = [0, 384], sizes = [8, 128], strides = [1, 1]} : vector<8x512xf32> to vector<8x128xf32>
    %289 = arith.negf %288 : vector<8x128xf32>
    %290 = math.exp %289 : vector<8x128xf32>
    %cst_147 = arith.constant 1.000000e+00 : f32
    %291 = vector.broadcast %cst_147 : f32 to vector<8x128xf32>
    %292 = arith.addf %291, %290 : vector<8x128xf32>
    %293 = arith.divf %291, %292 : vector<8x128xf32>
    %c0_148 = arith.constant 0 : index
    %c0_149 = arith.constant 0 : index
    %294 = vector.load %arg6[%c0_148, %c0_149] : memref<8x128xf32, #tpu.memory_space<vmem>>, vector<8x128xf32>
    %295 = arith.mulf %285, %294 : vector<8x128xf32>
    %296 = arith.mulf %279, %287 : vector<8x128xf32>
    %297 = arith.addf %295, %296 : vector<8x128xf32>
    %298 = math.tanh %297 : vector<8x128xf32>
    %299 = arith.mulf %293, %298 : vector<8x128xf32>
    %c0_150 = arith.constant 0 : index
    %c0_151 = arith.constant 0 : index
    %300 = vector.load %arg6[%c0_150, %c0_151] : memref<8x128xf32, #tpu.memory_space<vmem>>, vector<8x128xf32>
    tpu.vector_store %arg6[%c0_150, %c0_151], %297 {strides = array<i32>} : memref<8x128xf32, #tpu.memory_space<vmem>>, vector<8x128xf32>,
    %c0_152 = arith.constant 0 : index
    %c0_153 = arith.constant 0 : index
    %301 = vector.load %arg5[%c0_152, %c0_153] : memref<8x128xf32, #tpu.memory_space<vmem>>, vector<8x128xf32>
    tpu.vector_store %arg5[%c0_152, %c0_153], %299 {strides = array<i32>} : memref<8x128xf32, #tpu.memory_space<vmem>>, vector<8x128xf32>,
    %c7_154 = arith.constant 7 : index
    %c0_155 = arith.constant 0 : index
    %c0_156 = arith.constant 0 : index
    %302 = vector.load %arg7[%c7_154, %c0_155, %c0_156] : memref<8x8x128xf32, #tpu.memory_space<vmem>>, vector<1x8x128xf32>
    %303 = vector.shape_cast %302 : vector<1x8x128xf32> to vector<8x128xf32>
    %304 = vector.shape_cast %299 : vector<8x128xf32> to vector<1x8x128xf32>
    tpu.vector_store %arg7[%c7_154, %c0_155, %c0_156], %304 {strides = array<i32>} : memref<8x8x128xf32, #tpu.memory_space<vmem>>, vector<1x8x128xf32>,
    %c0_157 = arith.constant 0 : index
    %c0_158 = arith.constant 0 : index
    %c0_159 = arith.constant 0 : index
    %305 = vector.load %arg7[%c0_157, %c0_158, %c0_159] : memref<8x8x128xf32, #tpu.memory_space<vmem>>, vector<8x8x128xf32>
    %306 = vector.shape_cast %305 : vector<8x8x128xf32> to vector<64x128xf32>
    %c1_160 = arith.constant 1 : index
    %c0_161 = arith.constant 0 : index
    %c0_162 = arith.constant 0 : index
    %307 = vector.load %arg1[%c1_160, %c0_161, %c0_162] : memref<4x128x512xf32, #tpu.memory_space<vmem>>, vector<1x128x512xf32>
    %308 = vector.shape_cast %307 : vector<1x128x512xf32> to vector<128x512xf32>
    %cst_163 = arith.constant dense<0.000000e+00> : vector<64x512xf32>
    %309 = tpu.matmul %306, %308, %cst_163 {dimension_numbers = #tpu.dot_dimension_numbers<[1], [0], [0], [1], [0, 0, 1, 1], [], []>} : vector<64x128xf32>, vector<128x512xf32>, vector<64x512xf32> -> vector<64x512xf32>
    %c1_164 = arith.constant 1 : index
    %c0_165 = arith.constant 0 : index
    %c0_166 = arith.constant 0 : index
    %310 = vector.load %arg3[%c1_164, %c0_165, %c0_166] : memref<4x1x512xf32, #tpu.memory_space<vmem>>, vector<1x1x512xf32>
    %311 = vector.shape_cast %310 : vector<1x1x512xf32> to vector<1x512xf32>
    %312 = vector.broadcast %311 : vector<1x512xf32> to vector<64x512xf32>
    %313 = arith.addf %309, %312 : vector<64x512xf32>
    %314 = vector.shape_cast %313 : vector<64x512xf32> to vector<8x8x512xf32>
    %c0_167 = arith.constant 0 : index
    %c0_168 = arith.constant 0 : index
    %c0_169 = arith.constant 0 : index
    %315 = vector.load %arg8[%c0_167, %c0_168, %c0_169] : memref<8x8x512xf32, #tpu.memory_space<vmem>>, vector<8x8x512xf32>
    tpu.vector_store %arg8[%c0_167, %c0_168, %c0_169], %314 {strides = array<i32>} : memref<8x8x512xf32, #tpu.memory_space<vmem>>, vector<8x8x512xf32>,
    %cst_170 = arith.constant 0.000000e+00 : f32
    %316 = vector.broadcast %cst_170 : f32 to vector<8x128xf32>
    %c0_171 = arith.constant 0 : index
    %c0_172 = arith.constant 0 : index
    %317 = vector.load %arg5[%c0_171, %c0_172] : memref<8x128xf32, #tpu.memory_space<vmem>>, vector<8x128xf32>
    tpu.vector_store %arg5[%c0_171, %c0_172], %316 {strides = array<i32>} : memref<8x128xf32, #tpu.memory_space<vmem>>, vector<8x128xf32>,
    %cst_173 = arith.constant 0.000000e+00 : f32
    %318 = vector.broadcast %cst_173 : f32 to vector<8x128xf32>
    %c0_174 = arith.constant 0 : index
    %c0_175 = arith.constant 0 : index
    %319 = vector.load %arg6[%c0_174, %c0_175] : memref<8x128xf32, #tpu.memory_space<vmem>>, vector<8x128xf32>
    tpu.vector_store %arg6[%c0_174, %c0_175], %318 {strides = array<i32>} : memref<8x128xf32, #tpu.memory_space<vmem>>, vector<8x128xf32>,
    %c1_176 = arith.constant 1 : index
    %c0_177 = arith.constant 0 : index
    %c0_178 = arith.constant 0 : index
    %320 = vector.load %arg2[%c1_176, %c0_177, %c0_178] : memref<4x128x512xf32, #tpu.memory_space<vmem>>, vector<1x128x512xf32>
    %321 = vector.shape_cast %320 : vector<1x128x512xf32> to vector<128x512xf32>
    %c0_179 = arith.constant 0 : index
    %c0_180 = arith.constant 0 : index
    %c0_181 = arith.constant 0 : index
    %322 = vector.load %arg8[%c0_179, %c0_180, %c0_181] : memref<8x8x512xf32, #tpu.memory_space<vmem>>, vector<1x8x512xf32>
    %323 = vector.shape_cast %322 : vector<1x8x512xf32> to vector<8x512xf32>
    %c0_182 = arith.constant 0 : index
    %c0_183 = arith.constant 0 : index
    %324 = vector.load %arg5[%c0_182, %c0_183] : memref<8x128xf32, #tpu.memory_space<vmem>>, vector<8x128xf32>
    %cst_184 = arith.constant dense<0.000000e+00> : vector<8x512xf32>
    %325 = tpu.matmul %324, %321, %cst_184 {dimension_numbers = #tpu.dot_dimension_numbers<[1], [0], [0], [1], [0, 0, 1, 1], [], []>} : vector<8x128xf32>, vector<128x512xf32>, vector<8x512xf32> -> vector<8x512xf32>
    %326 = arith.addf %323, %325 : vector<8x512xf32>
    %327 = vector.extract_strided_slice %326 {offsets = [0, 0], sizes = [8, 128], strides = [1, 1]} : vector<8x512xf32> to vector<8x128xf32>
    %328 = arith.negf %327 : vector<8x128xf32>
    %329 = math.exp %328 : vector<8x128xf32>
    %cst_185 = arith.constant 1.000000e+00 : f32
    %330 = vector.broadcast %cst_185 : f32 to vector<8x128xf32>
    %331 = arith.addf %330, %329 : vector<8x128xf32>
    %332 = arith.divf %330, %331 : vector<8x128xf32>
    %333 = vector.extract_strided_slice %326 {offsets = [0, 128], sizes = [8, 128], strides = [1, 1]} : vector<8x512xf32> to vector<8x128xf32>
    %334 = arith.negf %333 : vector<8x128xf32>
    %335 = math.exp %334 : vector<8x128xf32>
    %cst_186 = arith.constant 1.000000e+00 : f32
    %336 = vector.broadcast %cst_186 : f32 to vector<8x128xf32>
    %337 = arith.addf %336, %335 : vector<8x128xf32>
    %338 = arith.divf %336, %337 : vector<8x128xf32>
    %339 = vector.extract_strided_slice %326 {offsets = [0, 256], sizes = [8, 128], strides = [1, 1]} : vector<8x512xf32> to vector<8x128xf32>
    %340 = math.tanh %339 : vector<8x128xf32>
    %341 = vector.extract_strided_slice %326 {offsets = [0, 384], sizes = [8, 128], strides = [1, 1]} : vector<8x512xf32> to vector<8x128xf32>
    %342 = arith.negf %341 : vector<8x128xf32>
    %343 = math.exp %342 : vector<8x128xf32>
    %cst_187 = arith.constant 1.000000e+00 : f32
    %344 = vector.broadcast %cst_187 : f32 to vector<8x128xf32>
    %345 = arith.addf %344, %343 : vector<8x128xf32>
    %346 = arith.divf %344, %345 : vector<8x128xf32>
    %c0_188 = arith.constant 0 : index
    %c0_189 = arith.constant 0 : index
    %347 = vector.load %arg6[%c0_188, %c0_189] : memref<8x128xf32, #tpu.memory_space<vmem>>, vector<8x128xf32>
    %348 = arith.mulf %338, %347 : vector<8x128xf32>
    %349 = arith.mulf %332, %340 : vector<8x128xf32>
    %350 = arith.addf %348, %349 : vector<8x128xf32>
    %351 = math.tanh %350 : vector<8x128xf32>
    %352 = arith.mulf %346, %351 : vector<8x128xf32>
    %c0_190 = arith.constant 0 : index
    %c0_191 = arith.constant 0 : index
    %353 = vector.load %arg6[%c0_190, %c0_191] : memref<8x128xf32, #tpu.memory_space<vmem>>, vector<8x128xf32>
    tpu.vector_store %arg6[%c0_190, %c0_191], %350 {strides = array<i32>} : memref<8x128xf32, #tpu.memory_space<vmem>>, vector<8x128xf32>,
    %c0_192 = arith.constant 0 : index
    %c0_193 = arith.constant 0 : index
    %354 = vector.load %arg5[%c0_192, %c0_193] : memref<8x128xf32, #tpu.memory_space<vmem>>, vector<8x128xf32>
    tpu.vector_store %arg5[%c0_192, %c0_193], %352 {strides = array<i32>} : memref<8x128xf32, #tpu.memory_space<vmem>>, vector<8x128xf32>,
    %c0_194 = arith.constant 0 : index
    %c0_195 = arith.constant 0 : index
    %c0_196 = arith.constant 0 : index
    %355 = vector.load %arg7[%c0_194, %c0_195, %c0_196] : memref<8x8x128xf32, #tpu.memory_space<vmem>>, vector<1x8x128xf32>
    %356 = vector.shape_cast %355 : vector<1x8x128xf32> to vector<8x128xf32>
    %357 = vector.shape_cast %352 : vector<8x128xf32> to vector<1x8x128xf32>
    tpu.vector_store %arg7[%c0_194, %c0_195, %c0_196], %357 {strides = array<i32>} : memref<8x8x128xf32, #tpu.memory_space<vmem>>, vector<1x8x128xf32>,
    %c1_197 = arith.constant 1 : index
    %c0_198 = arith.constant 0 : index
    %c0_199 = arith.constant 0 : index
    %358 = vector.load %arg8[%c1_197, %c0_198, %c0_199] : memref<8x8x512xf32, #tpu.memory_space<vmem>>, vector<1x8x512xf32>
    %359 = vector.shape_cast %358 : vector<1x8x512xf32> to vector<8x512xf32>
    %c0_200 = arith.constant 0 : index
    %c0_201 = arith.constant 0 : index
    %360 = vector.load %arg5[%c0_200, %c0_201] : memref<8x128xf32, #tpu.memory_space<vmem>>, vector<8x128xf32>
    %cst_202 = arith.constant dense<0.000000e+00> : vector<8x512xf32>
    %361 = tpu.matmul %360, %321, %cst_202 {dimension_numbers = #tpu.dot_dimension_numbers<[1], [0], [0], [1], [0, 0, 1, 1], [], []>} : vector<8x128xf32>, vector<128x512xf32>, vector<8x512xf32> -> vector<8x512xf32>
    %362 = arith.addf %359, %361 : vector<8x512xf32>
    %363 = vector.extract_strided_slice %362 {offsets = [0, 0], sizes = [8, 128], strides = [1, 1]} : vector<8x512xf32> to vector<8x128xf32>
    %364 = arith.negf %363 : vector<8x128xf32>
    %365 = math.exp %364 : vector<8x128xf32>
    %cst_203 = arith.constant 1.000000e+00 : f32
    %366 = vector.broadcast %cst_203 : f32 to vector<8x128xf32>
    %367 = arith.addf %366, %365 : vector<8x128xf32>
    %368 = arith.divf %366, %367 : vector<8x128xf32>
    %369 = vector.extract_strided_slice %362 {offsets = [0, 128], sizes = [8, 128], strides = [1, 1]} : vector<8x512xf32> to vector<8x128xf32>
    %370 = arith.negf %369 : vector<8x128xf32>
    %371 = math.exp %370 : vector<8x128xf32>
    %cst_204 = arith.constant 1.000000e+00 : f32
    %372 = vector.broadcast %cst_204 : f32 to vector<8x128xf32>
    %373 = arith.addf %372, %371 : vector<8x128xf32>
    %374 = arith.divf %372, %373 : vector<8x128xf32>
    %375 = vector.extract_strided_slice %362 {offsets = [0, 256], sizes = [8, 128], strides = [1, 1]} : vector<8x512xf32> to vector<8x128xf32>
    %376 = math.tanh %375 : vector<8x128xf32>
    %377 = vector.extract_strided_slice %362 {offsets = [0, 384], sizes = [8, 128], strides = [1, 1]} : vector<8x512xf32> to vector<8x128xf32>
    %378 = arith.negf %377 : vector<8x128xf32>
    %379 = math.exp %378 : vector<8x128xf32>
    %cst_205 = arith.constant 1.000000e+00 : f32
    %380 = vector.broadcast %cst_205 : f32 to vector<8x128xf32>
    %381 = arith.addf %380, %379 : vector<8x128xf32>
    %382 = arith.divf %380, %381 : vector<8x128xf32>
    %c0_206 = arith.constant 0 : index
    %c0_207 = arith.constant 0 : index
    %383 = vector.load %arg6[%c0_206, %c0_207] : memref<8x128xf32, #tpu.memory_space<vmem>>, vector<8x128xf32>
    %384 = arith.mulf %374, %383 : vector<8x128xf32>
    %385 = arith.mulf %368, %376 : vector<8x128xf32>
    %386 = arith.addf %384, %385 : vector<8x128xf32>
    %387 = math.tanh %386 : vector<8x128xf32>
    %388 = arith.mulf %382, %387 : vector<8x128xf32>
    %c0_208 = arith.constant 0 : index
    %c0_209 = arith.constant 0 : index
    %389 = vector.load %arg6[%c0_208, %c0_209] : memref<8x128xf32, #tpu.memory_space<vmem>>, vector<8x128xf32>
    tpu.vector_store %arg6[%c0_208, %c0_209], %386 {strides = array<i32>} : memref<8x128xf32, #tpu.memory_space<vmem>>, vector<8x128xf32>,
    %c0_210 = arith.constant 0 : index
    %c0_211 = arith.constant 0 : index
    %390 = vector.load %arg5[%c0_210, %c0_211] : memref<8x128xf32, #tpu.memory_space<vmem>>, vector<8x128xf32>
    tpu.vector_store %arg5[%c0_210, %c0_211], %388 {strides = array<i32>} : memref<8x128xf32, #tpu.memory_space<vmem>>, vector<8x128xf32>,
    %c1_212 = arith.constant 1 : index
    %c0_213 = arith.constant 0 : index
    %c0_214 = arith.constant 0 : index
    %391 = vector.load %arg7[%c1_212, %c0_213, %c0_214] : memref<8x8x128xf32, #tpu.memory_space<vmem>>, vector<1x8x128xf32>
    %392 = vector.shape_cast %391 : vector<1x8x128xf32> to vector<8x128xf32>
    %393 = vector.shape_cast %388 : vector<8x128xf32> to vector<1x8x128xf32>
    tpu.vector_store %arg7[%c1_212, %c0_213, %c0_214], %393 {strides = array<i32>} : memref<8x8x128xf32, #tpu.memory_space<vmem>>, vector<1x8x128xf32>,
    %c2_215 = arith.constant 2 : index
    %c0_216 = arith.constant 0 : index
    %c0_217 = arith.constant 0 : index
    %394 = vector.load %arg8[%c2_215, %c0_216, %c0_217] : memref<8x8x512xf32, #tpu.memory_space<vmem>>, vector<1x8x512xf32>
    %395 = vector.shape_cast %394 : vector<1x8x512xf32> to vector<8x512xf32>
    %c0_218 = arith.constant 0 : index
    %c0_219 = arith.constant 0 : index
    %396 = vector.load %arg5[%c0_218, %c0_219] : memref<8x128xf32, #tpu.memory_space<vmem>>, vector<8x128xf32>
    %cst_220 = arith.constant dense<0.000000e+00> : vector<8x512xf32>
    %397 = tpu.matmul %396, %321, %cst_220 {dimension_numbers = #tpu.dot_dimension_numbers<[1], [0], [0], [1], [0, 0, 1, 1], [], []>} : vector<8x128xf32>, vector<128x512xf32>, vector<8x512xf32> -> vector<8x512xf32>
    %398 = arith.addf %395, %397 : vector<8x512xf32>
    %399 = vector.extract_strided_slice %398 {offsets = [0, 0], sizes = [8, 128], strides = [1, 1]} : vector<8x512xf32> to vector<8x128xf32>
    %400 = arith.negf %399 : vector<8x128xf32>
    %401 = math.exp %400 : vector<8x128xf32>
    %cst_221 = arith.constant 1.000000e+00 : f32
    %402 = vector.broadcast %cst_221 : f32 to vector<8x128xf32>
    %403 = arith.addf %402, %401 : vector<8x128xf32>
    %404 = arith.divf %402, %403 : vector<8x128xf32>
    %405 = vector.extract_strided_slice %398 {offsets = [0, 128], sizes = [8, 128], strides = [1, 1]} : vector<8x512xf32> to vector<8x128xf32>
    %406 = arith.negf %405 : vector<8x128xf32>
    %407 = math.exp %406 : vector<8x128xf32>
    %cst_222 = arith.constant 1.000000e+00 : f32
    %408 = vector.broadcast %cst_222 : f32 to vector<8x128xf32>
    %409 = arith.addf %408, %407 : vector<8x128xf32>
    %410 = arith.divf %408, %409 : vector<8x128xf32>
    %411 = vector.extract_strided_slice %398 {offsets = [0, 256], sizes = [8, 128], strides = [1, 1]} : vector<8x512xf32> to vector<8x128xf32>
    %412 = math.tanh %411 : vector<8x128xf32>
    %413 = vector.extract_strided_slice %398 {offsets = [0, 384], sizes = [8, 128], strides = [1, 1]} : vector<8x512xf32> to vector<8x128xf32>
    %414 = arith.negf %413 : vector<8x128xf32>
    %415 = math.exp %414 : vector<8x128xf32>
    %cst_223 = arith.constant 1.000000e+00 : f32
    %416 = vector.broadcast %cst_223 : f32 to vector<8x128xf32>
    %417 = arith.addf %416, %415 : vector<8x128xf32>
    %418 = arith.divf %416, %417 : vector<8x128xf32>
    %c0_224 = arith.constant 0 : index
    %c0_225 = arith.constant 0 : index
    %419 = vector.load %arg6[%c0_224, %c0_225] : memref<8x128xf32, #tpu.memory_space<vmem>>, vector<8x128xf32>
    %420 = arith.mulf %410, %419 : vector<8x128xf32>
    %421 = arith.mulf %404, %412 : vector<8x128xf32>
    %422 = arith.addf %420, %421 : vector<8x128xf32>
    %423 = math.tanh %422 : vector<8x128xf32>
    %424 = arith.mulf %418, %423 : vector<8x128xf32>
    %c0_226 = arith.constant 0 : index
    %c0_227 = arith.constant 0 : index
    %425 = vector.load %arg6[%c0_226, %c0_227] : memref<8x128xf32, #tpu.memory_space<vmem>>, vector<8x128xf32>
    tpu.vector_store %arg6[%c0_226, %c0_227], %422 {strides = array<i32>} : memref<8x128xf32, #tpu.memory_space<vmem>>, vector<8x128xf32>,
    %c0_228 = arith.constant 0 : index
    %c0_229 = arith.constant 0 : index
    %426 = vector.load %arg5[%c0_228, %c0_229] : memref<8x128xf32, #tpu.memory_space<vmem>>, vector<8x128xf32>
    tpu.vector_store %arg5[%c0_228, %c0_229], %424 {strides = array<i32>} : memref<8x128xf32, #tpu.memory_space<vmem>>, vector<8x128xf32>,
    %c2_230 = arith.constant 2 : index
    %c0_231 = arith.constant 0 : index
    %c0_232 = arith.constant 0 : index
    %427 = vector.load %arg7[%c2_230, %c0_231, %c0_232] : memref<8x8x128xf32, #tpu.memory_space<vmem>>, vector<1x8x128xf32>
    %428 = vector.shape_cast %427 : vector<1x8x128xf32> to vector<8x128xf32>
    %429 = vector.shape_cast %424 : vector<8x128xf32> to vector<1x8x128xf32>
    tpu.vector_store %arg7[%c2_230, %c0_231, %c0_232], %429 {strides = array<i32>} : memref<8x8x128xf32, #tpu.memory_space<vmem>>, vector<1x8x128xf32>,
    %c3_233 = arith.constant 3 : index
    %c0_234 = arith.constant 0 : index
    %c0_235 = arith.constant 0 : index
    %430 = vector.load %arg8[%c3_233, %c0_234, %c0_235] : memref<8x8x512xf32, #tpu.memory_space<vmem>>, vector<1x8x512xf32>
    %431 = vector.shape_cast %430 : vector<1x8x512xf32> to vector<8x512xf32>
    %c0_236 = arith.constant 0 : index
    %c0_237 = arith.constant 0 : index
    %432 = vector.load %arg5[%c0_236, %c0_237] : memref<8x128xf32, #tpu.memory_space<vmem>>, vector<8x128xf32>
    %cst_238 = arith.constant dense<0.000000e+00> : vector<8x512xf32>
    %433 = tpu.matmul %432, %321, %cst_238 {dimension_numbers = #tpu.dot_dimension_numbers<[1], [0], [0], [1], [0, 0, 1, 1], [], []>} : vector<8x128xf32>, vector<128x512xf32>, vector<8x512xf32> -> vector<8x512xf32>
    %434 = arith.addf %431, %433 : vector<8x512xf32>
    %435 = vector.extract_strided_slice %434 {offsets = [0, 0], sizes = [8, 128], strides = [1, 1]} : vector<8x512xf32> to vector<8x128xf32>
    %436 = arith.negf %435 : vector<8x128xf32>
    %437 = math.exp %436 : vector<8x128xf32>
    %cst_239 = arith.constant 1.000000e+00 : f32
    %438 = vector.broadcast %cst_239 : f32 to vector<8x128xf32>
    %439 = arith.addf %438, %437 : vector<8x128xf32>
    %440 = arith.divf %438, %439 : vector<8x128xf32>
    %441 = vector.extract_strided_slice %434 {offsets = [0, 128], sizes = [8, 128], strides = [1, 1]} : vector<8x512xf32> to vector<8x128xf32>
    %442 = arith.negf %441 : vector<8x128xf32>
    %443 = math.exp %442 : vector<8x128xf32>
    %cst_240 = arith.constant 1.000000e+00 : f32
    %444 = vector.broadcast %cst_240 : f32 to vector<8x128xf32>
    %445 = arith.addf %444, %443 : vector<8x128xf32>
    %446 = arith.divf %444, %445 : vector<8x128xf32>
    %447 = vector.extract_strided_slice %434 {offsets = [0, 256], sizes = [8, 128], strides = [1, 1]} : vector<8x512xf32> to vector<8x128xf32>
    %448 = math.tanh %447 : vector<8x128xf32>
    %449 = vector.extract_strided_slice %434 {offsets = [0, 384], sizes = [8, 128], strides = [1, 1]} : vector<8x512xf32> to vector<8x128xf32>
    %450 = arith.negf %449 : vector<8x128xf32>
    %451 = math.exp %450 : vector<8x128xf32>
    %cst_241 = arith.constant 1.000000e+00 : f32
    %452 = vector.broadcast %cst_241 : f32 to vector<8x128xf32>
    %453 = arith.addf %452, %451 : vector<8x128xf32>
    %454 = arith.divf %452, %453 : vector<8x128xf32>
    %c0_242 = arith.constant 0 : index
    %c0_243 = arith.constant 0 : index
    %455 = vector.load %arg6[%c0_242, %c0_243] : memref<8x128xf32, #tpu.memory_space<vmem>>, vector<8x128xf32>
    %456 = arith.mulf %446, %455 : vector<8x128xf32>
    %457 = arith.mulf %440, %448 : vector<8x128xf32>
    %458 = arith.addf %456, %457 : vector<8x128xf32>
    %459 = math.tanh %458 : vector<8x128xf32>
    %460 = arith.mulf %454, %459 : vector<8x128xf32>
    %c0_244 = arith.constant 0 : index
    %c0_245 = arith.constant 0 : index
    %461 = vector.load %arg6[%c0_244, %c0_245] : memref<8x128xf32, #tpu.memory_space<vmem>>, vector<8x128xf32>
    tpu.vector_store %arg6[%c0_244, %c0_245], %458 {strides = array<i32>} : memref<8x128xf32, #tpu.memory_space<vmem>>, vector<8x128xf32>,
    %c0_246 = arith.constant 0 : index
    %c0_247 = arith.constant 0 : index
    %462 = vector.load %arg5[%c0_246, %c0_247] : memref<8x128xf32, #tpu.memory_space<vmem>>, vector<8x128xf32>
    tpu.vector_store %arg5[%c0_246, %c0_247], %460 {strides = array<i32>} : memref<8x128xf32, #tpu.memory_space<vmem>>, vector<8x128xf32>,
    %c3_248 = arith.constant 3 : index
    %c0_249 = arith.constant 0 : index
    %c0_250 = arith.constant 0 : index
    %463 = vector.load %arg7[%c3_248, %c0_249, %c0_250] : memref<8x8x128xf32, #tpu.memory_space<vmem>>, vector<1x8x128xf32>
    %464 = vector.shape_cast %463 : vector<1x8x128xf32> to vector<8x128xf32>
    %465 = vector.shape_cast %460 : vector<8x128xf32> to vector<1x8x128xf32>
    tpu.vector_store %arg7[%c3_248, %c0_249, %c0_250], %465 {strides = array<i32>} : memref<8x8x128xf32, #tpu.memory_space<vmem>>, vector<1x8x128xf32>,
    %c4_251 = arith.constant 4 : index
    %c0_252 = arith.constant 0 : index
    %c0_253 = arith.constant 0 : index
    %466 = vector.load %arg8[%c4_251, %c0_252, %c0_253] : memref<8x8x512xf32, #tpu.memory_space<vmem>>, vector<1x8x512xf32>
    %467 = vector.shape_cast %466 : vector<1x8x512xf32> to vector<8x512xf32>
    %c0_254 = arith.constant 0 : index
    %c0_255 = arith.constant 0 : index
    %468 = vector.load %arg5[%c0_254, %c0_255] : memref<8x128xf32, #tpu.memory_space<vmem>>, vector<8x128xf32>
    %cst_256 = arith.constant dense<0.000000e+00> : vector<8x512xf32>
    %469 = tpu.matmul %468, %321, %cst_256 {dimension_numbers = #tpu.dot_dimension_numbers<[1], [0], [0], [1], [0, 0, 1, 1], [], []>} : vector<8x128xf32>, vector<128x512xf32>, vector<8x512xf32> -> vector<8x512xf32>
    %470 = arith.addf %467, %469 : vector<8x512xf32>
    %471 = vector.extract_strided_slice %470 {offsets = [0, 0], sizes = [8, 128], strides = [1, 1]} : vector<8x512xf32> to vector<8x128xf32>
    %472 = arith.negf %471 : vector<8x128xf32>
    %473 = math.exp %472 : vector<8x128xf32>
    %cst_257 = arith.constant 1.000000e+00 : f32
    %474 = vector.broadcast %cst_257 : f32 to vector<8x128xf32>
    %475 = arith.addf %474, %473 : vector<8x128xf32>
    %476 = arith.divf %474, %475 : vector<8x128xf32>
    %477 = vector.extract_strided_slice %470 {offsets = [0, 128], sizes = [8, 128], strides = [1, 1]} : vector<8x512xf32> to vector<8x128xf32>
    %478 = arith.negf %477 : vector<8x128xf32>
    %479 = math.exp %478 : vector<8x128xf32>
    %cst_258 = arith.constant 1.000000e+00 : f32
    %480 = vector.broadcast %cst_258 : f32 to vector<8x128xf32>
    %481 = arith.addf %480, %479 : vector<8x128xf32>
    %482 = arith.divf %480, %481 : vector<8x128xf32>
    %483 = vector.extract_strided_slice %470 {offsets = [0, 256], sizes = [8, 128], strides = [1, 1]} : vector<8x512xf32> to vector<8x128xf32>
    %484 = math.tanh %483 : vector<8x128xf32>
    %485 = vector.extract_strided_slice %470 {offsets = [0, 384], sizes = [8, 128], strides = [1, 1]} : vector<8x512xf32> to vector<8x128xf32>
    %486 = arith.negf %485 : vector<8x128xf32>
    %487 = math.exp %486 : vector<8x128xf32>
    %cst_259 = arith.constant 1.000000e+00 : f32
    %488 = vector.broadcast %cst_259 : f32 to vector<8x128xf32>
    %489 = arith.addf %488, %487 : vector<8x128xf32>
    %490 = arith.divf %488, %489 : vector<8x128xf32>
    %c0_260 = arith.constant 0 : index
    %c0_261 = arith.constant 0 : index
    %491 = vector.load %arg6[%c0_260, %c0_261] : memref<8x128xf32, #tpu.memory_space<vmem>>, vector<8x128xf32>
    %492 = arith.mulf %482, %491 : vector<8x128xf32>
    %493 = arith.mulf %476, %484 : vector<8x128xf32>
    %494 = arith.addf %492, %493 : vector<8x128xf32>
    %495 = math.tanh %494 : vector<8x128xf32>
    %496 = arith.mulf %490, %495 : vector<8x128xf32>
    %c0_262 = arith.constant 0 : index
    %c0_263 = arith.constant 0 : index
    %497 = vector.load %arg6[%c0_262, %c0_263] : memref<8x128xf32, #tpu.memory_space<vmem>>, vector<8x128xf32>
    tpu.vector_store %arg6[%c0_262, %c0_263], %494 {strides = array<i32>} : memref<8x128xf32, #tpu.memory_space<vmem>>, vector<8x128xf32>,
    %c0_264 = arith.constant 0 : index
    %c0_265 = arith.constant 0 : index
    %498 = vector.load %arg5[%c0_264, %c0_265] : memref<8x128xf32, #tpu.memory_space<vmem>>, vector<8x128xf32>
    tpu.vector_store %arg5[%c0_264, %c0_265], %496 {strides = array<i32>} : memref<8x128xf32, #tpu.memory_space<vmem>>, vector<8x128xf32>,
    %c4_266 = arith.constant 4 : index
    %c0_267 = arith.constant 0 : index
    %c0_268 = arith.constant 0 : index
    %499 = vector.load %arg7[%c4_266, %c0_267, %c0_268] : memref<8x8x128xf32, #tpu.memory_space<vmem>>, vector<1x8x128xf32>
    %500 = vector.shape_cast %499 : vector<1x8x128xf32> to vector<8x128xf32>
    %501 = vector.shape_cast %496 : vector<8x128xf32> to vector<1x8x128xf32>
    tpu.vector_store %arg7[%c4_266, %c0_267, %c0_268], %501 {strides = array<i32>} : memref<8x8x128xf32, #tpu.memory_space<vmem>>, vector<1x8x128xf32>,
    %c5_269 = arith.constant 5 : index
    %c0_270 = arith.constant 0 : index
    %c0_271 = arith.constant 0 : index
    %502 = vector.load %arg8[%c5_269, %c0_270, %c0_271] : memref<8x8x512xf32, #tpu.memory_space<vmem>>, vector<1x8x512xf32>
    %503 = vector.shape_cast %502 : vector<1x8x512xf32> to vector<8x512xf32>
    %c0_272 = arith.constant 0 : index
    %c0_273 = arith.constant 0 : index
    %504 = vector.load %arg5[%c0_272, %c0_273] : memref<8x128xf32, #tpu.memory_space<vmem>>, vector<8x128xf32>
    %cst_274 = arith.constant dense<0.000000e+00> : vector<8x512xf32>
    %505 = tpu.matmul %504, %321, %cst_274 {dimension_numbers = #tpu.dot_dimension_numbers<[1], [0], [0], [1], [0, 0, 1, 1], [], []>} : vector<8x128xf32>, vector<128x512xf32>, vector<8x512xf32> -> vector<8x512xf32>
    %506 = arith.addf %503, %505 : vector<8x512xf32>
    %507 = vector.extract_strided_slice %506 {offsets = [0, 0], sizes = [8, 128], strides = [1, 1]} : vector<8x512xf32> to vector<8x128xf32>
    %508 = arith.negf %507 : vector<8x128xf32>
    %509 = math.exp %508 : vector<8x128xf32>
    %cst_275 = arith.constant 1.000000e+00 : f32
    %510 = vector.broadcast %cst_275 : f32 to vector<8x128xf32>
    %511 = arith.addf %510, %509 : vector<8x128xf32>
    %512 = arith.divf %510, %511 : vector<8x128xf32>
    %513 = vector.extract_strided_slice %506 {offsets = [0, 128], sizes = [8, 128], strides = [1, 1]} : vector<8x512xf32> to vector<8x128xf32>
    %514 = arith.negf %513 : vector<8x128xf32>
    %515 = math.exp %514 : vector<8x128xf32>
    %cst_276 = arith.constant 1.000000e+00 : f32
    %516 = vector.broadcast %cst_276 : f32 to vector<8x128xf32>
    %517 = arith.addf %516, %515 : vector<8x128xf32>
    %518 = arith.divf %516, %517 : vector<8x128xf32>
    %519 = vector.extract_strided_slice %506 {offsets = [0, 256], sizes = [8, 128], strides = [1, 1]} : vector<8x512xf32> to vector<8x128xf32>
    %520 = math.tanh %519 : vector<8x128xf32>
    %521 = vector.extract_strided_slice %506 {offsets = [0, 384], sizes = [8, 128], strides = [1, 1]} : vector<8x512xf32> to vector<8x128xf32>
    %522 = arith.negf %521 : vector<8x128xf32>
    %523 = math.exp %522 : vector<8x128xf32>
    %cst_277 = arith.constant 1.000000e+00 : f32
    %524 = vector.broadcast %cst_277 : f32 to vector<8x128xf32>
    %525 = arith.addf %524, %523 : vector<8x128xf32>
    %526 = arith.divf %524, %525 : vector<8x128xf32>
    %c0_278 = arith.constant 0 : index
    %c0_279 = arith.constant 0 : index
    %527 = vector.load %arg6[%c0_278, %c0_279] : memref<8x128xf32, #tpu.memory_space<vmem>>, vector<8x128xf32>
    %528 = arith.mulf %518, %527 : vector<8x128xf32>
    %529 = arith.mulf %512, %520 : vector<8x128xf32>
    %530 = arith.addf %528, %529 : vector<8x128xf32>
    %531 = math.tanh %530 : vector<8x128xf32>
    %532 = arith.mulf %526, %531 : vector<8x128xf32>
    %c0_280 = arith.constant 0 : index
    %c0_281 = arith.constant 0 : index
    %533 = vector.load %arg6[%c0_280, %c0_281] : memref<8x128xf32, #tpu.memory_space<vmem>>, vector<8x128xf32>
    tpu.vector_store %arg6[%c0_280, %c0_281], %530 {strides = array<i32>} : memref<8x128xf32, #tpu.memory_space<vmem>>, vector<8x128xf32>,
    %c0_282 = arith.constant 0 : index
    %c0_283 = arith.constant 0 : index
    %534 = vector.load %arg5[%c0_282, %c0_283] : memref<8x128xf32, #tpu.memory_space<vmem>>, vector<8x128xf32>
    tpu.vector_store %arg5[%c0_282, %c0_283], %532 {strides = array<i32>} : memref<8x128xf32, #tpu.memory_space<vmem>>, vector<8x128xf32>,
    %c5_284 = arith.constant 5 : index
    %c0_285 = arith.constant 0 : index
    %c0_286 = arith.constant 0 : index
    %535 = vector.load %arg7[%c5_284, %c0_285, %c0_286] : memref<8x8x128xf32, #tpu.memory_space<vmem>>, vector<1x8x128xf32>
    %536 = vector.shape_cast %535 : vector<1x8x128xf32> to vector<8x128xf32>
    %537 = vector.shape_cast %532 : vector<8x128xf32> to vector<1x8x128xf32>
    tpu.vector_store %arg7[%c5_284, %c0_285, %c0_286], %537 {strides = array<i32>} : memref<8x8x128xf32, #tpu.memory_space<vmem>>, vector<1x8x128xf32>,
    %c6_287 = arith.constant 6 : index
    %c0_288 = arith.constant 0 : index
    %c0_289 = arith.constant 0 : index
    %538 = vector.load %arg8[%c6_287, %c0_288, %c0_289] : memref<8x8x512xf32, #tpu.memory_space<vmem>>, vector<1x8x512xf32>
    %539 = vector.shape_cast %538 : vector<1x8x512xf32> to vector<8x512xf32>
    %c0_290 = arith.constant 0 : index
    %c0_291 = arith.constant 0 : index
    %540 = vector.load %arg5[%c0_290, %c0_291] : memref<8x128xf32, #tpu.memory_space<vmem>>, vector<8x128xf32>
    %cst_292 = arith.constant dense<0.000000e+00> : vector<8x512xf32>
    %541 = tpu.matmul %540, %321, %cst_292 {dimension_numbers = #tpu.dot_dimension_numbers<[1], [0], [0], [1], [0, 0, 1, 1], [], []>} : vector<8x128xf32>, vector<128x512xf32>, vector<8x512xf32> -> vector<8x512xf32>
    %542 = arith.addf %539, %541 : vector<8x512xf32>
    %543 = vector.extract_strided_slice %542 {offsets = [0, 0], sizes = [8, 128], strides = [1, 1]} : vector<8x512xf32> to vector<8x128xf32>
    %544 = arith.negf %543 : vector<8x128xf32>
    %545 = math.exp %544 : vector<8x128xf32>
    %cst_293 = arith.constant 1.000000e+00 : f32
    %546 = vector.broadcast %cst_293 : f32 to vector<8x128xf32>
    %547 = arith.addf %546, %545 : vector<8x128xf32>
    %548 = arith.divf %546, %547 : vector<8x128xf32>
    %549 = vector.extract_strided_slice %542 {offsets = [0, 128], sizes = [8, 128], strides = [1, 1]} : vector<8x512xf32> to vector<8x128xf32>
    %550 = arith.negf %549 : vector<8x128xf32>
    %551 = math.exp %550 : vector<8x128xf32>
    %cst_294 = arith.constant 1.000000e+00 : f32
    %552 = vector.broadcast %cst_294 : f32 to vector<8x128xf32>
    %553 = arith.addf %552, %551 : vector<8x128xf32>
    %554 = arith.divf %552, %553 : vector<8x128xf32>
    %555 = vector.extract_strided_slice %542 {offsets = [0, 256], sizes = [8, 128], strides = [1, 1]} : vector<8x512xf32> to vector<8x128xf32>
    %556 = math.tanh %555 : vector<8x128xf32>
    %557 = vector.extract_strided_slice %542 {offsets = [0, 384], sizes = [8, 128], strides = [1, 1]} : vector<8x512xf32> to vector<8x128xf32>
    %558 = arith.negf %557 : vector<8x128xf32>
    %559 = math.exp %558 : vector<8x128xf32>
    %cst_295 = arith.constant 1.000000e+00 : f32
    %560 = vector.broadcast %cst_295 : f32 to vector<8x128xf32>
    %561 = arith.addf %560, %559 : vector<8x128xf32>
    %562 = arith.divf %560, %561 : vector<8x128xf32>
    %c0_296 = arith.constant 0 : index
    %c0_297 = arith.constant 0 : index
    %563 = vector.load %arg6[%c0_296, %c0_297] : memref<8x128xf32, #tpu.memory_space<vmem>>, vector<8x128xf32>
    %564 = arith.mulf %554, %563 : vector<8x128xf32>
    %565 = arith.mulf %548, %556 : vector<8x128xf32>
    %566 = arith.addf %564, %565 : vector<8x128xf32>
    %567 = math.tanh %566 : vector<8x128xf32>
    %568 = arith.mulf %562, %567 : vector<8x128xf32>
    %c0_298 = arith.constant 0 : index
    %c0_299 = arith.constant 0 : index
    %569 = vector.load %arg6[%c0_298, %c0_299] : memref<8x128xf32, #tpu.memory_space<vmem>>, vector<8x128xf32>
    tpu.vector_store %arg6[%c0_298, %c0_299], %566 {strides = array<i32>} : memref<8x128xf32, #tpu.memory_space<vmem>>, vector<8x128xf32>,
    %c0_300 = arith.constant 0 : index
    %c0_301 = arith.constant 0 : index
    %570 = vector.load %arg5[%c0_300, %c0_301] : memref<8x128xf32, #tpu.memory_space<vmem>>, vector<8x128xf32>
    tpu.vector_store %arg5[%c0_300, %c0_301], %568 {strides = array<i32>} : memref<8x128xf32, #tpu.memory_space<vmem>>, vector<8x128xf32>,
    %c6_302 = arith.constant 6 : index
    %c0_303 = arith.constant 0 : index
    %c0_304 = arith.constant 0 : index
    %571 = vector.load %arg7[%c6_302, %c0_303, %c0_304] : memref<8x8x128xf32, #tpu.memory_space<vmem>>, vector<1x8x128xf32>
    %572 = vector.shape_cast %571 : vector<1x8x128xf32> to vector<8x128xf32>
    %573 = vector.shape_cast %568 : vector<8x128xf32> to vector<1x8x128xf32>
    tpu.vector_store %arg7[%c6_302, %c0_303, %c0_304], %573 {strides = array<i32>} : memref<8x8x128xf32, #tpu.memory_space<vmem>>, vector<1x8x128xf32>,
    %c7_305 = arith.constant 7 : index
    %c0_306 = arith.constant 0 : index
    %c0_307 = arith.constant 0 : index
    %574 = vector.load %arg8[%c7_305, %c0_306, %c0_307] : memref<8x8x512xf32, #tpu.memory_space<vmem>>, vector<1x8x512xf32>
    %575 = vector.shape_cast %574 : vector<1x8x512xf32> to vector<8x512xf32>
    %c0_308 = arith.constant 0 : index
    %c0_309 = arith.constant 0 : index
    %576 = vector.load %arg5[%c0_308, %c0_309] : memref<8x128xf32, #tpu.memory_space<vmem>>, vector<8x128xf32>
    %cst_310 = arith.constant dense<0.000000e+00> : vector<8x512xf32>
    %577 = tpu.matmul %576, %321, %cst_310 {dimension_numbers = #tpu.dot_dimension_numbers<[1], [0], [0], [1], [0, 0, 1, 1], [], []>} : vector<8x128xf32>, vector<128x512xf32>, vector<8x512xf32> -> vector<8x512xf32>
    %578 = arith.addf %575, %577 : vector<8x512xf32>
    %579 = vector.extract_strided_slice %578 {offsets = [0, 0], sizes = [8, 128], strides = [1, 1]} : vector<8x512xf32> to vector<8x128xf32>
    %580 = arith.negf %579 : vector<8x128xf32>
    %581 = math.exp %580 : vector<8x128xf32>
    %cst_311 = arith.constant 1.000000e+00 : f32
    %582 = vector.broadcast %cst_311 : f32 to vector<8x128xf32>
    %583 = arith.addf %582, %581 : vector<8x128xf32>
    %584 = arith.divf %582, %583 : vector<8x128xf32>
    %585 = vector.extract_strided_slice %578 {offsets = [0, 128], sizes = [8, 128], strides = [1, 1]} : vector<8x512xf32> to vector<8x128xf32>
    %586 = arith.negf %585 : vector<8x128xf32>
    %587 = math.exp %586 : vector<8x128xf32>
    %cst_312 = arith.constant 1.000000e+00 : f32
    %588 = vector.broadcast %cst_312 : f32 to vector<8x128xf32>
    %589 = arith.addf %588, %587 : vector<8x128xf32>
    %590 = arith.divf %588, %589 : vector<8x128xf32>
    %591 = vector.extract_strided_slice %578 {offsets = [0, 256], sizes = [8, 128], strides = [1, 1]} : vector<8x512xf32> to vector<8x128xf32>
    %592 = math.tanh %591 : vector<8x128xf32>
    %593 = vector.extract_strided_slice %578 {offsets = [0, 384], sizes = [8, 128], strides = [1, 1]} : vector<8x512xf32> to vector<8x128xf32>
    %594 = arith.negf %593 : vector<8x128xf32>
    %595 = math.exp %594 : vector<8x128xf32>
    %cst_313 = arith.constant 1.000000e+00 : f32
    %596 = vector.broadcast %cst_313 : f32 to vector<8x128xf32>
    %597 = arith.addf %596, %595 : vector<8x128xf32>
    %598 = arith.divf %596, %597 : vector<8x128xf32>
    %c0_314 = arith.constant 0 : index
    %c0_315 = arith.constant 0 : index
    %599 = vector.load %arg6[%c0_314, %c0_315] : memref<8x128xf32, #tpu.memory_space<vmem>>, vector<8x128xf32>
    %600 = arith.mulf %590, %599 : vector<8x128xf32>
    %601 = arith.mulf %584, %592 : vector<8x128xf32>
    %602 = arith.addf %600, %601 : vector<8x128xf32>
    %603 = math.tanh %602 : vector<8x128xf32>
    %604 = arith.mulf %598, %603 : vector<8x128xf32>
    %c0_316 = arith.constant 0 : index
    %c0_317 = arith.constant 0 : index
    %605 = vector.load %arg6[%c0_316, %c0_317] : memref<8x128xf32, #tpu.memory_space<vmem>>, vector<8x128xf32>
    tpu.vector_store %arg6[%c0_316, %c0_317], %602 {strides = array<i32>} : memref<8x128xf32, #tpu.memory_space<vmem>>, vector<8x128xf32>,
    %c0_318 = arith.constant 0 : index
    %c0_319 = arith.constant 0 : index
    %606 = vector.load %arg5[%c0_318, %c0_319] : memref<8x128xf32, #tpu.memory_space<vmem>>, vector<8x128xf32>
    tpu.vector_store %arg5[%c0_318, %c0_319], %604 {strides = array<i32>} : memref<8x128xf32, #tpu.memory_space<vmem>>, vector<8x128xf32>,
    %c7_320 = arith.constant 7 : index
    %c0_321 = arith.constant 0 : index
    %c0_322 = arith.constant 0 : index
    %607 = vector.load %arg7[%c7_320, %c0_321, %c0_322] : memref<8x8x128xf32, #tpu.memory_space<vmem>>, vector<1x8x128xf32>
    %608 = vector.shape_cast %607 : vector<1x8x128xf32> to vector<8x128xf32>
    %609 = vector.shape_cast %604 : vector<8x128xf32> to vector<1x8x128xf32>
    tpu.vector_store %arg7[%c7_320, %c0_321, %c0_322], %609 {strides = array<i32>} : memref<8x8x128xf32, #tpu.memory_space<vmem>>, vector<1x8x128xf32>,
    %c0_323 = arith.constant 0 : index
    %c0_324 = arith.constant 0 : index
    %610 = vector.load %arg5[%c0_323, %c0_324] : memref<8x128xf32, #tpu.memory_space<vmem>>, vector<8x128xf32>
    %c2_325 = arith.constant 2 : index
    %c0_326 = arith.constant 0 : index
    %c0_327 = arith.constant 0 : index
    %611 = vector.load %arg1[%c2_325, %c0_326, %c0_327] : memref<4x128x512xf32, #tpu.memory_space<vmem>>, vector<1x128x512xf32>
    %612 = vector.shape_cast %611 : vector<1x128x512xf32> to vector<128x512xf32>
    %cst_328 = arith.constant dense<0.000000e+00> : vector<8x512xf32>
    %613 = tpu.matmul %610, %612, %cst_328 {dimension_numbers = #tpu.dot_dimension_numbers<[1], [0], [0], [1], [0, 0, 1, 1], [], []>} : vector<8x128xf32>, vector<128x512xf32>, vector<8x512xf32> -> vector<8x512xf32>
    %c2_329 = arith.constant 2 : index
    %c0_330 = arith.constant 0 : index
    %c0_331 = arith.constant 0 : index
    %614 = vector.load %arg3[%c2_329, %c0_330, %c0_331] : memref<4x1x512xf32, #tpu.memory_space<vmem>>, vector<1x1x512xf32>
    %615 = vector.shape_cast %614 : vector<1x1x512xf32> to vector<1x512xf32>
    %616 = vector.broadcast %615 : vector<1x512xf32> to vector<8x512xf32>
    %617 = arith.addf %613, %616 : vector<8x512xf32>
    %cst_332 = arith.constant 0.000000e+00 : f32
    %618 = vector.broadcast %cst_332 : f32 to vector<8x128xf32>
    %c0_333 = arith.constant 0 : index
    %c0_334 = arith.constant 0 : index
    %619 = vector.load %arg5[%c0_333, %c0_334] : memref<8x128xf32, #tpu.memory_space<vmem>>, vector<8x128xf32>
    tpu.vector_store %arg5[%c0_333, %c0_334], %618 {strides = array<i32>} : memref<8x128xf32, #tpu.memory_space<vmem>>, vector<8x128xf32>,
    %cst_335 = arith.constant 0.000000e+00 : f32
    %620 = vector.broadcast %cst_335 : f32 to vector<8x128xf32>
    %c0_336 = arith.constant 0 : index
    %c0_337 = arith.constant 0 : index
    %621 = vector.load %arg6[%c0_336, %c0_337] : memref<8x128xf32, #tpu.memory_space<vmem>>, vector<8x128xf32>
    tpu.vector_store %arg6[%c0_336, %c0_337], %620 {strides = array<i32>} : memref<8x128xf32, #tpu.memory_space<vmem>>, vector<8x128xf32>,
    %c2_338 = arith.constant 2 : index
    %c0_339 = arith.constant 0 : index
    %c0_340 = arith.constant 0 : index
    %622 = vector.load %arg2[%c2_338, %c0_339, %c0_340] : memref<4x128x512xf32, #tpu.memory_space<vmem>>, vector<1x128x512xf32>
    %623 = vector.shape_cast %622 : vector<1x128x512xf32> to vector<128x512xf32>
    %c0_341 = arith.constant 0 : index
    %c0_342 = arith.constant 0 : index
    %624 = vector.load %arg5[%c0_341, %c0_342] : memref<8x128xf32, #tpu.memory_space<vmem>>, vector<8x128xf32>
    %cst_343 = arith.constant dense<0.000000e+00> : vector<8x512xf32>
    %625 = tpu.matmul %624, %623, %cst_343 {dimension_numbers = #tpu.dot_dimension_numbers<[1], [0], [0], [1], [0, 0, 1, 1], [], []>} : vector<8x128xf32>, vector<128x512xf32>, vector<8x512xf32> -> vector<8x512xf32>
    %626 = arith.addf %617, %625 : vector<8x512xf32>
    %627 = vector.extract_strided_slice %626 {offsets = [0, 0], sizes = [8, 128], strides = [1, 1]} : vector<8x512xf32> to vector<8x128xf32>
    %628 = arith.negf %627 : vector<8x128xf32>
    %629 = math.exp %628 : vector<8x128xf32>
    %cst_344 = arith.constant 1.000000e+00 : f32
    %630 = vector.broadcast %cst_344 : f32 to vector<8x128xf32>
    %631 = arith.addf %630, %629 : vector<8x128xf32>
    %632 = arith.divf %630, %631 : vector<8x128xf32>
    %633 = vector.extract_strided_slice %626 {offsets = [0, 128], sizes = [8, 128], strides = [1, 1]} : vector<8x512xf32> to vector<8x128xf32>
    %634 = arith.negf %633 : vector<8x128xf32>
    %635 = math.exp %634 : vector<8x128xf32>
    %cst_345 = arith.constant 1.000000e+00 : f32
    %636 = vector.broadcast %cst_345 : f32 to vector<8x128xf32>
    %637 = arith.addf %636, %635 : vector<8x128xf32>
    %638 = arith.divf %636, %637 : vector<8x128xf32>
    %639 = vector.extract_strided_slice %626 {offsets = [0, 256], sizes = [8, 128], strides = [1, 1]} : vector<8x512xf32> to vector<8x128xf32>
    %640 = math.tanh %639 : vector<8x128xf32>
    %641 = vector.extract_strided_slice %626 {offsets = [0, 384], sizes = [8, 128], strides = [1, 1]} : vector<8x512xf32> to vector<8x128xf32>
    %642 = arith.negf %641 : vector<8x128xf32>
    %643 = math.exp %642 : vector<8x128xf32>
    %cst_346 = arith.constant 1.000000e+00 : f32
    %644 = vector.broadcast %cst_346 : f32 to vector<8x128xf32>
    %645 = arith.addf %644, %643 : vector<8x128xf32>
    %646 = arith.divf %644, %645 : vector<8x128xf32>
    %c0_347 = arith.constant 0 : index
    %c0_348 = arith.constant 0 : index
    %647 = vector.load %arg6[%c0_347, %c0_348] : memref<8x128xf32, #tpu.memory_space<vmem>>, vector<8x128xf32>
    %648 = arith.mulf %638, %647 : vector<8x128xf32>
    %649 = arith.mulf %632, %640 : vector<8x128xf32>
    %650 = arith.addf %648, %649 : vector<8x128xf32>
    %651 = math.tanh %650 : vector<8x128xf32>
    %652 = arith.mulf %646, %651 : vector<8x128xf32>
    %c0_349 = arith.constant 0 : index
    %c0_350 = arith.constant 0 : index
    %653 = vector.load %arg6[%c0_349, %c0_350] : memref<8x128xf32, #tpu.memory_space<vmem>>, vector<8x128xf32>
    tpu.vector_store %arg6[%c0_349, %c0_350], %650 {strides = array<i32>} : memref<8x128xf32, #tpu.memory_space<vmem>>, vector<8x128xf32>,
    %c0_351 = arith.constant 0 : index
    %c0_352 = arith.constant 0 : index
    %654 = vector.load %arg5[%c0_351, %c0_352] : memref<8x128xf32, #tpu.memory_space<vmem>>, vector<8x128xf32>
    tpu.vector_store %arg5[%c0_351, %c0_352], %652 {strides = array<i32>} : memref<8x128xf32, #tpu.memory_space<vmem>>, vector<8x128xf32>,
    %c0_353 = arith.constant 0 : index
    %c0_354 = arith.constant 0 : index
    %c0_355 = arith.constant 0 : index
    %655 = vector.load %arg7[%c0_353, %c0_354, %c0_355] : memref<8x8x128xf32, #tpu.memory_space<vmem>>, vector<1x8x128xf32>
    %656 = vector.shape_cast %655 : vector<1x8x128xf32> to vector<8x128xf32>
    %657 = vector.shape_cast %652 : vector<8x128xf32> to vector<1x8x128xf32>
    tpu.vector_store %arg7[%c0_353, %c0_354, %c0_355], %657 {strides = array<i32>} : memref<8x8x128xf32, #tpu.memory_space<vmem>>, vector<1x8x128xf32>,
    %c0_356 = arith.constant 0 : index
    %c0_357 = arith.constant 0 : index
    %658 = vector.load %arg5[%c0_356, %c0_357] : memref<8x128xf32, #tpu.memory_space<vmem>>, vector<8x128xf32>
    %cst_358 = arith.constant dense<0.000000e+00> : vector<8x512xf32>
    %659 = tpu.matmul %658, %623, %cst_358 {dimension_numbers = #tpu.dot_dimension_numbers<[1], [0], [0], [1], [0, 0, 1, 1], [], []>} : vector<8x128xf32>, vector<128x512xf32>, vector<8x512xf32> -> vector<8x512xf32>
    %660 = arith.addf %617, %659 : vector<8x512xf32>
    %661 = vector.extract_strided_slice %660 {offsets = [0, 0], sizes = [8, 128], strides = [1, 1]} : vector<8x512xf32> to vector<8x128xf32>
    %662 = arith.negf %661 : vector<8x128xf32>
    %663 = math.exp %662 : vector<8x128xf32>
    %cst_359 = arith.constant 1.000000e+00 : f32
    %664 = vector.broadcast %cst_359 : f32 to vector<8x128xf32>
    %665 = arith.addf %664, %663 : vector<8x128xf32>
    %666 = arith.divf %664, %665 : vector<8x128xf32>
    %667 = vector.extract_strided_slice %660 {offsets = [0, 128], sizes = [8, 128], strides = [1, 1]} : vector<8x512xf32> to vector<8x128xf32>
    %668 = arith.negf %667 : vector<8x128xf32>
    %669 = math.exp %668 : vector<8x128xf32>
    %cst_360 = arith.constant 1.000000e+00 : f32
    %670 = vector.broadcast %cst_360 : f32 to vector<8x128xf32>
    %671 = arith.addf %670, %669 : vector<8x128xf32>
    %672 = arith.divf %670, %671 : vector<8x128xf32>
    %673 = vector.extract_strided_slice %660 {offsets = [0, 256], sizes = [8, 128], strides = [1, 1]} : vector<8x512xf32> to vector<8x128xf32>
    %674 = math.tanh %673 : vector<8x128xf32>
    %675 = vector.extract_strided_slice %660 {offsets = [0, 384], sizes = [8, 128], strides = [1, 1]} : vector<8x512xf32> to vector<8x128xf32>
    %676 = arith.negf %675 : vector<8x128xf32>
    %677 = math.exp %676 : vector<8x128xf32>
    %cst_361 = arith.constant 1.000000e+00 : f32
    %678 = vector.broadcast %cst_361 : f32 to vector<8x128xf32>
    %679 = arith.addf %678, %677 : vector<8x128xf32>
    %680 = arith.divf %678, %679 : vector<8x128xf32>
    %c0_362 = arith.constant 0 : index
    %c0_363 = arith.constant 0 : index
    %681 = vector.load %arg6[%c0_362, %c0_363] : memref<8x128xf32, #tpu.memory_space<vmem>>, vector<8x128xf32>
    %682 = arith.mulf %672, %681 : vector<8x128xf32>
    %683 = arith.mulf %666, %674 : vector<8x128xf32>
    %684 = arith.addf %682, %683 : vector<8x128xf32>
    %685 = math.tanh %684 : vector<8x128xf32>
    %686 = arith.mulf %680, %685 : vector<8x128xf32>
    %c0_364 = arith.constant 0 : index
    %c0_365 = arith.constant 0 : index
    %687 = vector.load %arg6[%c0_364, %c0_365] : memref<8x128xf32, #tpu.memory_space<vmem>>, vector<8x128xf32>
    tpu.vector_store %arg6[%c0_364, %c0_365], %684 {strides = array<i32>} : memref<8x128xf32, #tpu.memory_space<vmem>>, vector<8x128xf32>,
    %c0_366 = arith.constant 0 : index
    %c0_367 = arith.constant 0 : index
    %688 = vector.load %arg5[%c0_366, %c0_367] : memref<8x128xf32, #tpu.memory_space<vmem>>, vector<8x128xf32>
    tpu.vector_store %arg5[%c0_366, %c0_367], %686 {strides = array<i32>} : memref<8x128xf32, #tpu.memory_space<vmem>>, vector<8x128xf32>,
    %c1_368 = arith.constant 1 : index
    %c0_369 = arith.constant 0 : index
    %c0_370 = arith.constant 0 : index
    %689 = vector.load %arg7[%c1_368, %c0_369, %c0_370] : memref<8x8x128xf32, #tpu.memory_space<vmem>>, vector<1x8x128xf32>
    %690 = vector.shape_cast %689 : vector<1x8x128xf32> to vector<8x128xf32>
    %691 = vector.shape_cast %686 : vector<8x128xf32> to vector<1x8x128xf32>
    tpu.vector_store %arg7[%c1_368, %c0_369, %c0_370], %691 {strides = array<i32>} : memref<8x8x128xf32, #tpu.memory_space<vmem>>, vector<1x8x128xf32>,
    %c0_371 = arith.constant 0 : index
    %c0_372 = arith.constant 0 : index
    %692 = vector.load %arg5[%c0_371, %c0_372] : memref<8x128xf32, #tpu.memory_space<vmem>>, vector<8x128xf32>
    %cst_373 = arith.constant dense<0.000000e+00> : vector<8x512xf32>
    %693 = tpu.matmul %692, %623, %cst_373 {dimension_numbers = #tpu.dot_dimension_numbers<[1], [0], [0], [1], [0, 0, 1, 1], [], []>} : vector<8x128xf32>, vector<128x512xf32>, vector<8x512xf32> -> vector<8x512xf32>
    %694 = arith.addf %617, %693 : vector<8x512xf32>
    %695 = vector.extract_strided_slice %694 {offsets = [0, 0], sizes = [8, 128], strides = [1, 1]} : vector<8x512xf32> to vector<8x128xf32>
    %696 = arith.negf %695 : vector<8x128xf32>
    %697 = math.exp %696 : vector<8x128xf32>
    %cst_374 = arith.constant 1.000000e+00 : f32
    %698 = vector.broadcast %cst_374 : f32 to vector<8x128xf32>
    %699 = arith.addf %698, %697 : vector<8x128xf32>
    %700 = arith.divf %698, %699 : vector<8x128xf32>
    %701 = vector.extract_strided_slice %694 {offsets = [0, 128], sizes = [8, 128], strides = [1, 1]} : vector<8x512xf32> to vector<8x128xf32>
    %702 = arith.negf %701 : vector<8x128xf32>
    %703 = math.exp %702 : vector<8x128xf32>
    %cst_375 = arith.constant 1.000000e+00 : f32
    %704 = vector.broadcast %cst_375 : f32 to vector<8x128xf32>
    %705 = arith.addf %704, %703 : vector<8x128xf32>
    %706 = arith.divf %704, %705 : vector<8x128xf32>
    %707 = vector.extract_strided_slice %694 {offsets = [0, 256], sizes = [8, 128], strides = [1, 1]} : vector<8x512xf32> to vector<8x128xf32>
    %708 = math.tanh %707 : vector<8x128xf32>
    %709 = vector.extract_strided_slice %694 {offsets = [0, 384], sizes = [8, 128], strides = [1, 1]} : vector<8x512xf32> to vector<8x128xf32>
    %710 = arith.negf %709 : vector<8x128xf32>
    %711 = math.exp %710 : vector<8x128xf32>
    %cst_376 = arith.constant 1.000000e+00 : f32
    %712 = vector.broadcast %cst_376 : f32 to vector<8x128xf32>
    %713 = arith.addf %712, %711 : vector<8x128xf32>
    %714 = arith.divf %712, %713 : vector<8x128xf32>
    %c0_377 = arith.constant 0 : index
    %c0_378 = arith.constant 0 : index
    %715 = vector.load %arg6[%c0_377, %c0_378] : memref<8x128xf32, #tpu.memory_space<vmem>>, vector<8x128xf32>
    %716 = arith.mulf %706, %715 : vector<8x128xf32>
    %717 = arith.mulf %700, %708 : vector<8x128xf32>
    %718 = arith.addf %716, %717 : vector<8x128xf32>
    %719 = math.tanh %718 : vector<8x128xf32>
    %720 = arith.mulf %714, %719 : vector<8x128xf32>
    %c0_379 = arith.constant 0 : index
    %c0_380 = arith.constant 0 : index
    %721 = vector.load %arg6[%c0_379, %c0_380] : memref<8x128xf32, #tpu.memory_space<vmem>>, vector<8x128xf32>
    tpu.vector_store %arg6[%c0_379, %c0_380], %718 {strides = array<i32>} : memref<8x128xf32, #tpu.memory_space<vmem>>, vector<8x128xf32>,
    %c0_381 = arith.constant 0 : index
    %c0_382 = arith.constant 0 : index
    %722 = vector.load %arg5[%c0_381, %c0_382] : memref<8x128xf32, #tpu.memory_space<vmem>>, vector<8x128xf32>
    tpu.vector_store %arg5[%c0_381, %c0_382], %720 {strides = array<i32>} : memref<8x128xf32, #tpu.memory_space<vmem>>, vector<8x128xf32>,
    %c2_383 = arith.constant 2 : index
    %c0_384 = arith.constant 0 : index
    %c0_385 = arith.constant 0 : index
    %723 = vector.load %arg7[%c2_383, %c0_384, %c0_385] : memref<8x8x128xf32, #tpu.memory_space<vmem>>, vector<1x8x128xf32>
    %724 = vector.shape_cast %723 : vector<1x8x128xf32> to vector<8x128xf32>
    %725 = vector.shape_cast %720 : vector<8x128xf32> to vector<1x8x128xf32>
    tpu.vector_store %arg7[%c2_383, %c0_384, %c0_385], %725 {strides = array<i32>} : memref<8x8x128xf32, #tpu.memory_space<vmem>>, vector<1x8x128xf32>,
    %c0_386 = arith.constant 0 : index
    %c0_387 = arith.constant 0 : index
    %726 = vector.load %arg5[%c0_386, %c0_387] : memref<8x128xf32, #tpu.memory_space<vmem>>, vector<8x128xf32>
    %cst_388 = arith.constant dense<0.000000e+00> : vector<8x512xf32>
    %727 = tpu.matmul %726, %623, %cst_388 {dimension_numbers = #tpu.dot_dimension_numbers<[1], [0], [0], [1], [0, 0, 1, 1], [], []>} : vector<8x128xf32>, vector<128x512xf32>, vector<8x512xf32> -> vector<8x512xf32>
    %728 = arith.addf %617, %727 : vector<8x512xf32>
    %729 = vector.extract_strided_slice %728 {offsets = [0, 0], sizes = [8, 128], strides = [1, 1]} : vector<8x512xf32> to vector<8x128xf32>
    %730 = arith.negf %729 : vector<8x128xf32>
    %731 = math.exp %730 : vector<8x128xf32>
    %cst_389 = arith.constant 1.000000e+00 : f32
    %732 = vector.broadcast %cst_389 : f32 to vector<8x128xf32>
    %733 = arith.addf %732, %731 : vector<8x128xf32>
    %734 = arith.divf %732, %733 : vector<8x128xf32>
    %735 = vector.extract_strided_slice %728 {offsets = [0, 128], sizes = [8, 128], strides = [1, 1]} : vector<8x512xf32> to vector<8x128xf32>
    %736 = arith.negf %735 : vector<8x128xf32>
    %737 = math.exp %736 : vector<8x128xf32>
    %cst_390 = arith.constant 1.000000e+00 : f32
    %738 = vector.broadcast %cst_390 : f32 to vector<8x128xf32>
    %739 = arith.addf %738, %737 : vector<8x128xf32>
    %740 = arith.divf %738, %739 : vector<8x128xf32>
    %741 = vector.extract_strided_slice %728 {offsets = [0, 256], sizes = [8, 128], strides = [1, 1]} : vector<8x512xf32> to vector<8x128xf32>
    %742 = math.tanh %741 : vector<8x128xf32>
    %743 = vector.extract_strided_slice %728 {offsets = [0, 384], sizes = [8, 128], strides = [1, 1]} : vector<8x512xf32> to vector<8x128xf32>
    %744 = arith.negf %743 : vector<8x128xf32>
    %745 = math.exp %744 : vector<8x128xf32>
    %cst_391 = arith.constant 1.000000e+00 : f32
    %746 = vector.broadcast %cst_391 : f32 to vector<8x128xf32>
    %747 = arith.addf %746, %745 : vector<8x128xf32>
    %748 = arith.divf %746, %747 : vector<8x128xf32>
    %c0_392 = arith.constant 0 : index
    %c0_393 = arith.constant 0 : index
    %749 = vector.load %arg6[%c0_392, %c0_393] : memref<8x128xf32, #tpu.memory_space<vmem>>, vector<8x128xf32>
    %750 = arith.mulf %740, %749 : vector<8x128xf32>
    %751 = arith.mulf %734, %742 : vector<8x128xf32>
    %752 = arith.addf %750, %751 : vector<8x128xf32>
    %753 = math.tanh %752 : vector<8x128xf32>
    %754 = arith.mulf %748, %753 : vector<8x128xf32>
    %c0_394 = arith.constant 0 : index
    %c0_395 = arith.constant 0 : index
    %755 = vector.load %arg6[%c0_394, %c0_395] : memref<8x128xf32, #tpu.memory_space<vmem>>, vector<8x128xf32>
    tpu.vector_store %arg6[%c0_394, %c0_395], %752 {strides = array<i32>} : memref<8x128xf32, #tpu.memory_space<vmem>>, vector<8x128xf32>,
    %c0_396 = arith.constant 0 : index
    %c0_397 = arith.constant 0 : index
    %756 = vector.load %arg5[%c0_396, %c0_397] : memref<8x128xf32, #tpu.memory_space<vmem>>, vector<8x128xf32>
    tpu.vector_store %arg5[%c0_396, %c0_397], %754 {strides = array<i32>} : memref<8x128xf32, #tpu.memory_space<vmem>>, vector<8x128xf32>,
    %c3_398 = arith.constant 3 : index
    %c0_399 = arith.constant 0 : index
    %c0_400 = arith.constant 0 : index
    %757 = vector.load %arg7[%c3_398, %c0_399, %c0_400] : memref<8x8x128xf32, #tpu.memory_space<vmem>>, vector<1x8x128xf32>
    %758 = vector.shape_cast %757 : vector<1x8x128xf32> to vector<8x128xf32>
    %759 = vector.shape_cast %754 : vector<8x128xf32> to vector<1x8x128xf32>
    tpu.vector_store %arg7[%c3_398, %c0_399, %c0_400], %759 {strides = array<i32>} : memref<8x8x128xf32, #tpu.memory_space<vmem>>, vector<1x8x128xf32>,
    %c0_401 = arith.constant 0 : index
    %c0_402 = arith.constant 0 : index
    %760 = vector.load %arg5[%c0_401, %c0_402] : memref<8x128xf32, #tpu.memory_space<vmem>>, vector<8x128xf32>
    %cst_403 = arith.constant dense<0.000000e+00> : vector<8x512xf32>
    %761 = tpu.matmul %760, %623, %cst_403 {dimension_numbers = #tpu.dot_dimension_numbers<[1], [0], [0], [1], [0, 0, 1, 1], [], []>} : vector<8x128xf32>, vector<128x512xf32>, vector<8x512xf32> -> vector<8x512xf32>
    %762 = arith.addf %617, %761 : vector<8x512xf32>
    %763 = vector.extract_strided_slice %762 {offsets = [0, 0], sizes = [8, 128], strides = [1, 1]} : vector<8x512xf32> to vector<8x128xf32>
    %764 = arith.negf %763 : vector<8x128xf32>
    %765 = math.exp %764 : vector<8x128xf32>
    %cst_404 = arith.constant 1.000000e+00 : f32
    %766 = vector.broadcast %cst_404 : f32 to vector<8x128xf32>
    %767 = arith.addf %766, %765 : vector<8x128xf32>
    %768 = arith.divf %766, %767 : vector<8x128xf32>
    %769 = vector.extract_strided_slice %762 {offsets = [0, 128], sizes = [8, 128], strides = [1, 1]} : vector<8x512xf32> to vector<8x128xf32>
    %770 = arith.negf %769 : vector<8x128xf32>
    %771 = math.exp %770 : vector<8x128xf32>
    %cst_405 = arith.constant 1.000000e+00 : f32
    %772 = vector.broadcast %cst_405 : f32 to vector<8x128xf32>
    %773 = arith.addf %772, %771 : vector<8x128xf32>
    %774 = arith.divf %772, %773 : vector<8x128xf32>
    %775 = vector.extract_strided_slice %762 {offsets = [0, 256], sizes = [8, 128], strides = [1, 1]} : vector<8x512xf32> to vector<8x128xf32>
    %776 = math.tanh %775 : vector<8x128xf32>
    %777 = vector.extract_strided_slice %762 {offsets = [0, 384], sizes = [8, 128], strides = [1, 1]} : vector<8x512xf32> to vector<8x128xf32>
    %778 = arith.negf %777 : vector<8x128xf32>
    %779 = math.exp %778 : vector<8x128xf32>
    %cst_406 = arith.constant 1.000000e+00 : f32
    %780 = vector.broadcast %cst_406 : f32 to vector<8x128xf32>
    %781 = arith.addf %780, %779 : vector<8x128xf32>
    %782 = arith.divf %780, %781 : vector<8x128xf32>
    %c0_407 = arith.constant 0 : index
    %c0_408 = arith.constant 0 : index
    %783 = vector.load %arg6[%c0_407, %c0_408] : memref<8x128xf32, #tpu.memory_space<vmem>>, vector<8x128xf32>
    %784 = arith.mulf %774, %783 : vector<8x128xf32>
    %785 = arith.mulf %768, %776 : vector<8x128xf32>
    %786 = arith.addf %784, %785 : vector<8x128xf32>
    %787 = math.tanh %786 : vector<8x128xf32>
    %788 = arith.mulf %782, %787 : vector<8x128xf32>
    %c0_409 = arith.constant 0 : index
    %c0_410 = arith.constant 0 : index
    %789 = vector.load %arg6[%c0_409, %c0_410] : memref<8x128xf32, #tpu.memory_space<vmem>>, vector<8x128xf32>
    tpu.vector_store %arg6[%c0_409, %c0_410], %786 {strides = array<i32>} : memref<8x128xf32, #tpu.memory_space<vmem>>, vector<8x128xf32>,
    %c0_411 = arith.constant 0 : index
    %c0_412 = arith.constant 0 : index
    %790 = vector.load %arg5[%c0_411, %c0_412] : memref<8x128xf32, #tpu.memory_space<vmem>>, vector<8x128xf32>
    tpu.vector_store %arg5[%c0_411, %c0_412], %788 {strides = array<i32>} : memref<8x128xf32, #tpu.memory_space<vmem>>, vector<8x128xf32>,
    %c4_413 = arith.constant 4 : index
    %c0_414 = arith.constant 0 : index
    %c0_415 = arith.constant 0 : index
    %791 = vector.load %arg7[%c4_413, %c0_414, %c0_415] : memref<8x8x128xf32, #tpu.memory_space<vmem>>, vector<1x8x128xf32>
    %792 = vector.shape_cast %791 : vector<1x8x128xf32> to vector<8x128xf32>
    %793 = vector.shape_cast %788 : vector<8x128xf32> to vector<1x8x128xf32>
    tpu.vector_store %arg7[%c4_413, %c0_414, %c0_415], %793 {strides = array<i32>} : memref<8x8x128xf32, #tpu.memory_space<vmem>>, vector<1x8x128xf32>,
    %c0_416 = arith.constant 0 : index
    %c0_417 = arith.constant 0 : index
    %794 = vector.load %arg5[%c0_416, %c0_417] : memref<8x128xf32, #tpu.memory_space<vmem>>, vector<8x128xf32>
    %cst_418 = arith.constant dense<0.000000e+00> : vector<8x512xf32>
    %795 = tpu.matmul %794, %623, %cst_418 {dimension_numbers = #tpu.dot_dimension_numbers<[1], [0], [0], [1], [0, 0, 1, 1], [], []>} : vector<8x128xf32>, vector<128x512xf32>, vector<8x512xf32> -> vector<8x512xf32>
    %796 = arith.addf %617, %795 : vector<8x512xf32>
    %797 = vector.extract_strided_slice %796 {offsets = [0, 0], sizes = [8, 128], strides = [1, 1]} : vector<8x512xf32> to vector<8x128xf32>
    %798 = arith.negf %797 : vector<8x128xf32>
    %799 = math.exp %798 : vector<8x128xf32>
    %cst_419 = arith.constant 1.000000e+00 : f32
    %800 = vector.broadcast %cst_419 : f32 to vector<8x128xf32>
    %801 = arith.addf %800, %799 : vector<8x128xf32>
    %802 = arith.divf %800, %801 : vector<8x128xf32>
    %803 = vector.extract_strided_slice %796 {offsets = [0, 128], sizes = [8, 128], strides = [1, 1]} : vector<8x512xf32> to vector<8x128xf32>
    %804 = arith.negf %803 : vector<8x128xf32>
    %805 = math.exp %804 : vector<8x128xf32>
    %cst_420 = arith.constant 1.000000e+00 : f32
    %806 = vector.broadcast %cst_420 : f32 to vector<8x128xf32>
    %807 = arith.addf %806, %805 : vector<8x128xf32>
    %808 = arith.divf %806, %807 : vector<8x128xf32>
    %809 = vector.extract_strided_slice %796 {offsets = [0, 256], sizes = [8, 128], strides = [1, 1]} : vector<8x512xf32> to vector<8x128xf32>
    %810 = math.tanh %809 : vector<8x128xf32>
    %811 = vector.extract_strided_slice %796 {offsets = [0, 384], sizes = [8, 128], strides = [1, 1]} : vector<8x512xf32> to vector<8x128xf32>
    %812 = arith.negf %811 : vector<8x128xf32>
    %813 = math.exp %812 : vector<8x128xf32>
    %cst_421 = arith.constant 1.000000e+00 : f32
    %814 = vector.broadcast %cst_421 : f32 to vector<8x128xf32>
    %815 = arith.addf %814, %813 : vector<8x128xf32>
    %816 = arith.divf %814, %815 : vector<8x128xf32>
    %c0_422 = arith.constant 0 : index
    %c0_423 = arith.constant 0 : index
    %817 = vector.load %arg6[%c0_422, %c0_423] : memref<8x128xf32, #tpu.memory_space<vmem>>, vector<8x128xf32>
    %818 = arith.mulf %808, %817 : vector<8x128xf32>
    %819 = arith.mulf %802, %810 : vector<8x128xf32>
    %820 = arith.addf %818, %819 : vector<8x128xf32>
    %821 = math.tanh %820 : vector<8x128xf32>
    %822 = arith.mulf %816, %821 : vector<8x128xf32>
    %c0_424 = arith.constant 0 : index
    %c0_425 = arith.constant 0 : index
    %823 = vector.load %arg6[%c0_424, %c0_425] : memref<8x128xf32, #tpu.memory_space<vmem>>, vector<8x128xf32>
    tpu.vector_store %arg6[%c0_424, %c0_425], %820 {strides = array<i32>} : memref<8x128xf32, #tpu.memory_space<vmem>>, vector<8x128xf32>,
    %c0_426 = arith.constant 0 : index
    %c0_427 = arith.constant 0 : index
    %824 = vector.load %arg5[%c0_426, %c0_427] : memref<8x128xf32, #tpu.memory_space<vmem>>, vector<8x128xf32>
    tpu.vector_store %arg5[%c0_426, %c0_427], %822 {strides = array<i32>} : memref<8x128xf32, #tpu.memory_space<vmem>>, vector<8x128xf32>,
    %c5_428 = arith.constant 5 : index
    %c0_429 = arith.constant 0 : index
    %c0_430 = arith.constant 0 : index
    %825 = vector.load %arg7[%c5_428, %c0_429, %c0_430] : memref<8x8x128xf32, #tpu.memory_space<vmem>>, vector<1x8x128xf32>
    %826 = vector.shape_cast %825 : vector<1x8x128xf32> to vector<8x128xf32>
    %827 = vector.shape_cast %822 : vector<8x128xf32> to vector<1x8x128xf32>
    tpu.vector_store %arg7[%c5_428, %c0_429, %c0_430], %827 {strides = array<i32>} : memref<8x8x128xf32, #tpu.memory_space<vmem>>, vector<1x8x128xf32>,
    %c0_431 = arith.constant 0 : index
    %c0_432 = arith.constant 0 : index
    %828 = vector.load %arg5[%c0_431, %c0_432] : memref<8x128xf32, #tpu.memory_space<vmem>>, vector<8x128xf32>
    %cst_433 = arith.constant dense<0.000000e+00> : vector<8x512xf32>
    %829 = tpu.matmul %828, %623, %cst_433 {dimension_numbers = #tpu.dot_dimension_numbers<[1], [0], [0], [1], [0, 0, 1, 1], [], []>} : vector<8x128xf32>, vector<128x512xf32>, vector<8x512xf32> -> vector<8x512xf32>
    %830 = arith.addf %617, %829 : vector<8x512xf32>
    %831 = vector.extract_strided_slice %830 {offsets = [0, 0], sizes = [8, 128], strides = [1, 1]} : vector<8x512xf32> to vector<8x128xf32>
    %832 = arith.negf %831 : vector<8x128xf32>
    %833 = math.exp %832 : vector<8x128xf32>
    %cst_434 = arith.constant 1.000000e+00 : f32
    %834 = vector.broadcast %cst_434 : f32 to vector<8x128xf32>
    %835 = arith.addf %834, %833 : vector<8x128xf32>
    %836 = arith.divf %834, %835 : vector<8x128xf32>
    %837 = vector.extract_strided_slice %830 {offsets = [0, 128], sizes = [8, 128], strides = [1, 1]} : vector<8x512xf32> to vector<8x128xf32>
    %838 = arith.negf %837 : vector<8x128xf32>
    %839 = math.exp %838 : vector<8x128xf32>
    %cst_435 = arith.constant 1.000000e+00 : f32
    %840 = vector.broadcast %cst_435 : f32 to vector<8x128xf32>
    %841 = arith.addf %840, %839 : vector<8x128xf32>
    %842 = arith.divf %840, %841 : vector<8x128xf32>
    %843 = vector.extract_strided_slice %830 {offsets = [0, 256], sizes = [8, 128], strides = [1, 1]} : vector<8x512xf32> to vector<8x128xf32>
    %844 = math.tanh %843 : vector<8x128xf32>
    %845 = vector.extract_strided_slice %830 {offsets = [0, 384], sizes = [8, 128], strides = [1, 1]} : vector<8x512xf32> to vector<8x128xf32>
    %846 = arith.negf %845 : vector<8x128xf32>
    %847 = math.exp %846 : vector<8x128xf32>
    %cst_436 = arith.constant 1.000000e+00 : f32
    %848 = vector.broadcast %cst_436 : f32 to vector<8x128xf32>
    %849 = arith.addf %848, %847 : vector<8x128xf32>
    %850 = arith.divf %848, %849 : vector<8x128xf32>
    %c0_437 = arith.constant 0 : index
    %c0_438 = arith.constant 0 : index
    %851 = vector.load %arg6[%c0_437, %c0_438] : memref<8x128xf32, #tpu.memory_space<vmem>>, vector<8x128xf32>
    %852 = arith.mulf %842, %851 : vector<8x128xf32>
    %853 = arith.mulf %836, %844 : vector<8x128xf32>
    %854 = arith.addf %852, %853 : vector<8x128xf32>
    %855 = math.tanh %854 : vector<8x128xf32>
    %856 = arith.mulf %850, %855 : vector<8x128xf32>
    %c0_439 = arith.constant 0 : index
    %c0_440 = arith.constant 0 : index
    %857 = vector.load %arg6[%c0_439, %c0_440] : memref<8x128xf32, #tpu.memory_space<vmem>>, vector<8x128xf32>
    tpu.vector_store %arg6[%c0_439, %c0_440], %854 {strides = array<i32>} : memref<8x128xf32, #tpu.memory_space<vmem>>, vector<8x128xf32>,
    %c0_441 = arith.constant 0 : index
    %c0_442 = arith.constant 0 : index
    %858 = vector.load %arg5[%c0_441, %c0_442] : memref<8x128xf32, #tpu.memory_space<vmem>>, vector<8x128xf32>
    tpu.vector_store %arg5[%c0_441, %c0_442], %856 {strides = array<i32>} : memref<8x128xf32, #tpu.memory_space<vmem>>, vector<8x128xf32>,
    %c6_443 = arith.constant 6 : index
    %c0_444 = arith.constant 0 : index
    %c0_445 = arith.constant 0 : index
    %859 = vector.load %arg7[%c6_443, %c0_444, %c0_445] : memref<8x8x128xf32, #tpu.memory_space<vmem>>, vector<1x8x128xf32>
    %860 = vector.shape_cast %859 : vector<1x8x128xf32> to vector<8x128xf32>
    %861 = vector.shape_cast %856 : vector<8x128xf32> to vector<1x8x128xf32>
    tpu.vector_store %arg7[%c6_443, %c0_444, %c0_445], %861 {strides = array<i32>} : memref<8x8x128xf32, #tpu.memory_space<vmem>>, vector<1x8x128xf32>,
    %c0_446 = arith.constant 0 : index
    %c0_447 = arith.constant 0 : index
    %862 = vector.load %arg5[%c0_446, %c0_447] : memref<8x128xf32, #tpu.memory_space<vmem>>, vector<8x128xf32>
    %cst_448 = arith.constant dense<0.000000e+00> : vector<8x512xf32>
    %863 = tpu.matmul %862, %623, %cst_448 {dimension_numbers = #tpu.dot_dimension_numbers<[1], [0], [0], [1], [0, 0, 1, 1], [], []>} : vector<8x128xf32>, vector<128x512xf32>, vector<8x512xf32> -> vector<8x512xf32>
    %864 = arith.addf %617, %863 : vector<8x512xf32>
    %865 = vector.extract_strided_slice %864 {offsets = [0, 0], sizes = [8, 128], strides = [1, 1]} : vector<8x512xf32> to vector<8x128xf32>
    %866 = arith.negf %865 : vector<8x128xf32>
    %867 = math.exp %866 : vector<8x128xf32>
    %cst_449 = arith.constant 1.000000e+00 : f32
    %868 = vector.broadcast %cst_449 : f32 to vector<8x128xf32>
    %869 = arith.addf %868, %867 : vector<8x128xf32>
    %870 = arith.divf %868, %869 : vector<8x128xf32>
    %871 = vector.extract_strided_slice %864 {offsets = [0, 128], sizes = [8, 128], strides = [1, 1]} : vector<8x512xf32> to vector<8x128xf32>
    %872 = arith.negf %871 : vector<8x128xf32>
    %873 = math.exp %872 : vector<8x128xf32>
    %cst_450 = arith.constant 1.000000e+00 : f32
    %874 = vector.broadcast %cst_450 : f32 to vector<8x128xf32>
    %875 = arith.addf %874, %873 : vector<8x128xf32>
    %876 = arith.divf %874, %875 : vector<8x128xf32>
    %877 = vector.extract_strided_slice %864 {offsets = [0, 256], sizes = [8, 128], strides = [1, 1]} : vector<8x512xf32> to vector<8x128xf32>
    %878 = math.tanh %877 : vector<8x128xf32>
    %879 = vector.extract_strided_slice %864 {offsets = [0, 384], sizes = [8, 128], strides = [1, 1]} : vector<8x512xf32> to vector<8x128xf32>
    %880 = arith.negf %879 : vector<8x128xf32>
    %881 = math.exp %880 : vector<8x128xf32>
    %cst_451 = arith.constant 1.000000e+00 : f32
    %882 = vector.broadcast %cst_451 : f32 to vector<8x128xf32>
    %883 = arith.addf %882, %881 : vector<8x128xf32>
    %884 = arith.divf %882, %883 : vector<8x128xf32>
    %c0_452 = arith.constant 0 : index
    %c0_453 = arith.constant 0 : index
    %885 = vector.load %arg6[%c0_452, %c0_453] : memref<8x128xf32, #tpu.memory_space<vmem>>, vector<8x128xf32>
    %886 = arith.mulf %876, %885 : vector<8x128xf32>
    %887 = arith.mulf %870, %878 : vector<8x128xf32>
    %888 = arith.addf %886, %887 : vector<8x128xf32>
    %889 = math.tanh %888 : vector<8x128xf32>
    %890 = arith.mulf %884, %889 : vector<8x128xf32>
    %c0_454 = arith.constant 0 : index
    %c0_455 = arith.constant 0 : index
    %891 = vector.load %arg6[%c0_454, %c0_455] : memref<8x128xf32, #tpu.memory_space<vmem>>, vector<8x128xf32>
    tpu.vector_store %arg6[%c0_454, %c0_455], %888 {strides = array<i32>} : memref<8x128xf32, #tpu.memory_space<vmem>>, vector<8x128xf32>,
    %c0_456 = arith.constant 0 : index
    %c0_457 = arith.constant 0 : index
    %892 = vector.load %arg5[%c0_456, %c0_457] : memref<8x128xf32, #tpu.memory_space<vmem>>, vector<8x128xf32>
    tpu.vector_store %arg5[%c0_456, %c0_457], %890 {strides = array<i32>} : memref<8x128xf32, #tpu.memory_space<vmem>>, vector<8x128xf32>,
    %c7_458 = arith.constant 7 : index
    %c0_459 = arith.constant 0 : index
    %c0_460 = arith.constant 0 : index
    %893 = vector.load %arg7[%c7_458, %c0_459, %c0_460] : memref<8x8x128xf32, #tpu.memory_space<vmem>>, vector<1x8x128xf32>
    %894 = vector.shape_cast %893 : vector<1x8x128xf32> to vector<8x128xf32>
    %895 = vector.shape_cast %890 : vector<8x128xf32> to vector<1x8x128xf32>
    tpu.vector_store %arg7[%c7_458, %c0_459, %c0_460], %895 {strides = array<i32>} : memref<8x8x128xf32, #tpu.memory_space<vmem>>, vector<1x8x128xf32>,
    %c0_461 = arith.constant 0 : index
    %c0_462 = arith.constant 0 : index
    %c0_463 = arith.constant 0 : index
    %896 = vector.load %arg7[%c0_461, %c0_462, %c0_463] : memref<8x8x128xf32, #tpu.memory_space<vmem>>, vector<8x8x128xf32>
    %897 = vector.shape_cast %896 : vector<8x8x128xf32> to vector<64x128xf32>
    %c3_464 = arith.constant 3 : index
    %c0_465 = arith.constant 0 : index
    %c0_466 = arith.constant 0 : index
    %898 = vector.load %arg1[%c3_464, %c0_465, %c0_466] : memref<4x128x512xf32, #tpu.memory_space<vmem>>, vector<1x128x512xf32>
    %899 = vector.shape_cast %898 : vector<1x128x512xf32> to vector<128x512xf32>
    %cst_467 = arith.constant dense<0.000000e+00> : vector<64x512xf32>
    %900 = tpu.matmul %897, %899, %cst_467 {dimension_numbers = #tpu.dot_dimension_numbers<[1], [0], [0], [1], [0, 0, 1, 1], [], []>} : vector<64x128xf32>, vector<128x512xf32>, vector<64x512xf32> -> vector<64x512xf32>
    %c3_468 = arith.constant 3 : index
    %c0_469 = arith.constant 0 : index
    %c0_470 = arith.constant 0 : index
    %901 = vector.load %arg3[%c3_468, %c0_469, %c0_470] : memref<4x1x512xf32, #tpu.memory_space<vmem>>, vector<1x1x512xf32>
    %902 = vector.shape_cast %901 : vector<1x1x512xf32> to vector<1x512xf32>
    %903 = vector.broadcast %902 : vector<1x512xf32> to vector<64x512xf32>
    %904 = arith.addf %900, %903 : vector<64x512xf32>
    %905 = vector.shape_cast %904 : vector<64x512xf32> to vector<8x8x512xf32>
    %c0_471 = arith.constant 0 : index
    %c0_472 = arith.constant 0 : index
    %c0_473 = arith.constant 0 : index
    %906 = vector.load %arg8[%c0_471, %c0_472, %c0_473] : memref<8x8x512xf32, #tpu.memory_space<vmem>>, vector<8x8x512xf32>
    tpu.vector_store %arg8[%c0_471, %c0_472, %c0_473], %905 {strides = array<i32>} : memref<8x8x512xf32, #tpu.memory_space<vmem>>, vector<8x8x512xf32>,
    %cst_474 = arith.constant 0.000000e+00 : f32
    %907 = vector.broadcast %cst_474 : f32 to vector<8x128xf32>
    %c0_475 = arith.constant 0 : index
    %c0_476 = arith.constant 0 : index
    %908 = vector.load %arg5[%c0_475, %c0_476] : memref<8x128xf32, #tpu.memory_space<vmem>>, vector<8x128xf32>
    tpu.vector_store %arg5[%c0_475, %c0_476], %907 {strides = array<i32>} : memref<8x128xf32, #tpu.memory_space<vmem>>, vector<8x128xf32>,
    %cst_477 = arith.constant 0.000000e+00 : f32
    %909 = vector.broadcast %cst_477 : f32 to vector<8x128xf32>
    %c0_478 = arith.constant 0 : index
    %c0_479 = arith.constant 0 : index
    %910 = vector.load %arg6[%c0_478, %c0_479] : memref<8x128xf32, #tpu.memory_space<vmem>>, vector<8x128xf32>
    tpu.vector_store %arg6[%c0_478, %c0_479], %909 {strides = array<i32>} : memref<8x128xf32, #tpu.memory_space<vmem>>, vector<8x128xf32>,
    %c3_480 = arith.constant 3 : index
    %c0_481 = arith.constant 0 : index
    %c0_482 = arith.constant 0 : index
    %911 = vector.load %arg2[%c3_480, %c0_481, %c0_482] : memref<4x128x512xf32, #tpu.memory_space<vmem>>, vector<1x128x512xf32>
    %912 = vector.shape_cast %911 : vector<1x128x512xf32> to vector<128x512xf32>
    %c0_483 = arith.constant 0 : index
    %c0_484 = arith.constant 0 : index
    %c0_485 = arith.constant 0 : index
    %913 = vector.load %arg8[%c0_483, %c0_484, %c0_485] : memref<8x8x512xf32, #tpu.memory_space<vmem>>, vector<1x8x512xf32>
    %914 = vector.shape_cast %913 : vector<1x8x512xf32> to vector<8x512xf32>
    %c0_486 = arith.constant 0 : index
    %c0_487 = arith.constant 0 : index
    %915 = vector.load %arg5[%c0_486, %c0_487] : memref<8x128xf32, #tpu.memory_space<vmem>>, vector<8x128xf32>
    %cst_488 = arith.constant dense<0.000000e+00> : vector<8x512xf32>
    %916 = tpu.matmul %915, %912, %cst_488 {dimension_numbers = #tpu.dot_dimension_numbers<[1], [0], [0], [1], [0, 0, 1, 1], [], []>} : vector<8x128xf32>, vector<128x512xf32>, vector<8x512xf32> -> vector<8x512xf32>
    %917 = arith.addf %914, %916 : vector<8x512xf32>
    %918 = vector.extract_strided_slice %917 {offsets = [0, 0], sizes = [8, 128], strides = [1, 1]} : vector<8x512xf32> to vector<8x128xf32>
    %919 = arith.negf %918 : vector<8x128xf32>
    %920 = math.exp %919 : vector<8x128xf32>
    %cst_489 = arith.constant 1.000000e+00 : f32
    %921 = vector.broadcast %cst_489 : f32 to vector<8x128xf32>
    %922 = arith.addf %921, %920 : vector<8x128xf32>
    %923 = arith.divf %921, %922 : vector<8x128xf32>
    %924 = vector.extract_strided_slice %917 {offsets = [0, 128], sizes = [8, 128], strides = [1, 1]} : vector<8x512xf32> to vector<8x128xf32>
    %925 = arith.negf %924 : vector<8x128xf32>
    %926 = math.exp %925 : vector<8x128xf32>
    %cst_490 = arith.constant 1.000000e+00 : f32
    %927 = vector.broadcast %cst_490 : f32 to vector<8x128xf32>
    %928 = arith.addf %927, %926 : vector<8x128xf32>
    %929 = arith.divf %927, %928 : vector<8x128xf32>
    %930 = vector.extract_strided_slice %917 {offsets = [0, 256], sizes = [8, 128], strides = [1, 1]} : vector<8x512xf32> to vector<8x128xf32>
    %931 = math.tanh %930 : vector<8x128xf32>
    %932 = vector.extract_strided_slice %917 {offsets = [0, 384], sizes = [8, 128], strides = [1, 1]} : vector<8x512xf32> to vector<8x128xf32>
    %933 = arith.negf %932 : vector<8x128xf32>
    %934 = math.exp %933 : vector<8x128xf32>
    %cst_491 = arith.constant 1.000000e+00 : f32
    %935 = vector.broadcast %cst_491 : f32 to vector<8x128xf32>
    %936 = arith.addf %935, %934 : vector<8x128xf32>
    %937 = arith.divf %935, %936 : vector<8x128xf32>
    %c0_492 = arith.constant 0 : index
    %c0_493 = arith.constant 0 : index
    %938 = vector.load %arg6[%c0_492, %c0_493] : memref<8x128xf32, #tpu.memory_space<vmem>>, vector<8x128xf32>
    %939 = arith.mulf %929, %938 : vector<8x128xf32>
    %940 = arith.mulf %923, %931 : vector<8x128xf32>
    %941 = arith.addf %939, %940 : vector<8x128xf32>
    %942 = math.tanh %941 : vector<8x128xf32>
    %943 = arith.mulf %937, %942 : vector<8x128xf32>
    %c0_494 = arith.constant 0 : index
    %c0_495 = arith.constant 0 : index
    %944 = vector.load %arg6[%c0_494, %c0_495] : memref<8x128xf32, #tpu.memory_space<vmem>>, vector<8x128xf32>
    tpu.vector_store %arg6[%c0_494, %c0_495], %941 {strides = array<i32>} : memref<8x128xf32, #tpu.memory_space<vmem>>, vector<8x128xf32>,
    %c0_496 = arith.constant 0 : index
    %c0_497 = arith.constant 0 : index
    %945 = vector.load %arg5[%c0_496, %c0_497] : memref<8x128xf32, #tpu.memory_space<vmem>>, vector<8x128xf32>
    tpu.vector_store %arg5[%c0_496, %c0_497], %943 {strides = array<i32>} : memref<8x128xf32, #tpu.memory_space<vmem>>, vector<8x128xf32>,
    %c0_498 = arith.constant 0 : index
    %c0_499 = arith.constant 0 : index
    %c0_500 = arith.constant 0 : index
    %946 = vector.load %arg4[%c0_498, %c0_499, %c0_500] : memref<8x8x128xf32, #tpu.memory_space<vmem>>, vector<1x8x128xf32>
    %947 = vector.shape_cast %946 : vector<1x8x128xf32> to vector<8x128xf32>
    %948 = vector.shape_cast %943 : vector<8x128xf32> to vector<1x8x128xf32>
    tpu.vector_store %arg4[%c0_498, %c0_499, %c0_500], %948 {strides = array<i32>} : memref<8x8x128xf32, #tpu.memory_space<vmem>>, vector<1x8x128xf32>,
    %c1_501 = arith.constant 1 : index
    %c0_502 = arith.constant 0 : index
    %c0_503 = arith.constant 0 : index
    %949 = vector.load %arg8[%c1_501, %c0_502, %c0_503] : memref<8x8x512xf32, #tpu.memory_space<vmem>>, vector<1x8x512xf32>
    %950 = vector.shape_cast %949 : vector<1x8x512xf32> to vector<8x512xf32>
    %c0_504 = arith.constant 0 : index
    %c0_505 = arith.constant 0 : index
    %951 = vector.load %arg5[%c0_504, %c0_505] : memref<8x128xf32, #tpu.memory_space<vmem>>, vector<8x128xf32>
    %cst_506 = arith.constant dense<0.000000e+00> : vector<8x512xf32>
    %952 = tpu.matmul %951, %912, %cst_506 {dimension_numbers = #tpu.dot_dimension_numbers<[1], [0], [0], [1], [0, 0, 1, 1], [], []>} : vector<8x128xf32>, vector<128x512xf32>, vector<8x512xf32> -> vector<8x512xf32>
    %953 = arith.addf %950, %952 : vector<8x512xf32>
    %954 = vector.extract_strided_slice %953 {offsets = [0, 0], sizes = [8, 128], strides = [1, 1]} : vector<8x512xf32> to vector<8x128xf32>
    %955 = arith.negf %954 : vector<8x128xf32>
    %956 = math.exp %955 : vector<8x128xf32>
    %cst_507 = arith.constant 1.000000e+00 : f32
    %957 = vector.broadcast %cst_507 : f32 to vector<8x128xf32>
    %958 = arith.addf %957, %956 : vector<8x128xf32>
    %959 = arith.divf %957, %958 : vector<8x128xf32>
    %960 = vector.extract_strided_slice %953 {offsets = [0, 128], sizes = [8, 128], strides = [1, 1]} : vector<8x512xf32> to vector<8x128xf32>
    %961 = arith.negf %960 : vector<8x128xf32>
    %962 = math.exp %961 : vector<8x128xf32>
    %cst_508 = arith.constant 1.000000e+00 : f32
    %963 = vector.broadcast %cst_508 : f32 to vector<8x128xf32>
    %964 = arith.addf %963, %962 : vector<8x128xf32>
    %965 = arith.divf %963, %964 : vector<8x128xf32>
    %966 = vector.extract_strided_slice %953 {offsets = [0, 256], sizes = [8, 128], strides = [1, 1]} : vector<8x512xf32> to vector<8x128xf32>
    %967 = math.tanh %966 : vector<8x128xf32>
    %968 = vector.extract_strided_slice %953 {offsets = [0, 384], sizes = [8, 128], strides = [1, 1]} : vector<8x512xf32> to vector<8x128xf32>
    %969 = arith.negf %968 : vector<8x128xf32>
    %970 = math.exp %969 : vector<8x128xf32>
    %cst_509 = arith.constant 1.000000e+00 : f32
    %971 = vector.broadcast %cst_509 : f32 to vector<8x128xf32>
    %972 = arith.addf %971, %970 : vector<8x128xf32>
    %973 = arith.divf %971, %972 : vector<8x128xf32>
    %c0_510 = arith.constant 0 : index
    %c0_511 = arith.constant 0 : index
    %974 = vector.load %arg6[%c0_510, %c0_511] : memref<8x128xf32, #tpu.memory_space<vmem>>, vector<8x128xf32>
    %975 = arith.mulf %965, %974 : vector<8x128xf32>
    %976 = arith.mulf %959, %967 : vector<8x128xf32>
    %977 = arith.addf %975, %976 : vector<8x128xf32>
    %978 = math.tanh %977 : vector<8x128xf32>
    %979 = arith.mulf %973, %978 : vector<8x128xf32>
    %c0_512 = arith.constant 0 : index
    %c0_513 = arith.constant 0 : index
    %980 = vector.load %arg6[%c0_512, %c0_513] : memref<8x128xf32, #tpu.memory_space<vmem>>, vector<8x128xf32>
    tpu.vector_store %arg6[%c0_512, %c0_513], %977 {strides = array<i32>} : memref<8x128xf32, #tpu.memory_space<vmem>>, vector<8x128xf32>,
    %c0_514 = arith.constant 0 : index
    %c0_515 = arith.constant 0 : index
    %981 = vector.load %arg5[%c0_514, %c0_515] : memref<8x128xf32, #tpu.memory_space<vmem>>, vector<8x128xf32>
    tpu.vector_store %arg5[%c0_514, %c0_515], %979 {strides = array<i32>} : memref<8x128xf32, #tpu.memory_space<vmem>>, vector<8x128xf32>,
    %c1_516 = arith.constant 1 : index
    %c0_517 = arith.constant 0 : index
    %c0_518 = arith.constant 0 : index
    %982 = vector.load %arg4[%c1_516, %c0_517, %c0_518] : memref<8x8x128xf32, #tpu.memory_space<vmem>>, vector<1x8x128xf32>
    %983 = vector.shape_cast %982 : vector<1x8x128xf32> to vector<8x128xf32>
    %984 = vector.shape_cast %979 : vector<8x128xf32> to vector<1x8x128xf32>
    tpu.vector_store %arg4[%c1_516, %c0_517, %c0_518], %984 {strides = array<i32>} : memref<8x8x128xf32, #tpu.memory_space<vmem>>, vector<1x8x128xf32>,
    %c2_519 = arith.constant 2 : index
    %c0_520 = arith.constant 0 : index
    %c0_521 = arith.constant 0 : index
    %985 = vector.load %arg8[%c2_519, %c0_520, %c0_521] : memref<8x8x512xf32, #tpu.memory_space<vmem>>, vector<1x8x512xf32>
    %986 = vector.shape_cast %985 : vector<1x8x512xf32> to vector<8x512xf32>
    %c0_522 = arith.constant 0 : index
    %c0_523 = arith.constant 0 : index
    %987 = vector.load %arg5[%c0_522, %c0_523] : memref<8x128xf32, #tpu.memory_space<vmem>>, vector<8x128xf32>
    %cst_524 = arith.constant dense<0.000000e+00> : vector<8x512xf32>
    %988 = tpu.matmul %987, %912, %cst_524 {dimension_numbers = #tpu.dot_dimension_numbers<[1], [0], [0], [1], [0, 0, 1, 1], [], []>} : vector<8x128xf32>, vector<128x512xf32>, vector<8x512xf32> -> vector<8x512xf32>
    %989 = arith.addf %986, %988 : vector<8x512xf32>
    %990 = vector.extract_strided_slice %989 {offsets = [0, 0], sizes = [8, 128], strides = [1, 1]} : vector<8x512xf32> to vector<8x128xf32>
    %991 = arith.negf %990 : vector<8x128xf32>
    %992 = math.exp %991 : vector<8x128xf32>
    %cst_525 = arith.constant 1.000000e+00 : f32
    %993 = vector.broadcast %cst_525 : f32 to vector<8x128xf32>
    %994 = arith.addf %993, %992 : vector<8x128xf32>
    %995 = arith.divf %993, %994 : vector<8x128xf32>
    %996 = vector.extract_strided_slice %989 {offsets = [0, 128], sizes = [8, 128], strides = [1, 1]} : vector<8x512xf32> to vector<8x128xf32>
    %997 = arith.negf %996 : vector<8x128xf32>
    %998 = math.exp %997 : vector<8x128xf32>
    %cst_526 = arith.constant 1.000000e+00 : f32
    %999 = vector.broadcast %cst_526 : f32 to vector<8x128xf32>
    %1000 = arith.addf %999, %998 : vector<8x128xf32>
    %1001 = arith.divf %999, %1000 : vector<8x128xf32>
    %1002 = vector.extract_strided_slice %989 {offsets = [0, 256], sizes = [8, 128], strides = [1, 1]} : vector<8x512xf32> to vector<8x128xf32>
    %1003 = math.tanh %1002 : vector<8x128xf32>
    %1004 = vector.extract_strided_slice %989 {offsets = [0, 384], sizes = [8, 128], strides = [1, 1]} : vector<8x512xf32> to vector<8x128xf32>
    %1005 = arith.negf %1004 : vector<8x128xf32>
    %1006 = math.exp %1005 : vector<8x128xf32>
    %cst_527 = arith.constant 1.000000e+00 : f32
    %1007 = vector.broadcast %cst_527 : f32 to vector<8x128xf32>
    %1008 = arith.addf %1007, %1006 : vector<8x128xf32>
    %1009 = arith.divf %1007, %1008 : vector<8x128xf32>
    %c0_528 = arith.constant 0 : index
    %c0_529 = arith.constant 0 : index
    %1010 = vector.load %arg6[%c0_528, %c0_529] : memref<8x128xf32, #tpu.memory_space<vmem>>, vector<8x128xf32>
    %1011 = arith.mulf %1001, %1010 : vector<8x128xf32>
    %1012 = arith.mulf %995, %1003 : vector<8x128xf32>
    %1013 = arith.addf %1011, %1012 : vector<8x128xf32>
    %1014 = math.tanh %1013 : vector<8x128xf32>
    %1015 = arith.mulf %1009, %1014 : vector<8x128xf32>
    %c0_530 = arith.constant 0 : index
    %c0_531 = arith.constant 0 : index
    %1016 = vector.load %arg6[%c0_530, %c0_531] : memref<8x128xf32, #tpu.memory_space<vmem>>, vector<8x128xf32>
    tpu.vector_store %arg6[%c0_530, %c0_531], %1013 {strides = array<i32>} : memref<8x128xf32, #tpu.memory_space<vmem>>, vector<8x128xf32>,
    %c0_532 = arith.constant 0 : index
    %c0_533 = arith.constant 0 : index
    %1017 = vector.load %arg5[%c0_532, %c0_533] : memref<8x128xf32, #tpu.memory_space<vmem>>, vector<8x128xf32>
    tpu.vector_store %arg5[%c0_532, %c0_533], %1015 {strides = array<i32>} : memref<8x128xf32, #tpu.memory_space<vmem>>, vector<8x128xf32>,
    %c2_534 = arith.constant 2 : index
    %c0_535 = arith.constant 0 : index
    %c0_536 = arith.constant 0 : index
    %1018 = vector.load %arg4[%c2_534, %c0_535, %c0_536] : memref<8x8x128xf32, #tpu.memory_space<vmem>>, vector<1x8x128xf32>
    %1019 = vector.shape_cast %1018 : vector<1x8x128xf32> to vector<8x128xf32>
    %1020 = vector.shape_cast %1015 : vector<8x128xf32> to vector<1x8x128xf32>
    tpu.vector_store %arg4[%c2_534, %c0_535, %c0_536], %1020 {strides = array<i32>} : memref<8x8x128xf32, #tpu.memory_space<vmem>>, vector<1x8x128xf32>,
    %c3_537 = arith.constant 3 : index
    %c0_538 = arith.constant 0 : index
    %c0_539 = arith.constant 0 : index
    %1021 = vector.load %arg8[%c3_537, %c0_538, %c0_539] : memref<8x8x512xf32, #tpu.memory_space<vmem>>, vector<1x8x512xf32>
    %1022 = vector.shape_cast %1021 : vector<1x8x512xf32> to vector<8x512xf32>
    %c0_540 = arith.constant 0 : index
    %c0_541 = arith.constant 0 : index
    %1023 = vector.load %arg5[%c0_540, %c0_541] : memref<8x128xf32, #tpu.memory_space<vmem>>, vector<8x128xf32>
    %cst_542 = arith.constant dense<0.000000e+00> : vector<8x512xf32>
    %1024 = tpu.matmul %1023, %912, %cst_542 {dimension_numbers = #tpu.dot_dimension_numbers<[1], [0], [0], [1], [0, 0, 1, 1], [], []>} : vector<8x128xf32>, vector<128x512xf32>, vector<8x512xf32> -> vector<8x512xf32>
    %1025 = arith.addf %1022, %1024 : vector<8x512xf32>
    %1026 = vector.extract_strided_slice %1025 {offsets = [0, 0], sizes = [8, 128], strides = [1, 1]} : vector<8x512xf32> to vector<8x128xf32>
    %1027 = arith.negf %1026 : vector<8x128xf32>
    %1028 = math.exp %1027 : vector<8x128xf32>
    %cst_543 = arith.constant 1.000000e+00 : f32
    %1029 = vector.broadcast %cst_543 : f32 to vector<8x128xf32>
    %1030 = arith.addf %1029, %1028 : vector<8x128xf32>
    %1031 = arith.divf %1029, %1030 : vector<8x128xf32>
    %1032 = vector.extract_strided_slice %1025 {offsets = [0, 128], sizes = [8, 128], strides = [1, 1]} : vector<8x512xf32> to vector<8x128xf32>
    %1033 = arith.negf %1032 : vector<8x128xf32>
    %1034 = math.exp %1033 : vector<8x128xf32>
    %cst_544 = arith.constant 1.000000e+00 : f32
    %1035 = vector.broadcast %cst_544 : f32 to vector<8x128xf32>
    %1036 = arith.addf %1035, %1034 : vector<8x128xf32>
    %1037 = arith.divf %1035, %1036 : vector<8x128xf32>
    %1038 = vector.extract_strided_slice %1025 {offsets = [0, 256], sizes = [8, 128], strides = [1, 1]} : vector<8x512xf32> to vector<8x128xf32>
    %1039 = math.tanh %1038 : vector<8x128xf32>
    %1040 = vector.extract_strided_slice %1025 {offsets = [0, 384], sizes = [8, 128], strides = [1, 1]} : vector<8x512xf32> to vector<8x128xf32>
    %1041 = arith.negf %1040 : vector<8x128xf32>
    %1042 = math.exp %1041 : vector<8x128xf32>
    %cst_545 = arith.constant 1.000000e+00 : f32
    %1043 = vector.broadcast %cst_545 : f32 to vector<8x128xf32>
    %1044 = arith.addf %1043, %1042 : vector<8x128xf32>
    %1045 = arith.divf %1043, %1044 : vector<8x128xf32>
    %c0_546 = arith.constant 0 : index
    %c0_547 = arith.constant 0 : index
    %1046 = vector.load %arg6[%c0_546, %c0_547] : memref<8x128xf32, #tpu.memory_space<vmem>>, vector<8x128xf32>
    %1047 = arith.mulf %1037, %1046 : vector<8x128xf32>
    %1048 = arith.mulf %1031, %1039 : vector<8x128xf32>
    %1049 = arith.addf %1047, %1048 : vector<8x128xf32>
    %1050 = math.tanh %1049 : vector<8x128xf32>
    %1051 = arith.mulf %1045, %1050 : vector<8x128xf32>
    %c0_548 = arith.constant 0 : index
    %c0_549 = arith.constant 0 : index
    %1052 = vector.load %arg6[%c0_548, %c0_549] : memref<8x128xf32, #tpu.memory_space<vmem>>, vector<8x128xf32>
    tpu.vector_store %arg6[%c0_548, %c0_549], %1049 {strides = array<i32>} : memref<8x128xf32, #tpu.memory_space<vmem>>, vector<8x128xf32>,
    %c0_550 = arith.constant 0 : index
    %c0_551 = arith.constant 0 : index
    %1053 = vector.load %arg5[%c0_550, %c0_551] : memref<8x128xf32, #tpu.memory_space<vmem>>, vector<8x128xf32>
    tpu.vector_store %arg5[%c0_550, %c0_551], %1051 {strides = array<i32>} : memref<8x128xf32, #tpu.memory_space<vmem>>, vector<8x128xf32>,
    %c3_552 = arith.constant 3 : index
    %c0_553 = arith.constant 0 : index
    %c0_554 = arith.constant 0 : index
    %1054 = vector.load %arg4[%c3_552, %c0_553, %c0_554] : memref<8x8x128xf32, #tpu.memory_space<vmem>>, vector<1x8x128xf32>
    %1055 = vector.shape_cast %1054 : vector<1x8x128xf32> to vector<8x128xf32>
    %1056 = vector.shape_cast %1051 : vector<8x128xf32> to vector<1x8x128xf32>
    tpu.vector_store %arg4[%c3_552, %c0_553, %c0_554], %1056 {strides = array<i32>} : memref<8x8x128xf32, #tpu.memory_space<vmem>>, vector<1x8x128xf32>,
    %c4_555 = arith.constant 4 : index
    %c0_556 = arith.constant 0 : index
    %c0_557 = arith.constant 0 : index
    %1057 = vector.load %arg8[%c4_555, %c0_556, %c0_557] : memref<8x8x512xf32, #tpu.memory_space<vmem>>, vector<1x8x512xf32>
    %1058 = vector.shape_cast %1057 : vector<1x8x512xf32> to vector<8x512xf32>
    %c0_558 = arith.constant 0 : index
    %c0_559 = arith.constant 0 : index
    %1059 = vector.load %arg5[%c0_558, %c0_559] : memref<8x128xf32, #tpu.memory_space<vmem>>, vector<8x128xf32>
    %cst_560 = arith.constant dense<0.000000e+00> : vector<8x512xf32>
    %1060 = tpu.matmul %1059, %912, %cst_560 {dimension_numbers = #tpu.dot_dimension_numbers<[1], [0], [0], [1], [0, 0, 1, 1], [], []>} : vector<8x128xf32>, vector<128x512xf32>, vector<8x512xf32> -> vector<8x512xf32>
    %1061 = arith.addf %1058, %1060 : vector<8x512xf32>
    %1062 = vector.extract_strided_slice %1061 {offsets = [0, 0], sizes = [8, 128], strides = [1, 1]} : vector<8x512xf32> to vector<8x128xf32>
    %1063 = arith.negf %1062 : vector<8x128xf32>
    %1064 = math.exp %1063 : vector<8x128xf32>
    %cst_561 = arith.constant 1.000000e+00 : f32
    %1065 = vector.broadcast %cst_561 : f32 to vector<8x128xf32>
    %1066 = arith.addf %1065, %1064 : vector<8x128xf32>
    %1067 = arith.divf %1065, %1066 : vector<8x128xf32>
    %1068 = vector.extract_strided_slice %1061 {offsets = [0, 128], sizes = [8, 128], strides = [1, 1]} : vector<8x512xf32> to vector<8x128xf32>
    %1069 = arith.negf %1068 : vector<8x128xf32>
    %1070 = math.exp %1069 : vector<8x128xf32>
    %cst_562 = arith.constant 1.000000e+00 : f32
    %1071 = vector.broadcast %cst_562 : f32 to vector<8x128xf32>
    %1072 = arith.addf %1071, %1070 : vector<8x128xf32>
    %1073 = arith.divf %1071, %1072 : vector<8x128xf32>
    %1074 = vector.extract_strided_slice %1061 {offsets = [0, 256], sizes = [8, 128], strides = [1, 1]} : vector<8x512xf32> to vector<8x128xf32>
    %1075 = math.tanh %1074 : vector<8x128xf32>
    %1076 = vector.extract_strided_slice %1061 {offsets = [0, 384], sizes = [8, 128], strides = [1, 1]} : vector<8x512xf32> to vector<8x128xf32>
    %1077 = arith.negf %1076 : vector<8x128xf32>
    %1078 = math.exp %1077 : vector<8x128xf32>
    %cst_563 = arith.constant 1.000000e+00 : f32
    %1079 = vector.broadcast %cst_563 : f32 to vector<8x128xf32>
    %1080 = arith.addf %1079, %1078 : vector<8x128xf32>
    %1081 = arith.divf %1079, %1080 : vector<8x128xf32>
    %c0_564 = arith.constant 0 : index
    %c0_565 = arith.constant 0 : index
    %1082 = vector.load %arg6[%c0_564, %c0_565] : memref<8x128xf32, #tpu.memory_space<vmem>>, vector<8x128xf32>
    %1083 = arith.mulf %1073, %1082 : vector<8x128xf32>
    %1084 = arith.mulf %1067, %1075 : vector<8x128xf32>
    %1085 = arith.addf %1083, %1084 : vector<8x128xf32>
    %1086 = math.tanh %1085 : vector<8x128xf32>
    %1087 = arith.mulf %1081, %1086 : vector<8x128xf32>
    %c0_566 = arith.constant 0 : index
    %c0_567 = arith.constant 0 : index
    %1088 = vector.load %arg6[%c0_566, %c0_567] : memref<8x128xf32, #tpu.memory_space<vmem>>, vector<8x128xf32>
    tpu.vector_store %arg6[%c0_566, %c0_567], %1085 {strides = array<i32>} : memref<8x128xf32, #tpu.memory_space<vmem>>, vector<8x128xf32>,
    %c0_568 = arith.constant 0 : index
    %c0_569 = arith.constant 0 : index
    %1089 = vector.load %arg5[%c0_568, %c0_569] : memref<8x128xf32, #tpu.memory_space<vmem>>, vector<8x128xf32>
    tpu.vector_store %arg5[%c0_568, %c0_569], %1087 {strides = array<i32>} : memref<8x128xf32, #tpu.memory_space<vmem>>, vector<8x128xf32>,
    %c4_570 = arith.constant 4 : index
    %c0_571 = arith.constant 0 : index
    %c0_572 = arith.constant 0 : index
    %1090 = vector.load %arg4[%c4_570, %c0_571, %c0_572] : memref<8x8x128xf32, #tpu.memory_space<vmem>>, vector<1x8x128xf32>
    %1091 = vector.shape_cast %1090 : vector<1x8x128xf32> to vector<8x128xf32>
    %1092 = vector.shape_cast %1087 : vector<8x128xf32> to vector<1x8x128xf32>
    tpu.vector_store %arg4[%c4_570, %c0_571, %c0_572], %1092 {strides = array<i32>} : memref<8x8x128xf32, #tpu.memory_space<vmem>>, vector<1x8x128xf32>,
    %c5_573 = arith.constant 5 : index
    %c0_574 = arith.constant 0 : index
    %c0_575 = arith.constant 0 : index
    %1093 = vector.load %arg8[%c5_573, %c0_574, %c0_575] : memref<8x8x512xf32, #tpu.memory_space<vmem>>, vector<1x8x512xf32>
    %1094 = vector.shape_cast %1093 : vector<1x8x512xf32> to vector<8x512xf32>
    %c0_576 = arith.constant 0 : index
    %c0_577 = arith.constant 0 : index
    %1095 = vector.load %arg5[%c0_576, %c0_577] : memref<8x128xf32, #tpu.memory_space<vmem>>, vector<8x128xf32>
    %cst_578 = arith.constant dense<0.000000e+00> : vector<8x512xf32>
    %1096 = tpu.matmul %1095, %912, %cst_578 {dimension_numbers = #tpu.dot_dimension_numbers<[1], [0], [0], [1], [0, 0, 1, 1], [], []>} : vector<8x128xf32>, vector<128x512xf32>, vector<8x512xf32> -> vector<8x512xf32>
    %1097 = arith.addf %1094, %1096 : vector<8x512xf32>
    %1098 = vector.extract_strided_slice %1097 {offsets = [0, 0], sizes = [8, 128], strides = [1, 1]} : vector<8x512xf32> to vector<8x128xf32>
    %1099 = arith.negf %1098 : vector<8x128xf32>
    %1100 = math.exp %1099 : vector<8x128xf32>
    %cst_579 = arith.constant 1.000000e+00 : f32
    %1101 = vector.broadcast %cst_579 : f32 to vector<8x128xf32>
    %1102 = arith.addf %1101, %1100 : vector<8x128xf32>
    %1103 = arith.divf %1101, %1102 : vector<8x128xf32>
    %1104 = vector.extract_strided_slice %1097 {offsets = [0, 128], sizes = [8, 128], strides = [1, 1]} : vector<8x512xf32> to vector<8x128xf32>
    %1105 = arith.negf %1104 : vector<8x128xf32>
    %1106 = math.exp %1105 : vector<8x128xf32>
    %cst_580 = arith.constant 1.000000e+00 : f32
    %1107 = vector.broadcast %cst_580 : f32 to vector<8x128xf32>
    %1108 = arith.addf %1107, %1106 : vector<8x128xf32>
    %1109 = arith.divf %1107, %1108 : vector<8x128xf32>
    %1110 = vector.extract_strided_slice %1097 {offsets = [0, 256], sizes = [8, 128], strides = [1, 1]} : vector<8x512xf32> to vector<8x128xf32>
    %1111 = math.tanh %1110 : vector<8x128xf32>
    %1112 = vector.extract_strided_slice %1097 {offsets = [0, 384], sizes = [8, 128], strides = [1, 1]} : vector<8x512xf32> to vector<8x128xf32>
    %1113 = arith.negf %1112 : vector<8x128xf32>
    %1114 = math.exp %1113 : vector<8x128xf32>
    %cst_581 = arith.constant 1.000000e+00 : f32
    %1115 = vector.broadcast %cst_581 : f32 to vector<8x128xf32>
    %1116 = arith.addf %1115, %1114 : vector<8x128xf32>
    %1117 = arith.divf %1115, %1116 : vector<8x128xf32>
    %c0_582 = arith.constant 0 : index
    %c0_583 = arith.constant 0 : index
    %1118 = vector.load %arg6[%c0_582, %c0_583] : memref<8x128xf32, #tpu.memory_space<vmem>>, vector<8x128xf32>
    %1119 = arith.mulf %1109, %1118 : vector<8x128xf32>
    %1120 = arith.mulf %1103, %1111 : vector<8x128xf32>
    %1121 = arith.addf %1119, %1120 : vector<8x128xf32>
    %1122 = math.tanh %1121 : vector<8x128xf32>
    %1123 = arith.mulf %1117, %1122 : vector<8x128xf32>
    %c0_584 = arith.constant 0 : index
    %c0_585 = arith.constant 0 : index
    %1124 = vector.load %arg6[%c0_584, %c0_585] : memref<8x128xf32, #tpu.memory_space<vmem>>, vector<8x128xf32>
    tpu.vector_store %arg6[%c0_584, %c0_585], %1121 {strides = array<i32>} : memref<8x128xf32, #tpu.memory_space<vmem>>, vector<8x128xf32>,
    %c0_586 = arith.constant 0 : index
    %c0_587 = arith.constant 0 : index
    %1125 = vector.load %arg5[%c0_586, %c0_587] : memref<8x128xf32, #tpu.memory_space<vmem>>, vector<8x128xf32>
    tpu.vector_store %arg5[%c0_586, %c0_587], %1123 {strides = array<i32>} : memref<8x128xf32, #tpu.memory_space<vmem>>, vector<8x128xf32>,
    %c5_588 = arith.constant 5 : index
    %c0_589 = arith.constant 0 : index
    %c0_590 = arith.constant 0 : index
    %1126 = vector.load %arg4[%c5_588, %c0_589, %c0_590] : memref<8x8x128xf32, #tpu.memory_space<vmem>>, vector<1x8x128xf32>
    %1127 = vector.shape_cast %1126 : vector<1x8x128xf32> to vector<8x128xf32>
    %1128 = vector.shape_cast %1123 : vector<8x128xf32> to vector<1x8x128xf32>
    tpu.vector_store %arg4[%c5_588, %c0_589, %c0_590], %1128 {strides = array<i32>} : memref<8x8x128xf32, #tpu.memory_space<vmem>>, vector<1x8x128xf32>,
    %c6_591 = arith.constant 6 : index
    %c0_592 = arith.constant 0 : index
    %c0_593 = arith.constant 0 : index
    %1129 = vector.load %arg8[%c6_591, %c0_592, %c0_593] : memref<8x8x512xf32, #tpu.memory_space<vmem>>, vector<1x8x512xf32>
    %1130 = vector.shape_cast %1129 : vector<1x8x512xf32> to vector<8x512xf32>
    %c0_594 = arith.constant 0 : index
    %c0_595 = arith.constant 0 : index
    %1131 = vector.load %arg5[%c0_594, %c0_595] : memref<8x128xf32, #tpu.memory_space<vmem>>, vector<8x128xf32>
    %cst_596 = arith.constant dense<0.000000e+00> : vector<8x512xf32>
    %1132 = tpu.matmul %1131, %912, %cst_596 {dimension_numbers = #tpu.dot_dimension_numbers<[1], [0], [0], [1], [0, 0, 1, 1], [], []>} : vector<8x128xf32>, vector<128x512xf32>, vector<8x512xf32> -> vector<8x512xf32>
    %1133 = arith.addf %1130, %1132 : vector<8x512xf32>
    %1134 = vector.extract_strided_slice %1133 {offsets = [0, 0], sizes = [8, 128], strides = [1, 1]} : vector<8x512xf32> to vector<8x128xf32>
    %1135 = arith.negf %1134 : vector<8x128xf32>
    %1136 = math.exp %1135 : vector<8x128xf32>
    %cst_597 = arith.constant 1.000000e+00 : f32
    %1137 = vector.broadcast %cst_597 : f32 to vector<8x128xf32>
    %1138 = arith.addf %1137, %1136 : vector<8x128xf32>
    %1139 = arith.divf %1137, %1138 : vector<8x128xf32>
    %1140 = vector.extract_strided_slice %1133 {offsets = [0, 128], sizes = [8, 128], strides = [1, 1]} : vector<8x512xf32> to vector<8x128xf32>
    %1141 = arith.negf %1140 : vector<8x128xf32>
    %1142 = math.exp %1141 : vector<8x128xf32>
    %cst_598 = arith.constant 1.000000e+00 : f32
    %1143 = vector.broadcast %cst_598 : f32 to vector<8x128xf32>
    %1144 = arith.addf %1143, %1142 : vector<8x128xf32>
    %1145 = arith.divf %1143, %1144 : vector<8x128xf32>
    %1146 = vector.extract_strided_slice %1133 {offsets = [0, 256], sizes = [8, 128], strides = [1, 1]} : vector<8x512xf32> to vector<8x128xf32>
    %1147 = math.tanh %1146 : vector<8x128xf32>
    %1148 = vector.extract_strided_slice %1133 {offsets = [0, 384], sizes = [8, 128], strides = [1, 1]} : vector<8x512xf32> to vector<8x128xf32>
    %1149 = arith.negf %1148 : vector<8x128xf32>
    %1150 = math.exp %1149 : vector<8x128xf32>
    %cst_599 = arith.constant 1.000000e+00 : f32
    %1151 = vector.broadcast %cst_599 : f32 to vector<8x128xf32>
    %1152 = arith.addf %1151, %1150 : vector<8x128xf32>
    %1153 = arith.divf %1151, %1152 : vector<8x128xf32>
    %c0_600 = arith.constant 0 : index
    %c0_601 = arith.constant 0 : index
    %1154 = vector.load %arg6[%c0_600, %c0_601] : memref<8x128xf32, #tpu.memory_space<vmem>>, vector<8x128xf32>
    %1155 = arith.mulf %1145, %1154 : vector<8x128xf32>
    %1156 = arith.mulf %1139, %1147 : vector<8x128xf32>
    %1157 = arith.addf %1155, %1156 : vector<8x128xf32>
    %1158 = math.tanh %1157 : vector<8x128xf32>
    %1159 = arith.mulf %1153, %1158 : vector<8x128xf32>
    %c0_602 = arith.constant 0 : index
    %c0_603 = arith.constant 0 : index
    %1160 = vector.load %arg6[%c0_602, %c0_603] : memref<8x128xf32, #tpu.memory_space<vmem>>, vector<8x128xf32>
    tpu.vector_store %arg6[%c0_602, %c0_603], %1157 {strides = array<i32>} : memref<8x128xf32, #tpu.memory_space<vmem>>, vector<8x128xf32>,
    %c0_604 = arith.constant 0 : index
    %c0_605 = arith.constant 0 : index
    %1161 = vector.load %arg5[%c0_604, %c0_605] : memref<8x128xf32, #tpu.memory_space<vmem>>, vector<8x128xf32>
    tpu.vector_store %arg5[%c0_604, %c0_605], %1159 {strides = array<i32>} : memref<8x128xf32, #tpu.memory_space<vmem>>, vector<8x128xf32>,
    %c6_606 = arith.constant 6 : index
    %c0_607 = arith.constant 0 : index
    %c0_608 = arith.constant 0 : index
    %1162 = vector.load %arg4[%c6_606, %c0_607, %c0_608] : memref<8x8x128xf32, #tpu.memory_space<vmem>>, vector<1x8x128xf32>
    %1163 = vector.shape_cast %1162 : vector<1x8x128xf32> to vector<8x128xf32>
    %1164 = vector.shape_cast %1159 : vector<8x128xf32> to vector<1x8x128xf32>
    tpu.vector_store %arg4[%c6_606, %c0_607, %c0_608], %1164 {strides = array<i32>} : memref<8x8x128xf32, #tpu.memory_space<vmem>>, vector<1x8x128xf32>,
    %c7_609 = arith.constant 7 : index
    %c0_610 = arith.constant 0 : index
    %c0_611 = arith.constant 0 : index
    %1165 = vector.load %arg8[%c7_609, %c0_610, %c0_611] : memref<8x8x512xf32, #tpu.memory_space<vmem>>, vector<1x8x512xf32>
    %1166 = vector.shape_cast %1165 : vector<1x8x512xf32> to vector<8x512xf32>
    %c0_612 = arith.constant 0 : index
    %c0_613 = arith.constant 0 : index
    %1167 = vector.load %arg5[%c0_612, %c0_613] : memref<8x128xf32, #tpu.memory_space<vmem>>, vector<8x128xf32>
    %cst_614 = arith.constant dense<0.000000e+00> : vector<8x512xf32>
    %1168 = tpu.matmul %1167, %912, %cst_614 {dimension_numbers = #tpu.dot_dimension_numbers<[1], [0], [0], [1], [0, 0, 1, 1], [], []>} : vector<8x128xf32>, vector<128x512xf32>, vector<8x512xf32> -> vector<8x512xf32>
    %1169 = arith.addf %1166, %1168 : vector<8x512xf32>
    %1170 = vector.extract_strided_slice %1169 {offsets = [0, 0], sizes = [8, 128], strides = [1, 1]} : vector<8x512xf32> to vector<8x128xf32>
    %1171 = arith.negf %1170 : vector<8x128xf32>
    %1172 = math.exp %1171 : vector<8x128xf32>
    %cst_615 = arith.constant 1.000000e+00 : f32
    %1173 = vector.broadcast %cst_615 : f32 to vector<8x128xf32>
    %1174 = arith.addf %1173, %1172 : vector<8x128xf32>
    %1175 = arith.divf %1173, %1174 : vector<8x128xf32>
    %1176 = vector.extract_strided_slice %1169 {offsets = [0, 128], sizes = [8, 128], strides = [1, 1]} : vector<8x512xf32> to vector<8x128xf32>
    %1177 = arith.negf %1176 : vector<8x128xf32>
    %1178 = math.exp %1177 : vector<8x128xf32>
    %cst_616 = arith.constant 1.000000e+00 : f32
    %1179 = vector.broadcast %cst_616 : f32 to vector<8x128xf32>
    %1180 = arith.addf %1179, %1178 : vector<8x128xf32>
    %1181 = arith.divf %1179, %1180 : vector<8x128xf32>
    %1182 = vector.extract_strided_slice %1169 {offsets = [0, 256], sizes = [8, 128], strides = [1, 1]} : vector<8x512xf32> to vector<8x128xf32>
    %1183 = math.tanh %1182 : vector<8x128xf32>
    %1184 = vector.extract_strided_slice %1169 {offsets = [0, 384], sizes = [8, 128], strides = [1, 1]} : vector<8x512xf32> to vector<8x128xf32>
    %1185 = arith.negf %1184 : vector<8x128xf32>
    %1186 = math.exp %1185 : vector<8x128xf32>
    %cst_617 = arith.constant 1.000000e+00 : f32
    %1187 = vector.broadcast %cst_617 : f32 to vector<8x128xf32>
    %1188 = arith.addf %1187, %1186 : vector<8x128xf32>
    %1189 = arith.divf %1187, %1188 : vector<8x128xf32>
    %c0_618 = arith.constant 0 : index
    %c0_619 = arith.constant 0 : index
    %1190 = vector.load %arg6[%c0_618, %c0_619] : memref<8x128xf32, #tpu.memory_space<vmem>>, vector<8x128xf32>
    %1191 = arith.mulf %1181, %1190 : vector<8x128xf32>
    %1192 = arith.mulf %1175, %1183 : vector<8x128xf32>
    %1193 = arith.addf %1191, %1192 : vector<8x128xf32>
    %1194 = math.tanh %1193 : vector<8x128xf32>
    %1195 = arith.mulf %1189, %1194 : vector<8x128xf32>
    %c0_620 = arith.constant 0 : index
    %c0_621 = arith.constant 0 : index
    %1196 = vector.load %arg6[%c0_620, %c0_621] : memref<8x128xf32, #tpu.memory_space<vmem>>, vector<8x128xf32>
    tpu.vector_store %arg6[%c0_620, %c0_621], %1193 {strides = array<i32>} : memref<8x128xf32, #tpu.memory_space<vmem>>, vector<8x128xf32>,
    %c0_622 = arith.constant 0 : index
    %c0_623 = arith.constant 0 : index
    %1197 = vector.load %arg5[%c0_622, %c0_623] : memref<8x128xf32, #tpu.memory_space<vmem>>, vector<8x128xf32>
    tpu.vector_store %arg5[%c0_622, %c0_623], %1195 {strides = array<i32>} : memref<8x128xf32, #tpu.memory_space<vmem>>, vector<8x128xf32>,
    %c7_624 = arith.constant 7 : index
    %c0_625 = arith.constant 0 : index
    %c0_626 = arith.constant 0 : index
    %1198 = vector.load %arg4[%c7_624, %c0_625, %c0_626] : memref<8x8x128xf32, #tpu.memory_space<vmem>>, vector<1x8x128xf32>
    %1199 = vector.shape_cast %1198 : vector<1x8x128xf32> to vector<8x128xf32>
    %1200 = vector.shape_cast %1195 : vector<8x128xf32> to vector<1x8x128xf32>
    tpu.vector_store %arg4[%c7_624, %c0_625, %c0_626], %1200 {strides = array<i32>} : memref<8x8x128xf32, #tpu.memory_space<vmem>>, vector<1x8x128xf32>,
    return
  }
}

</mosaic_0001>

<llo_original>
// kernel: lstm_autoencoder_forward.1
$region0: #{lstm_autoencoder_forward.1}
  #allocation0 [shape = 'u32[]', space=smem, size = 0x4, offset = 0x4, fixed_abs, tag = 'smem constant byte address 0x4 - core index']
  #allocation1 [shape = 'u32[144,128]{1,0:T(1,128)}', space=vmem, size = 0x12000, scoped, tag = 'internal scratch']
  #allocation2 [shape = 'f32[8,128]{1,0:T(8,128)}', space=vmem, size = 0x1000, scoped, tag = 'scratch operand']
  #allocation3 [shape = 'f32[8,128]{1,0:T(8,128)}', space=vmem, size = 0x1000, scoped, tag = 'scratch operand']
  #allocation4 [shape = 'f32[8,8,128]{2,1,0:T(8,128)}', space=vmem, size = 0x8000, scoped, tag = 'scratch operand']
  #allocation5 [shape = 'f32[8,8,512]{2,1,0:T(8,128)}', space=vmem, size = 0x20000, scoped, tag = 'scratch operand']
  %s0 = inlined_call_operand.vmem [shape: f32[8,8,128], index: 0, kind: input, shape index: {}]
  %s1 = inlined_call_operand.vmem [shape: f32[4,128,512], index: 1, kind: input, shape index: {}]
  %s2 = inlined_call_operand.vmem [shape: f32[4,128,512], index: 2, kind: input, shape index: {}]
  %s3 = inlined_call_operand.vmem [shape: f32[4,1,512], index: 3, kind: input, shape index: {}]
  %s4 = inlined_call_operand.vmem [shape: f32[8,8,128], index: 4, kind: output, shape index: {}]
  %s5 = sld [smem:[#allocation0]]
  $region26: #{lstm_autoencoder_forward.1} parent=0
    _
  %s7 = ssub.s32 1, %s5
  %s8 = scalar_select 0, %s7, %s5
  // Predicated region
  $region2: #{lstm_autoencoder_forward.1} parent=0 // pred_check
    _
  $region3: #{lstm_autoencoder_forward.1} parent=0 // pred_check_branch
    %10 = sbr.rel (0) target = $region5
  $region4: #{lstm_autoencoder_forward.1} parent=0 // pred_region
    _
  $region5: #{lstm_autoencoder_forward.1} parent=0 // pred_fallthru
    _
  // Predicated region
  $region6: #{lstm_autoencoder_forward.1} parent=0 // pred_check
    _
  $region7: #{lstm_autoencoder_forward.1} parent=0 // pred_check_branch
    %12 = sbr.rel (0) target = $region9
  $region8: #{lstm_autoencoder_forward.1} parent=0 // pred_region
    _
  $region9: #{lstm_autoencoder_forward.1} parent=0 // pred_fallthru
    _
  // Predicated region
  $region10: #{lstm_autoencoder_forward.1} parent=0 // pred_check
    _
  $region11: #{lstm_autoencoder_forward.1} parent=0 // pred_check_branch
    %14 = sbr.rel (0) target = $region13
  $region12: #{lstm_autoencoder_forward.1} parent=0 // pred_region
    _
  $region13: #{lstm_autoencoder_forward.1} parent=0 // pred_fallthru
    _
  // Predicated region
  $region14: #{lstm_autoencoder_forward.1} parent=0 // pred_check
    _
  $region15: #{lstm_autoencoder_forward.1} parent=0 // pred_check_branch
    %16 = sbr.rel (0) target = $region17
  $region16: #{lstm_autoencoder_forward.1} parent=0 // pred_region
    _
  $region17: #{lstm_autoencoder_forward.1} parent=0 // pred_fallthru
    _
  %v17 = vld [vmem:[%s0] sm:$0xff]
  %v18 = vld [vmem:[%s0 + $0x8] sm:$0xff]
  %v19 = vld [vmem:[%s0 + $0x10] sm:$0xff]
  %v20 = vld [vmem:[%s0 + $0x18] sm:$0xff]
  %v21 = vld [vmem:[%s0 + $0x20] sm:$0xff]
  %v22 = vld [vmem:[%s0 + $0x28] sm:$0xff]
  %v23 = vld [vmem:[%s0 + $0x30] sm:$0xff]
  %v24 = vld [vmem:[%s0 + $0x38] sm:$0xff]
  %v25 = vld [vmem:[%s1] sm:$0xff]
  %v26 = vld [vmem:[%s1 + $0x8] sm:$0xff]
  %v27 = vld [vmem:[%s1 + $0x10] sm:$0xff]
  %v28 = vld [vmem:[%s1 + $0x18] sm:$0xff]
  %v29 = vld [vmem:[%s1 + $0x20] sm:$0xff]
  %v30 = vld [vmem:[%s1 + $0x28] sm:$0xff]
  %v31 = vld [vmem:[%s1 + $0x30] sm:$0xff]
  %v32 = vld [vmem:[%s1 + $0x38] sm:$0xff]
  %v33 = vld [vmem:[%s1 + $0x40] sm:$0xff]
  %v34 = vld [vmem:[%s1 + $0x48] sm:$0xff]
  %v35 = vld [vmem:[%s1 + $0x50] sm:$0xff]
  %v36 = vld [vmem:[%s1 + $0x58] sm:$0xff]
  %v37 = vld [vmem:[%s1 + $0x60] sm:$0xff]
  %v38 = vld [vmem:[%s1 + $0x68] sm:$0xff]
  %v39 = vld [vmem:[%s1 + $0x70] sm:$0xff]
  %v40 = vld [vmem:[%s1 + $0x78] sm:$0xff]
  %v41 = vld [vmem:[%s1 + $0x80] sm:$0xff]
  %v42 = vld [vmem:[%s1 + $0x88] sm:$0xff]
  %v43 = vld [vmem:[%s1 + $0x90] sm:$0xff]
  %v44 = vld [vmem:[%s1 + $0x98] sm:$0xff]
  %v45 = vld [vmem:[%s1 + $0xa0] sm:$0xff]
  %v46 = vld [vmem:[%s1 + $0xa8] sm:$0xff]
  %v47 = vld [vmem:[%s1 + $0xb0] sm:$0xff]
  %v48 = vld [vmem:[%s1 + $0xb8] sm:$0xff]
  %v49 = vld [vmem:[%s1 + $0xc0] sm:$0xff]
  %v50 = vld [vmem:[%s1 + $0xc8] sm:$0xff]
  %v51 = vld [vmem:[%s1 + $0xd0] sm:$0xff]
  %v52 = vld [vmem:[%s1 + $0xd8] sm:$0xff]
  %v53 = vld [vmem:[%s1 + $0xe0] sm:$0xff]
  %v54 = vld [vmem:[%s1 + $0xe8] sm:$0xff]
  %v55 = vld [vmem:[%s1 + $0xf0] sm:$0xff]
  %v56 = vld [vmem:[%s1 + $0xf8] sm:$0xff]
  %v57 = vld [vmem:[%s1 + $0x100] sm:$0xff]
  %v58 = vld [vmem:[%s1 + $0x108] sm:$0xff]
  %v59 = vld [vmem:[%s1 + $0x110] sm:$0xff]
  %v60 = vld [vmem:[%s1 + $0x118] sm:$0xff]
  %v61 = vld [vmem:[%s1 + $0x120] sm:$0xff]
  %v62 = vld [vmem:[%s1 + $0x128] sm:$0xff]
  %v63 = vld [vmem:[%s1 + $0x130] sm:$0xff]
  %v64 = vld [vmem:[%s1 + $0x138] sm:$0xff]
  %v65 = vld [vmem:[%s1 + $0x140] sm:$0xff]
  %v66 = vld [vmem:[%s1 + $0x148] sm:$0xff]
  %v67 = vld [vmem:[%s1 + $0x150] sm:$0xff]
  %v68 = vld [vmem:[%s1 + $0x158] sm:$0xff]
  %v69 = vld [vmem:[%s1 + $0x160] sm:$0xff]
  %v70 = vld [vmem:[%s1 + $0x168] sm:$0xff]
  %v71 = vld [vmem:[%s1 + $0x170] sm:$0xff]
  %v72 = vld [vmem:[%s1 + $0x178] sm:$0xff]
  %v73 = vld [vmem:[%s1 + $0x180] sm:$0xff]
  %v74 = vld [vmem:[%s1 + $0x188] sm:$0xff]
  %v75 = vld [vmem:[%s1 + $0x190] sm:$0xff]
  %v76 = vld [vmem:[%s1 + $0x198] sm:$0xff]
  %v77 = vld [vmem:[%s1 + $0x1a0] sm:$0xff]
  %v78 = vld [vmem:[%s1 + $0x1a8] sm:$0xff]
  %v79 = vld [vmem:[%s1 + $0x1b0] sm:$0xff]
  %v80 = vld [vmem:[%s1 + $0x1b8] sm:$0xff]
  %v81 = vld [vmem:[%s1 + $0x1c0] sm:$0xff]
  %v82 = vld [vmem:[%s1 + $0x1c8] sm:$0xff]
  %v83 = vld [vmem:[%s1 + $0x1d0] sm:$0xff]
  %v84 = vld [vmem:[%s1 + $0x1d8] sm:$0xff]
  %v85 = vld [vmem:[%s1 + $0x1e0] sm:$0xff]
  %v86 = vld [vmem:[%s1 + $0x1e8] sm:$0xff]
  %v87 = vld [vmem:[%s1 + $0x1f0] sm:$0xff]
  %v88 = vld [vmem:[%s1 + $0x1f8] sm:$0xff]
  %v89 = vld [vmem:[%s3] sm:$0xf]
  %v91 = vlaneseq
  %v92 = vshrl.u32 %v91, 7
  %v93 = vsub.s32 0, %v92
  %v94 = vrot.slane %v89, %v93
  %v95 = vlaneseq
  %v96 = vshrl.u32 %v95, 7
  %v97 = vsub.s32 1, %v96
  %v98 = vrot.slane %v89, %v97
  %v99 = vlaneseq
  %v100 = vshrl.u32 %v99, 7
  %v101 = vsub.s32 2, %v100
  %v102 = vrot.slane %v89, %v101
  %v103 = vlaneseq
  %v104 = vshrl.u32 %v103, 7
  %v105 = vsub.s32 3, %v104
  %v106 = vrot.slane %v89, %v105
  %111 = vmatprep.subr.mxu0 %v86
  %112 = vmatpush1.msra.mxu0 %v85
  %113 = vmatprep.subr.mxu0 %v82
  %114 = vmatpush1.msra.mxu0 %v81
  %115 = vmatprep.subr.mxu0 %v78
  %116 = vmatpush1.msra.mxu0 %v77
  %117 = vmatprep.subr.mxu0 %v74
  %118 = vmatpush1.msra.mxu0 %v73
  %119 = vmatprep.subr.mxu0 %v70
  %120 = vmatpush1.msra.mxu0 %v69
  %121 = vmatprep.subr.mxu0 %v66
  %122 = vmatpush1.msra.mxu0 %v65
  %123 = vmatprep.subr.mxu0 %v62
  %124 = vmatpush1.msra.mxu0 %v61
  %125 = vmatprep.subr.mxu0 %v58
  %126 = vmatpush1.msra.mxu0 %v57
  %127 = vmatprep.subr.mxu0 %v54
  %128 = vmatpush1.msra.mxu0 %v53
  %129 = vmatprep.subr.mxu0 %v50
  %130 = vmatpush1.msra.mxu0 %v49
  %131 = vmatprep.subr.mxu0 %v46
  %132 = vmatpush1.msra.mxu0 %v45
  %133 = vmatprep.subr.mxu0 %v42
  %134 = vmatpush1.msra.mxu0 %v41
  %135 = vmatprep.subr.mxu0 %v38
  %136 = vmatpush1.msra.mxu0 %v37
  %137 = vmatprep.subr.mxu0 %v34
  %138 = vmatpush1.msra.mxu0 %v33
  %139 = vmatprep.subr.mxu0 %v30
  %140 = vmatpush1.msra.mxu0 %v29
  %141 = vmatprep.subr.mxu0 %v26
  %142 = vmatpush1.msra.mxu0 %v25
  %143 = vmatprep.subr.mxu0 0.0
  %144 = vmatpush2.msra.mxu0 0.0
  %145 = vmatprep.subr.mxu0 0.0
  %146 = vmatpush2.msra.mxu0 0.0
  %147 = vmatprep.subr.mxu0 0.0
  %148 = vmatpush2.msra.mxu0 0.0
  %149 = vmatprep.subr.mxu0 0.0
  %150 = vmatpush2.msra.mxu0 0.0
  %151 = vmatprep.subr.mxu0 0.0
  %152 = vmatpush2.msra.mxu0 0.0
  %153 = vmatprep.subr.mxu0 0.0
  %154 = vmatpush2.msra.mxu0 0.0
  %155 = vmatprep.subr.mxu0 0.0
  %156 = vmatpush2.msra.mxu0 0.0
  %157 = vmatprep.subr.mxu0 0.0
  %158 = vmatpush2.msra.mxu0 0.0
  %159 = vmatprep.subr.mxu0 0.0
  %160 = vmatpush2.msra.mxu0 0.0
  %161 = vmatprep.subr.mxu0 0.0
  %162 = vmatpush2.msra.mxu0 0.0
  %163 = vmatprep.subr.mxu0 0.0
  %164 = vmatpush2.msra.mxu0 0.0
  %165 = vmatprep.subr.mxu0 0.0
  %166 = vmatpush2.msra.mxu0 0.0
  %167 = vmatprep.subr.mxu0 0.0
  %168 = vmatpush2.msra.mxu0 0.0
  %169 = vmatprep.subr.mxu0 0.0
  %170 = vmatpush2.msra.mxu0 0.0
  %171 = vmatprep.subr.mxu0 0.0
  %172 = vmatpush2.msra.mxu0 0.0
  %173 = vmatprep.subr.mxu0 0.0
  %174 = vmatpush2.msra.mxu0 0.0
  %175 = vmatprep.mubr.f32.mxu0 0.0
  %176 = vmatmul.mubr.f32.gmra.mxu0 %v17
  %v177 = vpop.f32.mrf.mxu0
  %v178 = vadd.f32 %v94, %v177
  %v179 = vpop.f32.mrf.mxu0
  %v180 = vadd.f32 %v98, %v179
  %181 = vmatprep.mubr.f32.mxu0 0.0
  %182 = vmatmul.mubr.f32.gmra.mxu0 %v18
  %v183 = vpop.f32.mrf.mxu0
  %v184 = vadd.f32 %v94, %v183
  %v185 = vpop.f32.mrf.mxu0
  %v186 = vadd.f32 %v98, %v185
  %187 = vmatprep.mubr.f32.mxu0 0.0
  %188 = vmatmul.mubr.f32.gmra.mxu0 %v19
  %v189 = vpop.f32.mrf.mxu0
  %v190 = vadd.f32 %v94, %v189
  %v191 = vpop.f32.mrf.mxu0
  %v192 = vadd.f32 %v98, %v191
  %193 = vmatprep.mubr.f32.mxu0 0.0
  %194 = vmatmul.mubr.f32.gmra.mxu0 %v20
  %v195 = vpop.f32.mrf.mxu0
  %v196 = vadd.f32 %v94, %v195
  %v197 = vpop.f32.mrf.mxu0
  %v198 = vadd.f32 %v98, %v197
  %199 = vmatprep.mubr.f32.mxu0 0.0
  %200 = vmatmul.mubr.f32.gmra.mxu0 %v21
  %v201 = vpop.f32.mrf.mxu0
  %v202 = vadd.f32 %v94, %v201
  %v203 = vpop.f32.mrf.mxu0
  %v204 = vadd.f32 %v98, %v203
  %205 = vmatprep.mubr.f32.mxu0 0.0
  %206 = vmatmul.mubr.f32.gmra.mxu0 %v22
  %v207 = vpop.f32.mrf.mxu0
  %v208 = vadd.f32 %v94, %v207
  %v209 = vpop.f32.mrf.mxu0
  %v210 = vadd.f32 %v98, %v209
  %211 = vmatprep.mubr.f32.mxu0 0.0
  %212 = vmatmul.mubr.f32.gmra.mxu0 %v23
  %v213 = vpop.f32.mrf.mxu0
  %v214 = vadd.f32 %v94, %v213
  %v215 = vpop.f32.mrf.mxu0
  %v216 = vadd.f32 %v98, %v215
  %217 = vmatprep.mubr.f32.mxu0 0.0
  %218 = vmatmul.mubr.f32.gmra.mxu0 %v24
  %v219 = vpop.f32.mrf.mxu0
  %v220 = vadd.f32 %v94, %v219
  %v221 = vpop.f32.mrf.mxu0
  %v222 = vadd.f32 %v98, %v221
  %223 = vdwg.mxu0
  %224 = vmatprep.subr.mxu0 %v88
  %225 = vmatpush1.msra.mxu0 %v87
  %226 = vmatprep.subr.mxu0 %v84
  %227 = vmatpush1.msra.mxu0 %v83
  %228 = vmatprep.subr.mxu0 %v80
  %229 = vmatpush1.msra.mxu0 %v79
  %230 = vmatprep.subr.mxu0 %v76
  %231 = vmatpush1.msra.mxu0 %v75
  %232 = vmatprep.subr.mxu0 %v72
  %233 = vmatpush1.msra.mxu0 %v71
  %234 = vmatprep.subr.mxu0 %v68
  %235 = vmatpush1.msra.mxu0 %v67
  %236 = vmatprep.subr.mxu0 %v64
  %237 = vmatpush1.msra.mxu0 %v63
  %238 = vmatprep.subr.mxu0 %v60
  %239 = vmatpush1.msra.mxu0 %v59
  %240 = vmatprep.subr.mxu0 %v56
  %241 = vmatpush1.msra.mxu0 %v55
  %242 = vmatprep.subr.mxu0 %v52
  %243 = vmatpush1.msra.mxu0 %v51
  %244 = vmatprep.subr.mxu0 %v48
  %245 = vmatpush1.msra.mxu0 %v47
  %246 = vmatprep.subr.mxu0 %v44
  %247 = vmatpush1.msra.mxu0 %v43
  %248 = vmatprep.subr.mxu0 %v40
  %249 = vmatpush1.msra.mxu0 %v39
  %250 = vmatprep.subr.mxu0 %v36
  %251 = vmatpush1.msra.mxu0 %v35
  %252 = vmatprep.subr.mxu0 %v32
  %253 = vmatpush1.msra.mxu0 %v31
  %254 = vmatprep.subr.mxu0 %v28
  %255 = vmatpush1.msra.mxu0 %v27
  %256 = vmatprep.subr.mxu0 0.0
  %257 = vmatpush2.msra.mxu0 0.0
  %258 = vmatprep.subr.mxu0 0.0
  %259 = vmatpush2.msra.mxu0 0.0
  %260 = vmatprep.subr.mxu0 0.0
  %261 = vmatpush2.msra.mxu0 0.0
  %262 = vmatprep.subr.mxu0 0.0
  %263 = vmatpush2.msra.mxu0 0.0
  %264 = vmatprep.subr.mxu0 0.0
  %265 = vmatpush2.msra.mxu0 0.0
  %266 = vmatprep.subr.mxu0 0.0
  %267 = vmatpush2.msra.mxu0 0.0
  %268 = vmatprep.subr.mxu0 0.0
  %269 = vmatpush2.msra.mxu0 0.0
  %270 = vmatprep.subr.mxu0 0.0
  %271 = vmatpush2.msra.mxu0 0.0
  %272 = vmatprep.subr.mxu0 0.0
  %273 = vmatpush2.msra.mxu0 0.0
  %274 = vmatprep.subr.mxu0 0.0
  %275 = vmatpush2.msra.mxu0 0.0
  %276 = vmatprep.subr.mxu0 0.0
  %277 = vmatpush2.msra.mxu0 0.0
  %278 = vmatprep.subr.mxu0 0.0
  %279 = vmatpush2.msra.mxu0 0.0
  %280 = vmatprep.subr.mxu0 0.0
  %281 = vmatpush2.msra.mxu0 0.0
  %282 = vmatprep.subr.mxu0 0.0
  %283 = vmatpush2.msra.mxu0 0.0
  %284 = vmatprep.subr.mxu0 0.0
  %285 = vmatpush2.msra.mxu0 0.0
  %286 = vmatprep.subr.mxu0 0.0
  %287 = vmatpush2.msra.mxu0 0.0
  %288 = vmatprep.mubr.f32.mxu0 0.0
  %289 = vmatmul.mubr.f32.gmra.mxu0 %v17
  %v290 = vpop.f32.mrf.mxu0
  %v291 = vadd.f32 %v102, %v290
  %v292 = vpop.f32.mrf.mxu0
  %v293 = vadd.f32 %v106, %v292
  %294 = vmatprep.mubr.f32.mxu0 0.0
  %295 = vmatmul.mubr.f32.gmra.mxu0 %v18
  %v296 = vpop.f32.mrf.mxu0
  %v297 = vadd.f32 %v102, %v296
  %v298 = vpop.f32.mrf.mxu0
  %v299 = vadd.f32 %v106, %v298
  %300 = vmatprep.mubr.f32.mxu0 0.0
  %301 = vmatmul.mubr.f32.gmra.mxu0 %v19
  %v302 = vpop.f32.mrf.mxu0
  %v303 = vadd.f32 %v102, %v302
  %v304 = vpop.f32.mrf.mxu0
  %v305 = vadd.f32 %v106, %v304
  %306 = vmatprep.mubr.f32.mxu0 0.0
  %307 = vmatmul.mubr.f32.gmra.mxu0 %v20
  %v308 = vpop.f32.mrf.mxu0
  %v309 = vadd.f32 %v102, %v308
  %v310 = vpop.f32.mrf.mxu0
  %v311 = vadd.f32 %v106, %v310
  %312 = vmatprep.mubr.f32.mxu0 0.0
  %313 = vmatmul.mubr.f32.gmra.mxu0 %v21
  %v314 = vpop.f32.mrf.mxu0
  %v315 = vadd.f32 %v102, %v314
  %v316 = vpop.f32.mrf.mxu0
  %v317 = vadd.f32 %v106, %v316
  %318 = vmatprep.mubr.f32.mxu0 0.0
  %319 = vmatmul.mubr.f32.gmra.mxu0 %v22
  %v320 = vpop.f32.mrf.mxu0
  %v321 = vadd.f32 %v102, %v320
  %v322 = vpop.f32.mrf.mxu0
  %v323 = vadd.f32 %v106, %v322
  %324 = vmatprep.mubr.f32.mxu0 0.0
  %325 = vmatmul.mubr.f32.gmra.mxu0 %v23
  %v326 = vpop.f32.mrf.mxu0
  %v327 = vadd.f32 %v102, %v326
  %v328 = vpop.f32.mrf.mxu0
  %v329 = vadd.f32 %v106, %v328
  %330 = vmatprep.mubr.f32.mxu0 0.0
  %331 = vmatmul.mubr.f32.gmra.mxu0 %v24
  %v332 = vpop.f32.mrf.mxu0
  %v333 = vadd.f32 %v102, %v332
  %v334 = vpop.f32.mrf.mxu0
  %v335 = vadd.f32 %v106, %v334
  %336 = vdwg.mxu0
  %337 = vst [vmem:[#allocation5] sm:$0xff] %v178
  %338 = vst [vmem:[#allocation5 + $0x8] sm:$0xff] %v180
  %339 = vst [vmem:[#allocation5 + $0x10] sm:$0xff] %v291
  %340 = vst [vmem:[#allocation5 + $0x18] sm:$0xff] %v293
  %341 = vst [vmem:[#allocation5 + $0x20] sm:$0xff] %v184
  %342 = vst [vmem:[#allocation5 + $0x28] sm:$0xff] %v186
  %343 = vst [vmem:[#allocation5 + $0x30] sm:$0xff] %v297
  %344 = vst [vmem:[#allocation5 + $0x38] sm:$0xff] %v299
  %345 = vst [vmem:[#allocation5 + $0x40] sm:$0xff] %v190
  %346 = vst [vmem:[#allocation5 + $0x48] sm:$0xff] %v192
  %347 = vst [vmem:[#allocation5 + $0x50] sm:$0xff] %v303
  %348 = vst [vmem:[#allocation5 + $0x58] sm:$0xff] %v305
  %349 = vst [vmem:[#allocation5 + $0x60] sm:$0xff] %v196
  %350 = vst [vmem:[#allocation5 + $0x68] sm:$0xff] %v198
  %351 = vst [vmem:[#allocation5 + $0x70] sm:$0xff] %v309
  %352 = vst [vmem:[#allocation5 + $0x78] sm:$0xff] %v311
  %353 = vst [vmem:[#allocation5 + $0x80] sm:$0xff] %v202
  %354 = vst [vmem:[#allocation5 + $0x88] sm:$0xff] %v204
  %355 = vst [vmem:[#allocation5 + $0x90] sm:$0xff] %v315
  %356 = vst [vmem:[#allocation5 + $0x98] sm:$0xff] %v317
  %357 = vst [vmem:[#allocation5 + $0xa0] sm:$0xff] %v208
  %358 = vst [vmem:[#allocation5 + $0xa8] sm:$0xff] %v210
  %359 = vst [vmem:[#allocation5 + $0xb0] sm:$0xff] %v321
  %360 = vst [vmem:[#allocation5 + $0xb8] sm:$0xff] %v323
  %361 = vst [vmem:[#allocation5 + $0xc0] sm:$0xff] %v214
  %362 = vst [vmem:[#allocation5 + $0xc8] sm:$0xff] %v216
  %363 = vst [vmem:[#allocation5 + $0xd0] sm:$0xff] %v327
  %364 = vst [vmem:[#allocation5 + $0xd8] sm:$0xff] %v329
  %365 = vst [vmem:[#allocation5 + $0xe0] sm:$0xff] %v220
  %366 = vst [vmem:[#allocation5 + $0xe8] sm:$0xff] %v222
  %367 = vst [vmem:[#allocation5 + $0xf0] sm:$0xff] %v333
  %368 = vst [vmem:[#allocation5 + $0xf8] sm:$0xff] %v335
  %369 = vst [vmem:[#allocation2] sm:$0xff] 0.0
  %370 = vst [vmem:[#allocation3] sm:$0xff] 0.0
  %v371 = vld [vmem:[%s2] sm:$0xff]
  %v372 = vld [vmem:[%s2 + $0x8] sm:$0xff]
  %v373 = vld [vmem:[%s2 + $0x10] sm:$0xff]
  %v374 = vld [vmem:[%s2 + $0x18] sm:$0xff]
  %v375 = vld [vmem:[%s2 + $0x20] sm:$0xff]
  %v376 = vld [vmem:[%s2 + $0x28] sm:$0xff]
  %v377 = vld [vmem:[%s2 + $0x30] sm:$0xff]
  %v378 = vld [vmem:[%s2 + $0x38] sm:$0xff]
  %v379 = vld [vmem:[%s2 + $0x40] sm:$0xff]
  %v380 = vld [vmem:[%s2 + $0x48] sm:$0xff]
  %v381 = vld [vmem:[%s2 + $0x50] sm:$0xff]
  %v382 = vld [vmem:[%s2 + $0x58] sm:$0xff]
  %v383 = vld [vmem:[%s2 + $0x60] sm:$0xff]
  %v384 = vld [vmem:[%s2 + $0x68] sm:$0xff]
  %v385 = vld [vmem:[%s2 + $0x70] sm:$0xff]
  %v386 = vld [vmem:[%s2 + $0x78] sm:$0xff]
  %v387 = vld [vmem:[%s2 + $0x80] sm:$0xff]
  %v388 = vld [vmem:[%s2 + $0x88] sm:$0xff]
  %v389 = vld [vmem:[%s2 + $0x90] sm:$0xff]
  %v390 = vld [vmem:[%s2 + $0x98] sm:$0xff]
  %v391 = vld [vmem:[%s2 + $0xa0] sm:$0xff]
  %v392 = vld [vmem:[%s2 + $0xa8] sm:$0xff]
  %v393 = vld [vmem:[%s2 + $0xb0] sm:$0xff]
  %v394 = vld [vmem:[%s2 + $0xb8] sm:$0xff]
  %v395 = vld [vmem:[%s2 + $0xc0] sm:$0xff]
  %v396 = vld [vmem:[%s2 + $0xc8] sm:$0xff]
  %v397 = vld [vmem:[%s2 + $0xd0] sm:$0xff]
  %v398 = vld [vmem:[%s2 + $0xd8] sm:$0xff]
  %v399 = vld [vmem:[%s2 + $0xe0] sm:$0xff]
  %v400 = vld [vmem:[%s2 + $0xe8] sm:$0xff]
  %v401 = vld [vmem:[%s2 + $0xf0] sm:$0xff]
  %v402 = vld [vmem:[%s2 + $0xf8] sm:$0xff]
  %v403 = vld [vmem:[%s2 + $0x100] sm:$0xff]
  %v404 = vld [vmem:[%s2 + $0x108] sm:$0xff]
  %v405 = vld [vmem:[%s2 + $0x110] sm:$0xff]
  %v406 = vld [vmem:[%s2 + $0x118] sm:$0xff]
  %v407 = vld [vmem:[%s2 + $0x120] sm:$0xff]
  %v408 = vld [vmem:[%s2 + $0x128] sm:$0xff]
  %v409 = vld [vmem:[%s2 + $0x130] sm:$0xff]
  %v410 = vld [vmem:[%s2 + $0x138] sm:$0xff]
  %v411 = vld [vmem:[%s2 + $0x140] sm:$0xff]
  %v412 = vld [vmem:[%s2 + $0x148] sm:$0xff]
  %v413 = vld [vmem:[%s2 + $0x150] sm:$0xff]
  %v414 = vld [vmem:[%s2 + $0x158] sm:$0xff]
  %v415 = vld [vmem:[%s2 + $0x160] sm:$0xff]
  %v416 = vld [vmem:[%s2 + $0x168] sm:$0xff]
  %v417 = vld [vmem:[%s2 + $0x170] sm:$0xff]
  %v418 = vld [vmem:[%s2 + $0x178] sm:$0xff]
  %v419 = vld [vmem:[%s2 + $0x180] sm:$0xff]
  %v420 = vld [vmem:[%s2 + $0x188] sm:$0xff]
  %v421 = vld [vmem:[%s2 + $0x190] sm:$0xff]
  %v422 = vld [vmem:[%s2 + $0x198] sm:$0xff]
  %v423 = vld [vmem:[%s2 + $0x1a0] sm:$0xff]
  %v424 = vld [vmem:[%s2 + $0x1a8] sm:$0xff]
  %v425 = vld [vmem:[%s2 + $0x1b0] sm:$0xff]
  %v426 = vld [vmem:[%s2 + $0x1b8] sm:$0xff]
  %v427 = vld [vmem:[%s2 + $0x1c0] sm:$0xff]
  %v428 = vld [vmem:[%s2 + $0x1c8] sm:$0xff]
  %v429 = vld [vmem:[%s2 + $0x1d0] sm:$0xff]
  %v430 = vld [vmem:[%s2 + $0x1d8] sm:$0xff]
  %v431 = vld [vmem:[%s2 + $0x1e0] sm:$0xff]
  %v432 = vld [vmem:[%s2 + $0x1e8] sm:$0xff]
  %v433 = vld [vmem:[%s2 + $0x1f0] sm:$0xff]
  %v434 = vld [vmem:[%s2 + $0x1f8] sm:$0xff]
  %v435 = vld [vmem:[#allocation5] sm:$0xff]
  %v436 = vld [vmem:[#allocation5 + $0x8] sm:$0xff]
  %v437 = vld [vmem:[#allocation5 + $0x10] sm:$0xff]
  %v438 = vld [vmem:[#allocation5 + $0x18] sm:$0xff]
  %v439 = vld [vmem:[#allocation2] sm:$0xff]
  %440 = vmatprep.subr.mxu0 %v432
  %441 = vmatpush1.msra.mxu0 %v431
  %442 = vmatprep.subr.mxu0 %v428
  %443 = vmatpush1.msra.mxu0 %v427
  %444 = vmatprep.subr.mxu0 %v424
  %445 = vmatpush1.msra.mxu0 %v423
  %446 = vmatprep.subr.mxu0 %v420
  %447 = vmatpush1.msra.mxu0 %v419
  %448 = vmatprep.subr.mxu0 %v416
  %449 = vmatpush1.msra.mxu0 %v415
  %450 = vmatprep.subr.mxu0 %v412
  %451 = vmatpush1.msra.mxu0 %v411
  %452 = vmatprep.subr.mxu0 %v408
  %453 = vmatpush1.msra.mxu0 %v407
  %454 = vmatprep.subr.mxu0 %v404
  %455 = vmatpush1.msra.mxu0 %v403
  %456 = vmatprep.subr.mxu0 %v400
  %457 = vmatpush1.msra.mxu0 %v399
  %458 = vmatprep.subr.mxu0 %v396
  %459 = vmatpush1.msra.mxu0 %v395
  %460 = vmatprep.subr.mxu0 %v392
  %461 = vmatpush1.msra.mxu0 %v391
  %462 = vmatprep.subr.mxu0 %v388
  %463 = vmatpush1.msra.mxu0 %v387
  %464 = vmatprep.subr.mxu0 %v384
  %465 = vmatpush1.msra.mxu0 %v383
  %466 = vmatprep.subr.mxu0 %v380
  %467 = vmatpush1.msra.mxu0 %v379
  %468 = vmatprep.subr.mxu0 %v376
  %469 = vmatpush1.msra.mxu0 %v375
  %470 = vmatprep.subr.mxu0 %v372
  %471 = vmatpush1.msra.mxu0 %v371
  %472 = vmatprep.subr.mxu0 0.0
  %473 = vmatpush2.msra.mxu0 0.0
  %474 = vmatprep.subr.mxu0 0.0
  %475 = vmatpush2.msra.mxu0 0.0
  %476 = vmatprep.subr.mxu0 0.0
  %477 = vmatpush2.msra.mxu0 0.0
  %478 = vmatprep.subr.mxu0 0.0
  %479 = vmatpush2.msra.mxu0 0.0
  %480 = vmatprep.subr.mxu0 0.0
  %481 = vmatpush2.msra.mxu0 0.0
  %482 = vmatprep.subr.mxu0 0.0
  %483 = vmatpush2.msra.mxu0 0.0
  %484 = vmatprep.subr.mxu0 0.0
  %485 = vmatpush2.msra.mxu0 0.0
  %486 = vmatprep.subr.mxu0 0.0
  %487 = vmatpush2.msra.mxu0 0.0
  %488 = vmatprep.subr.mxu0 0.0
  %489 = vmatpush2.msra.mxu0 0.0
  %490 = vmatprep.subr.mxu0 0.0
  %491 = vmatpush2.msra.mxu0 0.0
  %492 = vmatprep.subr.mxu0 0.0
  %493 = vmatpush2.msra.mxu0 0.0
  %494 = vmatprep.subr.mxu0 0.0
  %495 = vmatpush2.msra.mxu0 0.0
  %496 = vmatprep.subr.mxu0 0.0
  %497 = vmatpush2.msra.mxu0 0.0
  %498 = vmatprep.subr.mxu0 0.0
  %499 = vmatpush2.msra.mxu0 0.0
  %500 = vmatprep.subr.mxu0 0.0
  %501 = vmatpush2.msra.mxu0 0.0
  %502 = vmatprep.subr.mxu0 0.0
  %503 = vmatpush2.msra.mxu0 0.0
  %504 = vmatprep.mubr.f32.mxu0 0.0
  %505 = vmatmul.mubr.f32.gmra.mxu0 %v439
  %v506 = vpop.f32.mrf.mxu0
  %v507 = vadd.f32 0.0, %v506
  %v508 = vpop.f32.mrf.mxu0
  %v509 = vadd.f32 0.0, %v508
  %510 = vdwg.mxu0
  %511 = vmatprep.subr.mxu0 %v434
  %512 = vmatpush1.msra.mxu0 %v433
  %513 = vmatprep.subr.mxu0 %v430
  %514 = vmatpush1.msra.mxu0 %v429
  %515 = vmatprep.subr.mxu0 %v426
  %516 = vmatpush1.msra.mxu0 %v425
  %517 = vmatprep.subr.mxu0 %v422
  %518 = vmatpush1.msra.mxu0 %v421
  %519 = vmatprep.subr.mxu0 %v418
  %520 = vmatpush1.msra.mxu0 %v417
  %521 = vmatprep.subr.mxu0 %v414
  %522 = vmatpush1.msra.mxu0 %v413
  %523 = vmatprep.subr.mxu0 %v410
  %524 = vmatpush1.msra.mxu0 %v409
  %525 = vmatprep.subr.mxu0 %v406
  %526 = vmatpush1.msra.mxu0 %v405
  %527 = vmatprep.subr.mxu0 %v402
  %528 = vmatpush1.msra.mxu0 %v401
  %529 = vmatprep.subr.mxu0 %v398
  %530 = vmatpush1.msra.mxu0 %v397
  %531 = vmatprep.subr.mxu0 %v394
  %532 = vmatpush1.msra.mxu0 %v393
  %533 = vmatprep.subr.mxu0 %v390
  %534 = vmatpush1.msra.mxu0 %v389
  %535 = vmatprep.subr.mxu0 %v386
  %536 = vmatpush1.msra.mxu0 %v385
  %537 = vmatprep.subr.mxu0 %v382
  %538 = vmatpush1.msra.mxu0 %v381
  %539 = vmatprep.subr.mxu0 %v378
  %540 = vmatpush1.msra.mxu0 %v377
  %541 = vmatprep.subr.mxu0 %v374
  %542 = vmatpush1.msra.mxu0 %v373
  %543 = vmatprep.subr.mxu0 0.0
  %544 = vmatpush2.msra.mxu0 0.0
  %545 = vmatprep.subr.mxu0 0.0
  %546 = vmatpush2.msra.mxu0 0.0
  %547 = vmatprep.subr.mxu0 0.0
  %548 = vmatpush2.msra.mxu0 0.0
  %549 = vmatprep.subr.mxu0 0.0
  %550 = vmatpush2.msra.mxu0 0.0
  %551 = vmatprep.subr.mxu0 0.0
  %552 = vmatpush2.msra.mxu0 0.0
  %553 = vmatprep.subr.mxu0 0.0
  %554 = vmatpush2.msra.mxu0 0.0
  %555 = vmatprep.subr.mxu0 0.0
  %556 = vmatpush2.msra.mxu0 0.0
  %557 = vmatprep.subr.mxu0 0.0
  %558 = vmatpush2.msra.mxu0 0.0
  %559 = vmatprep.subr.mxu0 0.0
  %560 = vmatpush2.msra.mxu0 0.0
  %561 = vmatprep.subr.mxu0 0.0
  %562 = vmatpush2.msra.mxu0 0.0
  %563 = vmatprep.subr.mxu0 0.0
  %564 = vmatpush2.msra.mxu0 0.0
  %565 = vmatprep.subr.mxu0 0.0
  %566 = vmatpush2.msra.mxu0 0.0
  %567 = vmatprep.subr.mxu0 0.0
  %568 = vmatpush2.msra.mxu0 0.0
  %569 = vmatprep.subr.mxu0 0.0
  %570 = vmatpush2.msra.mxu0 0.0
  %571 = vmatprep.subr.mxu0 0.0
  %572 = vmatpush2.msra.mxu0 0.0
  %573 = vmatprep.subr.mxu0 0.0
  %574 = vmatpush2.msra.mxu0 0.0
  %575 = vmatprep.mubr.f32.mxu0 0.0
  %576 = vmatmul.mubr.f32.gmra.mxu0 %v439
  %v577 = vpop.f32.mrf.mxu0
  %v578 = vadd.f32 0.0, %v577
  %v579 = vpop.f32.mrf.mxu0
  %v580 = vadd.f32 0.0, %v579
  %581 = vdwg.mxu0
  %v582 = vadd.f32 %v435, %v507
  %v583 = vadd.f32 %v436, %v509
  %v584 = vadd.f32 %v437, %v578
  %v585 = vadd.f32 %v438, %v580
  %v586 = vxor.u32 %v582, 2147483648
  %v587 = vmul.f32 %v586, 1.442695
  %v588 = vpow.pop %v587
  %v589 = vadd.f32 %v588, 1.0
  %v590 = vrcp.pop %v589
  %v591 = vmul.f32 1.0, %v590
  %v592 = vxor.u32 %v583, 2147483648
  %v593 = vmul.f32 %v592, 1.442695
  %v594 = vpow.pop %v593
  %v595 = vadd.f32 %v594, 1.0
  %v596 = vrcp.pop %v595
  %v597 = vmul.f32 1.0, %v596
  %v598 = vtanh.pop %v584
  %v599 = vxor.u32 %v585, 2147483648
  %v600 = vmul.f32 %v599, 1.442695
  %v601 = vpow.pop %v600
  %v602 = vadd.f32 %v601, 1.0
  %v603 = vrcp.pop %v602
  %v604 = vmul.f32 1.0, %v603
  %v605 = vld [vmem:[#allocation3] sm:$0xff]
  %v606 = vmul.f32 %v597, %v605
  %v607 = vmul.f32 %v591, %v598
  %v608 = vadd.f32 %v606, %v607
  %v609 = vtanh.pop %v608
  %v610 = vmul.f32 %v604, %v609
  %611 = vst [vmem:[#allocation3] sm:$0xff] %v608
  %612 = vst [vmem:[#allocation2] sm:$0xff] %v610
  %613 = vst [vmem:[#allocation4] sm:$0xff] %v610
  %s614 = scalar_lea.vmem [#allocation5], 32
  %v615 = vld [vmem:[%s614] sm:$0xff]
  %v616 = vld [vmem:[%s614 + $0x8] sm:$0xff]
  %v617 = vld [vmem:[%s614 + $0x10] sm:$0xff]
  %v618 = vld [vmem:[%s614 + $0x18] sm:$0xff]
  %v619 = vld [vmem:[#allocation2] sm:$0xff]
  %620 = vmatprep.subr.mxu0 %v432
  %621 = vmatpush1.msra.mxu0 %v431
  %622 = vmatprep.subr.mxu0 %v428
  %623 = vmatpush1.msra.mxu0 %v427
  %624 = vmatprep.subr.mxu0 %v424
  %625 = vmatpush1.msra.mxu0 %v423
  %626 = vmatprep.subr.mxu0 %v420
  %627 = vmatpush1.msra.mxu0 %v419
  %628 = vmatprep.subr.mxu0 %v416
  %629 = vmatpush1.msra.mxu0 %v415
  %630 = vmatprep.subr.mxu0 %v412
  %631 = vmatpush1.msra.mxu0 %v411
  %632 = vmatprep.subr.mxu0 %v408
  %633 = vmatpush1.msra.mxu0 %v407
  %634 = vmatprep.subr.mxu0 %v404
  %635 = vmatpush1.msra.mxu0 %v403
  %636 = vmatprep.subr.mxu0 %v400
  %637 = vmatpush1.msra.mxu0 %v399
  %638 = vmatprep.subr.mxu0 %v396
  %639 = vmatpush1.msra.mxu0 %v395
  %640 = vmatprep.subr.mxu0 %v392
  %641 = vmatpush1.msra.mxu0 %v391
  %642 = vmatprep.subr.mxu0 %v388
  %643 = vmatpush1.msra.mxu0 %v387
  %644 = vmatprep.subr.mxu0 %v384
  %645 = vmatpush1.msra.mxu0 %v383
  %646 = vmatprep.subr.mxu0 %v380
  %647 = vmatpush1.msra.mxu0 %v379
  %648 = vmatprep.subr.mxu0 %v376
  %649 = vmatpush1.msra.mxu0 %v375
  %650 = vmatprep.subr.mxu0 %v372
  %651 = vmatpush1.msra.mxu0 %v371
  %652 = vmatprep.subr.mxu0 0.0
  %653 = vmatpush2.msra.mxu0 0.0
  %654 = vmatprep.subr.mxu0 0.0
  %655 = vmatpush2.msra.mxu0 0.0
  %656 = vmatprep.subr.mxu0 0.0
  %657 = vmatpush2.msra.mxu0 0.0
  %658 = vmatprep.subr.mxu0 0.0
  %659 = vmatpush2.msra.mxu0 0.0
  %660 = vmatprep.subr.mxu0 0.0
  %661 = vmatpush2.msra.mxu0 0.0
  %662 = vmatprep.subr.mxu0 0.0
  %663 = vmatpush2.msra.mxu0 0.0
  %664 = vmatprep.subr.mxu0 0.0
  %665 = vmatpush2.msra.mxu0 0.0
  %666 = vmatprep.subr.mxu0 0.0
  %667 = vmatpush2.msra.mxu0 0.0
  %668 = vmatprep.subr.mxu0 0.0
  %669 = vmatpush2.msra.mxu0 0.0
  %670 = vmatprep.subr.mxu0 0.0
  %671 = vmatpush2.msra.mxu0 0.0
  %672 = vmatprep.subr.mxu0 0.0
  %673 = vmatpush2.msra.mxu0 0.0
  %674 = vmatprep.subr.mxu0 0.0
  %675 = vmatpush2.msra.mxu0 0.0
  %676 = vmatprep.subr.mxu0 0.0
  %677 = vmatpush2.msra.mxu0 0.0
  %678 = vmatprep.subr.mxu0 0.0
  %679 = vmatpush2.msra.mxu0 0.0
  %680 = vmatprep.subr.mxu0 0.0
  %681 = vmatpush2.msra.mxu0 0.0
  %682 = vmatprep.subr.mxu0 0.0
  %683 = vmatpush2.msra.mxu0 0.0
  %684 = vmatprep.mubr.f32.mxu0 0.0
  %685 = vmatmul.mubr.f32.gmra.mxu0 %v619
  %v686 = vpop.f32.mrf.mxu0
  %v687 = vadd.f32 0.0, %v686
  %v688 = vpop.f32.mrf.mxu0
  %v689 = vadd.f32 0.0, %v688
  %690 = vdwg.mxu0
  %691 = vmatprep.subr.mxu0 %v434
  %692 = vmatpush1.msra.mxu0 %v433
  %693 = vmatprep.subr.mxu0 %v430
  %694 = vmatpush1.msra.mxu0 %v429
  %695 = vmatprep.subr.mxu0 %v426
  %696 = vmatpush1.msra.mxu0 %v425
  %697 = vmatprep.subr.mxu0 %v422
  %698 = vmatpush1.msra.mxu0 %v421
  %699 = vmatprep.subr.mxu0 %v418
  %700 = vmatpush1.msra.mxu0 %v417
  %701 = vmatprep.subr.mxu0 %v414
  %702 = vmatpush1.msra.mxu0 %v413
  %703 = vmatprep.subr.mxu0 %v410
  %704 = vmatpush1.msra.mxu0 %v409
  %705 = vmatprep.subr.mxu0 %v406
  %706 = vmatpush1.msra.mxu0 %v405
  %707 = vmatprep.subr.mxu0 %v402
  %708 = vmatpush1.msra.mxu0 %v401
  %709 = vmatprep.subr.mxu0 %v398
  %710 = vmatpush1.msra.mxu0 %v397
  %711 = vmatprep.subr.mxu0 %v394
  %712 = vmatpush1.msra.mxu0 %v393
  %713 = vmatprep.subr.mxu0 %v390
  %714 = vmatpush1.msra.mxu0 %v389
  %715 = vmatprep.subr.mxu0 %v386
  %716 = vmatpush1.msra.mxu0 %v385
  %717 = vmatprep.subr.mxu0 %v382
  %718 = vmatpush1.msra.mxu0 %v381
  %719 = vmatprep.subr.mxu0 %v378
  %720 = vmatpush1.msra.mxu0 %v377
  %721 = vmatprep.subr.mxu0 %v374
  %722 = vmatpush1.msra.mxu0 %v373
  %723 = vmatprep.subr.mxu0 0.0
  %724 = vmatpush2.msra.mxu0 0.0
  %725 = vmatprep.subr.mxu0 0.0
  %726 = vmatpush2.msra.mxu0 0.0
  %727 = vmatprep.subr.mxu0 0.0
  %728 = vmatpush2.msra.mxu0 0.0
  %729 = vmatprep.subr.mxu0 0.0
  %730 = vmatpush2.msra.mxu0 0.0
  %731 = vmatprep.subr.mxu0 0.0
  %732 = vmatpush2.msra.mxu0 0.0
  %733 = vmatprep.subr.mxu0 0.0
  %734 = vmatpush2.msra.mxu0 0.0
  %735 = vmatprep.subr.mxu0 0.0
  %736 = vmatpush2.msra.mxu0 0.0
  %737 = vmatprep.subr.mxu0 0.0
  %738 = vmatpush2.msra.mxu0 0.0
  %739 = vmatprep.subr.mxu0 0.0
  %740 = vmatpush2.msra.mxu0 0.0
  %741 = vmatprep.subr.mxu0 0.0
  %742 = vmatpush2.msra.mxu0 0.0
  %743 = vmatprep.subr.mxu0 0.0
  %744 = vmatpush2.msra.mxu0 0.0
  %745 = vmatprep.subr.mxu0 0.0
  %746 = vmatpush2.msra.mxu0 0.0
  %747 = vmatprep.subr.mxu0 0.0
  %748 = vmatpush2.msra.mxu0 0.0
  %749 = vmatprep.subr.mxu0 0.0
  %750 = vmatpush2.msra.mxu0 0.0
  %751 = vmatprep.subr.mxu0 0.0
  %752 = vmatpush2.msra.mxu0 0.0
  %753 = vmatprep.subr.mxu0 0.0
  %754 = vmatpush2.msra.mxu0 0.0
  %755 = vmatprep.mubr.f32.mxu0 0.0
  %756 = vmatmul.mubr.f32.gmra.mxu0 %v619
  %v757 = vpop.f32.mrf.mxu0
  %v758 = vadd.f32 0.0, %v757
  %v759 = vpop.f32.mrf.mxu0
  %v760 = vadd.f32 0.0, %v759
  %761 = vdwg.mxu0
  %v762 = vadd.f32 %v615, %v687
  %v763 = vadd.f32 %v616, %v689
  %v764 = vadd.f32 %v617, %v758
  %v765 = vadd.f32 %v618, %v760
  %v766 = vxor.u32 %v762, 2147483648
  %v767 = vmul.f32 %v766, 1.442695
  %v768 = vpow.pop %v767
  %v769 = vadd.f32 %v768, 1.0
  %v770 = vrcp.pop %v769
  %v771 = vmul.f32 1.0, %v770
  %v772 = vxor.u32 %v763, 2147483648
  %v773 = vmul.f32 %v772, 1.442695
  %v774 = vpow.pop %v773
  %v775 = vadd.f32 %v774, 1.0
  %v776 = vrcp.pop %v775
  %v777 = vmul.f32 1.0, %v776
  %v778 = vtanh.pop %v764
  %v779 = vxor.u32 %v765, 2147483648
  %v780 = vmul.f32 %v779, 1.442695
  %v781 = vpow.pop %v780
  %v782 = vadd.f32 %v781, 1.0
  %v783 = vrcp.pop %v782
  %v784 = vmul.f32 1.0, %v783
  %v785 = vld [vmem:[#allocation3] sm:$0xff]
  %v786 = vmul.f32 %v777, %v785
  %v787 = vmul.f32 %v771, %v778
  %v788 = vadd.f32 %v786, %v787
  %v789 = vtanh.pop %v788
  %v790 = vmul.f32 %v784, %v789
  %791 = vst [vmem:[#allocation3] sm:$0xff] %v788
  %792 = vst [vmem:[#allocation2] sm:$0xff] %v790
  %s793 = scalar_lea.vmem [#allocation4], 8
  %794 = vst [vmem:[%s793] sm:$0xff] %v790
  %s795 = scalar_lea.vmem [#allocation5], 64
  %v796 = vld [vmem:[%s795] sm:$0xff]
  %v797 = vld [vmem:[%s795 + $0x8] sm:$0xff]
  %v798 = vld [vmem:[%s795 + $0x10] sm:$0xff]
  %v799 = vld [vmem:[%s795 + $0x18] sm:$0xff]
  %v800 = vld [vmem:[#allocation2] sm:$0xff]
  %801 = vmatprep.subr.mxu0 %v432
  %802 = vmatpush1.msra.mxu0 %v431
  %803 = vmatprep.subr.mxu0 %v428
  %804 = vmatpush1.msra.mxu0 %v427
  %805 = vmatprep.subr.mxu0 %v424
  %806 = vmatpush1.msra.mxu0 %v423
  %807 = vmatprep.subr.mxu0 %v420
  %808 = vmatpush1.msra.mxu0 %v419
  %809 = vmatprep.subr.mxu0 %v416
  %810 = vmatpush1.msra.mxu0 %v415
  %811 = vmatprep.subr.mxu0 %v412
  %812 = vmatpush1.msra.mxu0 %v411
  %813 = vmatprep.subr.mxu0 %v408
  %814 = vmatpush1.msra.mxu0 %v407
  %815 = vmatprep.subr.mxu0 %v404
  %816 = vmatpush1.msra.mxu0 %v403
  %817 = vmatprep.subr.mxu0 %v400
  %818 = vmatpush1.msra.mxu0 %v399
  %819 = vmatprep.subr.mxu0 %v396
  %820 = vmatpush1.msra.mxu0 %v395
  %821 = vmatprep.subr.mxu0 %v392
  %822 = vmatpush1.msra.mxu0 %v391
  %823 = vmatprep.subr.mxu0 %v388
  %824 = vmatpush1.msra.mxu0 %v387
  %825 = vmatprep.subr.mxu0 %v384
  %826 = vmatpush1.msra.mxu0 %v383
  %827 = vmatprep.subr.mxu0 %v380
  %828 = vmatpush1.msra.mxu0 %v379
  %829 = vmatprep.subr.mxu0 %v376
  %830 = vmatpush1.msra.mxu0 %v375
  %831 = vmatprep.subr.mxu0 %v372
  %832 = vmatpush1.msra.mxu0 %v371
  %833 = vmatprep.subr.mxu0 0.0
  %834 = vmatpush2.msra.mxu0 0.0
  %835 = vmatprep.subr.mxu0 0.0
  %836 = vmatpush2.msra.mxu0 0.0
  %837 = vmatprep.subr.mxu0 0.0
  %838 = vmatpush2.msra.mxu0 0.0
  %839 = vmatprep.subr.mxu0 0.0
  %840 = vmatpush2.msra.mxu0 0.0
  %841 = vmatprep.subr.mxu0 0.0
  %842 = vmatpush2.msra.mxu0 0.0
  %843 = vmatprep.subr.mxu0 0.0
  %844 = vmatpush2.msra.mxu0 0.0
  %845 = vmatprep.subr.mxu0 0.0
  %846 = vmatpush2.msra.mxu0 0.0
  %847 = vmatprep.subr.mxu0 0.0
  %848 = vmatpush2.msra.mxu0 0.0
  %849 = vmatprep.subr.mxu0 0.0
  %850 = vmatpush2.msra.mxu0 0.0
  %851 = vmatprep.subr.mxu0 0.0
  %852 = vmatpush2.msra.mxu0 0.0
  %853 = vmatprep.subr.mxu0 0.0
  %854 = vmatpush2.msra.mxu0 0.0
  %855 = vmatprep.subr.mxu0 0.0
  %856 = vmatpush2.msra.mxu0 0.0
  %857 = vmatprep.subr.mxu0 0.0
  %858 = vmatpush2.msra.mxu0 0.0
  %859 = vmatprep.subr.mxu0 0.0
  %860 = vmatpush2.msra.mxu0 0.0
  %861 = vmatprep.subr.mxu0 0.0
  %862 = vmatpush2.msra.mxu0 0.0
  %863 = vmatprep.subr.mxu0 0.0
  %864 = vmatpush2.msra.mxu0 0.0
  %865 = vmatprep.mubr.f32.mxu0 0.0
  %866 = vmatmul.mubr.f32.gmra.mxu0 %v800
  %v867 = vpop.f32.mrf.mxu0
  %v868 = vadd.f32 0.0, %v867
  %v869 = vpop.f32.mrf.mxu0
  %v870 = vadd.f32 0.0, %v869
  %871 = vdwg.mxu0
  %872 = vmatprep.subr.mxu0 %v434
  %873 = vmatpush1.msra.mxu0 %v433
  %874 = vmatprep.subr.mxu0 %v430
  %875 = vmatpush1.msra.mxu0 %v429
  %876 = vmatprep.subr.mxu0 %v426
  %877 = vmatpush1.msra.mxu0 %v425
  %878 = vmatprep.subr.mxu0 %v422
  %879 = vmatpush1.msra.mxu0 %v421
  %880 = vmatprep.subr.mxu0 %v418
  %881 = vmatpush1.msra.mxu0 %v417
  %882 = vmatprep.subr.mxu0 %v414
  %883 = vmatpush1.msra.mxu0 %v413
  %884 = vmatprep.subr.mxu0 %v410
  %885 = vmatpush1.msra.mxu0 %v409
  %886 = vmatprep.subr.mxu0 %v406
  %887 = vmatpush1.msra.mxu0 %v405
  %888 = vmatprep.subr.mxu0 %v402
  %889 = vmatpush1.msra.mxu0 %v401
  %890 = vmatprep.subr.mxu0 %v398
  %891 = vmatpush1.msra.mxu0 %v397
  %892 = vmatprep.subr.mxu0 %v394
  %893 = vmatpush1.msra.mxu0 %v393
  %894 = vmatprep.subr.mxu0 %v390
  %895 = vmatpush1.msra.mxu0 %v389
  %896 = vmatprep.subr.mxu0 %v386
  %897 = vmatpush1.msra.mxu0 %v385
  %898 = vmatprep.subr.mxu0 %v382
  %899 = vmatpush1.msra.mxu0 %v381
  %900 = vmatprep.subr.mxu0 %v378
  %901 = vmatpush1.msra.mxu0 %v377
  %902 = vmatprep.subr.mxu0 %v374
  %903 = vmatpush1.msra.mxu0 %v373
  %904 = vmatprep.subr.mxu0 0.0
  %905 = vmatpush2.msra.mxu0 0.0
  %906 = vmatprep.subr.mxu0 0.0
  %907 = vmatpush2.msra.mxu0 0.0
  %908 = vmatprep.subr.mxu0 0.0
  %909 = vmatpush2.msra.mxu0 0.0
  %910 = vmatprep.subr.mxu0 0.0
  %911 = vmatpush2.msra.mxu0 0.0
  %912 = vmatprep.subr.mxu0 0.0
  %913 = vmatpush2.msra.mxu0 0.0
  %914 = vmatprep.subr.mxu0 0.0
  %915 = vmatpush2.msra.mxu0 0.0
  %916 = vmatprep.subr.mxu0 0.0
  %917 = vmatpush2.msra.mxu0 0.0
  %918 = vmatprep.subr.mxu0 0.0
  %919 = vmatpush2.msra.mxu0 0.0
  %920 = vmatprep.subr.mxu0 0.0
  %921 = vmatpush2.msra.mxu0 0.0
  %922 = vmatprep.subr.mxu0 0.0
  %923 = vmatpush2.msra.mxu0 0.0
  %924 = vmatprep.subr.mxu0 0.0
  %925 = vmatpush2.msra.mxu0 0.0
  %926 = vmatprep.subr.mxu0 0.0
  %927 = vmatpush2.msra.mxu0 0.0
  %928 = vmatprep.subr.mxu0 0.0
  %929 = vmatpush2.msra.mxu0 0.0
  %930 = vmatprep.subr.mxu0 0.0
  %931 = vmatpush2.msra.mxu0 0.0
  %932 = vmatprep.subr.mxu0 0.0
  %933 = vmatpush2.msra.mxu0 0.0
  %934 = vmatprep.subr.mxu0 0.0
  %935 = vmatpush2.msra.mxu0 0.0
  %936 = vmatprep.mubr.f32.mxu0 0.0
  %937 = vmatmul.mubr.f32.gmra.mxu0 %v800
  %v938 = vpop.f32.mrf.mxu0
  %v939 = vadd.f32 0.0, %v938
  %v940 = vpop.f32.mrf.mxu0
  %v941 = vadd.f32 0.0, %v940
  %942 = vdwg.mxu0
  %v943 = vadd.f32 %v796, %v868
  %v944 = vadd.f32 %v797, %v870
  %v945 = vadd.f32 %v798, %v939
  %v946 = vadd.f32 %v799, %v941
  %v947 = vxor.u32 %v943, 2147483648
  %v948 = vmul.f32 %v947, 1.442695
  %v949 = vpow.pop %v948
  %v950 = vadd.f32 %v949, 1.0
  %v951 = vrcp.pop %v950
  %v952 = vmul.f32 1.0, %v951
  %v953 = vxor.u32 %v944, 2147483648
  %v954 = vmul.f32 %v953, 1.442695
  %v955 = vpow.pop %v954
  %v956 = vadd.f32 %v955, 1.0
  %v957 = vrcp.pop %v956
  %v958 = vmul.f32 1.0, %v957
  %v959 = vtanh.pop %v945
  %v960 = vxor.u32 %v946, 2147483648
  %v961 = vmul.f32 %v960, 1.442695
  %v962 = vpow.pop %v961
  %v963 = vadd.f32 %v962, 1.0
  %v964 = vrcp.pop %v963
  %v965 = vmul.f32 1.0, %v964
  %v966 = vld [vmem:[#allocation3] sm:$0xff]
  %v967 = vmul.f32 %v958, %v966
  %v968 = vmul.f32 %v952, %v959
  %v969 = vadd.f32 %v967, %v968
  %v970 = vtanh.pop %v969
  %v971 = vmul.f32 %v965, %v970
  %972 = vst [vmem:[#allocation3] sm:$0xff] %v969
  %973 = vst [vmem:[#allocation2] sm:$0xff] %v971
  %s974 = scalar_lea.vmem [#allocation4], 16
  %975 = vst [vmem:[%s974] sm:$0xff] %v971
  %s976 = scalar_lea.vmem [#allocation5], 96
  %v977 = vld [vmem:[%s976] sm:$0xff]
  %v978 = vld [vmem:[%s976 + $0x8] sm:$0xff]
  %v979 = vld [vmem:[%s976 + $0x10] sm:$0xff]
  %v980 = vld [vmem:[%s976 + $0x18] sm:$0xff]
  %v981 = vld [vmem:[#allocation2] sm:$0xff]
  %982 = vmatprep.subr.mxu0 %v432
  %983 = vmatpush1.msra.mxu0 %v431
  %984 = vmatprep.subr.mxu0 %v428
  %985 = vmatpush1.msra.mxu0 %v427
  %986 = vmatprep.subr.mxu0 %v424
  %987 = vmatpush1.msra.mxu0 %v423
  %988 = vmatprep.subr.mxu0 %v420
  %989 = vmatpush1.msra.mxu0 %v419
  %990 = vmatprep.subr.mxu0 %v416
  %991 = vmatpush1.msra.mxu0 %v415
  %992 = vmatprep.subr.mxu0 %v412
  %993 = vmatpush1.msra.mxu0 %v411
  %994 = vmatprep.subr.mxu0 %v408
  %995 = vmatpush1.msra.mxu0 %v407
  %996 = vmatprep.subr.mxu0 %v404
  %997 = vmatpush1.msra.mxu0 %v403
  %998 = vmatprep.subr.mxu0 %v400
  %999 = vmatpush1.msra.mxu0 %v399
  %1000 = vmatprep.subr.mxu0 %v396
  %1001 = vmatpush1.msra.mxu0 %v395
  %1002 = vmatprep.subr.mxu0 %v392
  %1003 = vmatpush1.msra.mxu0 %v391
  %1004 = vmatprep.subr.mxu0 %v388
  %1005 = vmatpush1.msra.mxu0 %v387
  %1006 = vmatprep.subr.mxu0 %v384
  %1007 = vmatpush1.msra.mxu0 %v383
  %1008 = vmatprep.subr.mxu0 %v380
  %1009 = vmatpush1.msra.mxu0 %v379
  %1010 = vmatprep.subr.mxu0 %v376
  %1011 = vmatpush1.msra.mxu0 %v375
  %1012 = vmatprep.subr.mxu0 %v372
  %1013 = vmatpush1.msra.mxu0 %v371
  %1014 = vmatprep.subr.mxu0 0.0
  %1015 = vmatpush2.msra.mxu0 0.0
  %1016 = vmatprep.subr.mxu0 0.0
  %1017 = vmatpush2.msra.mxu0 0.0
  %1018 = vmatprep.subr.mxu0 0.0
  %1019 = vmatpush2.msra.mxu0 0.0
  %1020 = vmatprep.subr.mxu0 0.0
  %1021 = vmatpush2.msra.mxu0 0.0
  %1022 = vmatprep.subr.mxu0 0.0
  %1023 = vmatpush2.msra.mxu0 0.0
  %1024 = vmatprep.subr.mxu0 0.0
  %1025 = vmatpush2.msra.mxu0 0.0
  %1026 = vmatprep.subr.mxu0 0.0
  %1027 = vmatpush2.msra.mxu0 0.0
  %1028 = vmatprep.subr.mxu0 0.0
  %1029 = vmatpush2.msra.mxu0 0.0
  %1030 = vmatprep.subr.mxu0 0.0
  %1031 = vmatpush2.msra.mxu0 0.0
  %1032 = vmatprep.subr.mxu0 0.0
  %1033 = vmatpush2.msra.mxu0 0.0
  %1034 = vmatprep.subr.mxu0 0.0
  %1035 = vmatpush2.msra.mxu0 0.0
  %1036 = vmatprep.subr.mxu0 0.0
  %1037 = vmatpush2.msra.mxu0 0.0
  %1038 = vmatprep.subr.mxu0 0.0
  %1039 = vmatpush2.msra.mxu0 0.0
  %1040 = vmatprep.subr.mxu0 0.0
  %1041 = vmatpush2.msra.mxu0 0.0
  %1042 = vmatprep.subr.mxu0 0.0
  %1043 = vmatpush2.msra.mxu0 0.0
  %1044 = vmatprep.subr.mxu0 0.0
  %1045 = vmatpush2.msra.mxu0 0.0
  %1046 = vmatprep.mubr.f32.mxu0 0.0
  %1047 = vmatmul.mubr.f32.gmra.mxu0 %v981
  %v1048 = vpop.f32.mrf.mxu0
  %v1049 = vadd.f32 0.0, %v1048
  %v1050 = vpop.f32.mrf.mxu0
  %v1051 = vadd.f32 0.0, %v1050
  %1052 = vdwg.mxu0
  %1053 = vmatprep.subr.mxu0 %v434
  %1054 = vmatpush1.msra.mxu0 %v433
  %1055 = vmatprep.subr.mxu0 %v430
  %1056 = vmatpush1.msra.mxu0 %v429
  %1057 = vmatprep.subr.mxu0 %v426
  %1058 = vmatpush1.msra.mxu0 %v425
  %1059 = vmatprep.subr.mxu0 %v422
  %1060 = vmatpush1.msra.mxu0 %v421
  %1061 = vmatprep.subr.mxu0 %v418
  %1062 = vmatpush1.msra.mxu0 %v417
  %1063 = vmatprep.subr.mxu0 %v414
  %1064 = vmatpush1.msra.mxu0 %v413
  %1065 = vmatprep.subr.mxu0 %v410
  %1066 = vmatpush1.msra.mxu0 %v409
  %1067 = vmatprep.subr.mxu0 %v406
  %1068 = vmatpush1.msra.mxu0 %v405
  %1069 = vmatprep.subr.mxu0 %v402
  %1070 = vmatpush1.msra.mxu0 %v401
  %1071 = vmatprep.subr.mxu0 %v398
  %1072 = vmatpush1.msra.mxu0 %v397
  %1073 = vmatprep.subr.mxu0 %v394
  %1074 = vmatpush1.msra.mxu0 %v393
  %1075 = vmatprep.subr.mxu0 %v390
  %1076 = vmatpush1.msra.mxu0 %v389
  %1077 = vmatprep.subr.mxu0 %v386
  %1078 = vmatpush1.msra.mxu0 %v385
  %1079 = vmatprep.subr.mxu0 %v382
  %1080 = vmatpush1.msra.mxu0 %v381
  %1081 = vmatprep.subr.mxu0 %v378
  %1082 = vmatpush1.msra.mxu0 %v377
  %1083 = vmatprep.subr.mxu0 %v374
  %1084 = vmatpush1.msra.mxu0 %v373
  %1085 = vmatprep.subr.mxu0 0.0
  %1086 = vmatpush2.msra.mxu0 0.0
  %1087 = vmatprep.subr.mxu0 0.0
  %1088 = vmatpush2.msra.mxu0 0.0
  %1089 = vmatprep.subr.mxu0 0.0
  %1090 = vmatpush2.msra.mxu0 0.0
  %1091 = vmatprep.subr.mxu0 0.0
  %1092 = vmatpush2.msra.mxu0 0.0
  %1093 = vmatprep.subr.mxu0 0.0
  %1094 = vmatpush2.msra.mxu0 0.0
  %1095 = vmatprep.subr.mxu0 0.0
  %1096 = vmatpush2.msra.mxu0 0.0
  %1097 = vmatprep.subr.mxu0 0.0
  %1098 = vmatpush2.msra.mxu0 0.0
  %1099 = vmatprep.subr.mxu0 0.0
  %1100 = vmatpush2.msra.mxu0 0.0
  %1101 = vmatprep.subr.mxu0 0.0
  %1102 = vmatpush2.msra.mxu0 0.0
  %1103 = vmatprep.subr.mxu0 0.0
  %1104 = vmatpush2.msra.mxu0 0.0
  %1105 = vmatprep.subr.mxu0 0.0
  %1106 = vmatpush2.msra.mxu0 0.0
  %1107 = vmatprep.subr.mxu0 0.0
  %1108 = vmatpush2.msra.mxu0 0.0
  %1109 = vmatprep.subr.mxu0 0.0
  %1110 = vmatpush2.msra.mxu0 0.0
  %1111 = vmatprep.subr.mxu0 0.0
  %1112 = vmatpush2.msra.mxu0 0.0
  %1113 = vmatprep.subr.mxu0 0.0
  %1114 = vmatpush2.msra.mxu0 0.0
  %1115 = vmatprep.subr.mxu0 0.0
  %1116 = vmatpush2.msra.mxu0 0.0
  %1117 = vmatprep.mubr.f32.mxu0 0.0
  %1118 = vmatmul.mubr.f32.gmra.mxu0 %v981
  %v1119 = vpop.f32.mrf.mxu0
  %v1120 = vadd.f32 0.0, %v1119
  %v1121 = vpop.f32.mrf.mxu0
  %v1122 = vadd.f32 0.0, %v1121
  %1123 = vdwg.mxu0
  %v1124 = vadd.f32 %v977, %v1049
  %v1125 = vadd.f32 %v978, %v1051
  %v1126 = vadd.f32 %v979, %v1120
  %v1127 = vadd.f32 %v980, %v1122
  %v1128 = vxor.u32 %v1124, 2147483648
  %v1129 = vmul.f32 %v1128, 1.442695
  %v1130 = vpow.pop %v1129
  %v1131 = vadd.f32 %v1130, 1.0
  %v1132 = vrcp.pop %v1131
  %v1133 = vmul.f32 1.0, %v1132
  %v1134 = vxor.u32 %v1125, 2147483648
  %v1135 = vmul.f32 %v1134, 1.442695
  %v1136 = vpow.pop %v1135
  %v1137 = vadd.f32 %v1136, 1.0
  %v1138 = vrcp.pop %v1137
  %v1139 = vmul.f32 1.0, %v1138
  %v1140 = vtanh.pop %v1126
  %v1141 = vxor.u32 %v1127, 2147483648
  %v1142 = vmul.f32 %v1141, 1.442695
  %v1143 = vpow.pop %v1142
  %v1144 = vadd.f32 %v1143, 1.0
  %v1145 = vrcp.pop %v1144
  %v1146 = vmul.f32 1.0, %v1145
  %v1147 = vld [vmem:[#allocation3] sm:$0xff]
  %v1148 = vmul.f32 %v1139, %v1147
  %v1149 = vmul.f32 %v1133, %v1140
  %v1150 = vadd.f32 %v1148, %v1149
  %v1151 = vtanh.pop %v1150
  %v1152 = vmul.f32 %v1146, %v1151
  %1153 = vst [vmem:[#allocation3] sm:$0xff] %v1150
  %1154 = vst [vmem:[#allocation2] sm:$0xff] %v1152
  %s1155 = scalar_lea.vmem [#allocation4], 24
  %1156 = vst [vmem:[%s1155] sm:$0xff] %v1152
  %s1157 = scalar_lea.vmem [#allocation5], 128
  %v1158 = vld [vmem:[%s1157] sm:$0xff]
  %v1159 = vld [vmem:[%s1157 + $0x8] sm:$0xff]
  %v1160 = vld [vmem:[%s1157 + $0x10] sm:$0xff]
  %v1161 = vld [vmem:[%s1157 + $0x18] sm:$0xff]
  %v1162 = vld [vmem:[#allocation2] sm:$0xff]
  %1163 = vmatprep.subr.mxu0 %v432
  %1164 = vmatpush1.msra.mxu0 %v431
  %1165 = vmatprep.subr.mxu0 %v428
  %1166 = vmatpush1.msra.mxu0 %v427
  %1167 = vmatprep.subr.mxu0 %v424
  %1168 = vmatpush1.msra.mxu0 %v423
  %1169 = vmatprep.subr.mxu0 %v420
  %1170 = vmatpush1.msra.mxu0 %v419
  %1171 = vmatprep.subr.mxu0 %v416
  %1172 = vmatpush1.msra.mxu0 %v415
  %1173 = vmatprep.subr.mxu0 %v412
  %1174 = vmatpush1.msra.mxu0 %v411
  %1175 = vmatprep.subr.mxu0 %v408
  %1176 = vmatpush1.msra.mxu0 %v407
  %1177 = vmatprep.subr.mxu0 %v404
  %1178 = vmatpush1.msra.mxu0 %v403
  %1179 = vmatprep.subr.mxu0 %v400
  %1180 = vmatpush1.msra.mxu0 %v399
  %1181 = vmatprep.subr.mxu0 %v396
  %1182 = vmatpush1.msra.mxu0 %v395
  %1183 = vmatprep.subr.mxu0 %v392
  %1184 = vmatpush1.msra.mxu0 %v391
  %1185 = vmatprep.subr.mxu0 %v388
  %1186 = vmatpush1.msra.mxu0 %v387
  %1187 = vmatprep.subr.mxu0 %v384
  %1188 = vmatpush1.msra.mxu0 %v383
  %1189 = vmatprep.subr.mxu0 %v380
  %1190 = vmatpush1.msra.mxu0 %v379
  %1191 = vmatprep.subr.mxu0 %v376
  %1192 = vmatpush1.msra.mxu0 %v375
  %1193 = vmatprep.subr.mxu0 %v372
  %1194 = vmatpush1.msra.mxu0 %v371
  %1195 = vmatprep.subr.mxu0 0.0
  %1196 = vmatpush2.msra.mxu0 0.0
  %1197 = vmatprep.subr.mxu0 0.0
  %1198 = vmatpush2.msra.mxu0 0.0
  %1199 = vmatprep.subr.mxu0 0.0
  %1200 = vmatpush2.msra.mxu0 0.0
  %1201 = vmatprep.subr.mxu0 0.0
  %1202 = vmatpush2.msra.mxu0 0.0
  %1203 = vmatprep.subr.mxu0 0.0
  %1204 = vmatpush2.msra.mxu0 0.0
  %1205 = vmatprep.subr.mxu0 0.0
  %1206 = vmatpush2.msra.mxu0 0.0
  %1207 = vmatprep.subr.mxu0 0.0
  %1208 = vmatpush2.msra.mxu0 0.0
  %1209 = vmatprep.subr.mxu0 0.0
  %1210 = vmatpush2.msra.mxu0 0.0
  %1211 = vmatprep.subr.mxu0 0.0
  %1212 = vmatpush2.msra.mxu0 0.0
  %1213 = vmatprep.subr.mxu0 0.0
  %1214 = vmatpush2.msra.mxu0 0.0
  %1215 = vmatprep.subr.mxu0 0.0
  %1216 = vmatpush2.msra.mxu0 0.0
  %1217 = vmatprep.subr.mxu0 0.0
  %1218 = vmatpush2.msra.mxu0 0.0
  %1219 = vmatprep.subr.mxu0 0.0
  %1220 = vmatpush2.msra.mxu0 0.0
  %1221 = vmatprep.subr.mxu0 0.0
  %1222 = vmatpush2.msra.mxu0 0.0
  %1223 = vmatprep.subr.mxu0 0.0
  %1224 = vmatpush2.msra.mxu0 0.0
  %1225 = vmatprep.subr.mxu0 0.0
  %1226 = vmatpush2.msra.mxu0 0.0
  %1227 = vmatprep.mubr.f32.mxu0 0.0
  %1228 = vmatmul.mubr.f32.gmra.mxu0 %v1162
  %v1229 = vpop.f32.mrf.mxu0
  %v1230 = vadd.f32 0.0, %v1229
  %v1231 = vpop.f32.mrf.mxu0
  %v1232 = vadd.f32 0.0, %v1231
  %1233 = vdwg.mxu0
  %1234 = vmatprep.subr.mxu0 %v434
  %1235 = vmatpush1.msra.mxu0 %v433
  %1236 = vmatprep.subr.mxu0 %v430
  %1237 = vmatpush1.msra.mxu0 %v429
  %1238 = vmatprep.subr.mxu0 %v426
  %1239 = vmatpush1.msra.mxu0 %v425
  %1240 = vmatprep.subr.mxu0 %v422
  %1241 = vmatpush1.msra.mxu0 %v421
  %1242 = vmatprep.subr.mxu0 %v418
  %1243 = vmatpush1.msra.mxu0 %v417
  %1244 = vmatprep.subr.mxu0 %v414
  %1245 = vmatpush1.msra.mxu0 %v413
  %1246 = vmatprep.subr.mxu0 %v410
  %1247 = vmatpush1.msra.mxu0 %v409
  %1248 = vmatprep.subr.mxu0 %v406
  %1249 = vmatpush1.msra.mxu0 %v405
  %1250 = vmatprep.subr.mxu0 %v402
  %1251 = vmatpush1.msra.mxu0 %v401
  %1252 = vmatprep.subr.mxu0 %v398
  %1253 = vmatpush1.msra.mxu0 %v397
  %1254 = vmatprep.subr.mxu0 %v394
  %1255 = vmatpush1.msra.mxu0 %v393
  %1256 = vmatprep.subr.mxu0 %v390
  %1257 = vmatpush1.msra.mxu0 %v389
  %1258 = vmatprep.subr.mxu0 %v386
  %1259 = vmatpush1.msra.mxu0 %v385
  %1260 = vmatprep.subr.mxu0 %v382
  %1261 = vmatpush1.msra.mxu0 %v381
  %1262 = vmatprep.subr.mxu0 %v378
  %1263 = vmatpush1.msra.mxu0 %v377
  %1264 = vmatprep.subr.mxu0 %v374
  %1265 = vmatpush1.msra.mxu0 %v373
  %1266 = vmatprep.subr.mxu0 0.0
  %1267 = vmatpush2.msra.mxu0 0.0
  %1268 = vmatprep.subr.mxu0 0.0
  %1269 = vmatpush2.msra.mxu0 0.0
  %1270 = vmatprep.subr.mxu0 0.0
  %1271 = vmatpush2.msra.mxu0 0.0
  %1272 = vmatprep.subr.mxu0 0.0
  %1273 = vmatpush2.msra.mxu0 0.0
  %1274 = vmatprep.subr.mxu0 0.0
  %1275 = vmatpush2.msra.mxu0 0.0
  %1276 = vmatprep.subr.mxu0 0.0
  %1277 = vmatpush2.msra.mxu0 0.0
  %1278 = vmatprep.subr.mxu0 0.0
  %1279 = vmatpush2.msra.mxu0 0.0
  %1280 = vmatprep.subr.mxu0 0.0
  %1281 = vmatpush2.msra.mxu0 0.0
  %1282 = vmatprep.subr.mxu0 0.0
  %1283 = vmatpush2.msra.mxu0 0.0
  %1284 = vmatprep.subr.mxu0 0.0
  %1285 = vmatpush2.msra.mxu0 0.0
  %1286 = vmatprep.subr.mxu0 0.0
  %1287 = vmatpush2.msra.mxu0 0.0
  %1288 = vmatprep.subr.mxu0 0.0
  %1289 = vmatpush2.msra.mxu0 0.0
  %1290 = vmatprep.subr.mxu0 0.0
  %1291 = vmatpush2.msra.mxu0 0.0
  %1292 = vmatprep.subr.mxu0 0.0
  %1293 = vmatpush2.msra.mxu0 0.0
  %1294 = vmatprep.subr.mxu0 0.0
  %1295 = vmatpush2.msra.mxu0 0.0
  %1296 = vmatprep.subr.mxu0 0.0
  %1297 = vmatpush2.msra.mxu0 0.0
  %1298 = vmatprep.mubr.f32.mxu0 0.0
  %1299 = vmatmul.mubr.f32.gmra.mxu0 %v1162
  %v1300 = vpop.f32.mrf.mxu0
  %v1301 = vadd.f32 0.0, %v1300
  %v1302 = vpop.f32.mrf.mxu0
  %v1303 = vadd.f32 0.0, %v1302
  %1304 = vdwg.mxu0
  %v1305 = vadd.f32 %v1158, %v1230
  %v1306 = vadd.f32 %v1159, %v1232
  %v1307 = vadd.f32 %v1160, %v1301
  %v1308 = vadd.f32 %v1161, %v1303
  %v1309 = vxor.u32 %v1305, 2147483648
  %v1310 = vmul.f32 %v1309, 1.442695
  %v1311 = vpow.pop %v1310
  %v1312 = vadd.f32 %v1311, 1.0
  %v1313 = vrcp.pop %v1312
  %v1314 = vmul.f32 1.0, %v1313
  %v1315 = vxor.u32 %v1306, 2147483648
  %v1316 = vmul.f32 %v1315, 1.442695
  %v1317 = vpow.pop %v1316
  %v1318 = vadd.f32 %v1317, 1.0
  %v1319 = vrcp.pop %v1318
  %v1320 = vmul.f32 1.0, %v1319
  %v1321 = vtanh.pop %v1307
  %v1322 = vxor.u32 %v1308, 2147483648
  %v1323 = vmul.f32 %v1322, 1.442695
  %v1324 = vpow.pop %v1323
  %v1325 = vadd.f32 %v1324, 1.0
  %v1326 = vrcp.pop %v1325
  %v1327 = vmul.f32 1.0, %v1326
  %v1328 = vld [vmem:[#allocation3] sm:$0xff]
  %v1329 = vmul.f32 %v1320, %v1328
  %v1330 = vmul.f32 %v1314, %v1321
  %v1331 = vadd.f32 %v1329, %v1330
  %v1332 = vtanh.pop %v1331
  %v1333 = vmul.f32 %v1327, %v1332
  %1334 = vst [vmem:[#allocation3] sm:$0xff] %v1331
  %1335 = vst [vmem:[#allocation2] sm:$0xff] %v1333
  %s1336 = scalar_lea.vmem [#allocation4], 32
  %1337 = vst [vmem:[%s1336] sm:$0xff] %v1333
  %s1338 = scalar_lea.vmem [#allocation5], 160
  %v1339 = vld [vmem:[%s1338] sm:$0xff]
  %v1340 = vld [vmem:[%s1338 + $0x8] sm:$0xff]
  %v1341 = vld [vmem:[%s1338 + $0x10] sm:$0xff]
  %v1342 = vld [vmem:[%s1338 + $0x18] sm:$0xff]
  %v1343 = vld [vmem:[#allocation2] sm:$0xff]
  %1344 = vmatprep.subr.mxu0 %v432
  %1345 = vmatpush1.msra.mxu0 %v431
  %1346 = vmatprep.subr.mxu0 %v428
  %1347 = vmatpush1.msra.mxu0 %v427
  %1348 = vmatprep.subr.mxu0 %v424
  %1349 = vmatpush1.msra.mxu0 %v423
  %1350 = vmatprep.subr.mxu0 %v420
  %1351 = vmatpush1.msra.mxu0 %v419
  %1352 = vmatprep.subr.mxu0 %v416
  %1353 = vmatpush1.msra.mxu0 %v415
  %1354 = vmatprep.subr.mxu0 %v412
  %1355 = vmatpush1.msra.mxu0 %v411
  %1356 = vmatprep.subr.mxu0 %v408
  %1357 = vmatpush1.msra.mxu0 %v407
  %1358 = vmatprep.subr.mxu0 %v404
  %1359 = vmatpush1.msra.mxu0 %v403
  %1360 = vmatprep.subr.mxu0 %v400
  %1361 = vmatpush1.msra.mxu0 %v399
  %1362 = vmatprep.subr.mxu0 %v396
  %1363 = vmatpush1.msra.mxu0 %v395
  %1364 = vmatprep.subr.mxu0 %v392
  %1365 = vmatpush1.msra.mxu0 %v391
  %1366 = vmatprep.subr.mxu0 %v388
  %1367 = vmatpush1.msra.mxu0 %v387
  %1368 = vmatprep.subr.mxu0 %v384
  %1369 = vmatpush1.msra.mxu0 %v383
  %1370 = vmatprep.subr.mxu0 %v380
  %1371 = vmatpush1.msra.mxu0 %v379
  %1372 = vmatprep.subr.mxu0 %v376
  %1373 = vmatpush1.msra.mxu0 %v375
  %1374 = vmatprep.subr.mxu0 %v372
  %1375 = vmatpush1.msra.mxu0 %v371
  %1376 = vmatprep.subr.mxu0 0.0
  %1377 = vmatpush2.msra.mxu0 0.0
  %1378 = vmatprep.subr.mxu0 0.0
  %1379 = vmatpush2.msra.mxu0 0.0
  %1380 = vmatprep.subr.mxu0 0.0
  %1381 = vmatpush2.msra.mxu0 0.0
  %1382 = vmatprep.subr.mxu0 0.0
  %1383 = vmatpush2.msra.mxu0 0.0
  %1384 = vmatprep.subr.mxu0 0.0
  %1385 = vmatpush2.msra.mxu0 0.0
  %1386 = vmatprep.subr.mxu0 0.0
  %1387 = vmatpush2.msra.mxu0 0.0
  %1388 = vmatprep.subr.mxu0 0.0
  %1389 = vmatpush2.msra.mxu0 0.0
  %1390 = vmatprep.subr.mxu0 0.0
  %1391 = vmatpush2.msra.mxu0 0.0
  %1392 = vmatprep.subr.mxu0 0.0
  %1393 = vmatpush2.msra.mxu0 0.0
  %1394 = vmatprep.subr.mxu0 0.0
  %1395 = vmatpush2.msra.mxu0 0.0
  %1396 = vmatprep.subr.mxu0 0.0
  %1397 = vmatpush2.msra.mxu0 0.0
  %1398 = vmatprep.subr.mxu0 0.0
  %1399 = vmatpush2.msra.mxu0 0.0
  %1400 = vmatprep.subr.mxu0 0.0
  %1401 = vmatpush2.msra.mxu0 0.0
  %1402 = vmatprep.subr.mxu0 0.0
  %1403 = vmatpush2.msra.mxu0 0.0
  %1404 = vmatprep.subr.mxu0 0.0
  %1405 = vmatpush2.msra.mxu0 0.0
  %1406 = vmatprep.subr.mxu0 0.0
  %1407 = vmatpush2.msra.mxu0 0.0
  %1408 = vmatprep.mubr.f32.mxu0 0.0
  %1409 = vmatmul.mubr.f32.gmra.mxu0 %v1343
  %v1410 = vpop.f32.mrf.mxu0
  %v1411 = vadd.f32 0.0, %v1410
  %v1412 = vpop.f32.mrf.mxu0
  %v1413 = vadd.f32 0.0, %v1412
  %1414 = vdwg.mxu0
  %1415 = vmatprep.subr.mxu0 %v434
  %1416 = vmatpush1.msra.mxu0 %v433
  %1417 = vmatprep.subr.mxu0 %v430
  %1418 = vmatpush1.msra.mxu0 %v429
  %1419 = vmatprep.subr.mxu0 %v426
  %1420 = vmatpush1.msra.mxu0 %v425
  %1421 = vmatprep.subr.mxu0 %v422
  %1422 = vmatpush1.msra.mxu0 %v421
  %1423 = vmatprep.subr.mxu0 %v418
  %1424 = vmatpush1.msra.mxu0 %v417
  %1425 = vmatprep.subr.mxu0 %v414
  %1426 = vmatpush1.msra.mxu0 %v413
  %1427 = vmatprep.subr.mxu0 %v410
  %1428 = vmatpush1.msra.mxu0 %v409
  %1429 = vmatprep.subr.mxu0 %v406
  %1430 = vmatpush1.msra.mxu0 %v405
  %1431 = vmatprep.subr.mxu0 %v402
  %1432 = vmatpush1.msra.mxu0 %v401
  %1433 = vmatprep.subr.mxu0 %v398
  %1434 = vmatpush1.msra.mxu0 %v397
  %1435 = vmatprep.subr.mxu0 %v394
  %1436 = vmatpush1.msra.mxu0 %v393
  %1437 = vmatprep.subr.mxu0 %v390
  %1438 = vmatpush1.msra.mxu0 %v389
  %1439 = vmatprep.subr.mxu0 %v386
  %1440 = vmatpush1.msra.mxu0 %v385
  %1441 = vmatprep.subr.mxu0 %v382
  %1442 = vmatpush1.msra.mxu0 %v381
  %1443 = vmatprep.subr.mxu0 %v378
  %1444 = vmatpush1.msra.mxu0 %v377
  %1445 = vmatprep.subr.mxu0 %v374
  %1446 = vmatpush1.msra.mxu0 %v373
  %1447 = vmatprep.subr.mxu0 0.0
  %1448 = vmatpush2.msra.mxu0 0.0
  %1449 = vmatprep.subr.mxu0 0.0
  %1450 = vmatpush2.msra.mxu0 0.0
  %1451 = vmatprep.subr.mxu0 0.0
  %1452 = vmatpush2.msra.mxu0 0.0
  %1453 = vmatprep.subr.mxu0 0.0
  %1454 = vmatpush2.msra.mxu0 0.0
  %1455 = vmatprep.subr.mxu0 0.0
  %1456 = vmatpush2.msra.mxu0 0.0
  %1457 = vmatprep.subr.mxu0 0.0
  %1458 = vmatpush2.msra.mxu0 0.0
  %1459 = vmatprep.subr.mxu0 0.0
  %1460 = vmatpush2.msra.mxu0 0.0
  %1461 = vmatprep.subr.mxu0 0.0
  %1462 = vmatpush2.msra.mxu0 0.0
  %1463 = vmatprep.subr.mxu0 0.0
  %1464 = vmatpush2.msra.mxu0 0.0
  %1465 = vmatprep.subr.mxu0 0.0
  %1466 = vmatpush2.msra.mxu0 0.0
  %1467 = vmatprep.subr.mxu0 0.0
  %1468 = vmatpush2.msra.mxu0 0.0
  %1469 = vmatprep.subr.mxu0 0.0
  %1470 = vmatpush2.msra.mxu0 0.0
  %1471 = vmatprep.subr.mxu0 0.0
  %1472 = vmatpush2.msra.mxu0 0.0
  %1473 = vmatprep.subr.mxu0 0.0
  %1474 = vmatpush2.msra.mxu0 0.0
  %1475 = vmatprep.subr.mxu0 0.0
  %1476 = vmatpush2.msra.mxu0 0.0
  %1477 = vmatprep.subr.mxu0 0.0
  %1478 = vmatpush2.msra.mxu0 0.0
  %1479 = vmatprep.mubr.f32.mxu0 0.0
  %1480 = vmatmul.mubr.f32.gmra.mxu0 %v1343
  %v1481 = vpop.f32.mrf.mxu0
  %v1482 = vadd.f32 0.0, %v1481
  %v1483 = vpop.f32.mrf.mxu0
  %v1484 = vadd.f32 0.0, %v1483
  %1485 = vdwg.mxu0
  %v1486 = vadd.f32 %v1339, %v1411
  %v1487 = vadd.f32 %v1340, %v1413
  %v1488 = vadd.f32 %v1341, %v1482
  %v1489 = vadd.f32 %v1342, %v1484
  %v1490 = vxor.u32 %v1486, 2147483648
  %v1491 = vmul.f32 %v1490, 1.442695
  %v1492 = vpow.pop %v1491
  %v1493 = vadd.f32 %v1492, 1.0
  %v1494 = vrcp.pop %v1493
  %v1495 = vmul.f32 1.0, %v1494
  %v1496 = vxor.u32 %v1487, 2147483648
  %v1497 = vmul.f32 %v1496, 1.442695
  %v1498 = vpow.pop %v1497
  %v1499 = vadd.f32 %v1498, 1.0
  %v1500 = vrcp.pop %v1499
  %v1501 = vmul.f32 1.0, %v1500
  %v1502 = vtanh.pop %v1488
  %v1503 = vxor.u32 %v1489, 2147483648
  %v1504 = vmul.f32 %v1503, 1.442695
  %v1505 = vpow.pop %v1504
  %v1506 = vadd.f32 %v1505, 1.0
  %v1507 = vrcp.pop %v1506
  %v1508 = vmul.f32 1.0, %v1507
  %v1509 = vld [vmem:[#allocation3] sm:$0xff]
  %v1510 = vmul.f32 %v1501, %v1509
  %v1511 = vmul.f32 %v1495, %v1502
  %v1512 = vadd.f32 %v1510, %v1511
  %v1513 = vtanh.pop %v1512
  %v1514 = vmul.f32 %v1508, %v1513
  %1515 = vst [vmem:[#allocation3] sm:$0xff] %v1512
  %1516 = vst [vmem:[#allocation2] sm:$0xff] %v1514
  %s1517 = scalar_lea.vmem [#allocation4], 40
  %1518 = vst [vmem:[%s1517] sm:$0xff] %v1514
  %s1519 = scalar_lea.vmem [#allocation5], 192
  %v1520 = vld [vmem:[%s1519] sm:$0xff]
  %v1521 = vld [vmem:[%s1519 + $0x8] sm:$0xff]
  %v1522 = vld [vmem:[%s1519 + $0x10] sm:$0xff]
  %v1523 = vld [vmem:[%s1519 + $0x18] sm:$0xff]
  %v1524 = vld [vmem:[#allocation2] sm:$0xff]
  %1525 = vmatprep.subr.mxu0 %v432
  %1526 = vmatpush1.msra.mxu0 %v431
  %1527 = vmatprep.subr.mxu0 %v428
  %1528 = vmatpush1.msra.mxu0 %v427
  %1529 = vmatprep.subr.mxu0 %v424
  %1530 = vmatpush1.msra.mxu0 %v423
  %1531 = vmatprep.subr.mxu0 %v420
  %1532 = vmatpush1.msra.mxu0 %v419
  %1533 = vmatprep.subr.mxu0 %v416
  %1534 = vmatpush1.msra.mxu0 %v415
  %1535 = vmatprep.subr.mxu0 %v412
  %1536 = vmatpush1.msra.mxu0 %v411
  %1537 = vmatprep.subr.mxu0 %v408
  %1538 = vmatpush1.msra.mxu0 %v407
  %1539 = vmatprep.subr.mxu0 %v404
  %1540 = vmatpush1.msra.mxu0 %v403
  %1541 = vmatprep.subr.mxu0 %v400
  %1542 = vmatpush1.msra.mxu0 %v399
  %1543 = vmatprep.subr.mxu0 %v396
  %1544 = vmatpush1.msra.mxu0 %v395
  %1545 = vmatprep.subr.mxu0 %v392
  %1546 = vmatpush1.msra.mxu0 %v391
  %1547 = vmatprep.subr.mxu0 %v388
  %1548 = vmatpush1.msra.mxu0 %v387
  %1549 = vmatprep.subr.mxu0 %v384
  %1550 = vmatpush1.msra.mxu0 %v383
  %1551 = vmatprep.subr.mxu0 %v380
  %1552 = vmatpush1.msra.mxu0 %v379
  %1553 = vmatprep.subr.mxu0 %v376
  %1554 = vmatpush1.msra.mxu0 %v375
  %1555 = vmatprep.subr.mxu0 %v372
  %1556 = vmatpush1.msra.mxu0 %v371
  %1557 = vmatprep.subr.mxu0 0.0
  %1558 = vmatpush2.msra.mxu0 0.0
  %1559 = vmatprep.subr.mxu0 0.0
  %1560 = vmatpush2.msra.mxu0 0.0
  %1561 = vmatprep.subr.mxu0 0.0
  %1562 = vmatpush2.msra.mxu0 0.0
  %1563 = vmatprep.subr.mxu0 0.0
  %1564 = vmatpush2.msra.mxu0 0.0
  %1565 = vmatprep.subr.mxu0 0.0
  %1566 = vmatpush2.msra.mxu0 0.0
  %1567 = vmatprep.subr.mxu0 0.0
  %1568 = vmatpush2.msra.mxu0 0.0
  %1569 = vmatprep.subr.mxu0 0.0
  %1570 = vmatpush2.msra.mxu0 0.0
  %1571 = vmatprep.subr.mxu0 0.0
  %1572 = vmatpush2.msra.mxu0 0.0
  %1573 = vmatprep.subr.mxu0 0.0
  %1574 = vmatpush2.msra.mxu0 0.0
  %1575 = vmatprep.subr.mxu0 0.0
  %1576 = vmatpush2.msra.mxu0 0.0
  %1577 = vmatprep.subr.mxu0 0.0
  %1578 = vmatpush2.msra.mxu0 0.0
  %1579 = vmatprep.subr.mxu0 0.0
  %1580 = vmatpush2.msra.mxu0 0.0
  %1581 = vmatprep.subr.mxu0 0.0
  %1582 = vmatpush2.msra.mxu0 0.0
  %1583 = vmatprep.subr.mxu0 0.0
  %1584 = vmatpush2.msra.mxu0 0.0
  %1585 = vmatprep.subr.mxu0 0.0
  %1586 = vmatpush2.msra.mxu0 0.0
  %1587 = vmatprep.subr.mxu0 0.0
  %1588 = vmatpush2.msra.mxu0 0.0
  %1589 = vmatprep.mubr.f32.mxu0 0.0
  %1590 = vmatmul.mubr.f32.gmra.mxu0 %v1524
  %v1591 = vpop.f32.mrf.mxu0
  %v1592 = vadd.f32 0.0, %v1591
  %v1593 = vpop.f32.mrf.mxu0
  %v1594 = vadd.f32 0.0, %v1593
  %1595 = vdwg.mxu0
  %1596 = vmatprep.subr.mxu0 %v434
  %1597 = vmatpush1.msra.mxu0 %v433
  %1598 = vmatprep.subr.mxu0 %v430
  %1599 = vmatpush1.msra.mxu0 %v429
  %1600 = vmatprep.subr.mxu0 %v426
  %1601 = vmatpush1.msra.mxu0 %v425
  %1602 = vmatprep.subr.mxu0 %v422
  %1603 = vmatpush1.msra.mxu0 %v421
  %1604 = vmatprep.subr.mxu0 %v418
  %1605 = vmatpush1.msra.mxu0 %v417
  %1606 = vmatprep.subr.mxu0 %v414
  %1607 = vmatpush1.msra.mxu0 %v413
  %1608 = vmatprep.subr.mxu0 %v410
  %1609 = vmatpush1.msra.mxu0 %v409
  %1610 = vmatprep.subr.mxu0 %v406
  %1611 = vmatpush1.msra.mxu0 %v405
  %1612 = vmatprep.subr.mxu0 %v402
  %1613 = vmatpush1.msra.mxu0 %v401
  %1614 = vmatprep.subr.mxu0 %v398
  %1615 = vmatpush1.msra.mxu0 %v397
  %1616 = vmatprep.subr.mxu0 %v394
  %1617 = vmatpush1.msra.mxu0 %v393
  %1618 = vmatprep.subr.mxu0 %v390
  %1619 = vmatpush1.msra.mxu0 %v389
  %1620 = vmatprep.subr.mxu0 %v386
  %1621 = vmatpush1.msra.mxu0 %v385
  %1622 = vmatprep.subr.mxu0 %v382
  %1623 = vmatpush1.msra.mxu0 %v381
  %1624 = vmatprep.subr.mxu0 %v378
  %1625 = vmatpush1.msra.mxu0 %v377
  %1626 = vmatprep.subr.mxu0 %v374
  %1627 = vmatpush1.msra.mxu0 %v373
  %1628 = vmatprep.subr.mxu0 0.0
  %1629 = vmatpush2.msra.mxu0 0.0
  %1630 = vmatprep.subr.mxu0 0.0
  %1631 = vmatpush2.msra.mxu0 0.0
  %1632 = vmatprep.subr.mxu0 0.0
  %1633 = vmatpush2.msra.mxu0 0.0
  %1634 = vmatprep.subr.mxu0 0.0
  %1635 = vmatpush2.msra.mxu0 0.0
  %1636 = vmatprep.subr.mxu0 0.0
  %1637 = vmatpush2.msra.mxu0 0.0
  %1638 = vmatprep.subr.mxu0 0.0
  %1639 = vmatpush2.msra.mxu0 0.0
  %1640 = vmatprep.subr.mxu0 0.0
  %1641 = vmatpush2.msra.mxu0 0.0
  %1642 = vmatprep.subr.mxu0 0.0
  %1643 = vmatpush2.msra.mxu0 0.0
  %1644 = vmatprep.subr.mxu0 0.0
  %1645 = vmatpush2.msra.mxu0 0.0
  %1646 = vmatprep.subr.mxu0 0.0
  %1647 = vmatpush2.msra.mxu0 0.0
  %1648 = vmatprep.subr.mxu0 0.0
  %1649 = vmatpush2.msra.mxu0 0.0
  %1650 = vmatprep.subr.mxu0 0.0
  %1651 = vmatpush2.msra.mxu0 0.0
  %1652 = vmatprep.subr.mxu0 0.0
  %1653 = vmatpush2.msra.mxu0 0.0
  %1654 = vmatprep.subr.mxu0 0.0
  %1655 = vmatpush2.msra.mxu0 0.0
  %1656 = vmatprep.subr.mxu0 0.0
  %1657 = vmatpush2.msra.mxu0 0.0
  %1658 = vmatprep.subr.mxu0 0.0
  %1659 = vmatpush2.msra.mxu0 0.0
  %1660 = vmatprep.mubr.f32.mxu0 0.0
  %1661 = vmatmul.mubr.f32.gmra.mxu0 %v1524
  %v1662 = vpop.f32.mrf.mxu0
  %v1663 = vadd.f32 0.0, %v1662
  %v1664 = vpop.f32.mrf.mxu0
  %v1665 = vadd.f32 0.0, %v1664
  %1666 = vdwg.mxu0
  %v1667 = vadd.f32 %v1520, %v1592
  %v1668 = vadd.f32 %v1521, %v1594
  %v1669 = vadd.f32 %v1522, %v1663
  %v1670 = vadd.f32 %v1523, %v1665
  %v1671 = vxor.u32 %v1667, 2147483648
  %v1672 = vmul.f32 %v1671, 1.442695
  %v1673 = vpow.pop %v1672
  %v1674 = vadd.f32 %v1673, 1.0
  %v1675 = vrcp.pop %v1674
  %v1676 = vmul.f32 1.0, %v1675
  %v1677 = vxor.u32 %v1668, 2147483648
  %v1678 = vmul.f32 %v1677, 1.442695
  %v1679 = vpow.pop %v1678
  %v1680 = vadd.f32 %v1679, 1.0
  %v1681 = vrcp.pop %v1680
  %v1682 = vmul.f32 1.0, %v1681
  %v1683 = vtanh.pop %v1669
  %v1684 = vxor.u32 %v1670, 2147483648
  %v1685 = vmul.f32 %v1684, 1.442695
  %v1686 = vpow.pop %v1685
  %v1687 = vadd.f32 %v1686, 1.0
  %v1688 = vrcp.pop %v1687
  %v1689 = vmul.f32 1.0, %v1688
  %v1690 = vld [vmem:[#allocation3] sm:$0xff]
  %v1691 = vmul.f32 %v1682, %v1690
  %v1692 = vmul.f32 %v1676, %v1683
  %v1693 = vadd.f32 %v1691, %v1692
  %v1694 = vtanh.pop %v1693
  %v1695 = vmul.f32 %v1689, %v1694
  %1696 = vst [vmem:[#allocation3] sm:$0xff] %v1693
  %1697 = vst [vmem:[#allocation2] sm:$0xff] %v1695
  %s1698 = scalar_lea.vmem [#allocation4], 48
  %1699 = vst [vmem:[%s1698] sm:$0xff] %v1695
  %s1700 = scalar_lea.vmem [#allocation5], 224
  %v1701 = vld [vmem:[%s1700] sm:$0xff]
  %v1702 = vld [vmem:[%s1700 + $0x8] sm:$0xff]
  %v1703 = vld [vmem:[%s1700 + $0x10] sm:$0xff]
  %v1704 = vld [vmem:[%s1700 + $0x18] sm:$0xff]
  %v1705 = vld [vmem:[#allocation2] sm:$0xff]
  %1706 = vmatprep.subr.mxu0 %v432
  %1707 = vmatpush1.msra.mxu0 %v431
  %1708 = vmatprep.subr.mxu0 %v428
  %1709 = vmatpush1.msra.mxu0 %v427
  %1710 = vmatprep.subr.mxu0 %v424
  %1711 = vmatpush1.msra.mxu0 %v423
  %1712 = vmatprep.subr.mxu0 %v420
  %1713 = vmatpush1.msra.mxu0 %v419
  %1714 = vmatprep.subr.mxu0 %v416
  %1715 = vmatpush1.msra.mxu0 %v415
  %1716 = vmatprep.subr.mxu0 %v412
  %1717 = vmatpush1.msra.mxu0 %v411
  %1718 = vmatprep.subr.mxu0 %v408
  %1719 = vmatpush1.msra.mxu0 %v407
  %1720 = vmatprep.subr.mxu0 %v404
  %1721 = vmatpush1.msra.mxu0 %v403
  %1722 = vmatprep.subr.mxu0 %v400
  %1723 = vmatpush1.msra.mxu0 %v399
  %1724 = vmatprep.subr.mxu0 %v396
  %1725 = vmatpush1.msra.mxu0 %v395
  %1726 = vmatprep.subr.mxu0 %v392
  %1727 = vmatpush1.msra.mxu0 %v391
  %1728 = vmatprep.subr.mxu0 %v388
  %1729 = vmatpush1.msra.mxu0 %v387
  %1730 = vmatprep.subr.mxu0 %v384
  %1731 = vmatpush1.msra.mxu0 %v383
  %1732 = vmatprep.subr.mxu0 %v380
  %1733 = vmatpush1.msra.mxu0 %v379
  %1734 = vmatprep.subr.mxu0 %v376
  %1735 = vmatpush1.msra.mxu0 %v375
  %1736 = vmatprep.subr.mxu0 %v372
  %1737 = vmatpush1.msra.mxu0 %v371
  %1738 = vmatprep.subr.mxu0 0.0
  %1739 = vmatpush2.msra.mxu0 0.0
  %1740 = vmatprep.subr.mxu0 0.0
  %1741 = vmatpush2.msra.mxu0 0.0
  %1742 = vmatprep.subr.mxu0 0.0
  %1743 = vmatpush2.msra.mxu0 0.0
  %1744 = vmatprep.subr.mxu0 0.0
  %1745 = vmatpush2.msra.mxu0 0.0
  %1746 = vmatprep.subr.mxu0 0.0
  %1747 = vmatpush2.msra.mxu0 0.0
  %1748 = vmatprep.subr.mxu0 0.0
  %1749 = vmatpush2.msra.mxu0 0.0
  %1750 = vmatprep.subr.mxu0 0.0
  %1751 = vmatpush2.msra.mxu0 0.0
  %1752 = vmatprep.subr.mxu0 0.0
  %1753 = vmatpush2.msra.mxu0 0.0
  %1754 = vmatprep.subr.mxu0 0.0
  %1755 = vmatpush2.msra.mxu0 0.0
  %1756 = vmatprep.subr.mxu0 0.0
  %1757 = vmatpush2.msra.mxu0 0.0
  %1758 = vmatprep.subr.mxu0 0.0
  %1759 = vmatpush2.msra.mxu0 0.0
  %1760 = vmatprep.subr.mxu0 0.0
  %1761 = vmatpush2.msra.mxu0 0.0
  %1762 = vmatprep.subr.mxu0 0.0
  %1763 = vmatpush2.msra.mxu0 0.0
  %1764 = vmatprep.subr.mxu0 0.0
  %1765 = vmatpush2.msra.mxu0 0.0
  %1766 = vmatprep.subr.mxu0 0.0
  %1767 = vmatpush2.msra.mxu0 0.0
  %1768 = vmatprep.subr.mxu0 0.0
  %1769 = vmatpush2.msra.mxu0 0.0
  %1770 = vmatprep.mubr.f32.mxu0 0.0
  %1771 = vmatmul.mubr.f32.gmra.mxu0 %v1705
  %v1772 = vpop.f32.mrf.mxu0
  %v1773 = vadd.f32 0.0, %v1772
  %v1774 = vpop.f32.mrf.mxu0
  %v1775 = vadd.f32 0.0, %v1774
  %1776 = vdwg.mxu0
  %1777 = vmatprep.subr.mxu0 %v434
  %1778 = vmatpush1.msra.mxu0 %v433
  %1779 = vmatprep.subr.mxu0 %v430
  %1780 = vmatpush1.msra.mxu0 %v429
  %1781 = vmatprep.subr.mxu0 %v426
  %1782 = vmatpush1.msra.mxu0 %v425
  %1783 = vmatprep.subr.mxu0 %v422
  %1784 = vmatpush1.msra.mxu0 %v421
  %1785 = vmatprep.subr.mxu0 %v418
  %1786 = vmatpush1.msra.mxu0 %v417
  %1787 = vmatprep.subr.mxu0 %v414
  %1788 = vmatpush1.msra.mxu0 %v413
  %1789 = vmatprep.subr.mxu0 %v410
  %1790 = vmatpush1.msra.mxu0 %v409
  %1791 = vmatprep.subr.mxu0 %v406
  %1792 = vmatpush1.msra.mxu0 %v405
  %1793 = vmatprep.subr.mxu0 %v402
  %1794 = vmatpush1.msra.mxu0 %v401
  %1795 = vmatprep.subr.mxu0 %v398
  %1796 = vmatpush1.msra.mxu0 %v397
  %1797 = vmatprep.subr.mxu0 %v394
  %1798 = vmatpush1.msra.mxu0 %v393
  %1799 = vmatprep.subr.mxu0 %v390
  %1800 = vmatpush1.msra.mxu0 %v389
  %1801 = vmatprep.subr.mxu0 %v386
  %1802 = vmatpush1.msra.mxu0 %v385
  %1803 = vmatprep.subr.mxu0 %v382
  %1804 = vmatpush1.msra.mxu0 %v381
  %1805 = vmatprep.subr.mxu0 %v378
  %1806 = vmatpush1.msra.mxu0 %v377
  %1807 = vmatprep.subr.mxu0 %v374
  %1808 = vmatpush1.msra.mxu0 %v373
  %1809 = vmatprep.subr.mxu0 0.0
  %1810 = vmatpush2.msra.mxu0 0.0
  %1811 = vmatprep.subr.mxu0 0.0
  %1812 = vmatpush2.msra.mxu0 0.0
  %1813 = vmatprep.subr.mxu0 0.0
  %1814 = vmatpush2.msra.mxu0 0.0
  %1815 = vmatprep.subr.mxu0 0.0
  %1816 = vmatpush2.msra.mxu0 0.0
  %1817 = vmatprep.subr.mxu0 0.0
  %1818 = vmatpush2.msra.mxu0 0.0
  %1819 = vmatprep.subr.mxu0 0.0
  %1820 = vmatpush2.msra.mxu0 0.0
  %1821 = vmatprep.subr.mxu0 0.0
  %1822 = vmatpush2.msra.mxu0 0.0
  %1823 = vmatprep.subr.mxu0 0.0
  %1824 = vmatpush2.msra.mxu0 0.0
  %1825 = vmatprep.subr.mxu0 0.0
  %1826 = vmatpush2.msra.mxu0 0.0
  %1827 = vmatprep.subr.mxu0 0.0
  %1828 = vmatpush2.msra.mxu0 0.0
  %1829 = vmatprep.subr.mxu0 0.0
  %1830 = vmatpush2.msra.mxu0 0.0
  %1831 = vmatprep.subr.mxu0 0.0
  %1832 = vmatpush2.msra.mxu0 0.0
  %1833 = vmatprep.subr.mxu0 0.0
  %1834 = vmatpush2.msra.mxu0 0.0
  %1835 = vmatprep.subr.mxu0 0.0
  %1836 = vmatpush2.msra.mxu0 0.0
  %1837 = vmatprep.subr.mxu0 0.0
  %1838 = vmatpush2.msra.mxu0 0.0
  %1839 = vmatprep.subr.mxu0 0.0
  %1840 = vmatpush2.msra.mxu0 0.0
  %1841 = vmatprep.mubr.f32.mxu0 0.0
  %1842 = vmatmul.mubr.f32.gmra.mxu0 %v1705
  %v1843 = vpop.f32.mrf.mxu0
  %v1844 = vadd.f32 0.0, %v1843
  %v1845 = vpop.f32.mrf.mxu0
  %v1846 = vadd.f32 0.0, %v1845
  %1847 = vdwg.mxu0
  %v1848 = vadd.f32 %v1701, %v1773
  %v1849 = vadd.f32 %v1702, %v1775
  %v1850 = vadd.f32 %v1703, %v1844
  %v1851 = vadd.f32 %v1704, %v1846
  %v1852 = vxor.u32 %v1848, 2147483648
  %v1853 = vmul.f32 %v1852, 1.442695
  %v1854 = vpow.pop %v1853
  %v1855 = vadd.f32 %v1854, 1.0
  %v1856 = vrcp.pop %v1855
  %v1857 = vmul.f32 1.0, %v1856
  %v1858 = vxor.u32 %v1849, 2147483648
  %v1859 = vmul.f32 %v1858, 1.442695
  %v1860 = vpow.pop %v1859
  %v1861 = vadd.f32 %v1860, 1.0
  %v1862 = vrcp.pop %v1861
  %v1863 = vmul.f32 1.0, %v1862
  %v1864 = vtanh.pop %v1850
  %v1865 = vxor.u32 %v1851, 2147483648
  %v1866 = vmul.f32 %v1865, 1.442695
  %v1867 = vpow.pop %v1866
  %v1868 = vadd.f32 %v1867, 1.0
  %v1869 = vrcp.pop %v1868
  %v1870 = vmul.f32 1.0, %v1869
  %v1871 = vld [vmem:[#allocation3] sm:$0xff]
  %v1872 = vmul.f32 %v1863, %v1871
  %v1873 = vmul.f32 %v1857, %v1864
  %v1874 = vadd.f32 %v1872, %v1873
  %v1875 = vtanh.pop %v1874
  %v1876 = vmul.f32 %v1870, %v1875
  %1877 = vst [vmem:[#allocation3] sm:$0xff] %v1874
  %1878 = vst [vmem:[#allocation2] sm:$0xff] %v1876
  %s1879 = scalar_lea.vmem [#allocation4], 56
  %1880 = vst [vmem:[%s1879] sm:$0xff] %v1876
  %v1881 = vld [vmem:[#allocation4] sm:$0xff]
  %v1882 = vld [vmem:[#allocation4 + $0x8] sm:$0xff]
  %v1883 = vld [vmem:[#allocation4 + $0x10] sm:$0xff]
  %v1884 = vld [vmem:[#allocation4 + $0x18] sm:$0xff]
  %v1885 = vld [vmem:[#allocation4 + $0x20] sm:$0xff]
  %v1886 = vld [vmem:[#allocation4 + $0x28] sm:$0xff]
  %v1887 = vld [vmem:[#allocation4 + $0x30] sm:$0xff]
  %v1888 = vld [vmem:[#allocation4 + $0x38] sm:$0xff]
  %s1889 = scalar_lea.vmem %s1, 512
  %v1890 = vld [vmem:[%s1889] sm:$0xff]
  %v1891 = vld [vmem:[%s1889 + $0x8] sm:$0xff]
  %v1892 = vld [vmem:[%s1889 + $0x10] sm:$0xff]
  %v1893 = vld [vmem:[%s1889 + $0x18] sm:$0xff]
  %v1894 = vld [vmem:[%s1889 + $0x20] sm:$0xff]
  %v1895 = vld [vmem:[%s1889 + $0x28] sm:$0xff]
  %v1896 = vld [vmem:[%s1889 + $0x30] sm:$0xff]
  %v1897 = vld [vmem:[%s1889 + $0x38] sm:$0xff]
  %v1898 = vld [vmem:[%s1889 + $0x40] sm:$0xff]
  %v1899 = vld [vmem:[%s1889 + $0x48] sm:$0xff]
  %v1900 = vld [vmem:[%s1889 + $0x50] sm:$0xff]
  %v1901 = vld [vmem:[%s1889 + $0x58] sm:$0xff]
  %v1902 = vld [vmem:[%s1889 + $0x60] sm:$0xff]
  %v1903 = vld [vmem:[%s1889 + $0x68] sm:$0xff]
  %v1904 = vld [vmem:[%s1889 + $0x70] sm:$0xff]
  %v1905 = vld [vmem:[%s1889 + $0x78] sm:$0xff]
  %v1906 = vld [vmem:[%s1889 + $0x80] sm:$0xff]
  %v1907 = vld [vmem:[%s1889 + $0x88] sm:$0xff]
  %v1908 = vld [vmem:[%s1889 + $0x90] sm:$0xff]
  %v1909 = vld [vmem:[%s1889 + $0x98] sm:$0xff]
  %v1910 = vld [vmem:[%s1889 + $0xa0] sm:$0xff]
  %v1911 = vld [vmem:[%s1889 + $0xa8] sm:$0xff]
  %v1912 = vld [vmem:[%s1889 + $0xb0] sm:$0xff]
  %v1913 = vld [vmem:[%s1889 + $0xb8] sm:$0xff]
  %v1914 = vld [vmem:[%s1889 + $0xc0] sm:$0xff]
  %v1915 = vld [vmem:[%s1889 + $0xc8] sm:$0xff]
  %v1916 = vld [vmem:[%s1889 + $0xd0] sm:$0xff]
  %v1917 = vld [vmem:[%s1889 + $0xd8] sm:$0xff]
  %v1918 = vld [vmem:[%s1889 + $0xe0] sm:$0xff]
  %v1919 = vld [vmem:[%s1889 + $0xe8] sm:$0xff]
  %v1920 = vld [vmem:[%s1889 + $0xf0] sm:$0xff]
  %v1921 = vld [vmem:[%s1889 + $0xf8] sm:$0xff]
  %v1922 = vld [vmem:[%s1889 + $0x100] sm:$0xff]
  %v1923 = vld [vmem:[%s1889 + $0x108] sm:$0xff]
  %v1924 = vld [vmem:[%s1889 + $0x110] sm:$0xff]
  %v1925 = vld [vmem:[%s1889 + $0x118] sm:$0xff]
  %v1926 = vld [vmem:[%s1889 + $0x120] sm:$0xff]
  %v1927 = vld [vmem:[%s1889 + $0x128] sm:$0xff]
  %v1928 = vld [vmem:[%s1889 + $0x130] sm:$0xff]
  %v1929 = vld [vmem:[%s1889 + $0x138] sm:$0xff]
  %v1930 = vld [vmem:[%s1889 + $0x140] sm:$0xff]
  %v1931 = vld [vmem:[%s1889 + $0x148] sm:$0xff]
  %v1932 = vld [vmem:[%s1889 + $0x150] sm:$0xff]
  %v1933 = vld [vmem:[%s1889 + $0x158] sm:$0xff]
  %v1934 = vld [vmem:[%s1889 + $0x160] sm:$0xff]
  %v1935 = vld [vmem:[%s1889 + $0x168] sm:$0xff]
  %v1936 = vld [vmem:[%s1889 + $0x170] sm:$0xff]
  %v1937 = vld [vmem:[%s1889 + $0x178] sm:$0xff]
  %v1938 = vld [vmem:[%s1889 + $0x180] sm:$0xff]
  %v1939 = vld [vmem:[%s1889 + $0x188] sm:$0xff]
  %v1940 = vld [vmem:[%s1889 + $0x190] sm:$0xff]
  %v1941 = vld [vmem:[%s1889 + $0x198] sm:$0xff]
  %v1942 = vld [vmem:[%s1889 + $0x1a0] sm:$0xff]
  %v1943 = vld [vmem:[%s1889 + $0x1a8] sm:$0xff]
  %v1944 = vld [vmem:[%s1889 + $0x1b0] sm:$0xff]
  %v1945 = vld [vmem:[%s1889 + $0x1b8] sm:$0xff]
  %v1946 = vld [vmem:[%s1889 + $0x1c0] sm:$0xff]
  %v1947 = vld [vmem:[%s1889 + $0x1c8] sm:$0xff]
  %v1948 = vld [vmem:[%s1889 + $0x1d0] sm:$0xff]
  %v1949 = vld [vmem:[%s1889 + $0x1d8] sm:$0xff]
  %v1950 = vld [vmem:[%s1889 + $0x1e0] sm:$0xff]
  %v1951 = vld [vmem:[%s1889 + $0x1e8] sm:$0xff]
  %v1952 = vld [vmem:[%s1889 + $0x1f0] sm:$0xff]
  %v1953 = vld [vmem:[%s1889 + $0x1f8] sm:$0xff]
  %s1954 = scalar_lea.vmem %s3, 4
  %v1955 = vld [vmem:[%s1954] sm:$0xf]
  %v1957 = vlaneseq
  %v1958 = vshrl.u32 %v1957, 7
  %v1959 = vsub.s32 0, %v1958
  %v1960 = vrot.slane %v1955, %v1959
  %v1961 = vlaneseq
  %v1962 = vshrl.u32 %v1961, 7
  %v1963 = vsub.s32 1, %v1962
  %v1964 = vrot.slane %v1955, %v1963
  %v1965 = vlaneseq
  %v1966 = vshrl.u32 %v1965, 7
  %v1967 = vsub.s32 2, %v1966
  %v1968 = vrot.slane %v1955, %v1967
  %v1969 = vlaneseq
  %v1970 = vshrl.u32 %v1969, 7
  %v1971 = vsub.s32 3, %v1970
  %v1972 = vrot.slane %v1955, %v1971
  %1977 = vmatprep.subr.mxu0 %v1951
  %1978 = vmatpush1.msra.mxu0 %v1950
  %1979 = vmatprep.subr.mxu0 %v1947
  %1980 = vmatpush1.msra.mxu0 %v1946
  %1981 = vmatprep.subr.mxu0 %v1943
  %1982 = vmatpush1.msra.mxu0 %v1942
  %1983 = vmatprep.subr.mxu0 %v1939
  %1984 = vmatpush1.msra.mxu0 %v1938
  %1985 = vmatprep.subr.mxu0 %v1935
  %1986 = vmatpush1.msra.mxu0 %v1934
  %1987 = vmatprep.subr.mxu0 %v1931
  %1988 = vmatpush1.msra.mxu0 %v1930
  %1989 = vmatprep.subr.mxu0 %v1927
  %1990 = vmatpush1.msra.mxu0 %v1926
  %1991 = vmatprep.subr.mxu0 %v1923
  %1992 = vmatpush1.msra.mxu0 %v1922
  %1993 = vmatprep.subr.mxu0 %v1919
  %1994 = vmatpush1.msra.mxu0 %v1918
  %1995 = vmatprep.subr.mxu0 %v1915
  %1996 = vmatpush1.msra.mxu0 %v1914
  %1997 = vmatprep.subr.mxu0 %v1911
  %1998 = vmatpush1.msra.mxu0 %v1910
  %1999 = vmatprep.subr.mxu0 %v1907
  %2000 = vmatpush1.msra.mxu0 %v1906
  %2001 = vmatprep.subr.mxu0 %v1903
  %2002 = vmatpush1.msra.mxu0 %v1902
  %2003 = vmatprep.subr.mxu0 %v1899
  %2004 = vmatpush1.msra.mxu0 %v1898
  %2005 = vmatprep.subr.mxu0 %v1895
  %2006 = vmatpush1.msra.mxu0 %v1894
  %2007 = vmatprep.subr.mxu0 %v1891
  %2008 = vmatpush1.msra.mxu0 %v1890
  %2009 = vmatprep.subr.mxu0 0.0
  %2010 = vmatpush2.msra.mxu0 0.0
  %2011 = vmatprep.subr.mxu0 0.0
  %2012 = vmatpush2.msra.mxu0 0.0
  %2013 = vmatprep.subr.mxu0 0.0
  %2014 = vmatpush2.msra.mxu0 0.0
  %2015 = vmatprep.subr.mxu0 0.0
  %2016 = vmatpush2.msra.mxu0 0.0
  %2017 = vmatprep.subr.mxu0 0.0
  %2018 = vmatpush2.msra.mxu0 0.0
  %2019 = vmatprep.subr.mxu0 0.0
  %2020 = vmatpush2.msra.mxu0 0.0
  %2021 = vmatprep.subr.mxu0 0.0
  %2022 = vmatpush2.msra.mxu0 0.0
  %2023 = vmatprep.subr.mxu0 0.0
  %2024 = vmatpush2.msra.mxu0 0.0
  %2025 = vmatprep.subr.mxu0 0.0
  %2026 = vmatpush2.msra.mxu0 0.0
  %2027 = vmatprep.subr.mxu0 0.0
  %2028 = vmatpush2.msra.mxu0 0.0
  %2029 = vmatprep.subr.mxu0 0.0
  %2030 = vmatpush2.msra.mxu0 0.0
  %2031 = vmatprep.subr.mxu0 0.0
  %2032 = vmatpush2.msra.mxu0 0.0
  %2033 = vmatprep.subr.mxu0 0.0
  %2034 = vmatpush2.msra.mxu0 0.0
  %2035 = vmatprep.subr.mxu0 0.0
  %2036 = vmatpush2.msra.mxu0 0.0
  %2037 = vmatprep.subr.mxu0 0.0
  %2038 = vmatpush2.msra.mxu0 0.0
  %2039 = vmatprep.subr.mxu0 0.0
  %2040 = vmatpush2.msra.mxu0 0.0
  %2041 = vmatprep.mubr.f32.mxu0 0.0
  %2042 = vmatmul.mubr.f32.gmra.mxu0 %v1881
  %v2043 = vpop.f32.mrf.mxu0
  %v2044 = vadd.f32 %v1960, %v2043
  %v2045 = vpop.f32.mrf.mxu0
  %v2046 = vadd.f32 %v1964, %v2045
  %2047 = vmatprep.mubr.f32.mxu0 0.0
  %2048 = vmatmul.mubr.f32.gmra.mxu0 %v1882
  %v2049 = vpop.f32.mrf.mxu0
  %v2050 = vadd.f32 %v1960, %v2049
  %v2051 = vpop.f32.mrf.mxu0
  %v2052 = vadd.f32 %v1964, %v2051
  %2053 = vmatprep.mubr.f32.mxu0 0.0
  %2054 = vmatmul.mubr.f32.gmra.mxu0 %v1883
  %v2055 = vpop.f32.mrf.mxu0
  %v2056 = vadd.f32 %v1960, %v2055
  %v2057 = vpop.f32.mrf.mxu0
  %v2058 = vadd.f32 %v1964, %v2057
  %2059 = vmatprep.mubr.f32.mxu0 0.0
  %2060 = vmatmul.mubr.f32.gmra.mxu0 %v1884
  %v2061 = vpop.f32.mrf.mxu0
  %v2062 = vadd.f32 %v1960, %v2061
  %v2063 = vpop.f32.mrf.mxu0
  %v2064 = vadd.f32 %v1964, %v2063
  %2065 = vmatprep.mubr.f32.mxu0 0.0
  %2066 = vmatmul.mubr.f32.gmra.mxu0 %v1885
  %v2067 = vpop.f32.mrf.mxu0
  %v2068 = vadd.f32 %v1960, %v2067
  %v2069 = vpop.f32.mrf.mxu0
  %v2070 = vadd.f32 %v1964, %v2069
  %2071 = vmatprep.mubr.f32.mxu0 0.0
  %2072 = vmatmul.mubr.f32.gmra.mxu0 %v1886
  %v2073 = vpop.f32.mrf.mxu0
  %v2074 = vadd.f32 %v1960, %v2073
  %v2075 = vpop.f32.mrf.mxu0
  %v2076 = vadd.f32 %v1964, %v2075
  %2077 = vmatprep.mubr.f32.mxu0 0.0
  %2078 = vmatmul.mubr.f32.gmra.mxu0 %v1887
  %v2079 = vpop.f32.mrf.mxu0
  %v2080 = vadd.f32 %v1960, %v2079
  %v2081 = vpop.f32.mrf.mxu0
  %v2082 = vadd.f32 %v1964, %v2081
  %2083 = vmatprep.mubr.f32.mxu0 0.0
  %2084 = vmatmul.mubr.f32.gmra.mxu0 %v1888
  %v2085 = vpop.f32.mrf.mxu0
  %v2086 = vadd.f32 %v1960, %v2085
  %v2087 = vpop.f32.mrf.mxu0
  %v2088 = vadd.f32 %v1964, %v2087
  %2089 = vdwg.mxu0
  %2090 = vmatprep.subr.mxu0 %v1953
  %2091 = vmatpush1.msra.mxu0 %v1952
  %2092 = vmatprep.subr.mxu0 %v1949
  %2093 = vmatpush1.msra.mxu0 %v1948
  %2094 = vmatprep.subr.mxu0 %v1945
  %2095 = vmatpush1.msra.mxu0 %v1944
  %2096 = vmatprep.subr.mxu0 %v1941
  %2097 = vmatpush1.msra.mxu0 %v1940
  %2098 = vmatprep.subr.mxu0 %v1937
  %2099 = vmatpush1.msra.mxu0 %v1936
  %2100 = vmatprep.subr.mxu0 %v1933
  %2101 = vmatpush1.msra.mxu0 %v1932
  %2102 = vmatprep.subr.mxu0 %v1929
  %2103 = vmatpush1.msra.mxu0 %v1928
  %2104 = vmatprep.subr.mxu0 %v1925
  %2105 = vmatpush1.msra.mxu0 %v1924
  %2106 = vmatprep.subr.mxu0 %v1921
  %2107 = vmatpush1.msra.mxu0 %v1920
  %2108 = vmatprep.subr.mxu0 %v1917
  %2109 = vmatpush1.msra.mxu0 %v1916
  %2110 = vmatprep.subr.mxu0 %v1913
  %2111 = vmatpush1.msra.mxu0 %v1912
  %2112 = vmatprep.subr.mxu0 %v1909
  %2113 = vmatpush1.msra.mxu0 %v1908
  %2114 = vmatprep.subr.mxu0 %v1905
  %2115 = vmatpush1.msra.mxu0 %v1904
  %2116 = vmatprep.subr.mxu0 %v1901
  %2117 = vmatpush1.msra.mxu0 %v1900
  %2118 = vmatprep.subr.mxu0 %v1897
  %2119 = vmatpush1.msra.mxu0 %v1896
  %2120 = vmatprep.subr.mxu0 %v1893
  %2121 = vmatpush1.msra.mxu0 %v1892
  %2122 = vmatprep.subr.mxu0 0.0
  %2123 = vmatpush2.msra.mxu0 0.0
  %2124 = vmatprep.subr.mxu0 0.0
  %2125 = vmatpush2.msra.mxu0 0.0
  %2126 = vmatprep.subr.mxu0 0.0
  %2127 = vmatpush2.msra.mxu0 0.0
  %2128 = vmatprep.subr.mxu0 0.0
  %2129 = vmatpush2.msra.mxu0 0.0
  %2130 = vmatprep.subr.mxu0 0.0
  %2131 = vmatpush2.msra.mxu0 0.0
  %2132 = vmatprep.subr.mxu0 0.0
  %2133 = vmatpush2.msra.mxu0 0.0
  %2134 = vmatprep.subr.mxu0 0.0
  %2135 = vmatpush2.msra.mxu0 0.0
  %2136 = vmatprep.subr.mxu0 0.0
  %2137 = vmatpush2.msra.mxu0 0.0
  %2138 = vmatprep.subr.mxu0 0.0
  %2139 = vmatpush2.msra.mxu0 0.0
  %2140 = vmatprep.subr.mxu0 0.0
  %2141 = vmatpush2.msra.mxu0 0.0
  %2142 = vmatprep.subr.mxu0 0.0
  %2143 = vmatpush2.msra.mxu0 0.0
  %2144 = vmatprep.subr.mxu0 0.0
  %2145 = vmatpush2.msra.mxu0 0.0
  %2146 = vmatprep.subr.mxu0 0.0
  %2147 = vmatpush2.msra.mxu0 0.0
  %2148 = vmatprep.subr.mxu0 0.0
  %2149 = vmatpush2.msra.mxu0 0.0
  %2150 = vmatprep.subr.mxu0 0.0
  %2151 = vmatpush2.msra.mxu0 0.0
  %2152 = vmatprep.subr.mxu0 0.0
  %2153 = vmatpush2.msra.mxu0 0.0
  %2154 = vmatprep.mubr.f32.mxu0 0.0
  %2155 = vmatmul.mubr.f32.gmra.mxu0 %v1881
  %v2156 = vpop.f32.mrf.mxu0
  %v2157 = vadd.f32 %v1968, %v2156
  %v2158 = vpop.f32.mrf.mxu0
  %v2159 = vadd.f32 %v1972, %v2158
  %2160 = vmatprep.mubr.f32.mxu0 0.0
  %2161 = vmatmul.mubr.f32.gmra.mxu0 %v1882
  %v2162 = vpop.f32.mrf.mxu0
  %v2163 = vadd.f32 %v1968, %v2162
  %v2164 = vpop.f32.mrf.mxu0
  %v2165 = vadd.f32 %v1972, %v2164
  %2166 = vmatprep.mubr.f32.mxu0 0.0
  %2167 = vmatmul.mubr.f32.gmra.mxu0 %v1883
  %v2168 = vpop.f32.mrf.mxu0
  %v2169 = vadd.f32 %v1968, %v2168
  %v2170 = vpop.f32.mrf.mxu0
  %v2171 = vadd.f32 %v1972, %v2170
  %2172 = vmatprep.mubr.f32.mxu0 0.0
  %2173 = vmatmul.mubr.f32.gmra.mxu0 %v1884
  %v2174 = vpop.f32.mrf.mxu0
  %v2175 = vadd.f32 %v1968, %v2174
  %v2176 = vpop.f32.mrf.mxu0
  %v2177 = vadd.f32 %v1972, %v2176
  %2178 = vmatprep.mubr.f32.mxu0 0.0
  %2179 = vmatmul.mubr.f32.gmra.mxu0 %v1885
  %v2180 = vpop.f32.mrf.mxu0
  %v2181 = vadd.f32 %v1968, %v2180
  %v2182 = vpop.f32.mrf.mxu0
  %v2183 = vadd.f32 %v1972, %v2182
  %2184 = vmatprep.mubr.f32.mxu0 0.0
  %2185 = vmatmul.mubr.f32.gmra.mxu0 %v1886
  %v2186 = vpop.f32.mrf.mxu0
  %v2187 = vadd.f32 %v1968, %v2186
  %v2188 = vpop.f32.mrf.mxu0
  %v2189 = vadd.f32 %v1972, %v2188
  %2190 = vmatprep.mubr.f32.mxu0 0.0
  %2191 = vmatmul.mubr.f32.gmra.mxu0 %v1887
  %v2192 = vpop.f32.mrf.mxu0
  %v2193 = vadd.f32 %v1968, %v2192
  %v2194 = vpop.f32.mrf.mxu0
  %v2195 = vadd.f32 %v1972, %v2194
  %2196 = vmatprep.mubr.f32.mxu0 0.0
  %2197 = vmatmul.mubr.f32.gmra.mxu0 %v1888
  %v2198 = vpop.f32.mrf.mxu0
  %v2199 = vadd.f32 %v1968, %v2198
  %v2200 = vpop.f32.mrf.mxu0
  %v2201 = vadd.f32 %v1972, %v2200
  %2202 = vdwg.mxu0
  %2203 = vst [vmem:[#allocation5] sm:$0xff] %v2044
  %2204 = vst [vmem:[#allocation5 + $0x8] sm:$0xff] %v2046
  %2205 = vst [vmem:[#allocation5 + $0x10] sm:$0xff] %v2157
  %2206 = vst [vmem:[#allocation5 + $0x18] sm:$0xff] %v2159
  %2207 = vst [vmem:[#allocation5 + $0x20] sm:$0xff] %v2050
  %2208 = vst [vmem:[#allocation5 + $0x28] sm:$0xff] %v2052
  %2209 = vst [vmem:[#allocation5 + $0x30] sm:$0xff] %v2163
  %2210 = vst [vmem:[#allocation5 + $0x38] sm:$0xff] %v2165
  %2211 = vst [vmem:[#allocation5 + $0x40] sm:$0xff] %v2056
  %2212 = vst [vmem:[#allocation5 + $0x48] sm:$0xff] %v2058
  %2213 = vst [vmem:[#allocation5 + $0x50] sm:$0xff] %v2169
  %2214 = vst [vmem:[#allocation5 + $0x58] sm:$0xff] %v2171
  %2215 = vst [vmem:[#allocation5 + $0x60] sm:$0xff] %v2062
  %2216 = vst [vmem:[#allocation5 + $0x68] sm:$0xff] %v2064
  %2217 = vst [vmem:[#allocation5 + $0x70] sm:$0xff] %v2175
  %2218 = vst [vmem:[#allocation5 + $0x78] sm:$0xff] %v2177
  %2219 = vst [vmem:[#allocation5 + $0x80] sm:$0xff] %v2068
  %2220 = vst [vmem:[#allocation5 + $0x88] sm:$0xff] %v2070
  %2221 = vst [vmem:[#allocation5 + $0x90] sm:$0xff] %v2181
  %2222 = vst [vmem:[#allocation5 + $0x98] sm:$0xff] %v2183
  %2223 = vst [vmem:[#allocation5 + $0xa0] sm:$0xff] %v2074
  %2224 = vst [vmem:[#allocation5 + $0xa8] sm:$0xff] %v2076
  %2225 = vst [vmem:[#allocation5 + $0xb0] sm:$0xff] %v2187
  %2226 = vst [vmem:[#allocation5 + $0xb8] sm:$0xff] %v2189
  %2227 = vst [vmem:[#allocation5 + $0xc0] sm:$0xff] %v2080
  %2228 = vst [vmem:[#allocation5 + $0xc8] sm:$0xff] %v2082
  %2229 = vst [vmem:[#allocation5 + $0xd0] sm:$0xff] %v2193
  %2230 = vst [vmem:[#allocation5 + $0xd8] sm:$0xff] %v2195
  %2231 = vst [vmem:[#allocation5 + $0xe0] sm:$0xff] %v2086
  %2232 = vst [vmem:[#allocation5 + $0xe8] sm:$0xff] %v2088
  %2233 = vst [vmem:[#allocation5 + $0xf0] sm:$0xff] %v2199
  %2234 = vst [vmem:[#allocation5 + $0xf8] sm:$0xff] %v2201
  %2235 = vst [vmem:[#allocation2] sm:$0xff] 0.0
  %2236 = vst [vmem:[#allocation3] sm:$0xff] 0.0
  %s2237 = scalar_lea.vmem %s2, 512
  %v2238 = vld [vmem:[%s2237] sm:$0xff]
  %v2239 = vld [vmem:[%s2237 + $0x8] sm:$0xff]
  %v2240 = vld [vmem:[%s2237 + $0x10] sm:$0xff]
  %v2241 = vld [vmem:[%s2237 + $0x18] sm:$0xff]
  %v2242 = vld [vmem:[%s2237 + $0x20] sm:$0xff]
  %v2243 = vld [vmem:[%s2237 + $0x28] sm:$0xff]
  %v2244 = vld [vmem:[%s2237 + $0x30] sm:$0xff]
  %v2245 = vld [vmem:[%s2237 + $0x38] sm:$0xff]
  %v2246 = vld [vmem:[%s2237 + $0x40] sm:$0xff]
  %v2247 = vld [vmem:[%s2237 + $0x48] sm:$0xff]
  %v2248 = vld [vmem:[%s2237 + $0x50] sm:$0xff]
  %v2249 = vld [vmem:[%s2237 + $0x58] sm:$0xff]
  %v2250 = vld [vmem:[%s2237 + $0x60] sm:$0xff]
  %v2251 = vld [vmem:[%s2237 + $0x68] sm:$0xff]
  %v2252 = vld [vmem:[%s2237 + $0x70] sm:$0xff]
  %v2253 = vld [vmem:[%s2237 + $0x78] sm:$0xff]
  %v2254 = vld [vmem:[%s2237 + $0x80] sm:$0xff]
  %v2255 = vld [vmem:[%s2237 + $0x88] sm:$0xff]
  %v2256 = vld [vmem:[%s2237 + $0x90] sm:$0xff]
  %v2257 = vld [vmem:[%s2237 + $0x98] sm:$0xff]
  %v2258 = vld [vmem:[%s2237 + $0xa0] sm:$0xff]
  %v2259 = vld [vmem:[%s2237 + $0xa8] sm:$0xff]
  %v2260 = vld [vmem:[%s2237 + $0xb0] sm:$0xff]
  %v2261 = vld [vmem:[%s2237 + $0xb8] sm:$0xff]
  %v2262 = vld [vmem:[%s2237 + $0xc0] sm:$0xff]
  %v2263 = vld [vmem:[%s2237 + $0xc8] sm:$0xff]
  %v2264 = vld [vmem:[%s2237 + $0xd0] sm:$0xff]
  %v2265 = vld [vmem:[%s2237 + $0xd8] sm:$0xff]
  %v2266 = vld [vmem:[%s2237 + $0xe0] sm:$0xff]
  %v2267 = vld [vmem:[%s2237 + $0xe8] sm:$0xff]
  %v2268 = vld [vmem:[%s2237 + $0xf0] sm:$0xff]
  %v2269 = vld [vmem:[%s2237 + $0xf8] sm:$0xff]
  %v2270 = vld [vmem:[%s2237 + $0x100] sm:$0xff]
  %v2271 = vld [vmem:[%s2237 + $0x108] sm:$0xff]
  %v2272 = vld [vmem:[%s2237 + $0x110] sm:$0xff]
  %v2273 = vld [vmem:[%s2237 + $0x118] sm:$0xff]
  %v2274 = vld [vmem:[%s2237 + $0x120] sm:$0xff]
  %v2275 = vld [vmem:[%s2237 + $0x128] sm:$0xff]
  %v2276 = vld [vmem:[%s2237 + $0x130] sm:$0xff]
  %v2277 = vld [vmem:[%s2237 + $0x138] sm:$0xff]
  %v2278 = vld [vmem:[%s2237 + $0x140] sm:$0xff]
  %v2279 = vld [vmem:[%s2237 + $0x148] sm:$0xff]
  %v2280 = vld [vmem:[%s2237 + $0x150] sm:$0xff]
  %v2281 = vld [vmem:[%s2237 + $0x158] sm:$0xff]
  %v2282 = vld [vmem:[%s2237 + $0x160] sm:$0xff]
  %v2283 = vld [vmem:[%s2237 + $0x168] sm:$0xff]
  %v2284 = vld [vmem:[%s2237 + $0x170] sm:$0xff]
  %v2285 = vld [vmem:[%s2237 + $0x178] sm:$0xff]
  %v2286 = vld [vmem:[%s2237 + $0x180] sm:$0xff]
  %v2287 = vld [vmem:[%s2237 + $0x188] sm:$0xff]
  %v2288 = vld [vmem:[%s2237 + $0x190] sm:$0xff]
  %v2289 = vld [vmem:[%s2237 + $0x198] sm:$0xff]
  %v2290 = vld [vmem:[%s2237 + $0x1a0] sm:$0xff]
  %v2291 = vld [vmem:[%s2237 + $0x1a8] sm:$0xff]
  %v2292 = vld [vmem:[%s2237 + $0x1b0] sm:$0xff]
  %v2293 = vld [vmem:[%s2237 + $0x1b8] sm:$0xff]
  %v2294 = vld [vmem:[%s2237 + $0x1c0] sm:$0xff]
  %v2295 = vld [vmem:[%s2237 + $0x1c8] sm:$0xff]
  %v2296 = vld [vmem:[%s2237 + $0x1d0] sm:$0xff]
  %v2297 = vld [vmem:[%s2237 + $0x1d8] sm:$0xff]
  %v2298 = vld [vmem:[%s2237 + $0x1e0] sm:$0xff]
  %v2299 = vld [vmem:[%s2237 + $0x1e8] sm:$0xff]
  %v2300 = vld [vmem:[%s2237 + $0x1f0] sm:$0xff]
  %v2301 = vld [vmem:[%s2237 + $0x1f8] sm:$0xff]
  %v2302 = vld [vmem:[#allocation5] sm:$0xff]
  %v2303 = vld [vmem:[#allocation5 + $0x8] sm:$0xff]
  %v2304 = vld [vmem:[#allocation5 + $0x10] sm:$0xff]
  %v2305 = vld [vmem:[#allocation5 + $0x18] sm:$0xff]
  %v2306 = vld [vmem:[#allocation2] sm:$0xff]
  %2307 = vmatprep.subr.mxu0 %v2299
  %2308 = vmatpush1.msra.mxu0 %v2298
  %2309 = vmatprep.subr.mxu0 %v2295
  %2310 = vmatpush1.msra.mxu0 %v2294
  %2311 = vmatprep.subr.mxu0 %v2291
  %2312 = vmatpush1.msra.mxu0 %v2290
  %2313 = vmatprep.subr.mxu0 %v2287
  %2314 = vmatpush1.msra.mxu0 %v2286
  %2315 = vmatprep.subr.mxu0 %v2283
  %2316 = vmatpush1.msra.mxu0 %v2282
  %2317 = vmatprep.subr.mxu0 %v2279
  %2318 = vmatpush1.msra.mxu0 %v2278
  %2319 = vmatprep.subr.mxu0 %v2275
  %2320 = vmatpush1.msra.mxu0 %v2274
  %2321 = vmatprep.subr.mxu0 %v2271
  %2322 = vmatpush1.msra.mxu0 %v2270
  %2323 = vmatprep.subr.mxu0 %v2267
  %2324 = vmatpush1.msra.mxu0 %v2266
  %2325 = vmatprep.subr.mxu0 %v2263
  %2326 = vmatpush1.msra.mxu0 %v2262
  %2327 = vmatprep.subr.mxu0 %v2259
  %2328 = vmatpush1.msra.mxu0 %v2258
  %2329 = vmatprep.subr.mxu0 %v2255
  %2330 = vmatpush1.msra.mxu0 %v2254
  %2331 = vmatprep.subr.mxu0 %v2251
  %2332 = vmatpush1.msra.mxu0 %v2250
  %2333 = vmatprep.subr.mxu0 %v2247
  %2334 = vmatpush1.msra.mxu0 %v2246
  %2335 = vmatprep.subr.mxu0 %v2243
  %2336 = vmatpush1.msra.mxu0 %v2242
  %2337 = vmatprep.subr.mxu0 %v2239
  %2338 = vmatpush1.msra.mxu0 %v2238
  %2339 = vmatprep.subr.mxu0 0.0
  %2340 = vmatpush2.msra.mxu0 0.0
  %2341 = vmatprep.subr.mxu0 0.0
  %2342 = vmatpush2.msra.mxu0 0.0
  %2343 = vmatprep.subr.mxu0 0.0
  %2344 = vmatpush2.msra.mxu0 0.0
  %2345 = vmatprep.subr.mxu0 0.0
  %2346 = vmatpush2.msra.mxu0 0.0
  %2347 = vmatprep.subr.mxu0 0.0
  %2348 = vmatpush2.msra.mxu0 0.0
  %2349 = vmatprep.subr.mxu0 0.0
  %2350 = vmatpush2.msra.mxu0 0.0
  %2351 = vmatprep.subr.mxu0 0.0
  %2352 = vmatpush2.msra.mxu0 0.0
  %2353 = vmatprep.subr.mxu0 0.0
  %2354 = vmatpush2.msra.mxu0 0.0
  %2355 = vmatprep.subr.mxu0 0.0
  %2356 = vmatpush2.msra.mxu0 0.0
  %2357 = vmatprep.subr.mxu0 0.0
  %2358 = vmatpush2.msra.mxu0 0.0
  %2359 = vmatprep.subr.mxu0 0.0
  %2360 = vmatpush2.msra.mxu0 0.0
  %2361 = vmatprep.subr.mxu0 0.0
  %2362 = vmatpush2.msra.mxu0 0.0
  %2363 = vmatprep.subr.mxu0 0.0
  %2364 = vmatpush2.msra.mxu0 0.0
  %2365 = vmatprep.subr.mxu0 0.0
  %2366 = vmatpush2.msra.mxu0 0.0
  %2367 = vmatprep.subr.mxu0 0.0
  %2368 = vmatpush2.msra.mxu0 0.0
  %2369 = vmatprep.subr.mxu0 0.0
  %2370 = vmatpush2.msra.mxu0 0.0
  %2371 = vmatprep.mubr.f32.mxu0 0.0
  %2372 = vmatmul.mubr.f32.gmra.mxu0 %v2306
  %v2373 = vpop.f32.mrf.mxu0
  %v2374 = vadd.f32 0.0, %v2373
  %v2375 = vpop.f32.mrf.mxu0
  %v2376 = vadd.f32 0.0, %v2375
  %2377 = vdwg.mxu0
  %2378 = vmatprep.subr.mxu0 %v2301
  %2379 = vmatpush1.msra.mxu0 %v2300
  %2380 = vmatprep.subr.mxu0 %v2297
  %2381 = vmatpush1.msra.mxu0 %v2296
  %2382 = vmatprep.subr.mxu0 %v2293
  %2383 = vmatpush1.msra.mxu0 %v2292
  %2384 = vmatprep.subr.mxu0 %v2289
  %2385 = vmatpush1.msra.mxu0 %v2288
  %2386 = vmatprep.subr.mxu0 %v2285
  %2387 = vmatpush1.msra.mxu0 %v2284
  %2388 = vmatprep.subr.mxu0 %v2281
  %2389 = vmatpush1.msra.mxu0 %v2280
  %2390 = vmatprep.subr.mxu0 %v2277
  %2391 = vmatpush1.msra.mxu0 %v2276
  %2392 = vmatprep.subr.mxu0 %v2273
  %2393 = vmatpush1.msra.mxu0 %v2272
  %2394 = vmatprep.subr.mxu0 %v2269
  %2395 = vmatpush1.msra.mxu0 %v2268
  %2396 = vmatprep.subr.mxu0 %v2265
  %2397 = vmatpush1.msra.mxu0 %v2264
  %2398 = vmatprep.subr.mxu0 %v2261
  %2399 = vmatpush1.msra.mxu0 %v2260
  %2400 = vmatprep.subr.mxu0 %v2257
  %2401 = vmatpush1.msra.mxu0 %v2256
  %2402 = vmatprep.subr.mxu0 %v2253
  %2403 = vmatpush1.msra.mxu0 %v2252
  %2404 = vmatprep.subr.mxu0 %v2249
  %2405 = vmatpush1.msra.mxu0 %v2248
  %2406 = vmatprep.subr.mxu0 %v2245
  %2407 = vmatpush1.msra.mxu0 %v2244
  %2408 = vmatprep.subr.mxu0 %v2241
  %2409 = vmatpush1.msra.mxu0 %v2240
  %2410 = vmatprep.subr.mxu0 0.0
  %2411 = vmatpush2.msra.mxu0 0.0
  %2412 = vmatprep.subr.mxu0 0.0
  %2413 = vmatpush2.msra.mxu0 0.0
  %2414 = vmatprep.subr.mxu0 0.0
  %2415 = vmatpush2.msra.mxu0 0.0
  %2416 = vmatprep.subr.mxu0 0.0
  %2417 = vmatpush2.msra.mxu0 0.0
  %2418 = vmatprep.subr.mxu0 0.0
  %2419 = vmatpush2.msra.mxu0 0.0
  %2420 = vmatprep.subr.mxu0 0.0
  %2421 = vmatpush2.msra.mxu0 0.0
  %2422 = vmatprep.subr.mxu0 0.0
  %2423 = vmatpush2.msra.mxu0 0.0
  %2424 = vmatprep.subr.mxu0 0.0
  %2425 = vmatpush2.msra.mxu0 0.0
  %2426 = vmatprep.subr.mxu0 0.0
  %2427 = vmatpush2.msra.mxu0 0.0
  %2428 = vmatprep.subr.mxu0 0.0
  %2429 = vmatpush2.msra.mxu0 0.0
  %2430 = vmatprep.subr.mxu0 0.0
  %2431 = vmatpush2.msra.mxu0 0.0
  %2432 = vmatprep.subr.mxu0 0.0
  %2433 = vmatpush2.msra.mxu0 0.0
  %2434 = vmatprep.subr.mxu0 0.0
  %2435 = vmatpush2.msra.mxu0 0.0
  %2436 = vmatprep.subr.mxu0 0.0
  %2437 = vmatpush2.msra.mxu0 0.0
  %2438 = vmatprep.subr.mxu0 0.0
  %2439 = vmatpush2.msra.mxu0 0.0
  %2440 = vmatprep.subr.mxu0 0.0
  %2441 = vmatpush2.msra.mxu0 0.0
  %2442 = vmatprep.mubr.f32.mxu0 0.0
  %2443 = vmatmul.mubr.f32.gmra.mxu0 %v2306
  %v2444 = vpop.f32.mrf.mxu0
  %v2445 = vadd.f32 0.0, %v2444
  %v2446 = vpop.f32.mrf.mxu0
  %v2447 = vadd.f32 0.0, %v2446
  %2448 = vdwg.mxu0
  %v2449 = vadd.f32 %v2302, %v2374
  %v2450 = vadd.f32 %v2303, %v2376
  %v2451 = vadd.f32 %v2304, %v2445
  %v2452 = vadd.f32 %v2305, %v2447
  %v2453 = vxor.u32 %v2449, 2147483648
  %v2454 = vmul.f32 %v2453, 1.442695
  %v2455 = vpow.pop %v2454
  %v2456 = vadd.f32 %v2455, 1.0
  %v2457 = vrcp.pop %v2456
  %v2458 = vmul.f32 1.0, %v2457
  %v2459 = vxor.u32 %v2450, 2147483648
  %v2460 = vmul.f32 %v2459, 1.442695
  %v2461 = vpow.pop %v2460
  %v2462 = vadd.f32 %v2461, 1.0
  %v2463 = vrcp.pop %v2462
  %v2464 = vmul.f32 1.0, %v2463
  %v2465 = vtanh.pop %v2451
  %v2466 = vxor.u32 %v2452, 2147483648
  %v2467 = vmul.f32 %v2466, 1.442695
  %v2468 = vpow.pop %v2467
  %v2469 = vadd.f32 %v2468, 1.0
  %v2470 = vrcp.pop %v2469
  %v2471 = vmul.f32 1.0, %v2470
  %v2472 = vld [vmem:[#allocation3] sm:$0xff]
  %v2473 = vmul.f32 %v2464, %v2472
  %v2474 = vmul.f32 %v2458, %v2465
  %v2475 = vadd.f32 %v2473, %v2474
  %v2476 = vtanh.pop %v2475
  %v2477 = vmul.f32 %v2471, %v2476
  %2478 = vst [vmem:[#allocation3] sm:$0xff] %v2475
  %2479 = vst [vmem:[#allocation2] sm:$0xff] %v2477
  %2480 = vst [vmem:[#allocation4] sm:$0xff] %v2477
  %v2481 = vld [vmem:[%s614] sm:$0xff]
  %v2482 = vld [vmem:[%s614 + $0x8] sm:$0xff]
  %v2483 = vld [vmem:[%s614 + $0x10] sm:$0xff]
  %v2484 = vld [vmem:[%s614 + $0x18] sm:$0xff]
  %v2485 = vld [vmem:[#allocation2] sm:$0xff]
  %2486 = vmatprep.subr.mxu0 %v2299
  %2487 = vmatpush1.msra.mxu0 %v2298
  %2488 = vmatprep.subr.mxu0 %v2295
  %2489 = vmatpush1.msra.mxu0 %v2294
  %2490 = vmatprep.subr.mxu0 %v2291
  %2491 = vmatpush1.msra.mxu0 %v2290
  %2492 = vmatprep.subr.mxu0 %v2287
  %2493 = vmatpush1.msra.mxu0 %v2286
  %2494 = vmatprep.subr.mxu0 %v2283
  %2495 = vmatpush1.msra.mxu0 %v2282
  %2496 = vmatprep.subr.mxu0 %v2279
  %2497 = vmatpush1.msra.mxu0 %v2278
  %2498 = vmatprep.subr.mxu0 %v2275
  %2499 = vmatpush1.msra.mxu0 %v2274
  %2500 = vmatprep.subr.mxu0 %v2271
  %2501 = vmatpush1.msra.mxu0 %v2270
  %2502 = vmatprep.subr.mxu0 %v2267
  %2503 = vmatpush1.msra.mxu0 %v2266
  %2504 = vmatprep.subr.mxu0 %v2263
  %2505 = vmatpush1.msra.mxu0 %v2262
  %2506 = vmatprep.subr.mxu0 %v2259
  %2507 = vmatpush1.msra.mxu0 %v2258
  %2508 = vmatprep.subr.mxu0 %v2255
  %2509 = vmatpush1.msra.mxu0 %v2254
  %2510 = vmatprep.subr.mxu0 %v2251
  %2511 = vmatpush1.msra.mxu0 %v2250
  %2512 = vmatprep.subr.mxu0 %v2247
  %2513 = vmatpush1.msra.mxu0 %v2246
  %2514 = vmatprep.subr.mxu0 %v2243
  %2515 = vmatpush1.msra.mxu0 %v2242
  %2516 = vmatprep.subr.mxu0 %v2239
  %2517 = vmatpush1.msra.mxu0 %v2238
  %2518 = vmatprep.subr.mxu0 0.0
  %2519 = vmatpush2.msra.mxu0 0.0
  %2520 = vmatprep.subr.mxu0 0.0
  %2521 = vmatpush2.msra.mxu0 0.0
  %2522 = vmatprep.subr.mxu0 0.0
  %2523 = vmatpush2.msra.mxu0 0.0
  %2524 = vmatprep.subr.mxu0 0.0
  %2525 = vmatpush2.msra.mxu0 0.0
  %2526 = vmatprep.subr.mxu0 0.0
  %2527 = vmatpush2.msra.mxu0 0.0
  %2528 = vmatprep.subr.mxu0 0.0
  %2529 = vmatpush2.msra.mxu0 0.0
  %2530 = vmatprep.subr.mxu0 0.0
  %2531 = vmatpush2.msra.mxu0 0.0
  %2532 = vmatprep.subr.mxu0 0.0
  %2533 = vmatpush2.msra.mxu0 0.0
  %2534 = vmatprep.subr.mxu0 0.0
  %2535 = vmatpush2.msra.mxu0 0.0
  %2536 = vmatprep.subr.mxu0 0.0
  %2537 = vmatpush2.msra.mxu0 0.0
  %2538 = vmatprep.subr.mxu0 0.0
  %2539 = vmatpush2.msra.mxu0 0.0
  %2540 = vmatprep.subr.mxu0 0.0
  %2541 = vmatpush2.msra.mxu0 0.0
  %2542 = vmatprep.subr.mxu0 0.0
  %2543 = vmatpush2.msra.mxu0 0.0
  %2544 = vmatprep.subr.mxu0 0.0
  %2545 = vmatpush2.msra.mxu0 0.0
  %2546 = vmatprep.subr.mxu0 0.0
  %2547 = vmatpush2.msra.mxu0 0.0
  %2548 = vmatprep.subr.mxu0 0.0
  %2549 = vmatpush2.msra.mxu0 0.0
  %2550 = vmatprep.mubr.f32.mxu0 0.0
  %2551 = vmatmul.mubr.f32.gmra.mxu0 %v2485
  %v2552 = vpop.f32.mrf.mxu0
  %v2553 = vadd.f32 0.0, %v2552
  %v2554 = vpop.f32.mrf.mxu0
  %v2555 = vadd.f32 0.0, %v2554
  %2556 = vdwg.mxu0
  %2557 = vmatprep.subr.mxu0 %v2301
  %2558 = vmatpush1.msra.mxu0 %v2300
  %2559 = vmatprep.subr.mxu0 %v2297
  %2560 = vmatpush1.msra.mxu0 %v2296
  %2561 = vmatprep.subr.mxu0 %v2293
  %2562 = vmatpush1.msra.mxu0 %v2292
  %2563 = vmatprep.subr.mxu0 %v2289
  %2564 = vmatpush1.msra.mxu0 %v2288
  %2565 = vmatprep.subr.mxu0 %v2285
  %2566 = vmatpush1.msra.mxu0 %v2284
  %2567 = vmatprep.subr.mxu0 %v2281
  %2568 = vmatpush1.msra.mxu0 %v2280
  %2569 = vmatprep.subr.mxu0 %v2277
  %2570 = vmatpush1.msra.mxu0 %v2276
  %2571 = vmatprep.subr.mxu0 %v2273
  %2572 = vmatpush1.msra.mxu0 %v2272
  %2573 = vmatprep.subr.mxu0 %v2269
  %2574 = vmatpush1.msra.mxu0 %v2268
  %2575 = vmatprep.subr.mxu0 %v2265
  %2576 = vmatpush1.msra.mxu0 %v2264
  %2577 = vmatprep.subr.mxu0 %v2261
  %2578 = vmatpush1.msra.mxu0 %v2260
  %2579 = vmatprep.subr.mxu0 %v2257
  %2580 = vmatpush1.msra.mxu0 %v2256
  %2581 = vmatprep.subr.mxu0 %v2253
  %2582 = vmatpush1.msra.mxu0 %v2252
  %2583 = vmatprep.subr.mxu0 %v2249
  %2584 = vmatpush1.msra.mxu0 %v2248
  %2585 = vmatprep.subr.mxu0 %v2245
  %2586 = vmatpush1.msra.mxu0 %v2244
  %2587 = vmatprep.subr.mxu0 %v2241
  %2588 = vmatpush1.msra.mxu0 %v2240
  %2589 = vmatprep.subr.mxu0 0.0
  %2590 = vmatpush2.msra.mxu0 0.0
  %2591 = vmatprep.subr.mxu0 0.0
  %2592 = vmatpush2.msra.mxu0 0.0
  %2593 = vmatprep.subr.mxu0 0.0
  %2594 = vmatpush2.msra.mxu0 0.0
  %2595 = vmatprep.subr.mxu0 0.0
  %2596 = vmatpush2.msra.mxu0 0.0
  %2597 = vmatprep.subr.mxu0 0.0
  %2598 = vmatpush2.msra.mxu0 0.0
  %2599 = vmatprep.subr.mxu0 0.0
  %2600 = vmatpush2.msra.mxu0 0.0
  %2601 = vmatprep.subr.mxu0 0.0
  %2602 = vmatpush2.msra.mxu0 0.0
  %2603 = vmatprep.subr.mxu0 0.0
  %2604 = vmatpush2.msra.mxu0 0.0
  %2605 = vmatprep.subr.mxu0 0.0
  %2606 = vmatpush2.msra.mxu0 0.0
  %2607 = vmatprep.subr.mxu0 0.0
  %2608 = vmatpush2.msra.mxu0 0.0
  %2609 = vmatprep.subr.mxu0 0.0
  %2610 = vmatpush2.msra.mxu0 0.0
  %2611 = vmatprep.subr.mxu0 0.0
  %2612 = vmatpush2.msra.mxu0 0.0
  %2613 = vmatprep.subr.mxu0 0.0
  %2614 = vmatpush2.msra.mxu0 0.0
  %2615 = vmatprep.subr.mxu0 0.0
  %2616 = vmatpush2.msra.mxu0 0.0
  %2617 = vmatprep.subr.mxu0 0.0
  %2618 = vmatpush2.msra.mxu0 0.0
  %2619 = vmatprep.subr.mxu0 0.0
  %2620 = vmatpush2.msra.mxu0 0.0
  %2621 = vmatprep.mubr.f32.mxu0 0.0
  %2622 = vmatmul.mubr.f32.gmra.mxu0 %v2485
  %v2623 = vpop.f32.mrf.mxu0
  %v2624 = vadd.f32 0.0, %v2623
  %v2625 = vpop.f32.mrf.mxu0
  %v2626 = vadd.f32 0.0, %v2625
  %2627 = vdwg.mxu0
  %v2628 = vadd.f32 %v2481, %v2553
  %v2629 = vadd.f32 %v2482, %v2555
  %v2630 = vadd.f32 %v2483, %v2624
  %v2631 = vadd.f32 %v2484, %v2626
  %v2632 = vxor.u32 %v2628, 2147483648
  %v2633 = vmul.f32 %v2632, 1.442695
  %v2634 = vpow.pop %v2633
  %v2635 = vadd.f32 %v2634, 1.0
  %v2636 = vrcp.pop %v2635
  %v2637 = vmul.f32 1.0, %v2636
  %v2638 = vxor.u32 %v2629, 2147483648
  %v2639 = vmul.f32 %v2638, 1.442695
  %v2640 = vpow.pop %v2639
  %v2641 = vadd.f32 %v2640, 1.0
  %v2642 = vrcp.pop %v2641
  %v2643 = vmul.f32 1.0, %v2642
  %v2644 = vtanh.pop %v2630
  %v2645 = vxor.u32 %v2631, 2147483648
  %v2646 = vmul.f32 %v2645, 1.442695
  %v2647 = vpow.pop %v2646
  %v2648 = vadd.f32 %v2647, 1.0
  %v2649 = vrcp.pop %v2648
  %v2650 = vmul.f32 1.0, %v2649
  %v2651 = vld [vmem:[#allocation3] sm:$0xff]
  %v2652 = vmul.f32 %v2643, %v2651
  %v2653 = vmul.f32 %v2637, %v2644
  %v2654 = vadd.f32 %v2652, %v2653
  %v2655 = vtanh.pop %v2654
  %v2656 = vmul.f32 %v2650, %v2655
  %2657 = vst [vmem:[#allocation3] sm:$0xff] %v2654
  %2658 = vst [vmem:[#allocation2] sm:$0xff] %v2656
  %2659 = vst [vmem:[%s793] sm:$0xff] %v2656
  %v2660 = vld [vmem:[%s795] sm:$0xff]
  %v2661 = vld [vmem:[%s795 + $0x8] sm:$0xff]
  %v2662 = vld [vmem:[%s795 + $0x10] sm:$0xff]
  %v2663 = vld [vmem:[%s795 + $0x18] sm:$0xff]
  %v2664 = vld [vmem:[#allocation2] sm:$0xff]
  %2665 = vmatprep.subr.mxu0 %v2299
  %2666 = vmatpush1.msra.mxu0 %v2298
  %2667 = vmatprep.subr.mxu0 %v2295
  %2668 = vmatpush1.msra.mxu0 %v2294
  %2669 = vmatprep.subr.mxu0 %v2291
  %2670 = vmatpush1.msra.mxu0 %v2290
  %2671 = vmatprep.subr.mxu0 %v2287
  %2672 = vmatpush1.msra.mxu0 %v2286
  %2673 = vmatprep.subr.mxu0 %v2283
  %2674 = vmatpush1.msra.mxu0 %v2282
  %2675 = vmatprep.subr.mxu0 %v2279
  %2676 = vmatpush1.msra.mxu0 %v2278
  %2677 = vmatprep.subr.mxu0 %v2275
  %2678 = vmatpush1.msra.mxu0 %v2274
  %2679 = vmatprep.subr.mxu0 %v2271
  %2680 = vmatpush1.msra.mxu0 %v2270
  %2681 = vmatprep.subr.mxu0 %v2267
  %2682 = vmatpush1.msra.mxu0 %v2266
  %2683 = vmatprep.subr.mxu0 %v2263
  %2684 = vmatpush1.msra.mxu0 %v2262
  %2685 = vmatprep.subr.mxu0 %v2259
  %2686 = vmatpush1.msra.mxu0 %v2258
  %2687 = vmatprep.subr.mxu0 %v2255
  %2688 = vmatpush1.msra.mxu0 %v2254
  %2689 = vmatprep.subr.mxu0 %v2251
  %2690 = vmatpush1.msra.mxu0 %v2250
  %2691 = vmatprep.subr.mxu0 %v2247
  %2692 = vmatpush1.msra.mxu0 %v2246
  %2693 = vmatprep.subr.mxu0 %v2243
  %2694 = vmatpush1.msra.mxu0 %v2242
  %2695 = vmatprep.subr.mxu0 %v2239
  %2696 = vmatpush1.msra.mxu0 %v2238
  %2697 = vmatprep.subr.mxu0 0.0
  %2698 = vmatpush2.msra.mxu0 0.0
  %2699 = vmatprep.subr.mxu0 0.0
  %2700 = vmatpush2.msra.mxu0 0.0
  %2701 = vmatprep.subr.mxu0 0.0
  %2702 = vmatpush2.msra.mxu0 0.0
  %2703 = vmatprep.subr.mxu0 0.0
  %2704 = vmatpush2.msra.mxu0 0.0
  %2705 = vmatprep.subr.mxu0 0.0
  %2706 = vmatpush2.msra.mxu0 0.0
  %2707 = vmatprep.subr.mxu0 0.0
  %2708 = vmatpush2.msra.mxu0 0.0
  %2709 = vmatprep.subr.mxu0 0.0
  %2710 = vmatpush2.msra.mxu0 0.0
  %2711 = vmatprep.subr.mxu0 0.0
  %2712 = vmatpush2.msra.mxu0 0.0
  %2713 = vmatprep.subr.mxu0 0.0
  %2714 = vmatpush2.msra.mxu0 0.0
  %2715 = vmatprep.subr.mxu0 0.0
  %2716 = vmatpush2.msra.mxu0 0.0
  %2717 = vmatprep.subr.mxu0 0.0
  %2718 = vmatpush2.msra.mxu0 0.0
  %2719 = vmatprep.subr.mxu0 0.0
  %2720 = vmatpush2.msra.mxu0 0.0
  %2721 = vmatprep.subr.mxu0 0.0
  %2722 = vmatpush2.msra.mxu0 0.0
  %2723 = vmatprep.subr.mxu0 0.0
  %2724 = vmatpush2.msra.mxu0 0.0
  %2725 = vmatprep.subr.mxu0 0.0
  %2726 = vmatpush2.msra.mxu0 0.0
  %2727 = vmatprep.subr.mxu0 0.0
  %2728 = vmatpush2.msra.mxu0 0.0
  %2729 = vmatprep.mubr.f32.mxu0 0.0
  %2730 = vmatmul.mubr.f32.gmra.mxu0 %v2664
  %v2731 = vpop.f32.mrf.mxu0
  %v2732 = vadd.f32 0.0, %v2731
  %v2733 = vpop.f32.mrf.mxu0
  %v2734 = vadd.f32 0.0, %v2733
  %2735 = vdwg.mxu0
  %2736 = vmatprep.subr.mxu0 %v2301
  %2737 = vmatpush1.msra.mxu0 %v2300
  %2738 = vmatprep.subr.mxu0 %v2297
  %2739 = vmatpush1.msra.mxu0 %v2296
  %2740 = vmatprep.subr.mxu0 %v2293
  %2741 = vmatpush1.msra.mxu0 %v2292
  %2742 = vmatprep.subr.mxu0 %v2289
  %2743 = vmatpush1.msra.mxu0 %v2288
  %2744 = vmatprep.subr.mxu0 %v2285
  %2745 = vmatpush1.msra.mxu0 %v2284
  %2746 = vmatprep.subr.mxu0 %v2281
  %2747 = vmatpush1.msra.mxu0 %v2280
  %2748 = vmatprep.subr.mxu0 %v2277
  %2749 = vmatpush1.msra.mxu0 %v2276
  %2750 = vmatprep.subr.mxu0 %v2273
  %2751 = vmatpush1.msra.mxu0 %v2272
  %2752 = vmatprep.subr.mxu0 %v2269
  %2753 = vmatpush1.msra.mxu0 %v2268
  %2754 = vmatprep.subr.mxu0 %v2265
  %2755 = vmatpush1.msra.mxu0 %v2264
  %2756 = vmatprep.subr.mxu0 %v2261
  %2757 = vmatpush1.msra.mxu0 %v2260
  %2758 = vmatprep.subr.mxu0 %v2257
  %2759 = vmatpush1.msra.mxu0 %v2256
  %2760 = vmatprep.subr.mxu0 %v2253
  %2761 = vmatpush1.msra.mxu0 %v2252
  %2762 = vmatprep.subr.mxu0 %v2249
  %2763 = vmatpush1.msra.mxu0 %v2248
  %2764 = vmatprep.subr.mxu0 %v2245
  %2765 = vmatpush1.msra.mxu0 %v2244
  %2766 = vmatprep.subr.mxu0 %v2241
  %2767 = vmatpush1.msra.mxu0 %v2240
  %2768 = vmatprep.subr.mxu0 0.0
  %2769 = vmatpush2.msra.mxu0 0.0
  %2770 = vmatprep.subr.mxu0 0.0
  %2771 = vmatpush2.msra.mxu0 0.0
  %2772 = vmatprep.subr.mxu0 0.0
  %2773 = vmatpush2.msra.mxu0 0.0
  %2774 = vmatprep.subr.mxu0 0.0
  %2775 = vmatpush2.msra.mxu0 0.0
  %2776 = vmatprep.subr.mxu0 0.0
  %2777 = vmatpush2.msra.mxu0 0.0
  %2778 = vmatprep.subr.mxu0 0.0
  %2779 = vmatpush2.msra.mxu0 0.0
  %2780 = vmatprep.subr.mxu0 0.0
  %2781 = vmatpush2.msra.mxu0 0.0
  %2782 = vmatprep.subr.mxu0 0.0
  %2783 = vmatpush2.msra.mxu0 0.0
  %2784 = vmatprep.subr.mxu0 0.0
  %2785 = vmatpush2.msra.mxu0 0.0
  %2786 = vmatprep.subr.mxu0 0.0
  %2787 = vmatpush2.msra.mxu0 0.0
  %2788 = vmatprep.subr.mxu0 0.0
  %2789 = vmatpush2.msra.mxu0 0.0
  %2790 = vmatprep.subr.mxu0 0.0
  %2791 = vmatpush2.msra.mxu0 0.0
  %2792 = vmatprep.subr.mxu0 0.0
  %2793 = vmatpush2.msra.mxu0 0.0
  %2794 = vmatprep.subr.mxu0 0.0
  %2795 = vmatpush2.msra.mxu0 0.0
  %2796 = vmatprep.subr.mxu0 0.0
  %2797 = vmatpush2.msra.mxu0 0.0
  %2798 = vmatprep.subr.mxu0 0.0
  %2799 = vmatpush2.msra.mxu0 0.0
  %2800 = vmatprep.mubr.f32.mxu0 0.0
  %2801 = vmatmul.mubr.f32.gmra.mxu0 %v2664
  %v2802 = vpop.f32.mrf.mxu0
  %v2803 = vadd.f32 0.0, %v2802
  %v2804 = vpop.f32.mrf.mxu0
  %v2805 = vadd.f32 0.0, %v2804
  %2806 = vdwg.mxu0
  %v2807 = vadd.f32 %v2660, %v2732
  %v2808 = vadd.f32 %v2661, %v2734
  %v2809 = vadd.f32 %v2662, %v2803
  %v2810 = vadd.f32 %v2663, %v2805
  %v2811 = vxor.u32 %v2807, 2147483648
  %v2812 = vmul.f32 %v2811, 1.442695
  %v2813 = vpow.pop %v2812
  %v2814 = vadd.f32 %v2813, 1.0
  %v2815 = vrcp.pop %v2814
  %v2816 = vmul.f32 1.0, %v2815
  %v2817 = vxor.u32 %v2808, 2147483648
  %v2818 = vmul.f32 %v2817, 1.442695
  %v2819 = vpow.pop %v2818
  %v2820 = vadd.f32 %v2819, 1.0
  %v2821 = vrcp.pop %v2820
  %v2822 = vmul.f32 1.0, %v2821
  %v2823 = vtanh.pop %v2809
  %v2824 = vxor.u32 %v2810, 2147483648
  %v2825 = vmul.f32 %v2824, 1.442695
  %v2826 = vpow.pop %v2825
  %v2827 = vadd.f32 %v2826, 1.0
  %v2828 = vrcp.pop %v2827
  %v2829 = vmul.f32 1.0, %v2828
  %v2830 = vld [vmem:[#allocation3] sm:$0xff]
  %v2831 = vmul.f32 %v2822, %v2830
  %v2832 = vmul.f32 %v2816, %v2823
  %v2833 = vadd.f32 %v2831, %v2832
  %v2834 = vtanh.pop %v2833
  %v2835 = vmul.f32 %v2829, %v2834
  %2836 = vst [vmem:[#allocation3] sm:$0xff] %v2833
  %2837 = vst [vmem:[#allocation2] sm:$0xff] %v2835
  %2838 = vst [vmem:[%s974] sm:$0xff] %v2835
  %v2839 = vld [vmem:[%s976] sm:$0xff]
  %v2840 = vld [vmem:[%s976 + $0x8] sm:$0xff]
  %v2841 = vld [vmem:[%s976 + $0x10] sm:$0xff]
  %v2842 = vld [vmem:[%s976 + $0x18] sm:$0xff]
  %v2843 = vld [vmem:[#allocation2] sm:$0xff]
  %2844 = vmatprep.subr.mxu0 %v2299
  %2845 = vmatpush1.msra.mxu0 %v2298
  %2846 = vmatprep.subr.mxu0 %v2295
  %2847 = vmatpush1.msra.mxu0 %v2294
  %2848 = vmatprep.subr.mxu0 %v2291
  %2849 = vmatpush1.msra.mxu0 %v2290
  %2850 = vmatprep.subr.mxu0 %v2287
  %2851 = vmatpush1.msra.mxu0 %v2286
  %2852 = vmatprep.subr.mxu0 %v2283
  %2853 = vmatpush1.msra.mxu0 %v2282
  %2854 = vmatprep.subr.mxu0 %v2279
  %2855 = vmatpush1.msra.mxu0 %v2278
  %2856 = vmatprep.subr.mxu0 %v2275
  %2857 = vmatpush1.msra.mxu0 %v2274
  %2858 = vmatprep.subr.mxu0 %v2271
  %2859 = vmatpush1.msra.mxu0 %v2270
  %2860 = vmatprep.subr.mxu0 %v2267
  %2861 = vmatpush1.msra.mxu0 %v2266
  %2862 = vmatprep.subr.mxu0 %v2263
  %2863 = vmatpush1.msra.mxu0 %v2262
  %2864 = vmatprep.subr.mxu0 %v2259
  %2865 = vmatpush1.msra.mxu0 %v2258
  %2866 = vmatprep.subr.mxu0 %v2255
  %2867 = vmatpush1.msra.mxu0 %v2254
  %2868 = vmatprep.subr.mxu0 %v2251
  %2869 = vmatpush1.msra.mxu0 %v2250
  %2870 = vmatprep.subr.mxu0 %v2247
  %2871 = vmatpush1.msra.mxu0 %v2246
  %2872 = vmatprep.subr.mxu0 %v2243
  %2873 = vmatpush1.msra.mxu0 %v2242
  %2874 = vmatprep.subr.mxu0 %v2239
  %2875 = vmatpush1.msra.mxu0 %v2238
  %2876 = vmatprep.subr.mxu0 0.0
  %2877 = vmatpush2.msra.mxu0 0.0
  %2878 = vmatprep.subr.mxu0 0.0
  %2879 = vmatpush2.msra.mxu0 0.0
  %2880 = vmatprep.subr.mxu0 0.0
  %2881 = vmatpush2.msra.mxu0 0.0
  %2882 = vmatprep.subr.mxu0 0.0
  %2883 = vmatpush2.msra.mxu0 0.0
  %2884 = vmatprep.subr.mxu0 0.0
  %2885 = vmatpush2.msra.mxu0 0.0
  %2886 = vmatprep.subr.mxu0 0.0
  %2887 = vmatpush2.msra.mxu0 0.0
  %2888 = vmatprep.subr.mxu0 0.0
  %2889 = vmatpush2.msra.mxu0 0.0
  %2890 = vmatprep.subr.mxu0 0.0
  %2891 = vmatpush2.msra.mxu0 0.0
  %2892 = vmatprep.subr.mxu0 0.0
  %2893 = vmatpush2.msra.mxu0 0.0
  %2894 = vmatprep.subr.mxu0 0.0
  %2895 = vmatpush2.msra.mxu0 0.0
  %2896 = vmatprep.subr.mxu0 0.0
  %2897 = vmatpush2.msra.mxu0 0.0
  %2898 = vmatprep.subr.mxu0 0.0
  %2899 = vmatpush2.msra.mxu0 0.0
  %2900 = vmatprep.subr.mxu0 0.0
  %2901 = vmatpush2.msra.mxu0 0.0
  %2902 = vmatprep.subr.mxu0 0.0
  %2903 = vmatpush2.msra.mxu0 0.0
  %2904 = vmatprep.subr.mxu0 0.0
  %2905 = vmatpush2.msra.mxu0 0.0
  %2906 = vmatprep.subr.mxu0 0.0
  %2907 = vmatpush2.msra.mxu0 0.0
  %2908 = vmatprep.mubr.f32.mxu0 0.0
  %2909 = vmatmul.mubr.f32.gmra.mxu0 %v2843
  %v2910 = vpop.f32.mrf.mxu0
  %v2911 = vadd.f32 0.0, %v2910
  %v2912 = vpop.f32.mrf.mxu0
  %v2913 = vadd.f32 0.0, %v2912
  %2914 = vdwg.mxu0
  %2915 = vmatprep.subr.mxu0 %v2301
  %2916 = vmatpush1.msra.mxu0 %v2300
  %2917 = vmatprep.subr.mxu0 %v2297
  %2918 = vmatpush1.msra.mxu0 %v2296
  %2919 = vmatprep.subr.mxu0 %v2293
  %2920 = vmatpush1.msra.mxu0 %v2292
  %2921 = vmatprep.subr.mxu0 %v2289
  %2922 = vmatpush1.msra.mxu0 %v2288
  %2923 = vmatprep.subr.mxu0 %v2285
  %2924 = vmatpush1.msra.mxu0 %v2284
  %2925 = vmatprep.subr.mxu0 %v2281
  %2926 = vmatpush1.msra.mxu0 %v2280
  %2927 = vmatprep.subr.mxu0 %v2277
  %2928 = vmatpush1.msra.mxu0 %v2276
  %2929 = vmatprep.subr.mxu0 %v2273
  %2930 = vmatpush1.msra.mxu0 %v2272
  %2931 = vmatprep.subr.mxu0 %v2269
  %2932 = vmatpush1.msra.mxu0 %v2268
  %2933 = vmatprep.subr.mxu0 %v2265
  %2934 = vmatpush1.msra.mxu0 %v2264
  %2935 = vmatprep.subr.mxu0 %v2261
  %2936 = vmatpush1.msra.mxu0 %v2260
  %2937 = vmatprep.subr.mxu0 %v2257
  %2938 = vmatpush1.msra.mxu0 %v2256
  %2939 = vmatprep.subr.mxu0 %v2253
  %2940 = vmatpush1.msra.mxu0 %v2252
  %2941 = vmatprep.subr.mxu0 %v2249
  %2942 = vmatpush1.msra.mxu0 %v2248
  %2943 = vmatprep.subr.mxu0 %v2245
  %2944 = vmatpush1.msra.mxu0 %v2244
  %2945 = vmatprep.subr.mxu0 %v2241
  %2946 = vmatpush1.msra.mxu0 %v2240
  %2947 = vmatprep.subr.mxu0 0.0
  %2948 = vmatpush2.msra.mxu0 0.0
  %2949 = vmatprep.subr.mxu0 0.0
  %2950 = vmatpush2.msra.mxu0 0.0
  %2951 = vmatprep.subr.mxu0 0.0
  %2952 = vmatpush2.msra.mxu0 0.0
  %2953 = vmatprep.subr.mxu0 0.0
  %2954 = vmatpush2.msra.mxu0 0.0
  %2955 = vmatprep.subr.mxu0 0.0
  %2956 = vmatpush2.msra.mxu0 0.0
  %2957 = vmatprep.subr.mxu0 0.0
  %2958 = vmatpush2.msra.mxu0 0.0
  %2959 = vmatprep.subr.mxu0 0.0
  %2960 = vmatpush2.msra.mxu0 0.0
  %2961 = vmatprep.subr.mxu0 0.0
  %2962 = vmatpush2.msra.mxu0 0.0
  %2963 = vmatprep.subr.mxu0 0.0
  %2964 = vmatpush2.msra.mxu0 0.0
  %2965 = vmatprep.subr.mxu0 0.0
  %2966 = vmatpush2.msra.mxu0 0.0
  %2967 = vmatprep.subr.mxu0 0.0
  %2968 = vmatpush2.msra.mxu0 0.0
  %2969 = vmatprep.subr.mxu0 0.0
  %2970 = vmatpush2.msra.mxu0 0.0
  %2971 = vmatprep.subr.mxu0 0.0
  %2972 = vmatpush2.msra.mxu0 0.0
  %2973 = vmatprep.subr.mxu0 0.0
  %2974 = vmatpush2.msra.mxu0 0.0
  %2975 = vmatprep.subr.mxu0 0.0
  %2976 = vmatpush2.msra.mxu0 0.0
  %2977 = vmatprep.subr.mxu0 0.0
  %2978 = vmatpush2.msra.mxu0 0.0
  %2979 = vmatprep.mubr.f32.mxu0 0.0
  %2980 = vmatmul.mubr.f32.gmra.mxu0 %v2843
  %v2981 = vpop.f32.mrf.mxu0
  %v2982 = vadd.f32 0.0, %v2981
  %v2983 = vpop.f32.mrf.mxu0
  %v2984 = vadd.f32 0.0, %v2983
  %2985 = vdwg.mxu0
  %v2986 = vadd.f32 %v2839, %v2911
  %v2987 = vadd.f32 %v2840, %v2913
  %v2988 = vadd.f32 %v2841, %v2982
  %v2989 = vadd.f32 %v2842, %v2984
  %v2990 = vxor.u32 %v2986, 2147483648
  %v2991 = vmul.f32 %v2990, 1.442695
  %v2992 = vpow.pop %v2991
  %v2993 = vadd.f32 %v2992, 1.0
  %v2994 = vrcp.pop %v2993
  %v2995 = vmul.f32 1.0, %v2994
  %v2996 = vxor.u32 %v2987, 2147483648
  %v2997 = vmul.f32 %v2996, 1.442695
  %v2998 = vpow.pop %v2997
  %v2999 = vadd.f32 %v2998, 1.0
  %v3000 = vrcp.pop %v2999
  %v3001 = vmul.f32 1.0, %v3000
  %v3002 = vtanh.pop %v2988
  %v3003 = vxor.u32 %v2989, 2147483648
  %v3004 = vmul.f32 %v3003, 1.442695
  %v3005 = vpow.pop %v3004
  %v3006 = vadd.f32 %v3005, 1.0
  %v3007 = vrcp.pop %v3006
  %v3008 = vmul.f32 1.0, %v3007
  %v3009 = vld [vmem:[#allocation3] sm:$0xff]
  %v3010 = vmul.f32 %v3001, %v3009
  %v3011 = vmul.f32 %v2995, %v3002
  %v3012 = vadd.f32 %v3010, %v3011
  %v3013 = vtanh.pop %v3012
  %v3014 = vmul.f32 %v3008, %v3013
  %3015 = vst [vmem:[#allocation3] sm:$0xff] %v3012
  %3016 = vst [vmem:[#allocation2] sm:$0xff] %v3014
  %3017 = vst [vmem:[%s1155] sm:$0xff] %v3014
  %v3018 = vld [vmem:[%s1157] sm:$0xff]
  %v3019 = vld [vmem:[%s1157 + $0x8] sm:$0xff]
  %v3020 = vld [vmem:[%s1157 + $0x10] sm:$0xff]
  %v3021 = vld [vmem:[%s1157 + $0x18] sm:$0xff]
  %v3022 = vld [vmem:[#allocation2] sm:$0xff]
  %3023 = vmatprep.subr.mxu0 %v2299
  %3024 = vmatpush1.msra.mxu0 %v2298
  %3025 = vmatprep.subr.mxu0 %v2295
  %3026 = vmatpush1.msra.mxu0 %v2294
  %3027 = vmatprep.subr.mxu0 %v2291
  %3028 = vmatpush1.msra.mxu0 %v2290
  %3029 = vmatprep.subr.mxu0 %v2287
  %3030 = vmatpush1.msra.mxu0 %v2286
  %3031 = vmatprep.subr.mxu0 %v2283
  %3032 = vmatpush1.msra.mxu0 %v2282
  %3033 = vmatprep.subr.mxu0 %v2279
  %3034 = vmatpush1.msra.mxu0 %v2278
  %3035 = vmatprep.subr.mxu0 %v2275
  %3036 = vmatpush1.msra.mxu0 %v2274
  %3037 = vmatprep.subr.mxu0 %v2271
  %3038 = vmatpush1.msra.mxu0 %v2270
  %3039 = vmatprep.subr.mxu0 %v2267
  %3040 = vmatpush1.msra.mxu0 %v2266
  %3041 = vmatprep.subr.mxu0 %v2263
  %3042 = vmatpush1.msra.mxu0 %v2262
  %3043 = vmatprep.subr.mxu0 %v2259
  %3044 = vmatpush1.msra.mxu0 %v2258
  %3045 = vmatprep.subr.mxu0 %v2255
  %3046 = vmatpush1.msra.mxu0 %v2254
  %3047 = vmatprep.subr.mxu0 %v2251
  %3048 = vmatpush1.msra.mxu0 %v2250
  %3049 = vmatprep.subr.mxu0 %v2247
  %3050 = vmatpush1.msra.mxu0 %v2246
  %3051 = vmatprep.subr.mxu0 %v2243
  %3052 = vmatpush1.msra.mxu0 %v2242
  %3053 = vmatprep.subr.mxu0 %v2239
  %3054 = vmatpush1.msra.mxu0 %v2238
  %3055 = vmatprep.subr.mxu0 0.0
  %3056 = vmatpush2.msra.mxu0 0.0
  %3057 = vmatprep.subr.mxu0 0.0
  %3058 = vmatpush2.msra.mxu0 0.0
  %3059 = vmatprep.subr.mxu0 0.0
  %3060 = vmatpush2.msra.mxu0 0.0
  %3061 = vmatprep.subr.mxu0 0.0
  %3062 = vmatpush2.msra.mxu0 0.0
  %3063 = vmatprep.subr.mxu0 0.0
  %3064 = vmatpush2.msra.mxu0 0.0
  %3065 = vmatprep.subr.mxu0 0.0
  %3066 = vmatpush2.msra.mxu0 0.0
  %3067 = vmatprep.subr.mxu0 0.0
  %3068 = vmatpush2.msra.mxu0 0.0
  %3069 = vmatprep.subr.mxu0 0.0
  %3070 = vmatpush2.msra.mxu0 0.0
  %3071 = vmatprep.subr.mxu0 0.0
  %3072 = vmatpush2.msra.mxu0 0.0
  %3073 = vmatprep.subr.mxu0 0.0
  %3074 = vmatpush2.msra.mxu0 0.0
  %3075 = vmatprep.subr.mxu0 0.0
  %3076 = vmatpush2.msra.mxu0 0.0
  %3077 = vmatprep.subr.mxu0 0.0
  %3078 = vmatpush2.msra.mxu0 0.0
  %3079 = vmatprep.subr.mxu0 0.0
  %3080 = vmatpush2.msra.mxu0 0.0
  %3081 = vmatprep.subr.mxu0 0.0
  %3082 = vmatpush2.msra.mxu0 0.0
  %3083 = vmatprep.subr.mxu0 0.0
  %3084 = vmatpush2.msra.mxu0 0.0
  %3085 = vmatprep.subr.mxu0 0.0
  %3086 = vmatpush2.msra.mxu0 0.0
  %3087 = vmatprep.mubr.f32.mxu0 0.0
  %3088 = vmatmul.mubr.f32.gmra.mxu0 %v3022
  %v3089 = vpop.f32.mrf.mxu0
  %v3090 = vadd.f32 0.0, %v3089
  %v3091 = vpop.f32.mrf.mxu0
  %v3092 = vadd.f32 0.0, %v3091
  %3093 = vdwg.mxu0
  %3094 = vmatprep.subr.mxu0 %v2301
  %3095 = vmatpush1.msra.mxu0 %v2300
  %3096 = vmatprep.subr.mxu0 %v2297
  %3097 = vmatpush1.msra.mxu0 %v2296
  %3098 = vmatprep.subr.mxu0 %v2293
  %3099 = vmatpush1.msra.mxu0 %v2292
  %3100 = vmatprep.subr.mxu0 %v2289
  %3101 = vmatpush1.msra.mxu0 %v2288
  %3102 = vmatprep.subr.mxu0 %v2285
  %3103 = vmatpush1.msra.mxu0 %v2284
  %3104 = vmatprep.subr.mxu0 %v2281
  %3105 = vmatpush1.msra.mxu0 %v2280
  %3106 = vmatprep.subr.mxu0 %v2277
  %3107 = vmatpush1.msra.mxu0 %v2276
  %3108 = vmatprep.subr.mxu0 %v2273
  %3109 = vmatpush1.msra.mxu0 %v2272
  %3110 = vmatprep.subr.mxu0 %v2269
  %3111 = vmatpush1.msra.mxu0 %v2268
  %3112 = vmatprep.subr.mxu0 %v2265
  %3113 = vmatpush1.msra.mxu0 %v2264
  %3114 = vmatprep.subr.mxu0 %v2261
  %3115 = vmatpush1.msra.mxu0 %v2260
  %3116 = vmatprep.subr.mxu0 %v2257
  %3117 = vmatpush1.msra.mxu0 %v2256
  %3118 = vmatprep.subr.mxu0 %v2253
  %3119 = vmatpush1.msra.mxu0 %v2252
  %3120 = vmatprep.subr.mxu0 %v2249
  %3121 = vmatpush1.msra.mxu0 %v2248
  %3122 = vmatprep.subr.mxu0 %v2245
  %3123 = vmatpush1.msra.mxu0 %v2244
  %3124 = vmatprep.subr.mxu0 %v2241
  %3125 = vmatpush1.msra.mxu0 %v2240
  %3126 = vmatprep.subr.mxu0 0.0
  %3127 = vmatpush2.msra.mxu0 0.0
  %3128 = vmatprep.subr.mxu0 0.0
  %3129 = vmatpush2.msra.mxu0 0.0
  %3130 = vmatprep.subr.mxu0 0.0
  %3131 = vmatpush2.msra.mxu0 0.0
  %3132 = vmatprep.subr.mxu0 0.0
  %3133 = vmatpush2.msra.mxu0 0.0
  %3134 = vmatprep.subr.mxu0 0.0
  %3135 = vmatpush2.msra.mxu0 0.0
  %3136 = vmatprep.subr.mxu0 0.0
  %3137 = vmatpush2.msra.mxu0 0.0
  %3138 = vmatprep.subr.mxu0 0.0
  %3139 = vmatpush2.msra.mxu0 0.0
  %3140 = vmatprep.subr.mxu0 0.0
  %3141 = vmatpush2.msra.mxu0 0.0
  %3142 = vmatprep.subr.mxu0 0.0
  %3143 = vmatpush2.msra.mxu0 0.0
  %3144 = vmatprep.subr.mxu0 0.0
  %3145 = vmatpush2.msra.mxu0 0.0
  %3146 = vmatprep.subr.mxu0 0.0
  %3147 = vmatpush2.msra.mxu0 0.0
  %3148 = vmatprep.subr.mxu0 0.0
  %3149 = vmatpush2.msra.mxu0 0.0
  %3150 = vmatprep.subr.mxu0 0.0
  %3151 = vmatpush2.msra.mxu0 0.0
  %3152 = vmatprep.subr.mxu0 0.0
  %3153 = vmatpush2.msra.mxu0 0.0
  %3154 = vmatprep.subr.mxu0 0.0
  %3155 = vmatpush2.msra.mxu0 0.0
  %3156 = vmatprep.subr.mxu0 0.0
  %3157 = vmatpush2.msra.mxu0 0.0
  %3158 = vmatprep.mubr.f32.mxu0 0.0
  %3159 = vmatmul.mubr.f32.gmra.mxu0 %v3022
  %v3160 = vpop.f32.mrf.mxu0
  %v3161 = vadd.f32 0.0, %v3160
  %v3162 = vpop.f32.mrf.mxu0
  %v3163 = vadd.f32 0.0, %v3162
  %3164 = vdwg.mxu0
  %v3165 = vadd.f32 %v3018, %v3090
  %v3166 = vadd.f32 %v3019, %v3092
  %v3167 = vadd.f32 %v3020, %v3161
  %v3168 = vadd.f32 %v3021, %v3163
  %v3169 = vxor.u32 %v3165, 2147483648
  %v3170 = vmul.f32 %v3169, 1.442695
  %v3171 = vpow.pop %v3170
  %v3172 = vadd.f32 %v3171, 1.0
  %v3173 = vrcp.pop %v3172
  %v3174 = vmul.f32 1.0, %v3173
  %v3175 = vxor.u32 %v3166, 2147483648
  %v3176 = vmul.f32 %v3175, 1.442695
  %v3177 = vpow.pop %v3176
  %v3178 = vadd.f32 %v3177, 1.0
  %v3179 = vrcp.pop %v3178
  %v3180 = vmul.f32 1.0, %v3179
  %v3181 = vtanh.pop %v3167
  %v3182 = vxor.u32 %v3168, 2147483648
  %v3183 = vmul.f32 %v3182, 1.442695
  %v3184 = vpow.pop %v3183
  %v3185 = vadd.f32 %v3184, 1.0
  %v3186 = vrcp.pop %v3185
  %v3187 = vmul.f32 1.0, %v3186
  %v3188 = vld [vmem:[#allocation3] sm:$0xff]
  %v3189 = vmul.f32 %v3180, %v3188
  %v3190 = vmul.f32 %v3174, %v3181
  %v3191 = vadd.f32 %v3189, %v3190
  %v3192 = vtanh.pop %v3191
  %v3193 = vmul.f32 %v3187, %v3192
  %3194 = vst [vmem:[#allocation3] sm:$0xff] %v3191
  %3195 = vst [vmem:[#allocation2] sm:$0xff] %v3193
  %3196 = vst [vmem:[%s1336] sm:$0xff] %v3193
  %v3197 = vld [vmem:[%s1338] sm:$0xff]
  %v3198 = vld [vmem:[%s1338 + $0x8] sm:$0xff]
  %v3199 = vld [vmem:[%s1338 + $0x10] sm:$0xff]
  %v3200 = vld [vmem:[%s1338 + $0x18] sm:$0xff]
  %v3201 = vld [vmem:[#allocation2] sm:$0xff]
  %3202 = vmatprep.subr.mxu0 %v2299
  %3203 = vmatpush1.msra.mxu0 %v2298
  %3204 = vmatprep.subr.mxu0 %v2295
  %3205 = vmatpush1.msra.mxu0 %v2294
  %3206 = vmatprep.subr.mxu0 %v2291
  %3207 = vmatpush1.msra.mxu0 %v2290
  %3208 = vmatprep.subr.mxu0 %v2287
  %3209 = vmatpush1.msra.mxu0 %v2286
  %3210 = vmatprep.subr.mxu0 %v2283
  %3211 = vmatpush1.msra.mxu0 %v2282
  %3212 = vmatprep.subr.mxu0 %v2279
  %3213 = vmatpush1.msra.mxu0 %v2278
  %3214 = vmatprep.subr.mxu0 %v2275
  %3215 = vmatpush1.msra.mxu0 %v2274
  %3216 = vmatprep.subr.mxu0 %v2271
  %3217 = vmatpush1.msra.mxu0 %v2270
  %3218 = vmatprep.subr.mxu0 %v2267
  %3219 = vmatpush1.msra.mxu0 %v2266
  %3220 = vmatprep.subr.mxu0 %v2263
  %3221 = vmatpush1.msra.mxu0 %v2262
  %3222 = vmatprep.subr.mxu0 %v2259
  %3223 = vmatpush1.msra.mxu0 %v2258
  %3224 = vmatprep.subr.mxu0 %v2255
  %3225 = vmatpush1.msra.mxu0 %v2254
  %3226 = vmatprep.subr.mxu0 %v2251
  %3227 = vmatpush1.msra.mxu0 %v2250
  %3228 = vmatprep.subr.mxu0 %v2247
  %3229 = vmatpush1.msra.mxu0 %v2246
  %3230 = vmatprep.subr.mxu0 %v2243
  %3231 = vmatpush1.msra.mxu0 %v2242
  %3232 = vmatprep.subr.mxu0 %v2239
  %3233 = vmatpush1.msra.mxu0 %v2238
  %3234 = vmatprep.subr.mxu0 0.0
  %3235 = vmatpush2.msra.mxu0 0.0
  %3236 = vmatprep.subr.mxu0 0.0
  %3237 = vmatpush2.msra.mxu0 0.0
  %3238 = vmatprep.subr.mxu0 0.0
  %3239 = vmatpush2.msra.mxu0 0.0
  %3240 = vmatprep.subr.mxu0 0.0
  %3241 = vmatpush2.msra.mxu0 0.0
  %3242 = vmatprep.subr.mxu0 0.0
  %3243 = vmatpush2.msra.mxu0 0.0
  %3244 = vmatprep.subr.mxu0 0.0
  %3245 = vmatpush2.msra.mxu0 0.0
  %3246 = vmatprep.subr.mxu0 0.0
  %3247 = vmatpush2.msra.mxu0 0.0
  %3248 = vmatprep.subr.mxu0 0.0
  %3249 = vmatpush2.msra.mxu0 0.0
  %3250 = vmatprep.subr.mxu0 0.0
  %3251 = vmatpush2.msra.mxu0 0.0
  %3252 = vmatprep.subr.mxu0 0.0
  %3253 = vmatpush2.msra.mxu0 0.0
  %3254 = vmatprep.subr.mxu0 0.0
  %3255 = vmatpush2.msra.mxu0 0.0
  %3256 = vmatprep.subr.mxu0 0.0
  %3257 = vmatpush2.msra.mxu0 0.0
  %3258 = vmatprep.subr.mxu0 0.0
  %3259 = vmatpush2.msra.mxu0 0.0
  %3260 = vmatprep.subr.mxu0 0.0
  %3261 = vmatpush2.msra.mxu0 0.0
  %3262 = vmatprep.subr.mxu0 0.0
  %3263 = vmatpush2.msra.mxu0 0.0
  %3264 = vmatprep.subr.mxu0 0.0
  %3265 = vmatpush2.msra.mxu0 0.0
  %3266 = vmatprep.mubr.f32.mxu0 0.0
  %3267 = vmatmul.mubr.f32.gmra.mxu0 %v3201
  %v3268 = vpop.f32.mrf.mxu0
  %v3269 = vadd.f32 0.0, %v3268
  %v3270 = vpop.f32.mrf.mxu0
  %v3271 = vadd.f32 0.0, %v3270
  %3272 = vdwg.mxu0
  %3273 = vmatprep.subr.mxu0 %v2301
  %3274 = vmatpush1.msra.mxu0 %v2300
  %3275 = vmatprep.subr.mxu0 %v2297
  %3276 = vmatpush1.msra.mxu0 %v2296
  %3277 = vmatprep.subr.mxu0 %v2293
  %3278 = vmatpush1.msra.mxu0 %v2292
  %3279 = vmatprep.subr.mxu0 %v2289
  %3280 = vmatpush1.msra.mxu0 %v2288
  %3281 = vmatprep.subr.mxu0 %v2285
  %3282 = vmatpush1.msra.mxu0 %v2284
  %3283 = vmatprep.subr.mxu0 %v2281
  %3284 = vmatpush1.msra.mxu0 %v2280
  %3285 = vmatprep.subr.mxu0 %v2277
  %3286 = vmatpush1.msra.mxu0 %v2276
  %3287 = vmatprep.subr.mxu0 %v2273
  %3288 = vmatpush1.msra.mxu0 %v2272
  %3289 = vmatprep.subr.mxu0 %v2269
  %3290 = vmatpush1.msra.mxu0 %v2268
  %3291 = vmatprep.subr.mxu0 %v2265
  %3292 = vmatpush1.msra.mxu0 %v2264
  %3293 = vmatprep.subr.mxu0 %v2261
  %3294 = vmatpush1.msra.mxu0 %v2260
  %3295 = vmatprep.subr.mxu0 %v2257
  %3296 = vmatpush1.msra.mxu0 %v2256
  %3297 = vmatprep.subr.mxu0 %v2253
  %3298 = vmatpush1.msra.mxu0 %v2252
  %3299 = vmatprep.subr.mxu0 %v2249
  %3300 = vmatpush1.msra.mxu0 %v2248
  %3301 = vmatprep.subr.mxu0 %v2245
  %3302 = vmatpush1.msra.mxu0 %v2244
  %3303 = vmatprep.subr.mxu0 %v2241
  %3304 = vmatpush1.msra.mxu0 %v2240
  %3305 = vmatprep.subr.mxu0 0.0
  %3306 = vmatpush2.msra.mxu0 0.0
  %3307 = vmatprep.subr.mxu0 0.0
  %3308 = vmatpush2.msra.mxu0 0.0
  %3309 = vmatprep.subr.mxu0 0.0
  %3310 = vmatpush2.msra.mxu0 0.0
  %3311 = vmatprep.subr.mxu0 0.0
  %3312 = vmatpush2.msra.mxu0 0.0
  %3313 = vmatprep.subr.mxu0 0.0
  %3314 = vmatpush2.msra.mxu0 0.0
  %3315 = vmatprep.subr.mxu0 0.0
  %3316 = vmatpush2.msra.mxu0 0.0
  %3317 = vmatprep.subr.mxu0 0.0
  %3318 = vmatpush2.msra.mxu0 0.0
  %3319 = vmatprep.subr.mxu0 0.0
  %3320 = vmatpush2.msra.mxu0 0.0
  %3321 = vmatprep.subr.mxu0 0.0
  %3322 = vmatpush2.msra.mxu0 0.0
  %3323 = vmatprep.subr.mxu0 0.0
  %3324 = vmatpush2.msra.mxu0 0.0
  %3325 = vmatprep.subr.mxu0 0.0
  %3326 = vmatpush2.msra.mxu0 0.0
  %3327 = vmatprep.subr.mxu0 0.0
  %3328 = vmatpush2.msra.mxu0 0.0
  %3329 = vmatprep.subr.mxu0 0.0
  %3330 = vmatpush2.msra.mxu0 0.0
  %3331 = vmatprep.subr.mxu0 0.0
  %3332 = vmatpush2.msra.mxu0 0.0
  %3333 = vmatprep.subr.mxu0 0.0
  %3334 = vmatpush2.msra.mxu0 0.0
  %3335 = vmatprep.subr.mxu0 0.0
  %3336 = vmatpush2.msra.mxu0 0.0
  %3337 = vmatprep.mubr.f32.mxu0 0.0
  %3338 = vmatmul.mubr.f32.gmra.mxu0 %v3201
  %v3339 = vpop.f32.mrf.mxu0
  %v3340 = vadd.f32 0.0, %v3339
  %v3341 = vpop.f32.mrf.mxu0
  %v3342 = vadd.f32 0.0, %v3341
  %3343 = vdwg.mxu0
  %v3344 = vadd.f32 %v3197, %v3269
  %v3345 = vadd.f32 %v3198, %v3271
  %v3346 = vadd.f32 %v3199, %v3340
  %v3347 = vadd.f32 %v3200, %v3342
  %v3348 = vxor.u32 %v3344, 2147483648
  %v3349 = vmul.f32 %v3348, 1.442695
  %v3350 = vpow.pop %v3349
  %v3351 = vadd.f32 %v3350, 1.0
  %v3352 = vrcp.pop %v3351
  %v3353 = vmul.f32 1.0, %v3352
  %v3354 = vxor.u32 %v3345, 2147483648
  %v3355 = vmul.f32 %v3354, 1.442695
  %v3356 = vpow.pop %v3355
  %v3357 = vadd.f32 %v3356, 1.0
  %v3358 = vrcp.pop %v3357
  %v3359 = vmul.f32 1.0, %v3358
  %v3360 = vtanh.pop %v3346
  %v3361 = vxor.u32 %v3347, 2147483648
  %v3362 = vmul.f32 %v3361, 1.442695
  %v3363 = vpow.pop %v3362
  %v3364 = vadd.f32 %v3363, 1.0
  %v3365 = vrcp.pop %v3364
  %v3366 = vmul.f32 1.0, %v3365
  %v3367 = vld [vmem:[#allocation3] sm:$0xff]
  %v3368 = vmul.f32 %v3359, %v3367
  %v3369 = vmul.f32 %v3353, %v3360
  %v3370 = vadd.f32 %v3368, %v3369
  %v3371 = vtanh.pop %v3370
  %v3372 = vmul.f32 %v3366, %v3371
  %3373 = vst [vmem:[#allocation3] sm:$0xff] %v3370
  %3374 = vst [vmem:[#allocation2] sm:$0xff] %v3372
  %3375 = vst [vmem:[%s1517] sm:$0xff] %v3372
  %v3376 = vld [vmem:[%s1519] sm:$0xff]
  %v3377 = vld [vmem:[%s1519 + $0x8] sm:$0xff]
  %v3378 = vld [vmem:[%s1519 + $0x10] sm:$0xff]
  %v3379 = vld [vmem:[%s1519 + $0x18] sm:$0xff]
  %v3380 = vld [vmem:[#allocation2] sm:$0xff]
  %3381 = vmatprep.subr.mxu0 %v2299
  %3382 = vmatpush1.msra.mxu0 %v2298
  %3383 = vmatprep.subr.mxu0 %v2295
  %3384 = vmatpush1.msra.mxu0 %v2294
  %3385 = vmatprep.subr.mxu0 %v2291
  %3386 = vmatpush1.msra.mxu0 %v2290
  %3387 = vmatprep.subr.mxu0 %v2287
  %3388 = vmatpush1.msra.mxu0 %v2286
  %3389 = vmatprep.subr.mxu0 %v2283
  %3390 = vmatpush1.msra.mxu0 %v2282
  %3391 = vmatprep.subr.mxu0 %v2279
  %3392 = vmatpush1.msra.mxu0 %v2278
  %3393 = vmatprep.subr.mxu0 %v2275
  %3394 = vmatpush1.msra.mxu0 %v2274
  %3395 = vmatprep.subr.mxu0 %v2271
  %3396 = vmatpush1.msra.mxu0 %v2270
  %3397 = vmatprep.subr.mxu0 %v2267
  %3398 = vmatpush1.msra.mxu0 %v2266
  %3399 = vmatprep.subr.mxu0 %v2263
  %3400 = vmatpush1.msra.mxu0 %v2262
  %3401 = vmatprep.subr.mxu0 %v2259
  %3402 = vmatpush1.msra.mxu0 %v2258
  %3403 = vmatprep.subr.mxu0 %v2255
  %3404 = vmatpush1.msra.mxu0 %v2254
  %3405 = vmatprep.subr.mxu0 %v2251
  %3406 = vmatpush1.msra.mxu0 %v2250
  %3407 = vmatprep.subr.mxu0 %v2247
  %3408 = vmatpush1.msra.mxu0 %v2246
  %3409 = vmatprep.subr.mxu0 %v2243
  %3410 = vmatpush1.msra.mxu0 %v2242
  %3411 = vmatprep.subr.mxu0 %v2239
  %3412 = vmatpush1.msra.mxu0 %v2238
  %3413 = vmatprep.subr.mxu0 0.0
  %3414 = vmatpush2.msra.mxu0 0.0
  %3415 = vmatprep.subr.mxu0 0.0
  %3416 = vmatpush2.msra.mxu0 0.0
  %3417 = vmatprep.subr.mxu0 0.0
  %3418 = vmatpush2.msra.mxu0 0.0
  %3419 = vmatprep.subr.mxu0 0.0
  %3420 = vmatpush2.msra.mxu0 0.0
  %3421 = vmatprep.subr.mxu0 0.0
  %3422 = vmatpush2.msra.mxu0 0.0
  %3423 = vmatprep.subr.mxu0 0.0
  %3424 = vmatpush2.msra.mxu0 0.0
  %3425 = vmatprep.subr.mxu0 0.0
  %3426 = vmatpush2.msra.mxu0 0.0
  %3427 = vmatprep.subr.mxu0 0.0
  %3428 = vmatpush2.msra.mxu0 0.0
  %3429 = vmatprep.subr.mxu0 0.0
  %3430 = vmatpush2.msra.mxu0 0.0
  %3431 = vmatprep.subr.mxu0 0.0
  %3432 = vmatpush2.msra.mxu0 0.0
  %3433 = vmatprep.subr.mxu0 0.0
  %3434 = vmatpush2.msra.mxu0 0.0
  %3435 = vmatprep.subr.mxu0 0.0
  %3436 = vmatpush2.msra.mxu0 0.0
  %3437 = vmatprep.subr.mxu0 0.0
  %3438 = vmatpush2.msra.mxu0 0.0
  %3439 = vmatprep.subr.mxu0 0.0
  %3440 = vmatpush2.msra.mxu0 0.0
  %3441 = vmatprep.subr.mxu0 0.0
  %3442 = vmatpush2.msra.mxu0 0.0
  %3443 = vmatprep.subr.mxu0 0.0
  %3444 = vmatpush2.msra.mxu0 0.0
  %3445 = vmatprep.mubr.f32.mxu0 0.0
  %3446 = vmatmul.mubr.f32.gmra.mxu0 %v3380
  %v3447 = vpop.f32.mrf.mxu0
  %v3448 = vadd.f32 0.0, %v3447
  %v3449 = vpop.f32.mrf.mxu0
  %v3450 = vadd.f32 0.0, %v3449
  %3451 = vdwg.mxu0
  %3452 = vmatprep.subr.mxu0 %v2301
  %3453 = vmatpush1.msra.mxu0 %v2300
  %3454 = vmatprep.subr.mxu0 %v2297
  %3455 = vmatpush1.msra.mxu0 %v2296
  %3456 = vmatprep.subr.mxu0 %v2293
  %3457 = vmatpush1.msra.mxu0 %v2292
  %3458 = vmatprep.subr.mxu0 %v2289
  %3459 = vmatpush1.msra.mxu0 %v2288
  %3460 = vmatprep.subr.mxu0 %v2285
  %3461 = vmatpush1.msra.mxu0 %v2284
  %3462 = vmatprep.subr.mxu0 %v2281
  %3463 = vmatpush1.msra.mxu0 %v2280
  %3464 = vmatprep.subr.mxu0 %v2277
  %3465 = vmatpush1.msra.mxu0 %v2276
  %3466 = vmatprep.subr.mxu0 %v2273
  %3467 = vmatpush1.msra.mxu0 %v2272
  %3468 = vmatprep.subr.mxu0 %v2269
  %3469 = vmatpush1.msra.mxu0 %v2268
  %3470 = vmatprep.subr.mxu0 %v2265
  %3471 = vmatpush1.msra.mxu0 %v2264
  %3472 = vmatprep.subr.mxu0 %v2261
  %3473 = vmatpush1.msra.mxu0 %v2260
  %3474 = vmatprep.subr.mxu0 %v2257
  %3475 = vmatpush1.msra.mxu0 %v2256
  %3476 = vmatprep.subr.mxu0 %v2253
  %3477 = vmatpush1.msra.mxu0 %v2252
  %3478 = vmatprep.subr.mxu0 %v2249
  %3479 = vmatpush1.msra.mxu0 %v2248
  %3480 = vmatprep.subr.mxu0 %v2245
  %3481 = vmatpush1.msra.mxu0 %v2244
  %3482 = vmatprep.subr.mxu0 %v2241
  %3483 = vmatpush1.msra.mxu0 %v2240
  %3484 = vmatprep.subr.mxu0 0.0
  %3485 = vmatpush2.msra.mxu0 0.0
  %3486 = vmatprep.subr.mxu0 0.0
  %3487 = vmatpush2.msra.mxu0 0.0
  %3488 = vmatprep.subr.mxu0 0.0
  %3489 = vmatpush2.msra.mxu0 0.0
  %3490 = vmatprep.subr.mxu0 0.0
  %3491 = vmatpush2.msra.mxu0 0.0
  %3492 = vmatprep.subr.mxu0 0.0
  %3493 = vmatpush2.msra.mxu0 0.0
  %3494 = vmatprep.subr.mxu0 0.0
  %3495 = vmatpush2.msra.mxu0 0.0
  %3496 = vmatprep.subr.mxu0 0.0
  %3497 = vmatpush2.msra.mxu0 0.0
  %3498 = vmatprep.subr.mxu0 0.0
  %3499 = vmatpush2.msra.mxu0 0.0
  %3500 = vmatprep.subr.mxu0 0.0
  %3501 = vmatpush2.msra.mxu0 0.0
  %3502 = vmatprep.subr.mxu0 0.0
  %3503 = vmatpush2.msra.mxu0 0.0
  %3504 = vmatprep.subr.mxu0 0.0
  %3505 = vmatpush2.msra.mxu0 0.0
  %3506 = vmatprep.subr.mxu0 0.0
  %3507 = vmatpush2.msra.mxu0 0.0
  %3508 = vmatprep.subr.mxu0 0.0
  %3509 = vmatpush2.msra.mxu0 0.0
  %3510 = vmatprep.subr.mxu0 0.0
  %3511 = vmatpush2.msra.mxu0 0.0
  %3512 = vmatprep.subr.mxu0 0.0
  %3513 = vmatpush2.msra.mxu0 0.0
  %3514 = vmatprep.subr.mxu0 0.0
  %3515 = vmatpush2.msra.mxu0 0.0
  %3516 = vmatprep.mubr.f32.mxu0 0.0
  %3517 = vmatmul.mubr.f32.gmra.mxu0 %v3380
  %v3518 = vpop.f32.mrf.mxu0
  %v3519 = vadd.f32 0.0, %v3518
  %v3520 = vpop.f32.mrf.mxu0
  %v3521 = vadd.f32 0.0, %v3520
  %3522 = vdwg.mxu0
  %v3523 = vadd.f32 %v3376, %v3448
  %v3524 = vadd.f32 %v3377, %v3450
  %v3525 = vadd.f32 %v3378, %v3519
  %v3526 = vadd.f32 %v3379, %v3521
  %v3527 = vxor.u32 %v3523, 2147483648
  %v3528 = vmul.f32 %v3527, 1.442695
  %v3529 = vpow.pop %v3528
  %v3530 = vadd.f32 %v3529, 1.0
  %v3531 = vrcp.pop %v3530
  %v3532 = vmul.f32 1.0, %v3531
  %v3533 = vxor.u32 %v3524, 2147483648
  %v3534 = vmul.f32 %v3533, 1.442695
  %v3535 = vpow.pop %v3534
  %v3536 = vadd.f32 %v3535, 1.0
  %v3537 = vrcp.pop %v3536
  %v3538 = vmul.f32 1.0, %v3537
  %v3539 = vtanh.pop %v3525
  %v3540 = vxor.u32 %v3526, 2147483648
  %v3541 = vmul.f32 %v3540, 1.442695
  %v3542 = vpow.pop %v3541
  %v3543 = vadd.f32 %v3542, 1.0
  %v3544 = vrcp.pop %v3543
  %v3545 = vmul.f32 1.0, %v3544
  %v3546 = vld [vmem:[#allocation3] sm:$0xff]
  %v3547 = vmul.f32 %v3538, %v3546
  %v3548 = vmul.f32 %v3532, %v3539
  %v3549 = vadd.f32 %v3547, %v3548
  %v3550 = vtanh.pop %v3549
  %v3551 = vmul.f32 %v3545, %v3550
  %3552 = vst [vmem:[#allocation3] sm:$0xff] %v3549
  %3553 = vst [vmem:[#allocation2] sm:$0xff] %v3551
  %3554 = vst [vmem:[%s1698] sm:$0xff] %v3551
  %v3555 = vld [vmem:[%s1700] sm:$0xff]
  %v3556 = vld [vmem:[%s1700 + $0x8] sm:$0xff]
  %v3557 = vld [vmem:[%s1700 + $0x10] sm:$0xff]
  %v3558 = vld [vmem:[%s1700 + $0x18] sm:$0xff]
  %v3559 = vld [vmem:[#allocation2] sm:$0xff]
  %3560 = vmatprep.subr.mxu0 %v2299
  %3561 = vmatpush1.msra.mxu0 %v2298
  %3562 = vmatprep.subr.mxu0 %v2295
  %3563 = vmatpush1.msra.mxu0 %v2294
  %3564 = vmatprep.subr.mxu0 %v2291
  %3565 = vmatpush1.msra.mxu0 %v2290
  %3566 = vmatprep.subr.mxu0 %v2287
  %3567 = vmatpush1.msra.mxu0 %v2286
  %3568 = vmatprep.subr.mxu0 %v2283
  %3569 = vmatpush1.msra.mxu0 %v2282
  %3570 = vmatprep.subr.mxu0 %v2279
  %3571 = vmatpush1.msra.mxu0 %v2278
  %3572 = vmatprep.subr.mxu0 %v2275
  %3573 = vmatpush1.msra.mxu0 %v2274
  %3574 = vmatprep.subr.mxu0 %v2271
  %3575 = vmatpush1.msra.mxu0 %v2270
  %3576 = vmatprep.subr.mxu0 %v2267
  %3577 = vmatpush1.msra.mxu0 %v2266
  %3578 = vmatprep.subr.mxu0 %v2263
  %3579 = vmatpush1.msra.mxu0 %v2262
  %3580 = vmatprep.subr.mxu0 %v2259
  %3581 = vmatpush1.msra.mxu0 %v2258
  %3582 = vmatprep.subr.mxu0 %v2255
  %3583 = vmatpush1.msra.mxu0 %v2254
  %3584 = vmatprep.subr.mxu0 %v2251
  %3585 = vmatpush1.msra.mxu0 %v2250
  %3586 = vmatprep.subr.mxu0 %v2247
  %3587 = vmatpush1.msra.mxu0 %v2246
  %3588 = vmatprep.subr.mxu0 %v2243
  %3589 = vmatpush1.msra.mxu0 %v2242
  %3590 = vmatprep.subr.mxu0 %v2239
  %3591 = vmatpush1.msra.mxu0 %v2238
  %3592 = vmatprep.subr.mxu0 0.0
  %3593 = vmatpush2.msra.mxu0 0.0
  %3594 = vmatprep.subr.mxu0 0.0
  %3595 = vmatpush2.msra.mxu0 0.0
  %3596 = vmatprep.subr.mxu0 0.0
  %3597 = vmatpush2.msra.mxu0 0.0
  %3598 = vmatprep.subr.mxu0 0.0
  %3599 = vmatpush2.msra.mxu0 0.0
  %3600 = vmatprep.subr.mxu0 0.0
  %3601 = vmatpush2.msra.mxu0 0.0
  %3602 = vmatprep.subr.mxu0 0.0
  %3603 = vmatpush2.msra.mxu0 0.0
  %3604 = vmatprep.subr.mxu0 0.0
  %3605 = vmatpush2.msra.mxu0 0.0
  %3606 = vmatprep.subr.mxu0 0.0
  %3607 = vmatpush2.msra.mxu0 0.0
  %3608 = vmatprep.subr.mxu0 0.0
  %3609 = vmatpush2.msra.mxu0 0.0
  %3610 = vmatprep.subr.mxu0 0.0
  %3611 = vmatpush2.msra.mxu0 0.0
  %3612 = vmatprep.subr.mxu0 0.0
  %3613 = vmatpush2.msra.mxu0 0.0
  %3614 = vmatprep.subr.mxu0 0.0
  %3615 = vmatpush2.msra.mxu0 0.0
  %3616 = vmatprep.subr.mxu0 0.0
  %3617 = vmatpush2.msra.mxu0 0.0
  %3618 = vmatprep.subr.mxu0 0.0
  %3619 = vmatpush2.msra.mxu0 0.0
  %3620 = vmatprep.subr.mxu0 0.0
  %3621 = vmatpush2.msra.mxu0 0.0
  %3622 = vmatprep.subr.mxu0 0.0
  %3623 = vmatpush2.msra.mxu0 0.0
  %3624 = vmatprep.mubr.f32.mxu0 0.0
  %3625 = vmatmul.mubr.f32.gmra.mxu0 %v3559
  %v3626 = vpop.f32.mrf.mxu0
  %v3627 = vadd.f32 0.0, %v3626
  %v3628 = vpop.f32.mrf.mxu0
  %v3629 = vadd.f32 0.0, %v3628
  %3630 = vdwg.mxu0
  %3631 = vmatprep.subr.mxu0 %v2301
  %3632 = vmatpush1.msra.mxu0 %v2300
  %3633 = vmatprep.subr.mxu0 %v2297
  %3634 = vmatpush1.msra.mxu0 %v2296
  %3635 = vmatprep.subr.mxu0 %v2293
  %3636 = vmatpush1.msra.mxu0 %v2292
  %3637 = vmatprep.subr.mxu0 %v2289
  %3638 = vmatpush1.msra.mxu0 %v2288
  %3639 = vmatprep.subr.mxu0 %v2285
  %3640 = vmatpush1.msra.mxu0 %v2284
  %3641 = vmatprep.subr.mxu0 %v2281
  %3642 = vmatpush1.msra.mxu0 %v2280
  %3643 = vmatprep.subr.mxu0 %v2277
  %3644 = vmatpush1.msra.mxu0 %v2276
  %3645 = vmatprep.subr.mxu0 %v2273
  %3646 = vmatpush1.msra.mxu0 %v2272
  %3647 = vmatprep.subr.mxu0 %v2269
  %3648 = vmatpush1.msra.mxu0 %v2268
  %3649 = vmatprep.subr.mxu0 %v2265
  %3650 = vmatpush1.msra.mxu0 %v2264
  %3651 = vmatprep.subr.mxu0 %v2261
  %3652 = vmatpush1.msra.mxu0 %v2260
  %3653 = vmatprep.subr.mxu0 %v2257
  %3654 = vmatpush1.msra.mxu0 %v2256
  %3655 = vmatprep.subr.mxu0 %v2253
  %3656 = vmatpush1.msra.mxu0 %v2252
  %3657 = vmatprep.subr.mxu0 %v2249
  %3658 = vmatpush1.msra.mxu0 %v2248
  %3659 = vmatprep.subr.mxu0 %v2245
  %3660 = vmatpush1.msra.mxu0 %v2244
  %3661 = vmatprep.subr.mxu0 %v2241
  %3662 = vmatpush1.msra.mxu0 %v2240
  %3663 = vmatprep.subr.mxu0 0.0
  %3664 = vmatpush2.msra.mxu0 0.0
  %3665 = vmatprep.subr.mxu0 0.0
  %3666 = vmatpush2.msra.mxu0 0.0
  %3667 = vmatprep.subr.mxu0 0.0
  %3668 = vmatpush2.msra.mxu0 0.0
  %3669 = vmatprep.subr.mxu0 0.0
  %3670 = vmatpush2.msra.mxu0 0.0
  %3671 = vmatprep.subr.mxu0 0.0
  %3672 = vmatpush2.msra.mxu0 0.0
  %3673 = vmatprep.subr.mxu0 0.0
  %3674 = vmatpush2.msra.mxu0 0.0
  %3675 = vmatprep.subr.mxu0 0.0
  %3676 = vmatpush2.msra.mxu0 0.0
  %3677 = vmatprep.subr.mxu0 0.0
  %3678 = vmatpush2.msra.mxu0 0.0
  %3679 = vmatprep.subr.mxu0 0.0
  %3680 = vmatpush2.msra.mxu0 0.0
  %3681 = vmatprep.subr.mxu0 0.0
  %3682 = vmatpush2.msra.mxu0 0.0
  %3683 = vmatprep.subr.mxu0 0.0
  %3684 = vmatpush2.msra.mxu0 0.0
  %3685 = vmatprep.subr.mxu0 0.0
  %3686 = vmatpush2.msra.mxu0 0.0
  %3687 = vmatprep.subr.mxu0 0.0
  %3688 = vmatpush2.msra.mxu0 0.0
  %3689 = vmatprep.subr.mxu0 0.0
  %3690 = vmatpush2.msra.mxu0 0.0
  %3691 = vmatprep.subr.mxu0 0.0
  %3692 = vmatpush2.msra.mxu0 0.0
  %3693 = vmatprep.subr.mxu0 0.0
  %3694 = vmatpush2.msra.mxu0 0.0
  %3695 = vmatprep.mubr.f32.mxu0 0.0
  %3696 = vmatmul.mubr.f32.gmra.mxu0 %v3559
  %v3697 = vpop.f32.mrf.mxu0
  %v3698 = vadd.f32 0.0, %v3697
  %v3699 = vpop.f32.mrf.mxu0
  %v3700 = vadd.f32 0.0, %v3699
  %3701 = vdwg.mxu0
  %v3702 = vadd.f32 %v3555, %v3627
  %v3703 = vadd.f32 %v3556, %v3629
  %v3704 = vadd.f32 %v3557, %v3698
  %v3705 = vadd.f32 %v3558, %v3700
  %v3706 = vxor.u32 %v3702, 2147483648
  %v3707 = vmul.f32 %v3706, 1.442695
  %v3708 = vpow.pop %v3707
  %v3709 = vadd.f32 %v3708, 1.0
  %v3710 = vrcp.pop %v3709
  %v3711 = vmul.f32 1.0, %v3710
  %v3712 = vxor.u32 %v3703, 2147483648
  %v3713 = vmul.f32 %v3712, 1.442695
  %v3714 = vpow.pop %v3713
  %v3715 = vadd.f32 %v3714, 1.0
  %v3716 = vrcp.pop %v3715
  %v3717 = vmul.f32 1.0, %v3716
  %v3718 = vtanh.pop %v3704
  %v3719 = vxor.u32 %v3705, 2147483648
  %v3720 = vmul.f32 %v3719, 1.442695
  %v3721 = vpow.pop %v3720
  %v3722 = vadd.f32 %v3721, 1.0
  %v3723 = vrcp.pop %v3722
  %v3724 = vmul.f32 1.0, %v3723
  %v3725 = vld [vmem:[#allocation3] sm:$0xff]
  %v3726 = vmul.f32 %v3717, %v3725
  %v3727 = vmul.f32 %v3711, %v3718
  %v3728 = vadd.f32 %v3726, %v3727
  %v3729 = vtanh.pop %v3728
  %v3730 = vmul.f32 %v3724, %v3729
  %3731 = vst [vmem:[#allocation3] sm:$0xff] %v3728
  %3732 = vst [vmem:[#allocation2] sm:$0xff] %v3730
  %3733 = vst [vmem:[%s1879] sm:$0xff] %v3730
  %v3734 = vld [vmem:[#allocation2] sm:$0xff]
  %s3735 = scalar_lea.vmem %s1, 1024
  %v3736 = vld [vmem:[%s3735] sm:$0xff]
  %v3737 = vld [vmem:[%s3735 + $0x8] sm:$0xff]
  %v3738 = vld [vmem:[%s3735 + $0x10] sm:$0xff]
  %v3739 = vld [vmem:[%s3735 + $0x18] sm:$0xff]
  %v3740 = vld [vmem:[%s3735 + $0x20] sm:$0xff]
  %v3741 = vld [vmem:[%s3735 + $0x28] sm:$0xff]
  %v3742 = vld [vmem:[%s3735 + $0x30] sm:$0xff]
  %v3743 = vld [vmem:[%s3735 + $0x38] sm:$0xff]
  %v3744 = vld [vmem:[%s3735 + $0x40] sm:$0xff]
  %v3745 = vld [vmem:[%s3735 + $0x48] sm:$0xff]
  %v3746 = vld [vmem:[%s3735 + $0x50] sm:$0xff]
  %v3747 = vld [vmem:[%s3735 + $0x58] sm:$0xff]
  %v3748 = vld [vmem:[%s3735 + $0x60] sm:$0xff]
  %v3749 = vld [vmem:[%s3735 + $0x68] sm:$0xff]
  %v3750 = vld [vmem:[%s3735 + $0x70] sm:$0xff]
  %v3751 = vld [vmem:[%s3735 + $0x78] sm:$0xff]
  %v3752 = vld [vmem:[%s3735 + $0x80] sm:$0xff]
  %v3753 = vld [vmem:[%s3735 + $0x88] sm:$0xff]
  %v3754 = vld [vmem:[%s3735 + $0x90] sm:$0xff]
  %v3755 = vld [vmem:[%s3735 + $0x98] sm:$0xff]
  %v3756 = vld [vmem:[%s3735 + $0xa0] sm:$0xff]
  %v3757 = vld [vmem:[%s3735 + $0xa8] sm:$0xff]
  %v3758 = vld [vmem:[%s3735 + $0xb0] sm:$0xff]
  %v3759 = vld [vmem:[%s3735 + $0xb8] sm:$0xff]
  %v3760 = vld [vmem:[%s3735 + $0xc0] sm:$0xff]
  %v3761 = vld [vmem:[%s3735 + $0xc8] sm:$0xff]
  %v3762 = vld [vmem:[%s3735 + $0xd0] sm:$0xff]
  %v3763 = vld [vmem:[%s3735 + $0xd8] sm:$0xff]
  %v3764 = vld [vmem:[%s3735 + $0xe0] sm:$0xff]
  %v3765 = vld [vmem:[%s3735 + $0xe8] sm:$0xff]
  %v3766 = vld [vmem:[%s3735 + $0xf0] sm:$0xff]
  %v3767 = vld [vmem:[%s3735 + $0xf8] sm:$0xff]
  %v3768 = vld [vmem:[%s3735 + $0x100] sm:$0xff]
  %v3769 = vld [vmem:[%s3735 + $0x108] sm:$0xff]
  %v3770 = vld [vmem:[%s3735 + $0x110] sm:$0xff]
  %v3771 = vld [vmem:[%s3735 + $0x118] sm:$0xff]
  %v3772 = vld [vmem:[%s3735 + $0x120] sm:$0xff]
  %v3773 = vld [vmem:[%s3735 + $0x128] sm:$0xff]
  %v3774 = vld [vmem:[%s3735 + $0x130] sm:$0xff]
  %v3775 = vld [vmem:[%s3735 + $0x138] sm:$0xff]
  %v3776 = vld [vmem:[%s3735 + $0x140] sm:$0xff]
  %v3777 = vld [vmem:[%s3735 + $0x148] sm:$0xff]
  %v3778 = vld [vmem:[%s3735 + $0x150] sm:$0xff]
  %v3779 = vld [vmem:[%s3735 + $0x158] sm:$0xff]
  %v3780 = vld [vmem:[%s3735 + $0x160] sm:$0xff]
  %v3781 = vld [vmem:[%s3735 + $0x168] sm:$0xff]
  %v3782 = vld [vmem:[%s3735 + $0x170] sm:$0xff]
  %v3783 = vld [vmem:[%s3735 + $0x178] sm:$0xff]
  %v3784 = vld [vmem:[%s3735 + $0x180] sm:$0xff]
  %v3785 = vld [vmem:[%s3735 + $0x188] sm:$0xff]
  %v3786 = vld [vmem:[%s3735 + $0x190] sm:$0xff]
  %v3787 = vld [vmem:[%s3735 + $0x198] sm:$0xff]
  %v3788 = vld [vmem:[%s3735 + $0x1a0] sm:$0xff]
  %v3789 = vld [vmem:[%s3735 + $0x1a8] sm:$0xff]
  %v3790 = vld [vmem:[%s3735 + $0x1b0] sm:$0xff]
  %v3791 = vld [vmem:[%s3735 + $0x1b8] sm:$0xff]
  %v3792 = vld [vmem:[%s3735 + $0x1c0] sm:$0xff]
  %v3793 = vld [vmem:[%s3735 + $0x1c8] sm:$0xff]
  %v3794 = vld [vmem:[%s3735 + $0x1d0] sm:$0xff]
  %v3795 = vld [vmem:[%s3735 + $0x1d8] sm:$0xff]
  %v3796 = vld [vmem:[%s3735 + $0x1e0] sm:$0xff]
  %v3797 = vld [vmem:[%s3735 + $0x1e8] sm:$0xff]
  %v3798 = vld [vmem:[%s3735 + $0x1f0] sm:$0xff]
  %v3799 = vld [vmem:[%s3735 + $0x1f8] sm:$0xff]
  %s3800 = scalar_lea.vmem %s3, 8
  %v3801 = vld [vmem:[%s3800] sm:$0xf]
  %v3803 = vlaneseq
  %v3804 = vshrl.u32 %v3803, 7
  %v3805 = vsub.s32 0, %v3804
  %v3806 = vrot.slane %v3801, %v3805
  %v3807 = vlaneseq
  %v3808 = vshrl.u32 %v3807, 7
  %v3809 = vsub.s32 1, %v3808
  %v3810 = vrot.slane %v3801, %v3809
  %v3811 = vlaneseq
  %v3812 = vshrl.u32 %v3811, 7
  %v3813 = vsub.s32 2, %v3812
  %v3814 = vrot.slane %v3801, %v3813
  %v3815 = vlaneseq
  %v3816 = vshrl.u32 %v3815, 7
  %v3817 = vsub.s32 3, %v3816
  %v3818 = vrot.slane %v3801, %v3817
  %3823 = vmatprep.subr.mxu0 %v3797
  %3824 = vmatpush1.msra.mxu0 %v3796
  %3825 = vmatprep.subr.mxu0 %v3793
  %3826 = vmatpush1.msra.mxu0 %v3792
  %3827 = vmatprep.subr.mxu0 %v3789
  %3828 = vmatpush1.msra.mxu0 %v3788
  %3829 = vmatprep.subr.mxu0 %v3785
  %3830 = vmatpush1.msra.mxu0 %v3784
  %3831 = vmatprep.subr.mxu0 %v3781
  %3832 = vmatpush1.msra.mxu0 %v3780
  %3833 = vmatprep.subr.mxu0 %v3777
  %3834 = vmatpush1.msra.mxu0 %v3776
  %3835 = vmatprep.subr.mxu0 %v3773
  %3836 = vmatpush1.msra.mxu0 %v3772
  %3837 = vmatprep.subr.mxu0 %v3769
  %3838 = vmatpush1.msra.mxu0 %v3768
  %3839 = vmatprep.subr.mxu0 %v3765
  %3840 = vmatpush1.msra.mxu0 %v3764
  %3841 = vmatprep.subr.mxu0 %v3761
  %3842 = vmatpush1.msra.mxu0 %v3760
  %3843 = vmatprep.subr.mxu0 %v3757
  %3844 = vmatpush1.msra.mxu0 %v3756
  %3845 = vmatprep.subr.mxu0 %v3753
  %3846 = vmatpush1.msra.mxu0 %v3752
  %3847 = vmatprep.subr.mxu0 %v3749
  %3848 = vmatpush1.msra.mxu0 %v3748
  %3849 = vmatprep.subr.mxu0 %v3745
  %3850 = vmatpush1.msra.mxu0 %v3744
  %3851 = vmatprep.subr.mxu0 %v3741
  %3852 = vmatpush1.msra.mxu0 %v3740
  %3853 = vmatprep.subr.mxu0 %v3737
  %3854 = vmatpush1.msra.mxu0 %v3736
  %3855 = vmatprep.subr.mxu0 0.0
  %3856 = vmatpush2.msra.mxu0 0.0
  %3857 = vmatprep.subr.mxu0 0.0
  %3858 = vmatpush2.msra.mxu0 0.0
  %3859 = vmatprep.subr.mxu0 0.0
  %3860 = vmatpush2.msra.mxu0 0.0
  %3861 = vmatprep.subr.mxu0 0.0
  %3862 = vmatpush2.msra.mxu0 0.0
  %3863 = vmatprep.subr.mxu0 0.0
  %3864 = vmatpush2.msra.mxu0 0.0
  %3865 = vmatprep.subr.mxu0 0.0
  %3866 = vmatpush2.msra.mxu0 0.0
  %3867 = vmatprep.subr.mxu0 0.0
  %3868 = vmatpush2.msra.mxu0 0.0
  %3869 = vmatprep.subr.mxu0 0.0
  %3870 = vmatpush2.msra.mxu0 0.0
  %3871 = vmatprep.subr.mxu0 0.0
  %3872 = vmatpush2.msra.mxu0 0.0
  %3873 = vmatprep.subr.mxu0 0.0
  %3874 = vmatpush2.msra.mxu0 0.0
  %3875 = vmatprep.subr.mxu0 0.0
  %3876 = vmatpush2.msra.mxu0 0.0
  %3877 = vmatprep.subr.mxu0 0.0
  %3878 = vmatpush2.msra.mxu0 0.0
  %3879 = vmatprep.subr.mxu0 0.0
  %3880 = vmatpush2.msra.mxu0 0.0
  %3881 = vmatprep.subr.mxu0 0.0
  %3882 = vmatpush2.msra.mxu0 0.0
  %3883 = vmatprep.subr.mxu0 0.0
  %3884 = vmatpush2.msra.mxu0 0.0
  %3885 = vmatprep.subr.mxu0 0.0
  %3886 = vmatpush2.msra.mxu0 0.0
  %3887 = vmatprep.mubr.f32.mxu0 0.0
  %3888 = vmatmul.mubr.f32.gmra.mxu0 %v3734
  %v3889 = vpop.f32.mrf.mxu0
  %v3890 = vadd.f32 %v3806, %v3889
  %v3891 = vpop.f32.mrf.mxu0
  %v3892 = vadd.f32 %v3810, %v3891
  %3893 = vdwg.mxu0
  %3894 = vmatprep.subr.mxu0 %v3799
  %3895 = vmatpush1.msra.mxu0 %v3798
  %3896 = vmatprep.subr.mxu0 %v3795
  %3897 = vmatpush1.msra.mxu0 %v3794
  %3898 = vmatprep.subr.mxu0 %v3791
  %3899 = vmatpush1.msra.mxu0 %v3790
  %3900 = vmatprep.subr.mxu0 %v3787
  %3901 = vmatpush1.msra.mxu0 %v3786
  %3902 = vmatprep.subr.mxu0 %v3783
  %3903 = vmatpush1.msra.mxu0 %v3782
  %3904 = vmatprep.subr.mxu0 %v3779
  %3905 = vmatpush1.msra.mxu0 %v3778
  %3906 = vmatprep.subr.mxu0 %v3775
  %3907 = vmatpush1.msra.mxu0 %v3774
  %3908 = vmatprep.subr.mxu0 %v3771
  %3909 = vmatpush1.msra.mxu0 %v3770
  %3910 = vmatprep.subr.mxu0 %v3767
  %3911 = vmatpush1.msra.mxu0 %v3766
  %3912 = vmatprep.subr.mxu0 %v3763
  %3913 = vmatpush1.msra.mxu0 %v3762
  %3914 = vmatprep.subr.mxu0 %v3759
  %3915 = vmatpush1.msra.mxu0 %v3758
  %3916 = vmatprep.subr.mxu0 %v3755
  %3917 = vmatpush1.msra.mxu0 %v3754
  %3918 = vmatprep.subr.mxu0 %v3751
  %3919 = vmatpush1.msra.mxu0 %v3750
  %3920 = vmatprep.subr.mxu0 %v3747
  %3921 = vmatpush1.msra.mxu0 %v3746
  %3922 = vmatprep.subr.mxu0 %v3743
  %3923 = vmatpush1.msra.mxu0 %v3742
  %3924 = vmatprep.subr.mxu0 %v3739
  %3925 = vmatpush1.msra.mxu0 %v3738
  %3926 = vmatprep.subr.mxu0 0.0
  %3927 = vmatpush2.msra.mxu0 0.0
  %3928 = vmatprep.subr.mxu0 0.0
  %3929 = vmatpush2.msra.mxu0 0.0
  %3930 = vmatprep.subr.mxu0 0.0
  %3931 = vmatpush2.msra.mxu0 0.0
  %3932 = vmatprep.subr.mxu0 0.0
  %3933 = vmatpush2.msra.mxu0 0.0
  %3934 = vmatprep.subr.mxu0 0.0
  %3935 = vmatpush2.msra.mxu0 0.0
  %3936 = vmatprep.subr.mxu0 0.0
  %3937 = vmatpush2.msra.mxu0 0.0
  %3938 = vmatprep.subr.mxu0 0.0
  %3939 = vmatpush2.msra.mxu0 0.0
  %3940 = vmatprep.subr.mxu0 0.0
  %3941 = vmatpush2.msra.mxu0 0.0
  %3942 = vmatprep.subr.mxu0 0.0
  %3943 = vmatpush2.msra.mxu0 0.0
  %3944 = vmatprep.subr.mxu0 0.0
  %3945 = vmatpush2.msra.mxu0 0.0
  %3946 = vmatprep.subr.mxu0 0.0
  %3947 = vmatpush2.msra.mxu0 0.0
  %3948 = vmatprep.subr.mxu0 0.0
  %3949 = vmatpush2.msra.mxu0 0.0
  %3950 = vmatprep.subr.mxu0 0.0
  %3951 = vmatpush2.msra.mxu0 0.0
  %3952 = vmatprep.subr.mxu0 0.0
  %3953 = vmatpush2.msra.mxu0 0.0
  %3954 = vmatprep.subr.mxu0 0.0
  %3955 = vmatpush2.msra.mxu0 0.0
  %3956 = vmatprep.subr.mxu0 0.0
  %3957 = vmatpush2.msra.mxu0 0.0
  %3958 = vmatprep.mubr.f32.mxu0 0.0
  %3959 = vmatmul.mubr.f32.gmra.mxu0 %v3734
  %v3960 = vpop.f32.mrf.mxu0
  %v3961 = vadd.f32 %v3814, %v3960
  %v3962 = vpop.f32.mrf.mxu0
  %v3963 = vadd.f32 %v3818, %v3962
  %3964 = vdwg.mxu0
  %3965 = vst [vmem:[#allocation2] sm:$0xff] 0.0
  %3966 = vst [vmem:[#allocation3] sm:$0xff] 0.0
  %s3967 = scalar_lea.vmem %s2, 1024
  %v3968 = vld [vmem:[%s3967] sm:$0xff]
  %v3969 = vld [vmem:[%s3967 + $0x8] sm:$0xff]
  %v3970 = vld [vmem:[%s3967 + $0x10] sm:$0xff]
  %v3971 = vld [vmem:[%s3967 + $0x18] sm:$0xff]
  %v3972 = vld [vmem:[%s3967 + $0x20] sm:$0xff]
  %v3973 = vld [vmem:[%s3967 + $0x28] sm:$0xff]
  %v3974 = vld [vmem:[%s3967 + $0x30] sm:$0xff]
  %v3975 = vld [vmem:[%s3967 + $0x38] sm:$0xff]
  %v3976 = vld [vmem:[%s3967 + $0x40] sm:$0xff]
  %v3977 = vld [vmem:[%s3967 + $0x48] sm:$0xff]
  %v3978 = vld [vmem:[%s3967 + $0x50] sm:$0xff]
  %v3979 = vld [vmem:[%s3967 + $0x58] sm:$0xff]
  %v3980 = vld [vmem:[%s3967 + $0x60] sm:$0xff]
  %v3981 = vld [vmem:[%s3967 + $0x68] sm:$0xff]
  %v3982 = vld [vmem:[%s3967 + $0x70] sm:$0xff]
  %v3983 = vld [vmem:[%s3967 + $0x78] sm:$0xff]
  %v3984 = vld [vmem:[%s3967 + $0x80] sm:$0xff]
  %v3985 = vld [vmem:[%s3967 + $0x88] sm:$0xff]
  %v3986 = vld [vmem:[%s3967 + $0x90] sm:$0xff]
  %v3987 = vld [vmem:[%s3967 + $0x98] sm:$0xff]
  %v3988 = vld [vmem:[%s3967 + $0xa0] sm:$0xff]
  %v3989 = vld [vmem:[%s3967 + $0xa8] sm:$0xff]
  %v3990 = vld [vmem:[%s3967 + $0xb0] sm:$0xff]
  %v3991 = vld [vmem:[%s3967 + $0xb8] sm:$0xff]
  %v3992 = vld [vmem:[%s3967 + $0xc0] sm:$0xff]
  %v3993 = vld [vmem:[%s3967 + $0xc8] sm:$0xff]
  %v3994 = vld [vmem:[%s3967 + $0xd0] sm:$0xff]
  %v3995 = vld [vmem:[%s3967 + $0xd8] sm:$0xff]
  %v3996 = vld [vmem:[%s3967 + $0xe0] sm:$0xff]
  %v3997 = vld [vmem:[%s3967 + $0xe8] sm:$0xff]
  %v3998 = vld [vmem:[%s3967 + $0xf0] sm:$0xff]
  %v3999 = vld [vmem:[%s3967 + $0xf8] sm:$0xff]
  %v4000 = vld [vmem:[%s3967 + $0x100] sm:$0xff]
  %v4001 = vld [vmem:[%s3967 + $0x108] sm:$0xff]
  %v4002 = vld [vmem:[%s3967 + $0x110] sm:$0xff]
  %v4003 = vld [vmem:[%s3967 + $0x118] sm:$0xff]
  %v4004 = vld [vmem:[%s3967 + $0x120] sm:$0xff]
  %v4005 = vld [vmem:[%s3967 + $0x128] sm:$0xff]
  %v4006 = vld [vmem:[%s3967 + $0x130] sm:$0xff]
  %v4007 = vld [vmem:[%s3967 + $0x138] sm:$0xff]
  %v4008 = vld [vmem:[%s3967 + $0x140] sm:$0xff]
  %v4009 = vld [vmem:[%s3967 + $0x148] sm:$0xff]
  %v4010 = vld [vmem:[%s3967 + $0x150] sm:$0xff]
  %v4011 = vld [vmem:[%s3967 + $0x158] sm:$0xff]
  %v4012 = vld [vmem:[%s3967 + $0x160] sm:$0xff]
  %v4013 = vld [vmem:[%s3967 + $0x168] sm:$0xff]
  %v4014 = vld [vmem:[%s3967 + $0x170] sm:$0xff]
  %v4015 = vld [vmem:[%s3967 + $0x178] sm:$0xff]
  %v4016 = vld [vmem:[%s3967 + $0x180] sm:$0xff]
  %v4017 = vld [vmem:[%s3967 + $0x188] sm:$0xff]
  %v4018 = vld [vmem:[%s3967 + $0x190] sm:$0xff]
  %v4019 = vld [vmem:[%s3967 + $0x198] sm:$0xff]
  %v4020 = vld [vmem:[%s3967 + $0x1a0] sm:$0xff]
  %v4021 = vld [vmem:[%s3967 + $0x1a8] sm:$0xff]
  %v4022 = vld [vmem:[%s3967 + $0x1b0] sm:$0xff]
  %v4023 = vld [vmem:[%s3967 + $0x1b8] sm:$0xff]
  %v4024 = vld [vmem:[%s3967 + $0x1c0] sm:$0xff]
  %v4025 = vld [vmem:[%s3967 + $0x1c8] sm:$0xff]
  %v4026 = vld [vmem:[%s3967 + $0x1d0] sm:$0xff]
  %v4027 = vld [vmem:[%s3967 + $0x1d8] sm:$0xff]
  %v4028 = vld [vmem:[%s3967 + $0x1e0] sm:$0xff]
  %v4029 = vld [vmem:[%s3967 + $0x1e8] sm:$0xff]
  %v4030 = vld [vmem:[%s3967 + $0x1f0] sm:$0xff]
  %v4031 = vld [vmem:[%s3967 + $0x1f8] sm:$0xff]
  %v4032 = vld [vmem:[#allocation2] sm:$0xff]
  %4033 = vmatprep.subr.mxu0 %v4029
  %4034 = vmatpush1.msra.mxu0 %v4028
  %4035 = vmatprep.subr.mxu0 %v4025
  %4036 = vmatpush1.msra.mxu0 %v4024
  %4037 = vmatprep.subr.mxu0 %v4021
  %4038 = vmatpush1.msra.mxu0 %v4020
  %4039 = vmatprep.subr.mxu0 %v4017
  %4040 = vmatpush1.msra.mxu0 %v4016
  %4041 = vmatprep.subr.mxu0 %v4013
  %4042 = vmatpush1.msra.mxu0 %v4012
  %4043 = vmatprep.subr.mxu0 %v4009
  %4044 = vmatpush1.msra.mxu0 %v4008
  %4045 = vmatprep.subr.mxu0 %v4005
  %4046 = vmatpush1.msra.mxu0 %v4004
  %4047 = vmatprep.subr.mxu0 %v4001
  %4048 = vmatpush1.msra.mxu0 %v4000
  %4049 = vmatprep.subr.mxu0 %v3997
  %4050 = vmatpush1.msra.mxu0 %v3996
  %4051 = vmatprep.subr.mxu0 %v3993
  %4052 = vmatpush1.msra.mxu0 %v3992
  %4053 = vmatprep.subr.mxu0 %v3989
  %4054 = vmatpush1.msra.mxu0 %v3988
  %4055 = vmatprep.subr.mxu0 %v3985
  %4056 = vmatpush1.msra.mxu0 %v3984
  %4057 = vmatprep.subr.mxu0 %v3981
  %4058 = vmatpush1.msra.mxu0 %v3980
  %4059 = vmatprep.subr.mxu0 %v3977
  %4060 = vmatpush1.msra.mxu0 %v3976
  %4061 = vmatprep.subr.mxu0 %v3973
  %4062 = vmatpush1.msra.mxu0 %v3972
  %4063 = vmatprep.subr.mxu0 %v3969
  %4064 = vmatpush1.msra.mxu0 %v3968
  %4065 = vmatprep.subr.mxu0 0.0
  %4066 = vmatpush2.msra.mxu0 0.0
  %4067 = vmatprep.subr.mxu0 0.0
  %4068 = vmatpush2.msra.mxu0 0.0
  %4069 = vmatprep.subr.mxu0 0.0
  %4070 = vmatpush2.msra.mxu0 0.0
  %4071 = vmatprep.subr.mxu0 0.0
  %4072 = vmatpush2.msra.mxu0 0.0
  %4073 = vmatprep.subr.mxu0 0.0
  %4074 = vmatpush2.msra.mxu0 0.0
  %4075 = vmatprep.subr.mxu0 0.0
  %4076 = vmatpush2.msra.mxu0 0.0
  %4077 = vmatprep.subr.mxu0 0.0
  %4078 = vmatpush2.msra.mxu0 0.0
  %4079 = vmatprep.subr.mxu0 0.0
  %4080 = vmatpush2.msra.mxu0 0.0
  %4081 = vmatprep.subr.mxu0 0.0
  %4082 = vmatpush2.msra.mxu0 0.0
  %4083 = vmatprep.subr.mxu0 0.0
  %4084 = vmatpush2.msra.mxu0 0.0
  %4085 = vmatprep.subr.mxu0 0.0
  %4086 = vmatpush2.msra.mxu0 0.0
  %4087 = vmatprep.subr.mxu0 0.0
  %4088 = vmatpush2.msra.mxu0 0.0
  %4089 = vmatprep.subr.mxu0 0.0
  %4090 = vmatpush2.msra.mxu0 0.0
  %4091 = vmatprep.subr.mxu0 0.0
  %4092 = vmatpush2.msra.mxu0 0.0
  %4093 = vmatprep.subr.mxu0 0.0
  %4094 = vmatpush2.msra.mxu0 0.0
  %4095 = vmatprep.subr.mxu0 0.0
  %4096 = vmatpush2.msra.mxu0 0.0
  %4097 = vmatprep.mubr.f32.mxu0 0.0
  %4098 = vmatmul.mubr.f32.gmra.mxu0 %v4032
  %v4099 = vpop.f32.mrf.mxu0
  %v4100 = vadd.f32 0.0, %v4099
  %v4101 = vpop.f32.mrf.mxu0
  %v4102 = vadd.f32 0.0, %v4101
  %4103 = vdwg.mxu0
  %4104 = vmatprep.subr.mxu0 %v4031
  %4105 = vmatpush1.msra.mxu0 %v4030
  %4106 = vmatprep.subr.mxu0 %v4027
  %4107 = vmatpush1.msra.mxu0 %v4026
  %4108 = vmatprep.subr.mxu0 %v4023
  %4109 = vmatpush1.msra.mxu0 %v4022
  %4110 = vmatprep.subr.mxu0 %v4019
  %4111 = vmatpush1.msra.mxu0 %v4018
  %4112 = vmatprep.subr.mxu0 %v4015
  %4113 = vmatpush1.msra.mxu0 %v4014
  %4114 = vmatprep.subr.mxu0 %v4011
  %4115 = vmatpush1.msra.mxu0 %v4010
  %4116 = vmatprep.subr.mxu0 %v4007
  %4117 = vmatpush1.msra.mxu0 %v4006
  %4118 = vmatprep.subr.mxu0 %v4003
  %4119 = vmatpush1.msra.mxu0 %v4002
  %4120 = vmatprep.subr.mxu0 %v3999
  %4121 = vmatpush1.msra.mxu0 %v3998
  %4122 = vmatprep.subr.mxu0 %v3995
  %4123 = vmatpush1.msra.mxu0 %v3994
  %4124 = vmatprep.subr.mxu0 %v3991
  %4125 = vmatpush1.msra.mxu0 %v3990
  %4126 = vmatprep.subr.mxu0 %v3987
  %4127 = vmatpush1.msra.mxu0 %v3986
  %4128 = vmatprep.subr.mxu0 %v3983
  %4129 = vmatpush1.msra.mxu0 %v3982
  %4130 = vmatprep.subr.mxu0 %v3979
  %4131 = vmatpush1.msra.mxu0 %v3978
  %4132 = vmatprep.subr.mxu0 %v3975
  %4133 = vmatpush1.msra.mxu0 %v3974
  %4134 = vmatprep.subr.mxu0 %v3971
  %4135 = vmatpush1.msra.mxu0 %v3970
  %4136 = vmatprep.subr.mxu0 0.0
  %4137 = vmatpush2.msra.mxu0 0.0
  %4138 = vmatprep.subr.mxu0 0.0
  %4139 = vmatpush2.msra.mxu0 0.0
  %4140 = vmatprep.subr.mxu0 0.0
  %4141 = vmatpush2.msra.mxu0 0.0
  %4142 = vmatprep.subr.mxu0 0.0
  %4143 = vmatpush2.msra.mxu0 0.0
  %4144 = vmatprep.subr.mxu0 0.0
  %4145 = vmatpush2.msra.mxu0 0.0
  %4146 = vmatprep.subr.mxu0 0.0
  %4147 = vmatpush2.msra.mxu0 0.0
  %4148 = vmatprep.subr.mxu0 0.0
  %4149 = vmatpush2.msra.mxu0 0.0
  %4150 = vmatprep.subr.mxu0 0.0
  %4151 = vmatpush2.msra.mxu0 0.0
  %4152 = vmatprep.subr.mxu0 0.0
  %4153 = vmatpush2.msra.mxu0 0.0
  %4154 = vmatprep.subr.mxu0 0.0
  %4155 = vmatpush2.msra.mxu0 0.0
  %4156 = vmatprep.subr.mxu0 0.0
  %4157 = vmatpush2.msra.mxu0 0.0
  %4158 = vmatprep.subr.mxu0 0.0
  %4159 = vmatpush2.msra.mxu0 0.0
  %4160 = vmatprep.subr.mxu0 0.0
  %4161 = vmatpush2.msra.mxu0 0.0
  %4162 = vmatprep.subr.mxu0 0.0
  %4163 = vmatpush2.msra.mxu0 0.0
  %4164 = vmatprep.subr.mxu0 0.0
  %4165 = vmatpush2.msra.mxu0 0.0
  %4166 = vmatprep.subr.mxu0 0.0
  %4167 = vmatpush2.msra.mxu0 0.0
  %4168 = vmatprep.mubr.f32.mxu0 0.0
  %4169 = vmatmul.mubr.f32.gmra.mxu0 %v4032
  %v4170 = vpop.f32.mrf.mxu0
  %v4171 = vadd.f32 0.0, %v4170
  %v4172 = vpop.f32.mrf.mxu0
  %v4173 = vadd.f32 0.0, %v4172
  %4174 = vdwg.mxu0
  %v4175 = vadd.f32 %v3890, %v4100
  %v4176 = vadd.f32 %v3892, %v4102
  %v4177 = vadd.f32 %v3961, %v4171
  %v4178 = vadd.f32 %v3963, %v4173
  %v4179 = vxor.u32 %v4175, 2147483648
  %v4180 = vmul.f32 %v4179, 1.442695
  %v4181 = vpow.pop %v4180
  %v4182 = vadd.f32 %v4181, 1.0
  %v4183 = vrcp.pop %v4182
  %v4184 = vmul.f32 1.0, %v4183
  %v4185 = vxor.u32 %v4176, 2147483648
  %v4186 = vmul.f32 %v4185, 1.442695
  %v4187 = vpow.pop %v4186
  %v4188 = vadd.f32 %v4187, 1.0
  %v4189 = vrcp.pop %v4188
  %v4190 = vmul.f32 1.0, %v4189
  %v4191 = vtanh.pop %v4177
  %v4192 = vxor.u32 %v4178, 2147483648
  %v4193 = vmul.f32 %v4192, 1.442695
  %v4194 = vpow.pop %v4193
  %v4195 = vadd.f32 %v4194, 1.0
  %v4196 = vrcp.pop %v4195
  %v4197 = vmul.f32 1.0, %v4196
  %v4198 = vld [vmem:[#allocation3] sm:$0xff]
  %v4199 = vmul.f32 %v4190, %v4198
  %v4200 = vmul.f32 %v4184, %v4191
  %v4201 = vadd.f32 %v4199, %v4200
  %v4202 = vtanh.pop %v4201
  %v4203 = vmul.f32 %v4197, %v4202
  %4204 = vst [vmem:[#allocation3] sm:$0xff] %v4201
  %4205 = vst [vmem:[#allocation2] sm:$0xff] %v4203
  %4206 = vst [vmem:[#allocation4] sm:$0xff] %v4203
  %v4207 = vld [vmem:[#allocation2] sm:$0xff]
  %4208 = vmatprep.subr.mxu0 %v4029
  %4209 = vmatpush1.msra.mxu0 %v4028
  %4210 = vmatprep.subr.mxu0 %v4025
  %4211 = vmatpush1.msra.mxu0 %v4024
  %4212 = vmatprep.subr.mxu0 %v4021
  %4213 = vmatpush1.msra.mxu0 %v4020
  %4214 = vmatprep.subr.mxu0 %v4017
  %4215 = vmatpush1.msra.mxu0 %v4016
  %4216 = vmatprep.subr.mxu0 %v4013
  %4217 = vmatpush1.msra.mxu0 %v4012
  %4218 = vmatprep.subr.mxu0 %v4009
  %4219 = vmatpush1.msra.mxu0 %v4008
  %4220 = vmatprep.subr.mxu0 %v4005
  %4221 = vmatpush1.msra.mxu0 %v4004
  %4222 = vmatprep.subr.mxu0 %v4001
  %4223 = vmatpush1.msra.mxu0 %v4000
  %4224 = vmatprep.subr.mxu0 %v3997
  %4225 = vmatpush1.msra.mxu0 %v3996
  %4226 = vmatprep.subr.mxu0 %v3993
  %4227 = vmatpush1.msra.mxu0 %v3992
  %4228 = vmatprep.subr.mxu0 %v3989
  %4229 = vmatpush1.msra.mxu0 %v3988
  %4230 = vmatprep.subr.mxu0 %v3985
  %4231 = vmatpush1.msra.mxu0 %v3984
  %4232 = vmatprep.subr.mxu0 %v3981
  %4233 = vmatpush1.msra.mxu0 %v3980
  %4234 = vmatprep.subr.mxu0 %v3977
  %4235 = vmatpush1.msra.mxu0 %v3976
  %4236 = vmatprep.subr.mxu0 %v3973
  %4237 = vmatpush1.msra.mxu0 %v3972
  %4238 = vmatprep.subr.mxu0 %v3969
  %4239 = vmatpush1.msra.mxu0 %v3968
  %4240 = vmatprep.subr.mxu0 0.0
  %4241 = vmatpush2.msra.mxu0 0.0
  %4242 = vmatprep.subr.mxu0 0.0
  %4243 = vmatpush2.msra.mxu0 0.0
  %4244 = vmatprep.subr.mxu0 0.0
  %4245 = vmatpush2.msra.mxu0 0.0
  %4246 = vmatprep.subr.mxu0 0.0
  %4247 = vmatpush2.msra.mxu0 0.0
  %4248 = vmatprep.subr.mxu0 0.0
  %4249 = vmatpush2.msra.mxu0 0.0
  %4250 = vmatprep.subr.mxu0 0.0
  %4251 = vmatpush2.msra.mxu0 0.0
  %4252 = vmatprep.subr.mxu0 0.0
  %4253 = vmatpush2.msra.mxu0 0.0
  %4254 = vmatprep.subr.mxu0 0.0
  %4255 = vmatpush2.msra.mxu0 0.0
  %4256 = vmatprep.subr.mxu0 0.0
  %4257 = vmatpush2.msra.mxu0 0.0
  %4258 = vmatprep.subr.mxu0 0.0
  %4259 = vmatpush2.msra.mxu0 0.0
  %4260 = vmatprep.subr.mxu0 0.0
  %4261 = vmatpush2.msra.mxu0 0.0
  %4262 = vmatprep.subr.mxu0 0.0
  %4263 = vmatpush2.msra.mxu0 0.0
  %4264 = vmatprep.subr.mxu0 0.0
  %4265 = vmatpush2.msra.mxu0 0.0
  %4266 = vmatprep.subr.mxu0 0.0
  %4267 = vmatpush2.msra.mxu0 0.0
  %4268 = vmatprep.subr.mxu0 0.0
  %4269 = vmatpush2.msra.mxu0 0.0
  %4270 = vmatprep.subr.mxu0 0.0
  %4271 = vmatpush2.msra.mxu0 0.0
  %4272 = vmatprep.mubr.f32.mxu0 0.0
  %4273 = vmatmul.mubr.f32.gmra.mxu0 %v4207
  %v4274 = vpop.f32.mrf.mxu0
  %v4275 = vadd.f32 0.0, %v4274
  %v4276 = vpop.f32.mrf.mxu0
  %v4277 = vadd.f32 0.0, %v4276
  %4278 = vdwg.mxu0
  %4279 = vmatprep.subr.mxu0 %v4031
  %4280 = vmatpush1.msra.mxu0 %v4030
  %4281 = vmatprep.subr.mxu0 %v4027
  %4282 = vmatpush1.msra.mxu0 %v4026
  %4283 = vmatprep.subr.mxu0 %v4023
  %4284 = vmatpush1.msra.mxu0 %v4022
  %4285 = vmatprep.subr.mxu0 %v4019
  %4286 = vmatpush1.msra.mxu0 %v4018
  %4287 = vmatprep.subr.mxu0 %v4015
  %4288 = vmatpush1.msra.mxu0 %v4014
  %4289 = vmatprep.subr.mxu0 %v4011
  %4290 = vmatpush1.msra.mxu0 %v4010
  %4291 = vmatprep.subr.mxu0 %v4007
  %4292 = vmatpush1.msra.mxu0 %v4006
  %4293 = vmatprep.subr.mxu0 %v4003
  %4294 = vmatpush1.msra.mxu0 %v4002
  %4295 = vmatprep.subr.mxu0 %v3999
  %4296 = vmatpush1.msra.mxu0 %v3998
  %4297 = vmatprep.subr.mxu0 %v3995
  %4298 = vmatpush1.msra.mxu0 %v3994
  %4299 = vmatprep.subr.mxu0 %v3991
  %4300 = vmatpush1.msra.mxu0 %v3990
  %4301 = vmatprep.subr.mxu0 %v3987
  %4302 = vmatpush1.msra.mxu0 %v3986
  %4303 = vmatprep.subr.mxu0 %v3983
  %4304 = vmatpush1.msra.mxu0 %v3982
  %4305 = vmatprep.subr.mxu0 %v3979
  %4306 = vmatpush1.msra.mxu0 %v3978
  %4307 = vmatprep.subr.mxu0 %v3975
  %4308 = vmatpush1.msra.mxu0 %v3974
  %4309 = vmatprep.subr.mxu0 %v3971
  %4310 = vmatpush1.msra.mxu0 %v3970
  %4311 = vmatprep.subr.mxu0 0.0
  %4312 = vmatpush2.msra.mxu0 0.0
  %4313 = vmatprep.subr.mxu0 0.0
  %4314 = vmatpush2.msra.mxu0 0.0
  %4315 = vmatprep.subr.mxu0 0.0
  %4316 = vmatpush2.msra.mxu0 0.0
  %4317 = vmatprep.subr.mxu0 0.0
  %4318 = vmatpush2.msra.mxu0 0.0
  %4319 = vmatprep.subr.mxu0 0.0
  %4320 = vmatpush2.msra.mxu0 0.0
  %4321 = vmatprep.subr.mxu0 0.0
  %4322 = vmatpush2.msra.mxu0 0.0
  %4323 = vmatprep.subr.mxu0 0.0
  %4324 = vmatpush2.msra.mxu0 0.0
  %4325 = vmatprep.subr.mxu0 0.0
  %4326 = vmatpush2.msra.mxu0 0.0
  %4327 = vmatprep.subr.mxu0 0.0
  %4328 = vmatpush2.msra.mxu0 0.0
  %4329 = vmatprep.subr.mxu0 0.0
  %4330 = vmatpush2.msra.mxu0 0.0
  %4331 = vmatprep.subr.mxu0 0.0
  %4332 = vmatpush2.msra.mxu0 0.0
  %4333 = vmatprep.subr.mxu0 0.0
  %4334 = vmatpush2.msra.mxu0 0.0
  %4335 = vmatprep.subr.mxu0 0.0
  %4336 = vmatpush2.msra.mxu0 0.0
  %4337 = vmatprep.subr.mxu0 0.0
  %4338 = vmatpush2.msra.mxu0 0.0
  %4339 = vmatprep.subr.mxu0 0.0
  %4340 = vmatpush2.msra.mxu0 0.0
  %4341 = vmatprep.subr.mxu0 0.0
  %4342 = vmatpush2.msra.mxu0 0.0
  %4343 = vmatprep.mubr.f32.mxu0 0.0
  %4344 = vmatmul.mubr.f32.gmra.mxu0 %v4207
  %v4345 = vpop.f32.mrf.mxu0
  %v4346 = vadd.f32 0.0, %v4345
  %v4347 = vpop.f32.mrf.mxu0
  %v4348 = vadd.f32 0.0, %v4347
  %4349 = vdwg.mxu0
  %v4350 = vadd.f32 %v3890, %v4275
  %v4351 = vadd.f32 %v3892, %v4277
  %v4352 = vadd.f32 %v3961, %v4346
  %v4353 = vadd.f32 %v3963, %v4348
  %v4354 = vxor.u32 %v4350, 2147483648
  %v4355 = vmul.f32 %v4354, 1.442695
  %v4356 = vpow.pop %v4355
  %v4357 = vadd.f32 %v4356, 1.0
  %v4358 = vrcp.pop %v4357
  %v4359 = vmul.f32 1.0, %v4358
  %v4360 = vxor.u32 %v4351, 2147483648
  %v4361 = vmul.f32 %v4360, 1.442695
  %v4362 = vpow.pop %v4361
  %v4363 = vadd.f32 %v4362, 1.0
  %v4364 = vrcp.pop %v4363
  %v4365 = vmul.f32 1.0, %v4364
  %v4366 = vtanh.pop %v4352
  %v4367 = vxor.u32 %v4353, 2147483648
  %v4368 = vmul.f32 %v4367, 1.442695
  %v4369 = vpow.pop %v4368
  %v4370 = vadd.f32 %v4369, 1.0
  %v4371 = vrcp.pop %v4370
  %v4372 = vmul.f32 1.0, %v4371
  %v4373 = vld [vmem:[#allocation3] sm:$0xff]
  %v4374 = vmul.f32 %v4365, %v4373
  %v4375 = vmul.f32 %v4359, %v4366
  %v4376 = vadd.f32 %v4374, %v4375
  %v4377 = vtanh.pop %v4376
  %v4378 = vmul.f32 %v4372, %v4377
  %4379 = vst [vmem:[#allocation3] sm:$0xff] %v4376
  %4380 = vst [vmem:[#allocation2] sm:$0xff] %v4378
  %4381 = vst [vmem:[%s793] sm:$0xff] %v4378
  %v4382 = vld [vmem:[#allocation2] sm:$0xff]
  %4383 = vmatprep.subr.mxu0 %v4029
  %4384 = vmatpush1.msra.mxu0 %v4028
  %4385 = vmatprep.subr.mxu0 %v4025
  %4386 = vmatpush1.msra.mxu0 %v4024
  %4387 = vmatprep.subr.mxu0 %v4021
  %4388 = vmatpush1.msra.mxu0 %v4020
  %4389 = vmatprep.subr.mxu0 %v4017
  %4390 = vmatpush1.msra.mxu0 %v4016
  %4391 = vmatprep.subr.mxu0 %v4013
  %4392 = vmatpush1.msra.mxu0 %v4012
  %4393 = vmatprep.subr.mxu0 %v4009
  %4394 = vmatpush1.msra.mxu0 %v4008
  %4395 = vmatprep.subr.mxu0 %v4005
  %4396 = vmatpush1.msra.mxu0 %v4004
  %4397 = vmatprep.subr.mxu0 %v4001
  %4398 = vmatpush1.msra.mxu0 %v4000
  %4399 = vmatprep.subr.mxu0 %v3997
  %4400 = vmatpush1.msra.mxu0 %v3996
  %4401 = vmatprep.subr.mxu0 %v3993
  %4402 = vmatpush1.msra.mxu0 %v3992
  %4403 = vmatprep.subr.mxu0 %v3989
  %4404 = vmatpush1.msra.mxu0 %v3988
  %4405 = vmatprep.subr.mxu0 %v3985
  %4406 = vmatpush1.msra.mxu0 %v3984
  %4407 = vmatprep.subr.mxu0 %v3981
  %4408 = vmatpush1.msra.mxu0 %v3980
  %4409 = vmatprep.subr.mxu0 %v3977
  %4410 = vmatpush1.msra.mxu0 %v3976
  %4411 = vmatprep.subr.mxu0 %v3973
  %4412 = vmatpush1.msra.mxu0 %v3972
  %4413 = vmatprep.subr.mxu0 %v3969
  %4414 = vmatpush1.msra.mxu0 %v3968
  %4415 = vmatprep.subr.mxu0 0.0
  %4416 = vmatpush2.msra.mxu0 0.0
  %4417 = vmatprep.subr.mxu0 0.0
  %4418 = vmatpush2.msra.mxu0 0.0
  %4419 = vmatprep.subr.mxu0 0.0
  %4420 = vmatpush2.msra.mxu0 0.0
  %4421 = vmatprep.subr.mxu0 0.0
  %4422 = vmatpush2.msra.mxu0 0.0
  %4423 = vmatprep.subr.mxu0 0.0
  %4424 = vmatpush2.msra.mxu0 0.0
  %4425 = vmatprep.subr.mxu0 0.0
  %4426 = vmatpush2.msra.mxu0 0.0
  %4427 = vmatprep.subr.mxu0 0.0
  %4428 = vmatpush2.msra.mxu0 0.0
  %4429 = vmatprep.subr.mxu0 0.0
  %4430 = vmatpush2.msra.mxu0 0.0
  %4431 = vmatprep.subr.mxu0 0.0
  %4432 = vmatpush2.msra.mxu0 0.0
  %4433 = vmatprep.subr.mxu0 0.0
  %4434 = vmatpush2.msra.mxu0 0.0
  %4435 = vmatprep.subr.mxu0 0.0
  %4436 = vmatpush2.msra.mxu0 0.0
  %4437 = vmatprep.subr.mxu0 0.0
  %4438 = vmatpush2.msra.mxu0 0.0
  %4439 = vmatprep.subr.mxu0 0.0
  %4440 = vmatpush2.msra.mxu0 0.0
  %4441 = vmatprep.subr.mxu0 0.0
  %4442 = vmatpush2.msra.mxu0 0.0
  %4443 = vmatprep.subr.mxu0 0.0
  %4444 = vmatpush2.msra.mxu0 0.0
  %4445 = vmatprep.subr.mxu0 0.0
  %4446 = vmatpush2.msra.mxu0 0.0
  %4447 = vmatprep.mubr.f32.mxu0 0.0
  %4448 = vmatmul.mubr.f32.gmra.mxu0 %v4382
  %v4449 = vpop.f32.mrf.mxu0
  %v4450 = vadd.f32 0.0, %v4449
  %v4451 = vpop.f32.mrf.mxu0
  %v4452 = vadd.f32 0.0, %v4451
  %4453 = vdwg.mxu0
  %4454 = vmatprep.subr.mxu0 %v4031
  %4455 = vmatpush1.msra.mxu0 %v4030
  %4456 = vmatprep.subr.mxu0 %v4027
  %4457 = vmatpush1.msra.mxu0 %v4026
  %4458 = vmatprep.subr.mxu0 %v4023
  %4459 = vmatpush1.msra.mxu0 %v4022
  %4460 = vmatprep.subr.mxu0 %v4019
  %4461 = vmatpush1.msra.mxu0 %v4018
  %4462 = vmatprep.subr.mxu0 %v4015
  %4463 = vmatpush1.msra.mxu0 %v4014
  %4464 = vmatprep.subr.mxu0 %v4011
  %4465 = vmatpush1.msra.mxu0 %v4010
  %4466 = vmatprep.subr.mxu0 %v4007
  %4467 = vmatpush1.msra.mxu0 %v4006
  %4468 = vmatprep.subr.mxu0 %v4003
  %4469 = vmatpush1.msra.mxu0 %v4002
  %4470 = vmatprep.subr.mxu0 %v3999
  %4471 = vmatpush1.msra.mxu0 %v3998
  %4472 = vmatprep.subr.mxu0 %v3995
  %4473 = vmatpush1.msra.mxu0 %v3994
  %4474 = vmatprep.subr.mxu0 %v3991
  %4475 = vmatpush1.msra.mxu0 %v3990
  %4476 = vmatprep.subr.mxu0 %v3987
  %4477 = vmatpush1.msra.mxu0 %v3986
  %4478 = vmatprep.subr.mxu0 %v3983
  %4479 = vmatpush1.msra.mxu0 %v3982
  %4480 = vmatprep.subr.mxu0 %v3979
  %4481 = vmatpush1.msra.mxu0 %v3978
  %4482 = vmatprep.subr.mxu0 %v3975
  %4483 = vmatpush1.msra.mxu0 %v3974
  %4484 = vmatprep.subr.mxu0 %v3971
  %4485 = vmatpush1.msra.mxu0 %v3970
  %4486 = vmatprep.subr.mxu0 0.0
  %4487 = vmatpush2.msra.mxu0 0.0
  %4488 = vmatprep.subr.mxu0 0.0
  %4489 = vmatpush2.msra.mxu0 0.0
  %4490 = vmatprep.subr.mxu0 0.0
  %4491 = vmatpush2.msra.mxu0 0.0
  %4492 = vmatprep.subr.mxu0 0.0
  %4493 = vmatpush2.msra.mxu0 0.0
  %4494 = vmatprep.subr.mxu0 0.0
  %4495 = vmatpush2.msra.mxu0 0.0
  %4496 = vmatprep.subr.mxu0 0.0
  %4497 = vmatpush2.msra.mxu0 0.0
  %4498 = vmatprep.subr.mxu0 0.0
  %4499 = vmatpush2.msra.mxu0 0.0
  %4500 = vmatprep.subr.mxu0 0.0
  %4501 = vmatpush2.msra.mxu0 0.0
  %4502 = vmatprep.subr.mxu0 0.0
  %4503 = vmatpush2.msra.mxu0 0.0
  %4504 = vmatprep.subr.mxu0 0.0
  %4505 = vmatpush2.msra.mxu0 0.0
  %4506 = vmatprep.subr.mxu0 0.0
  %4507 = vmatpush2.msra.mxu0 0.0
  %4508 = vmatprep.subr.mxu0 0.0
  %4509 = vmatpush2.msra.mxu0 0.0
  %4510 = vmatprep.subr.mxu0 0.0
  %4511 = vmatpush2.msra.mxu0 0.0
  %4512 = vmatprep.subr.mxu0 0.0
  %4513 = vmatpush2.msra.mxu0 0.0
  %4514 = vmatprep.subr.mxu0 0.0
  %4515 = vmatpush2.msra.mxu0 0.0
  %4516 = vmatprep.subr.mxu0 0.0
  %4517 = vmatpush2.msra.mxu0 0.0
  %4518 = vmatprep.mubr.f32.mxu0 0.0
  %4519 = vmatmul.mubr.f32.gmra.mxu0 %v4382
  %v4520 = vpop.f32.mrf.mxu0
  %v4521 = vadd.f32 0.0, %v4520
  %v4522 = vpop.f32.mrf.mxu0
  %v4523 = vadd.f32 0.0, %v4522
  %4524 = vdwg.mxu0
  %v4525 = vadd.f32 %v3890, %v4450
  %v4526 = vadd.f32 %v3892, %v4452
  %v4527 = vadd.f32 %v3961, %v4521
  %v4528 = vadd.f32 %v3963, %v4523
  %v4529 = vxor.u32 %v4525, 2147483648
  %v4530 = vmul.f32 %v4529, 1.442695
  %v4531 = vpow.pop %v4530
  %v4532 = vadd.f32 %v4531, 1.0
  %v4533 = vrcp.pop %v4532
  %v4534 = vmul.f32 1.0, %v4533
  %v4535 = vxor.u32 %v4526, 2147483648
  %v4536 = vmul.f32 %v4535, 1.442695
  %v4537 = vpow.pop %v4536
  %v4538 = vadd.f32 %v4537, 1.0
  %v4539 = vrcp.pop %v4538
  %v4540 = vmul.f32 1.0, %v4539
  %v4541 = vtanh.pop %v4527
  %v4542 = vxor.u32 %v4528, 2147483648
  %v4543 = vmul.f32 %v4542, 1.442695
  %v4544 = vpow.pop %v4543
  %v4545 = vadd.f32 %v4544, 1.0
  %v4546 = vrcp.pop %v4545
  %v4547 = vmul.f32 1.0, %v4546
  %v4548 = vld [vmem:[#allocation3] sm:$0xff]
  %v4549 = vmul.f32 %v4540, %v4548
  %v4550 = vmul.f32 %v4534, %v4541
  %v4551 = vadd.f32 %v4549, %v4550
  %v4552 = vtanh.pop %v4551
  %v4553 = vmul.f32 %v4547, %v4552
  %4554 = vst [vmem:[#allocation3] sm:$0xff] %v4551
  %4555 = vst [vmem:[#allocation2] sm:$0xff] %v4553
  %4556 = vst [vmem:[%s974] sm:$0xff] %v4553
  %v4557 = vld [vmem:[#allocation2] sm:$0xff]
  %4558 = vmatprep.subr.mxu0 %v4029
  %4559 = vmatpush1.msra.mxu0 %v4028
  %4560 = vmatprep.subr.mxu0 %v4025
  %4561 = vmatpush1.msra.mxu0 %v4024
  %4562 = vmatprep.subr.mxu0 %v4021
  %4563 = vmatpush1.msra.mxu0 %v4020
  %4564 = vmatprep.subr.mxu0 %v4017
  %4565 = vmatpush1.msra.mxu0 %v4016
  %4566 = vmatprep.subr.mxu0 %v4013
  %4567 = vmatpush1.msra.mxu0 %v4012
  %4568 = vmatprep.subr.mxu0 %v4009
  %4569 = vmatpush1.msra.mxu0 %v4008
  %4570 = vmatprep.subr.mxu0 %v4005
  %4571 = vmatpush1.msra.mxu0 %v4004
  %4572 = vmatprep.subr.mxu0 %v4001
  %4573 = vmatpush1.msra.mxu0 %v4000
  %4574 = vmatprep.subr.mxu0 %v3997
  %4575 = vmatpush1.msra.mxu0 %v3996
  %4576 = vmatprep.subr.mxu0 %v3993
  %4577 = vmatpush1.msra.mxu0 %v3992
  %4578 = vmatprep.subr.mxu0 %v3989
  %4579 = vmatpush1.msra.mxu0 %v3988
  %4580 = vmatprep.subr.mxu0 %v3985
  %4581 = vmatpush1.msra.mxu0 %v3984
  %4582 = vmatprep.subr.mxu0 %v3981
  %4583 = vmatpush1.msra.mxu0 %v3980
  %4584 = vmatprep.subr.mxu0 %v3977
  %4585 = vmatpush1.msra.mxu0 %v3976
  %4586 = vmatprep.subr.mxu0 %v3973
  %4587 = vmatpush1.msra.mxu0 %v3972
  %4588 = vmatprep.subr.mxu0 %v3969
  %4589 = vmatpush1.msra.mxu0 %v3968
  %4590 = vmatprep.subr.mxu0 0.0
  %4591 = vmatpush2.msra.mxu0 0.0
  %4592 = vmatprep.subr.mxu0 0.0
  %4593 = vmatpush2.msra.mxu0 0.0
  %4594 = vmatprep.subr.mxu0 0.0
  %4595 = vmatpush2.msra.mxu0 0.0
  %4596 = vmatprep.subr.mxu0 0.0
  %4597 = vmatpush2.msra.mxu0 0.0
  %4598 = vmatprep.subr.mxu0 0.0
  %4599 = vmatpush2.msra.mxu0 0.0
  %4600 = vmatprep.subr.mxu0 0.0
  %4601 = vmatpush2.msra.mxu0 0.0
  %4602 = vmatprep.subr.mxu0 0.0
  %4603 = vmatpush2.msra.mxu0 0.0
  %4604 = vmatprep.subr.mxu0 0.0
  %4605 = vmatpush2.msra.mxu0 0.0
  %4606 = vmatprep.subr.mxu0 0.0
  %4607 = vmatpush2.msra.mxu0 0.0
  %4608 = vmatprep.subr.mxu0 0.0
  %4609 = vmatpush2.msra.mxu0 0.0
  %4610 = vmatprep.subr.mxu0 0.0
  %4611 = vmatpush2.msra.mxu0 0.0
  %4612 = vmatprep.subr.mxu0 0.0
  %4613 = vmatpush2.msra.mxu0 0.0
  %4614 = vmatprep.subr.mxu0 0.0
  %4615 = vmatpush2.msra.mxu0 0.0
  %4616 = vmatprep.subr.mxu0 0.0
  %4617 = vmatpush2.msra.mxu0 0.0
  %4618 = vmatprep.subr.mxu0 0.0
  %4619 = vmatpush2.msra.mxu0 0.0
  %4620 = vmatprep.subr.mxu0 0.0
  %4621 = vmatpush2.msra.mxu0 0.0
  %4622 = vmatprep.mubr.f32.mxu0 0.0
  %4623 = vmatmul.mubr.f32.gmra.mxu0 %v4557
  %v4624 = vpop.f32.mrf.mxu0
  %v4625 = vadd.f32 0.0, %v4624
  %v4626 = vpop.f32.mrf.mxu0
  %v4627 = vadd.f32 0.0, %v4626
  %4628 = vdwg.mxu0
  %4629 = vmatprep.subr.mxu0 %v4031
  %4630 = vmatpush1.msra.mxu0 %v4030
  %4631 = vmatprep.subr.mxu0 %v4027
  %4632 = vmatpush1.msra.mxu0 %v4026
  %4633 = vmatprep.subr.mxu0 %v4023
  %4634 = vmatpush1.msra.mxu0 %v4022
  %4635 = vmatprep.subr.mxu0 %v4019
  %4636 = vmatpush1.msra.mxu0 %v4018
  %4637 = vmatprep.subr.mxu0 %v4015
  %4638 = vmatpush1.msra.mxu0 %v4014
  %4639 = vmatprep.subr.mxu0 %v4011
  %4640 = vmatpush1.msra.mxu0 %v4010
  %4641 = vmatprep.subr.mxu0 %v4007
  %4642 = vmatpush1.msra.mxu0 %v4006
  %4643 = vmatprep.subr.mxu0 %v4003
  %4644 = vmatpush1.msra.mxu0 %v4002
  %4645 = vmatprep.subr.mxu0 %v3999
  %4646 = vmatpush1.msra.mxu0 %v3998
  %4647 = vmatprep.subr.mxu0 %v3995
  %4648 = vmatpush1.msra.mxu0 %v3994
  %4649 = vmatprep.subr.mxu0 %v3991
  %4650 = vmatpush1.msra.mxu0 %v3990
  %4651 = vmatprep.subr.mxu0 %v3987
  %4652 = vmatpush1.msra.mxu0 %v3986
  %4653 = vmatprep.subr.mxu0 %v3983
  %4654 = vmatpush1.msra.mxu0 %v3982
  %4655 = vmatprep.subr.mxu0 %v3979
  %4656 = vmatpush1.msra.mxu0 %v3978
  %4657 = vmatprep.subr.mxu0 %v3975
  %4658 = vmatpush1.msra.mxu0 %v3974
  %4659 = vmatprep.subr.mxu0 %v3971
  %4660 = vmatpush1.msra.mxu0 %v3970
  %4661 = vmatprep.subr.mxu0 0.0
  %4662 = vmatpush2.msra.mxu0 0.0
  %4663 = vmatprep.subr.mxu0 0.0
  %4664 = vmatpush2.msra.mxu0 0.0
  %4665 = vmatprep.subr.mxu0 0.0
  %4666 = vmatpush2.msra.mxu0 0.0
  %4667 = vmatprep.subr.mxu0 0.0
  %4668 = vmatpush2.msra.mxu0 0.0
  %4669 = vmatprep.subr.mxu0 0.0
  %4670 = vmatpush2.msra.mxu0 0.0
  %4671 = vmatprep.subr.mxu0 0.0
  %4672 = vmatpush2.msra.mxu0 0.0
  %4673 = vmatprep.subr.mxu0 0.0
  %4674 = vmatpush2.msra.mxu0 0.0
  %4675 = vmatprep.subr.mxu0 0.0
  %4676 = vmatpush2.msra.mxu0 0.0
  %4677 = vmatprep.subr.mxu0 0.0
  %4678 = vmatpush2.msra.mxu0 0.0
  %4679 = vmatprep.subr.mxu0 0.0
  %4680 = vmatpush2.msra.mxu0 0.0
  %4681 = vmatprep.subr.mxu0 0.0
  %4682 = vmatpush2.msra.mxu0 0.0
  %4683 = vmatprep.subr.mxu0 0.0
  %4684 = vmatpush2.msra.mxu0 0.0
  %4685 = vmatprep.subr.mxu0 0.0
  %4686 = vmatpush2.msra.mxu0 0.0
  %4687 = vmatprep.subr.mxu0 0.0
  %4688 = vmatpush2.msra.mxu0 0.0
  %4689 = vmatprep.subr.mxu0 0.0
  %4690 = vmatpush2.msra.mxu0 0.0
  %4691 = vmatprep.subr.mxu0 0.0
  %4692 = vmatpush2.msra.mxu0 0.0
  %4693 = vmatprep.mubr.f32.mxu0 0.0
  %4694 = vmatmul.mubr.f32.gmra.mxu0 %v4557
  %v4695 = vpop.f32.mrf.mxu0
  %v4696 = vadd.f32 0.0, %v4695
  %v4697 = vpop.f32.mrf.mxu0
  %v4698 = vadd.f32 0.0, %v4697
  %4699 = vdwg.mxu0
  %v4700 = vadd.f32 %v3890, %v4625
  %v4701 = vadd.f32 %v3892, %v4627
  %v4702 = vadd.f32 %v3961, %v4696
  %v4703 = vadd.f32 %v3963, %v4698
  %v4704 = vxor.u32 %v4700, 2147483648
  %v4705 = vmul.f32 %v4704, 1.442695
  %v4706 = vpow.pop %v4705
  %v4707 = vadd.f32 %v4706, 1.0
  %v4708 = vrcp.pop %v4707
  %v4709 = vmul.f32 1.0, %v4708
  %v4710 = vxor.u32 %v4701, 2147483648
  %v4711 = vmul.f32 %v4710, 1.442695
  %v4712 = vpow.pop %v4711
  %v4713 = vadd.f32 %v4712, 1.0
  %v4714 = vrcp.pop %v4713
  %v4715 = vmul.f32 1.0, %v4714
  %v4716 = vtanh.pop %v4702
  %v4717 = vxor.u32 %v4703, 2147483648
  %v4718 = vmul.f32 %v4717, 1.442695
  %v4719 = vpow.pop %v4718
  %v4720 = vadd.f32 %v4719, 1.0
  %v4721 = vrcp.pop %v4720
  %v4722 = vmul.f32 1.0, %v4721
  %v4723 = vld [vmem:[#allocation3] sm:$0xff]
  %v4724 = vmul.f32 %v4715, %v4723
  %v4725 = vmul.f32 %v4709, %v4716
  %v4726 = vadd.f32 %v4724, %v4725
  %v4727 = vtanh.pop %v4726
  %v4728 = vmul.f32 %v4722, %v4727
  %4729 = vst [vmem:[#allocation3] sm:$0xff] %v4726
  %4730 = vst [vmem:[#allocation2] sm:$0xff] %v4728
  %4731 = vst [vmem:[%s1155] sm:$0xff] %v4728
  %v4732 = vld [vmem:[#allocation2] sm:$0xff]
  %4733 = vmatprep.subr.mxu0 %v4029
  %4734 = vmatpush1.msra.mxu0 %v4028
  %4735 = vmatprep.subr.mxu0 %v4025
  %4736 = vmatpush1.msra.mxu0 %v4024
  %4737 = vmatprep.subr.mxu0 %v4021
  %4738 = vmatpush1.msra.mxu0 %v4020
  %4739 = vmatprep.subr.mxu0 %v4017
  %4740 = vmatpush1.msra.mxu0 %v4016
  %4741 = vmatprep.subr.mxu0 %v4013
  %4742 = vmatpush1.msra.mxu0 %v4012
  %4743 = vmatprep.subr.mxu0 %v4009
  %4744 = vmatpush1.msra.mxu0 %v4008
  %4745 = vmatprep.subr.mxu0 %v4005
  %4746 = vmatpush1.msra.mxu0 %v4004
  %4747 = vmatprep.subr.mxu0 %v4001
  %4748 = vmatpush1.msra.mxu0 %v4000
  %4749 = vmatprep.subr.mxu0 %v3997
  %4750 = vmatpush1.msra.mxu0 %v3996
  %4751 = vmatprep.subr.mxu0 %v3993
  %4752 = vmatpush1.msra.mxu0 %v3992
  %4753 = vmatprep.subr.mxu0 %v3989
  %4754 = vmatpush1.msra.mxu0 %v3988
  %4755 = vmatprep.subr.mxu0 %v3985
  %4756 = vmatpush1.msra.mxu0 %v3984
  %4757 = vmatprep.subr.mxu0 %v3981
  %4758 = vmatpush1.msra.mxu0 %v3980
  %4759 = vmatprep.subr.mxu0 %v3977
  %4760 = vmatpush1.msra.mxu0 %v3976
  %4761 = vmatprep.subr.mxu0 %v3973
  %4762 = vmatpush1.msra.mxu0 %v3972
  %4763 = vmatprep.subr.mxu0 %v3969
  %4764 = vmatpush1.msra.mxu0 %v3968
  %4765 = vmatprep.subr.mxu0 0.0
  %4766 = vmatpush2.msra.mxu0 0.0
  %4767 = vmatprep.subr.mxu0 0.0
  %4768 = vmatpush2.msra.mxu0 0.0
  %4769 = vmatprep.subr.mxu0 0.0
  %4770 = vmatpush2.msra.mxu0 0.0
  %4771 = vmatprep.subr.mxu0 0.0
  %4772 = vmatpush2.msra.mxu0 0.0
  %4773 = vmatprep.subr.mxu0 0.0
  %4774 = vmatpush2.msra.mxu0 0.0
  %4775 = vmatprep.subr.mxu0 0.0
  %4776 = vmatpush2.msra.mxu0 0.0
  %4777 = vmatprep.subr.mxu0 0.0
  %4778 = vmatpush2.msra.mxu0 0.0
  %4779 = vmatprep.subr.mxu0 0.0
  %4780 = vmatpush2.msra.mxu0 0.0
  %4781 = vmatprep.subr.mxu0 0.0
  %4782 = vmatpush2.msra.mxu0 0.0
  %4783 = vmatprep.subr.mxu0 0.0
  %4784 = vmatpush2.msra.mxu0 0.0
  %4785 = vmatprep.subr.mxu0 0.0
  %4786 = vmatpush2.msra.mxu0 0.0
  %4787 = vmatprep.subr.mxu0 0.0
  %4788 = vmatpush2.msra.mxu0 0.0
  %4789 = vmatprep.subr.mxu0 0.0
  %4790 = vmatpush2.msra.mxu0 0.0
  %4791 = vmatprep.subr.mxu0 0.0
  %4792 = vmatpush2.msra.mxu0 0.0
  %4793 = vmatprep.subr.mxu0 0.0
  %4794 = vmatpush2.msra.mxu0 0.0
  %4795 = vmatprep.subr.mxu0 0.0
  %4796 = vmatpush2.msra.mxu0 0.0
  %4797 = vmatprep.mubr.f32.mxu0 0.0
  %4798 = vmatmul.mubr.f32.gmra.mxu0 %v4732
  %v4799 = vpop.f32.mrf.mxu0
  %v4800 = vadd.f32 0.0, %v4799
  %v4801 = vpop.f32.mrf.mxu0
  %v4802 = vadd.f32 0.0, %v4801
  %4803 = vdwg.mxu0
  %4804 = vmatprep.subr.mxu0 %v4031
  %4805 = vmatpush1.msra.mxu0 %v4030
  %4806 = vmatprep.subr.mxu0 %v4027
  %4807 = vmatpush1.msra.mxu0 %v4026
  %4808 = vmatprep.subr.mxu0 %v4023
  %4809 = vmatpush1.msra.mxu0 %v4022
  %4810 = vmatprep.subr.mxu0 %v4019
  %4811 = vmatpush1.msra.mxu0 %v4018
  %4812 = vmatprep.subr.mxu0 %v4015
  %4813 = vmatpush1.msra.mxu0 %v4014
  %4814 = vmatprep.subr.mxu0 %v4011
  %4815 = vmatpush1.msra.mxu0 %v4010
  %4816 = vmatprep.subr.mxu0 %v4007
  %4817 = vmatpush1.msra.mxu0 %v4006
  %4818 = vmatprep.subr.mxu0 %v4003
  %4819 = vmatpush1.msra.mxu0 %v4002
  %4820 = vmatprep.subr.mxu0 %v3999
  %4821 = vmatpush1.msra.mxu0 %v3998
  %4822 = vmatprep.subr.mxu0 %v3995
  %4823 = vmatpush1.msra.mxu0 %v3994
  %4824 = vmatprep.subr.mxu0 %v3991
  %4825 = vmatpush1.msra.mxu0 %v3990
  %4826 = vmatprep.subr.mxu0 %v3987
  %4827 = vmatpush1.msra.mxu0 %v3986
  %4828 = vmatprep.subr.mxu0 %v3983
  %4829 = vmatpush1.msra.mxu0 %v3982
  %4830 = vmatprep.subr.mxu0 %v3979
  %4831 = vmatpush1.msra.mxu0 %v3978
  %4832 = vmatprep.subr.mxu0 %v3975
  %4833 = vmatpush1.msra.mxu0 %v3974
  %4834 = vmatprep.subr.mxu0 %v3971
  %4835 = vmatpush1.msra.mxu0 %v3970
  %4836 = vmatprep.subr.mxu0 0.0
  %4837 = vmatpush2.msra.mxu0 0.0
  %4838 = vmatprep.subr.mxu0 0.0
  %4839 = vmatpush2.msra.mxu0 0.0
  %4840 = vmatprep.subr.mxu0 0.0
  %4841 = vmatpush2.msra.mxu0 0.0
  %4842 = vmatprep.subr.mxu0 0.0
  %4843 = vmatpush2.msra.mxu0 0.0
  %4844 = vmatprep.subr.mxu0 0.0
  %4845 = vmatpush2.msra.mxu0 0.0
  %4846 = vmatprep.subr.mxu0 0.0
  %4847 = vmatpush2.msra.mxu0 0.0
  %4848 = vmatprep.subr.mxu0 0.0
  %4849 = vmatpush2.msra.mxu0 0.0
  %4850 = vmatprep.subr.mxu0 0.0
  %4851 = vmatpush2.msra.mxu0 0.0
  %4852 = vmatprep.subr.mxu0 0.0
  %4853 = vmatpush2.msra.mxu0 0.0
  %4854 = vmatprep.subr.mxu0 0.0
  %4855 = vmatpush2.msra.mxu0 0.0
  %4856 = vmatprep.subr.mxu0 0.0
  %4857 = vmatpush2.msra.mxu0 0.0
  %4858 = vmatprep.subr.mxu0 0.0
  %4859 = vmatpush2.msra.mxu0 0.0
  %4860 = vmatprep.subr.mxu0 0.0
  %4861 = vmatpush2.msra.mxu0 0.0
  %4862 = vmatprep.subr.mxu0 0.0
  %4863 = vmatpush2.msra.mxu0 0.0
  %4864 = vmatprep.subr.mxu0 0.0
  %4865 = vmatpush2.msra.mxu0 0.0
  %4866 = vmatprep.subr.mxu0 0.0
  %4867 = vmatpush2.msra.mxu0 0.0
  %4868 = vmatprep.mubr.f32.mxu0 0.0
  %4869 = vmatmul.mubr.f32.gmra.mxu0 %v4732
  %v4870 = vpop.f32.mrf.mxu0
  %v4871 = vadd.f32 0.0, %v4870
  %v4872 = vpop.f32.mrf.mxu0
  %v4873 = vadd.f32 0.0, %v4872
  %4874 = vdwg.mxu0
  %v4875 = vadd.f32 %v3890, %v4800
  %v4876 = vadd.f32 %v3892, %v4802
  %v4877 = vadd.f32 %v3961, %v4871
  %v4878 = vadd.f32 %v3963, %v4873
  %v4879 = vxor.u32 %v4875, 2147483648
  %v4880 = vmul.f32 %v4879, 1.442695
  %v4881 = vpow.pop %v4880
  %v4882 = vadd.f32 %v4881, 1.0
  %v4883 = vrcp.pop %v4882
  %v4884 = vmul.f32 1.0, %v4883
  %v4885 = vxor.u32 %v4876, 2147483648
  %v4886 = vmul.f32 %v4885, 1.442695
  %v4887 = vpow.pop %v4886
  %v4888 = vadd.f32 %v4887, 1.0
  %v4889 = vrcp.pop %v4888
  %v4890 = vmul.f32 1.0, %v4889
  %v4891 = vtanh.pop %v4877
  %v4892 = vxor.u32 %v4878, 2147483648
  %v4893 = vmul.f32 %v4892, 1.442695
  %v4894 = vpow.pop %v4893
  %v4895 = vadd.f32 %v4894, 1.0
  %v4896 = vrcp.pop %v4895
  %v4897 = vmul.f32 1.0, %v4896
  %v4898 = vld [vmem:[#allocation3] sm:$0xff]
  %v4899 = vmul.f32 %v4890, %v4898
  %v4900 = vmul.f32 %v4884, %v4891
  %v4901 = vadd.f32 %v4899, %v4900
  %v4902 = vtanh.pop %v4901
  %v4903 = vmul.f32 %v4897, %v4902
  %4904 = vst [vmem:[#allocation3] sm:$0xff] %v4901
  %4905 = vst [vmem:[#allocation2] sm:$0xff] %v4903
  %4906 = vst [vmem:[%s1336] sm:$0xff] %v4903
  %v4907 = vld [vmem:[#allocation2] sm:$0xff]
  %4908 = vmatprep.subr.mxu0 %v4029
  %4909 = vmatpush1.msra.mxu0 %v4028
  %4910 = vmatprep.subr.mxu0 %v4025
  %4911 = vmatpush1.msra.mxu0 %v4024
  %4912 = vmatprep.subr.mxu0 %v4021
  %4913 = vmatpush1.msra.mxu0 %v4020
  %4914 = vmatprep.subr.mxu0 %v4017
  %4915 = vmatpush1.msra.mxu0 %v4016
  %4916 = vmatprep.subr.mxu0 %v4013
  %4917 = vmatpush1.msra.mxu0 %v4012
  %4918 = vmatprep.subr.mxu0 %v4009
  %4919 = vmatpush1.msra.mxu0 %v4008
  %4920 = vmatprep.subr.mxu0 %v4005
  %4921 = vmatpush1.msra.mxu0 %v4004
  %4922 = vmatprep.subr.mxu0 %v4001
  %4923 = vmatpush1.msra.mxu0 %v4000
  %4924 = vmatprep.subr.mxu0 %v3997
  %4925 = vmatpush1.msra.mxu0 %v3996
  %4926 = vmatprep.subr.mxu0 %v3993
  %4927 = vmatpush1.msra.mxu0 %v3992
  %4928 = vmatprep.subr.mxu0 %v3989
  %4929 = vmatpush1.msra.mxu0 %v3988
  %4930 = vmatprep.subr.mxu0 %v3985
  %4931 = vmatpush1.msra.mxu0 %v3984
  %4932 = vmatprep.subr.mxu0 %v3981
  %4933 = vmatpush1.msra.mxu0 %v3980
  %4934 = vmatprep.subr.mxu0 %v3977
  %4935 = vmatpush1.msra.mxu0 %v3976
  %4936 = vmatprep.subr.mxu0 %v3973
  %4937 = vmatpush1.msra.mxu0 %v3972
  %4938 = vmatprep.subr.mxu0 %v3969
  %4939 = vmatpush1.msra.mxu0 %v3968
  %4940 = vmatprep.subr.mxu0 0.0
  %4941 = vmatpush2.msra.mxu0 0.0
  %4942 = vmatprep.subr.mxu0 0.0
  %4943 = vmatpush2.msra.mxu0 0.0
  %4944 = vmatprep.subr.mxu0 0.0
  %4945 = vmatpush2.msra.mxu0 0.0
  %4946 = vmatprep.subr.mxu0 0.0
  %4947 = vmatpush2.msra.mxu0 0.0
  %4948 = vmatprep.subr.mxu0 0.0
  %4949 = vmatpush2.msra.mxu0 0.0
  %4950 = vmatprep.subr.mxu0 0.0
  %4951 = vmatpush2.msra.mxu0 0.0
  %4952 = vmatprep.subr.mxu0 0.0
  %4953 = vmatpush2.msra.mxu0 0.0
  %4954 = vmatprep.subr.mxu0 0.0
  %4955 = vmatpush2.msra.mxu0 0.0
  %4956 = vmatprep.subr.mxu0 0.0
  %4957 = vmatpush2.msra.mxu0 0.0
  %4958 = vmatprep.subr.mxu0 0.0
  %4959 = vmatpush2.msra.mxu0 0.0
  %4960 = vmatprep.subr.mxu0 0.0
  %4961 = vmatpush2.msra.mxu0 0.0
  %4962 = vmatprep.subr.mxu0 0.0
  %4963 = vmatpush2.msra.mxu0 0.0
  %4964 = vmatprep.subr.mxu0 0.0
  %4965 = vmatpush2.msra.mxu0 0.0
  %4966 = vmatprep.subr.mxu0 0.0
  %4967 = vmatpush2.msra.mxu0 0.0
  %4968 = vmatprep.subr.mxu0 0.0
  %4969 = vmatpush2.msra.mxu0 0.0
  %4970 = vmatprep.subr.mxu0 0.0
  %4971 = vmatpush2.msra.mxu0 0.0
  %4972 = vmatprep.mubr.f32.mxu0 0.0
  %4973 = vmatmul.mubr.f32.gmra.mxu0 %v4907
  %v4974 = vpop.f32.mrf.mxu0
  %v4975 = vadd.f32 0.0, %v4974
  %v4976 = vpop.f32.mrf.mxu0
  %v4977 = vadd.f32 0.0, %v4976
  %4978 = vdwg.mxu0
  %4979 = vmatprep.subr.mxu0 %v4031
  %4980 = vmatpush1.msra.mxu0 %v4030
  %4981 = vmatprep.subr.mxu0 %v4027
  %4982 = vmatpush1.msra.mxu0 %v4026
  %4983 = vmatprep.subr.mxu0 %v4023
  %4984 = vmatpush1.msra.mxu0 %v4022
  %4985 = vmatprep.subr.mxu0 %v4019
  %4986 = vmatpush1.msra.mxu0 %v4018
  %4987 = vmatprep.subr.mxu0 %v4015
  %4988 = vmatpush1.msra.mxu0 %v4014
  %4989 = vmatprep.subr.mxu0 %v4011
  %4990 = vmatpush1.msra.mxu0 %v4010
  %4991 = vmatprep.subr.mxu0 %v4007
  %4992 = vmatpush1.msra.mxu0 %v4006
  %4993 = vmatprep.subr.mxu0 %v4003
  %4994 = vmatpush1.msra.mxu0 %v4002
  %4995 = vmatprep.subr.mxu0 %v3999
  %4996 = vmatpush1.msra.mxu0 %v3998
  %4997 = vmatprep.subr.mxu0 %v3995
  %4998 = vmatpush1.msra.mxu0 %v3994
  %4999 = vmatprep.subr.mxu0 %v3991
  %5000 = vmatpush1.msra.mxu0 %v3990
  %5001 = vmatprep.subr.mxu0 %v3987
  %5002 = vmatpush1.msra.mxu0 %v3986
  %5003 = vmatprep.subr.mxu0 %v3983
  %5004 = vmatpush1.msra.mxu0 %v3982
  %5005 = vmatprep.subr.mxu0 %v3979
  %5006 = vmatpush1.msra.mxu0 %v3978
  %5007 = vmatprep.subr.mxu0 %v3975
  %5008 = vmatpush1.msra.mxu0 %v3974
  %5009 = vmatprep.subr.mxu0 %v3971
  %5010 = vmatpush1.msra.mxu0 %v3970
  %5011 = vmatprep.subr.mxu0 0.0
  %5012 = vmatpush2.msra.mxu0 0.0
  %5013 = vmatprep.subr.mxu0 0.0
  %5014 = vmatpush2.msra.mxu0 0.0
  %5015 = vmatprep.subr.mxu0 0.0
  %5016 = vmatpush2.msra.mxu0 0.0
  %5017 = vmatprep.subr.mxu0 0.0
  %5018 = vmatpush2.msra.mxu0 0.0
  %5019 = vmatprep.subr.mxu0 0.0
  %5020 = vmatpush2.msra.mxu0 0.0
  %5021 = vmatprep.subr.mxu0 0.0
  %5022 = vmatpush2.msra.mxu0 0.0
  %5023 = vmatprep.subr.mxu0 0.0
  %5024 = vmatpush2.msra.mxu0 0.0
  %5025 = vmatprep.subr.mxu0 0.0
  %5026 = vmatpush2.msra.mxu0 0.0
  %5027 = vmatprep.subr.mxu0 0.0
  %5028 = vmatpush2.msra.mxu0 0.0
  %5029 = vmatprep.subr.mxu0 0.0
  %5030 = vmatpush2.msra.mxu0 0.0
  %5031 = vmatprep.subr.mxu0 0.0
  %5032 = vmatpush2.msra.mxu0 0.0
  %5033 = vmatprep.subr.mxu0 0.0
  %5034 = vmatpush2.msra.mxu0 0.0
  %5035 = vmatprep.subr.mxu0 0.0
  %5036 = vmatpush2.msra.mxu0 0.0
  %5037 = vmatprep.subr.mxu0 0.0
  %5038 = vmatpush2.msra.mxu0 0.0
  %5039 = vmatprep.subr.mxu0 0.0
  %5040 = vmatpush2.msra.mxu0 0.0
  %5041 = vmatprep.subr.mxu0 0.0
  %5042 = vmatpush2.msra.mxu0 0.0
  %5043 = vmatprep.mubr.f32.mxu0 0.0
  %5044 = vmatmul.mubr.f32.gmra.mxu0 %v4907
  %v5045 = vpop.f32.mrf.mxu0
  %v5046 = vadd.f32 0.0, %v5045
  %v5047 = vpop.f32.mrf.mxu0
  %v5048 = vadd.f32 0.0, %v5047
  %5049 = vdwg.mxu0
  %v5050 = vadd.f32 %v3890, %v4975
  %v5051 = vadd.f32 %v3892, %v4977
  %v5052 = vadd.f32 %v3961, %v5046
  %v5053 = vadd.f32 %v3963, %v5048
  %v5054 = vxor.u32 %v5050, 2147483648
  %v5055 = vmul.f32 %v5054, 1.442695
  %v5056 = vpow.pop %v5055
  %v5057 = vadd.f32 %v5056, 1.0
  %v5058 = vrcp.pop %v5057
  %v5059 = vmul.f32 1.0, %v5058
  %v5060 = vxor.u32 %v5051, 2147483648
  %v5061 = vmul.f32 %v5060, 1.442695
  %v5062 = vpow.pop %v5061
  %v5063 = vadd.f32 %v5062, 1.0
  %v5064 = vrcp.pop %v5063
  %v5065 = vmul.f32 1.0, %v5064
  %v5066 = vtanh.pop %v5052
  %v5067 = vxor.u32 %v5053, 2147483648
  %v5068 = vmul.f32 %v5067, 1.442695
  %v5069 = vpow.pop %v5068
  %v5070 = vadd.f32 %v5069, 1.0
  %v5071 = vrcp.pop %v5070
  %v5072 = vmul.f32 1.0, %v5071
  %v5073 = vld [vmem:[#allocation3] sm:$0xff]
  %v5074 = vmul.f32 %v5065, %v5073
  %v5075 = vmul.f32 %v5059, %v5066
  %v5076 = vadd.f32 %v5074, %v5075
  %v5077 = vtanh.pop %v5076
  %v5078 = vmul.f32 %v5072, %v5077
  %5079 = vst [vmem:[#allocation3] sm:$0xff] %v5076
  %5080 = vst [vmem:[#allocation2] sm:$0xff] %v5078
  %5081 = vst [vmem:[%s1517] sm:$0xff] %v5078
  %v5082 = vld [vmem:[#allocation2] sm:$0xff]
  %5083 = vmatprep.subr.mxu0 %v4029
  %5084 = vmatpush1.msra.mxu0 %v4028
  %5085 = vmatprep.subr.mxu0 %v4025
  %5086 = vmatpush1.msra.mxu0 %v4024
  %5087 = vmatprep.subr.mxu0 %v4021
  %5088 = vmatpush1.msra.mxu0 %v4020
  %5089 = vmatprep.subr.mxu0 %v4017
  %5090 = vmatpush1.msra.mxu0 %v4016
  %5091 = vmatprep.subr.mxu0 %v4013
  %5092 = vmatpush1.msra.mxu0 %v4012
  %5093 = vmatprep.subr.mxu0 %v4009
  %5094 = vmatpush1.msra.mxu0 %v4008
  %5095 = vmatprep.subr.mxu0 %v4005
  %5096 = vmatpush1.msra.mxu0 %v4004
  %5097 = vmatprep.subr.mxu0 %v4001
  %5098 = vmatpush1.msra.mxu0 %v4000
  %5099 = vmatprep.subr.mxu0 %v3997
  %5100 = vmatpush1.msra.mxu0 %v3996
  %5101 = vmatprep.subr.mxu0 %v3993
  %5102 = vmatpush1.msra.mxu0 %v3992
  %5103 = vmatprep.subr.mxu0 %v3989
  %5104 = vmatpush1.msra.mxu0 %v3988
  %5105 = vmatprep.subr.mxu0 %v3985
  %5106 = vmatpush1.msra.mxu0 %v3984
  %5107 = vmatprep.subr.mxu0 %v3981
  %5108 = vmatpush1.msra.mxu0 %v3980
  %5109 = vmatprep.subr.mxu0 %v3977
  %5110 = vmatpush1.msra.mxu0 %v3976
  %5111 = vmatprep.subr.mxu0 %v3973
  %5112 = vmatpush1.msra.mxu0 %v3972
  %5113 = vmatprep.subr.mxu0 %v3969
  %5114 = vmatpush1.msra.mxu0 %v3968
  %5115 = vmatprep.subr.mxu0 0.0
  %5116 = vmatpush2.msra.mxu0 0.0
  %5117 = vmatprep.subr.mxu0 0.0
  %5118 = vmatpush2.msra.mxu0 0.0
  %5119 = vmatprep.subr.mxu0 0.0
  %5120 = vmatpush2.msra.mxu0 0.0
  %5121 = vmatprep.subr.mxu0 0.0
  %5122 = vmatpush2.msra.mxu0 0.0
  %5123 = vmatprep.subr.mxu0 0.0
  %5124 = vmatpush2.msra.mxu0 0.0
  %5125 = vmatprep.subr.mxu0 0.0
  %5126 = vmatpush2.msra.mxu0 0.0
  %5127 = vmatprep.subr.mxu0 0.0
  %5128 = vmatpush2.msra.mxu0 0.0
  %5129 = vmatprep.subr.mxu0 0.0
  %5130 = vmatpush2.msra.mxu0 0.0
  %5131 = vmatprep.subr.mxu0 0.0
  %5132 = vmatpush2.msra.mxu0 0.0
  %5133 = vmatprep.subr.mxu0 0.0
  %5134 = vmatpush2.msra.mxu0 0.0
  %5135 = vmatprep.subr.mxu0 0.0
  %5136 = vmatpush2.msra.mxu0 0.0
  %5137 = vmatprep.subr.mxu0 0.0
  %5138 = vmatpush2.msra.mxu0 0.0
  %5139 = vmatprep.subr.mxu0 0.0
  %5140 = vmatpush2.msra.mxu0 0.0
  %5141 = vmatprep.subr.mxu0 0.0
  %5142 = vmatpush2.msra.mxu0 0.0
  %5143 = vmatprep.subr.mxu0 0.0
  %5144 = vmatpush2.msra.mxu0 0.0
  %5145 = vmatprep.subr.mxu0 0.0
  %5146 = vmatpush2.msra.mxu0 0.0
  %5147 = vmatprep.mubr.f32.mxu0 0.0
  %5148 = vmatmul.mubr.f32.gmra.mxu0 %v5082
  %v5149 = vpop.f32.mrf.mxu0
  %v5150 = vadd.f32 0.0, %v5149
  %v5151 = vpop.f32.mrf.mxu0
  %v5152 = vadd.f32 0.0, %v5151
  %5153 = vdwg.mxu0
  %5154 = vmatprep.subr.mxu0 %v4031
  %5155 = vmatpush1.msra.mxu0 %v4030
  %5156 = vmatprep.subr.mxu0 %v4027
  %5157 = vmatpush1.msra.mxu0 %v4026
  %5158 = vmatprep.subr.mxu0 %v4023
  %5159 = vmatpush1.msra.mxu0 %v4022
  %5160 = vmatprep.subr.mxu0 %v4019
  %5161 = vmatpush1.msra.mxu0 %v4018
  %5162 = vmatprep.subr.mxu0 %v4015
  %5163 = vmatpush1.msra.mxu0 %v4014
  %5164 = vmatprep.subr.mxu0 %v4011
  %5165 = vmatpush1.msra.mxu0 %v4010
  %5166 = vmatprep.subr.mxu0 %v4007
  %5167 = vmatpush1.msra.mxu0 %v4006
  %5168 = vmatprep.subr.mxu0 %v4003
  %5169 = vmatpush1.msra.mxu0 %v4002
  %5170 = vmatprep.subr.mxu0 %v3999
  %5171 = vmatpush1.msra.mxu0 %v3998
  %5172 = vmatprep.subr.mxu0 %v3995
  %5173 = vmatpush1.msra.mxu0 %v3994
  %5174 = vmatprep.subr.mxu0 %v3991
  %5175 = vmatpush1.msra.mxu0 %v3990
  %5176 = vmatprep.subr.mxu0 %v3987
  %5177 = vmatpush1.msra.mxu0 %v3986
  %5178 = vmatprep.subr.mxu0 %v3983
  %5179 = vmatpush1.msra.mxu0 %v3982
  %5180 = vmatprep.subr.mxu0 %v3979
  %5181 = vmatpush1.msra.mxu0 %v3978
  %5182 = vmatprep.subr.mxu0 %v3975
  %5183 = vmatpush1.msra.mxu0 %v3974
  %5184 = vmatprep.subr.mxu0 %v3971
  %5185 = vmatpush1.msra.mxu0 %v3970
  %5186 = vmatprep.subr.mxu0 0.0
  %5187 = vmatpush2.msra.mxu0 0.0
  %5188 = vmatprep.subr.mxu0 0.0
  %5189 = vmatpush2.msra.mxu0 0.0
  %5190 = vmatprep.subr.mxu0 0.0
  %5191 = vmatpush2.msra.mxu0 0.0
  %5192 = vmatprep.subr.mxu0 0.0
  %5193 = vmatpush2.msra.mxu0 0.0
  %5194 = vmatprep.subr.mxu0 0.0
  %5195 = vmatpush2.msra.mxu0 0.0
  %5196 = vmatprep.subr.mxu0 0.0
  %5197 = vmatpush2.msra.mxu0 0.0
  %5198 = vmatprep.subr.mxu0 0.0
  %5199 = vmatpush2.msra.mxu0 0.0
  %5200 = vmatprep.subr.mxu0 0.0
  %5201 = vmatpush2.msra.mxu0 0.0
  %5202 = vmatprep.subr.mxu0 0.0
  %5203 = vmatpush2.msra.mxu0 0.0
  %5204 = vmatprep.subr.mxu0 0.0
  %5205 = vmatpush2.msra.mxu0 0.0
  %5206 = vmatprep.subr.mxu0 0.0
  %5207 = vmatpush2.msra.mxu0 0.0
  %5208 = vmatprep.subr.mxu0 0.0
  %5209 = vmatpush2.msra.mxu0 0.0
  %5210 = vmatprep.subr.mxu0 0.0
  %5211 = vmatpush2.msra.mxu0 0.0
  %5212 = vmatprep.subr.mxu0 0.0
  %5213 = vmatpush2.msra.mxu0 0.0
  %5214 = vmatprep.subr.mxu0 0.0
  %5215 = vmatpush2.msra.mxu0 0.0
  %5216 = vmatprep.subr.mxu0 0.0
  %5217 = vmatpush2.msra.mxu0 0.0
  %5218 = vmatprep.mubr.f32.mxu0 0.0
  %5219 = vmatmul.mubr.f32.gmra.mxu0 %v5082
  %v5220 = vpop.f32.mrf.mxu0
  %v5221 = vadd.f32 0.0, %v5220
  %v5222 = vpop.f32.mrf.mxu0
  %v5223 = vadd.f32 0.0, %v5222
  %5224 = vdwg.mxu0
  %v5225 = vadd.f32 %v3890, %v5150
  %v5226 = vadd.f32 %v3892, %v5152
  %v5227 = vadd.f32 %v3961, %v5221
  %v5228 = vadd.f32 %v3963, %v5223
  %v5229 = vxor.u32 %v5225, 2147483648
  %v5230 = vmul.f32 %v5229, 1.442695
  %v5231 = vpow.pop %v5230
  %v5232 = vadd.f32 %v5231, 1.0
  %v5233 = vrcp.pop %v5232
  %v5234 = vmul.f32 1.0, %v5233
  %v5235 = vxor.u32 %v5226, 2147483648
  %v5236 = vmul.f32 %v5235, 1.442695
  %v5237 = vpow.pop %v5236
  %v5238 = vadd.f32 %v5237, 1.0
  %v5239 = vrcp.pop %v5238
  %v5240 = vmul.f32 1.0, %v5239
  %v5241 = vtanh.pop %v5227
  %v5242 = vxor.u32 %v5228, 2147483648
  %v5243 = vmul.f32 %v5242, 1.442695
  %v5244 = vpow.pop %v5243
  %v5245 = vadd.f32 %v5244, 1.0
  %v5246 = vrcp.pop %v5245
  %v5247 = vmul.f32 1.0, %v5246
  %v5248 = vld [vmem:[#allocation3] sm:$0xff]
  %v5249 = vmul.f32 %v5240, %v5248
  %v5250 = vmul.f32 %v5234, %v5241
  %v5251 = vadd.f32 %v5249, %v5250
  %v5252 = vtanh.pop %v5251
  %v5253 = vmul.f32 %v5247, %v5252
  %5254 = vst [vmem:[#allocation3] sm:$0xff] %v5251
  %5255 = vst [vmem:[#allocation2] sm:$0xff] %v5253
  %5256 = vst [vmem:[%s1698] sm:$0xff] %v5253
  %v5257 = vld [vmem:[#allocation2] sm:$0xff]
  %5258 = vmatprep.subr.mxu0 %v4029
  %5259 = vmatpush1.msra.mxu0 %v4028
  %5260 = vmatprep.subr.mxu0 %v4025
  %5261 = vmatpush1.msra.mxu0 %v4024
  %5262 = vmatprep.subr.mxu0 %v4021
  %5263 = vmatpush1.msra.mxu0 %v4020
  %5264 = vmatprep.subr.mxu0 %v4017
  %5265 = vmatpush1.msra.mxu0 %v4016
  %5266 = vmatprep.subr.mxu0 %v4013
  %5267 = vmatpush1.msra.mxu0 %v4012
  %5268 = vmatprep.subr.mxu0 %v4009
  %5269 = vmatpush1.msra.mxu0 %v4008
  %5270 = vmatprep.subr.mxu0 %v4005
  %5271 = vmatpush1.msra.mxu0 %v4004
  %5272 = vmatprep.subr.mxu0 %v4001
  %5273 = vmatpush1.msra.mxu0 %v4000
  %5274 = vmatprep.subr.mxu0 %v3997
  %5275 = vmatpush1.msra.mxu0 %v3996
  %5276 = vmatprep.subr.mxu0 %v3993
  %5277 = vmatpush1.msra.mxu0 %v3992
  %5278 = vmatprep.subr.mxu0 %v3989
  %5279 = vmatpush1.msra.mxu0 %v3988
  %5280 = vmatprep.subr.mxu0 %v3985
  %5281 = vmatpush1.msra.mxu0 %v3984
  %5282 = vmatprep.subr.mxu0 %v3981
  %5283 = vmatpush1.msra.mxu0 %v3980
  %5284 = vmatprep.subr.mxu0 %v3977
  %5285 = vmatpush1.msra.mxu0 %v3976
  %5286 = vmatprep.subr.mxu0 %v3973
  %5287 = vmatpush1.msra.mxu0 %v3972
  %5288 = vmatprep.subr.mxu0 %v3969
  %5289 = vmatpush1.msra.mxu0 %v3968
  %5290 = vmatprep.subr.mxu0 0.0
  %5291 = vmatpush2.msra.mxu0 0.0
  %5292 = vmatprep.subr.mxu0 0.0
  %5293 = vmatpush2.msra.mxu0 0.0
  %5294 = vmatprep.subr.mxu0 0.0
  %5295 = vmatpush2.msra.mxu0 0.0
  %5296 = vmatprep.subr.mxu0 0.0
  %5297 = vmatpush2.msra.mxu0 0.0
  %5298 = vmatprep.subr.mxu0 0.0
  %5299 = vmatpush2.msra.mxu0 0.0
  %5300 = vmatprep.subr.mxu0 0.0
  %5301 = vmatpush2.msra.mxu0 0.0
  %5302 = vmatprep.subr.mxu0 0.0
  %5303 = vmatpush2.msra.mxu0 0.0
  %5304 = vmatprep.subr.mxu0 0.0
  %5305 = vmatpush2.msra.mxu0 0.0
  %5306 = vmatprep.subr.mxu0 0.0
  %5307 = vmatpush2.msra.mxu0 0.0
  %5308 = vmatprep.subr.mxu0 0.0
  %5309 = vmatpush2.msra.mxu0 0.0
  %5310 = vmatprep.subr.mxu0 0.0
  %5311 = vmatpush2.msra.mxu0 0.0
  %5312 = vmatprep.subr.mxu0 0.0
  %5313 = vmatpush2.msra.mxu0 0.0
  %5314 = vmatprep.subr.mxu0 0.0
  %5315 = vmatpush2.msra.mxu0 0.0
  %5316 = vmatprep.subr.mxu0 0.0
  %5317 = vmatpush2.msra.mxu0 0.0
  %5318 = vmatprep.subr.mxu0 0.0
  %5319 = vmatpush2.msra.mxu0 0.0
  %5320 = vmatprep.subr.mxu0 0.0
  %5321 = vmatpush2.msra.mxu0 0.0
  %5322 = vmatprep.mubr.f32.mxu0 0.0
  %5323 = vmatmul.mubr.f32.gmra.mxu0 %v5257
  %v5324 = vpop.f32.mrf.mxu0
  %v5325 = vadd.f32 0.0, %v5324
  %v5326 = vpop.f32.mrf.mxu0
  %v5327 = vadd.f32 0.0, %v5326
  %5328 = vdwg.mxu0
  %5329 = vmatprep.subr.mxu0 %v4031
  %5330 = vmatpush1.msra.mxu0 %v4030
  %5331 = vmatprep.subr.mxu0 %v4027
  %5332 = vmatpush1.msra.mxu0 %v4026
  %5333 = vmatprep.subr.mxu0 %v4023
  %5334 = vmatpush1.msra.mxu0 %v4022
  %5335 = vmatprep.subr.mxu0 %v4019
  %5336 = vmatpush1.msra.mxu0 %v4018
  %5337 = vmatprep.subr.mxu0 %v4015
  %5338 = vmatpush1.msra.mxu0 %v4014
  %5339 = vmatprep.subr.mxu0 %v4011
  %5340 = vmatpush1.msra.mxu0 %v4010
  %5341 = vmatprep.subr.mxu0 %v4007
  %5342 = vmatpush1.msra.mxu0 %v4006
  %5343 = vmatprep.subr.mxu0 %v4003
  %5344 = vmatpush1.msra.mxu0 %v4002
  %5345 = vmatprep.subr.mxu0 %v3999
  %5346 = vmatpush1.msra.mxu0 %v3998
  %5347 = vmatprep.subr.mxu0 %v3995
  %5348 = vmatpush1.msra.mxu0 %v3994
  %5349 = vmatprep.subr.mxu0 %v3991
  %5350 = vmatpush1.msra.mxu0 %v3990
  %5351 = vmatprep.subr.mxu0 %v3987
  %5352 = vmatpush1.msra.mxu0 %v3986
  %5353 = vmatprep.subr.mxu0 %v3983
  %5354 = vmatpush1.msra.mxu0 %v3982
  %5355 = vmatprep.subr.mxu0 %v3979
  %5356 = vmatpush1.msra.mxu0 %v3978
  %5357 = vmatprep.subr.mxu0 %v3975
  %5358 = vmatpush1.msra.mxu0 %v3974
  %5359 = vmatprep.subr.mxu0 %v3971
  %5360 = vmatpush1.msra.mxu0 %v3970
  %5361 = vmatprep.subr.mxu0 0.0
  %5362 = vmatpush2.msra.mxu0 0.0
  %5363 = vmatprep.subr.mxu0 0.0
  %5364 = vmatpush2.msra.mxu0 0.0
  %5365 = vmatprep.subr.mxu0 0.0
  %5366 = vmatpush2.msra.mxu0 0.0
  %5367 = vmatprep.subr.mxu0 0.0
  %5368 = vmatpush2.msra.mxu0 0.0
  %5369 = vmatprep.subr.mxu0 0.0
  %5370 = vmatpush2.msra.mxu0 0.0
  %5371 = vmatprep.subr.mxu0 0.0
  %5372 = vmatpush2.msra.mxu0 0.0
  %5373 = vmatprep.subr.mxu0 0.0
  %5374 = vmatpush2.msra.mxu0 0.0
  %5375 = vmatprep.subr.mxu0 0.0
  %5376 = vmatpush2.msra.mxu0 0.0
  %5377 = vmatprep.subr.mxu0 0.0
  %5378 = vmatpush2.msra.mxu0 0.0
  %5379 = vmatprep.subr.mxu0 0.0
  %5380 = vmatpush2.msra.mxu0 0.0
  %5381 = vmatprep.subr.mxu0 0.0
  %5382 = vmatpush2.msra.mxu0 0.0
  %5383 = vmatprep.subr.mxu0 0.0
  %5384 = vmatpush2.msra.mxu0 0.0
  %5385 = vmatprep.subr.mxu0 0.0
  %5386 = vmatpush2.msra.mxu0 0.0
  %5387 = vmatprep.subr.mxu0 0.0
  %5388 = vmatpush2.msra.mxu0 0.0
  %5389 = vmatprep.subr.mxu0 0.0
  %5390 = vmatpush2.msra.mxu0 0.0
  %5391 = vmatprep.subr.mxu0 0.0
  %5392 = vmatpush2.msra.mxu0 0.0
  %5393 = vmatprep.mubr.f32.mxu0 0.0
  %5394 = vmatmul.mubr.f32.gmra.mxu0 %v5257
  %v5395 = vpop.f32.mrf.mxu0
  %v5396 = vadd.f32 0.0, %v5395
  %v5397 = vpop.f32.mrf.mxu0
  %v5398 = vadd.f32 0.0, %v5397
  %5399 = vdwg.mxu0
  %v5400 = vadd.f32 %v3890, %v5325
  %v5401 = vadd.f32 %v3892, %v5327
  %v5402 = vadd.f32 %v3961, %v5396
  %v5403 = vadd.f32 %v3963, %v5398
  %v5404 = vxor.u32 %v5400, 2147483648
  %v5405 = vmul.f32 %v5404, 1.442695
  %v5406 = vpow.pop %v5405
  %v5407 = vadd.f32 %v5406, 1.0
  %v5408 = vrcp.pop %v5407
  %v5409 = vmul.f32 1.0, %v5408
  %v5410 = vxor.u32 %v5401, 2147483648
  %v5411 = vmul.f32 %v5410, 1.442695
  %v5412 = vpow.pop %v5411
  %v5413 = vadd.f32 %v5412, 1.0
  %v5414 = vrcp.pop %v5413
  %v5415 = vmul.f32 1.0, %v5414
  %v5416 = vtanh.pop %v5402
  %v5417 = vxor.u32 %v5403, 2147483648
  %v5418 = vmul.f32 %v5417, 1.442695
  %v5419 = vpow.pop %v5418
  %v5420 = vadd.f32 %v5419, 1.0
  %v5421 = vrcp.pop %v5420
  %v5422 = vmul.f32 1.0, %v5421
  %v5423 = vld [vmem:[#allocation3] sm:$0xff]
  %v5424 = vmul.f32 %v5415, %v5423
  %v5425 = vmul.f32 %v5409, %v5416
  %v5426 = vadd.f32 %v5424, %v5425
  %v5427 = vtanh.pop %v5426
  %v5428 = vmul.f32 %v5422, %v5427
  %5429 = vst [vmem:[#allocation3] sm:$0xff] %v5426
  %5430 = vst [vmem:[#allocation2] sm:$0xff] %v5428
  %5431 = vst [vmem:[%s1879] sm:$0xff] %v5428
  %v5432 = vld [vmem:[#allocation4] sm:$0xff]
  %v5433 = vld [vmem:[#allocation4 + $0x8] sm:$0xff]
  %v5434 = vld [vmem:[#allocation4 + $0x10] sm:$0xff]
  %v5435 = vld [vmem:[#allocation4 + $0x18] sm:$0xff]
  %v5436 = vld [vmem:[#allocation4 + $0x20] sm:$0xff]
  %v5437 = vld [vmem:[#allocation4 + $0x28] sm:$0xff]
  %v5438 = vld [vmem:[#allocation4 + $0x30] sm:$0xff]
  %v5439 = vld [vmem:[#allocation4 + $0x38] sm:$0xff]
  %s5440 = scalar_lea.vmem %s1, 1536
  %v5441 = vld [vmem:[%s5440] sm:$0xff]
  %v5442 = vld [vmem:[%s5440 + $0x8] sm:$0xff]
  %v5443 = vld [vmem:[%s5440 + $0x10] sm:$0xff]
  %v5444 = vld [vmem:[%s5440 + $0x18] sm:$0xff]
  %v5445 = vld [vmem:[%s5440 + $0x20] sm:$0xff]
  %v5446 = vld [vmem:[%s5440 + $0x28] sm:$0xff]
  %v5447 = vld [vmem:[%s5440 + $0x30] sm:$0xff]
  %v5448 = vld [vmem:[%s5440 + $0x38] sm:$0xff]
  %v5449 = vld [vmem:[%s5440 + $0x40] sm:$0xff]
  %v5450 = vld [vmem:[%s5440 + $0x48] sm:$0xff]
  %v5451 = vld [vmem:[%s5440 + $0x50] sm:$0xff]
  %v5452 = vld [vmem:[%s5440 + $0x58] sm:$0xff]
  %v5453 = vld [vmem:[%s5440 + $0x60] sm:$0xff]
  %v5454 = vld [vmem:[%s5440 + $0x68] sm:$0xff]
  %v5455 = vld [vmem:[%s5440 + $0x70] sm:$0xff]
  %v5456 = vld [vmem:[%s5440 + $0x78] sm:$0xff]
  %v5457 = vld [vmem:[%s5440 + $0x80] sm:$0xff]
  %v5458 = vld [vmem:[%s5440 + $0x88] sm:$0xff]
  %v5459 = vld [vmem:[%s5440 + $0x90] sm:$0xff]
  %v5460 = vld [vmem:[%s5440 + $0x98] sm:$0xff]
  %v5461 = vld [vmem:[%s5440 + $0xa0] sm:$0xff]
  %v5462 = vld [vmem:[%s5440 + $0xa8] sm:$0xff]
  %v5463 = vld [vmem:[%s5440 + $0xb0] sm:$0xff]
  %v5464 = vld [vmem:[%s5440 + $0xb8] sm:$0xff]
  %v5465 = vld [vmem:[%s5440 + $0xc0] sm:$0xff]
  %v5466 = vld [vmem:[%s5440 + $0xc8] sm:$0xff]
  %v5467 = vld [vmem:[%s5440 + $0xd0] sm:$0xff]
  %v5468 = vld [vmem:[%s5440 + $0xd8] sm:$0xff]
  %v5469 = vld [vmem:[%s5440 + $0xe0] sm:$0xff]
  %v5470 = vld [vmem:[%s5440 + $0xe8] sm:$0xff]
  %v5471 = vld [vmem:[%s5440 + $0xf0] sm:$0xff]
  %v5472 = vld [vmem:[%s5440 + $0xf8] sm:$0xff]
  %v5473 = vld [vmem:[%s5440 + $0x100] sm:$0xff]
  %v5474 = vld [vmem:[%s5440 + $0x108] sm:$0xff]
  %v5475 = vld [vmem:[%s5440 + $0x110] sm:$0xff]
  %v5476 = vld [vmem:[%s5440 + $0x118] sm:$0xff]
  %v5477 = vld [vmem:[%s5440 + $0x120] sm:$0xff]
  %v5478 = vld [vmem:[%s5440 + $0x128] sm:$0xff]
  %v5479 = vld [vmem:[%s5440 + $0x130] sm:$0xff]
  %v5480 = vld [vmem:[%s5440 + $0x138] sm:$0xff]
  %v5481 = vld [vmem:[%s5440 + $0x140] sm:$0xff]
  %v5482 = vld [vmem:[%s5440 + $0x148] sm:$0xff]
  %v5483 = vld [vmem:[%s5440 + $0x150] sm:$0xff]
  %v5484 = vld [vmem:[%s5440 + $0x158] sm:$0xff]
  %v5485 = vld [vmem:[%s5440 + $0x160] sm:$0xff]
  %v5486 = vld [vmem:[%s5440 + $0x168] sm:$0xff]
  %v5487 = vld [vmem:[%s5440 + $0x170] sm:$0xff]
  %v5488 = vld [vmem:[%s5440 + $0x178] sm:$0xff]
  %v5489 = vld [vmem:[%s5440 + $0x180] sm:$0xff]
  %v5490 = vld [vmem:[%s5440 + $0x188] sm:$0xff]
  %v5491 = vld [vmem:[%s5440 + $0x190] sm:$0xff]
  %v5492 = vld [vmem:[%s5440 + $0x198] sm:$0xff]
  %v5493 = vld [vmem:[%s5440 + $0x1a0] sm:$0xff]
  %v5494 = vld [vmem:[%s5440 + $0x1a8] sm:$0xff]
  %v5495 = vld [vmem:[%s5440 + $0x1b0] sm:$0xff]
  %v5496 = vld [vmem:[%s5440 + $0x1b8] sm:$0xff]
  %v5497 = vld [vmem:[%s5440 + $0x1c0] sm:$0xff]
  %v5498 = vld [vmem:[%s5440 + $0x1c8] sm:$0xff]
  %v5499 = vld [vmem:[%s5440 + $0x1d0] sm:$0xff]
  %v5500 = vld [vmem:[%s5440 + $0x1d8] sm:$0xff]
  %v5501 = vld [vmem:[%s5440 + $0x1e0] sm:$0xff]
  %v5502 = vld [vmem:[%s5440 + $0x1e8] sm:$0xff]
  %v5503 = vld [vmem:[%s5440 + $0x1f0] sm:$0xff]
  %v5504 = vld [vmem:[%s5440 + $0x1f8] sm:$0xff]
  %s5505 = scalar_lea.vmem %s3, 12
  %v5506 = vld [vmem:[%s5505] sm:$0xf]
  %v5508 = vlaneseq
  %v5509 = vshrl.u32 %v5508, 7
  %v5510 = vsub.s32 0, %v5509
  %v5511 = vrot.slane %v5506, %v5510
  %v5512 = vlaneseq
  %v5513 = vshrl.u32 %v5512, 7
  %v5514 = vsub.s32 1, %v5513
  %v5515 = vrot.slane %v5506, %v5514
  %v5516 = vlaneseq
  %v5517 = vshrl.u32 %v5516, 7
  %v5518 = vsub.s32 2, %v5517
  %v5519 = vrot.slane %v5506, %v5518
  %v5520 = vlaneseq
  %v5521 = vshrl.u32 %v5520, 7
  %v5522 = vsub.s32 3, %v5521
  %v5523 = vrot.slane %v5506, %v5522
  %5528 = vmatprep.subr.mxu0 %v5502
  %5529 = vmatpush1.msra.mxu0 %v5501
  %5530 = vmatprep.subr.mxu0 %v5498
  %5531 = vmatpush1.msra.mxu0 %v5497
  %5532 = vmatprep.subr.mxu0 %v5494
  %5533 = vmatpush1.msra.mxu0 %v5493
  %5534 = vmatprep.subr.mxu0 %v5490
  %5535 = vmatpush1.msra.mxu0 %v5489
  %5536 = vmatprep.subr.mxu0 %v5486
  %5537 = vmatpush1.msra.mxu0 %v5485
  %5538 = vmatprep.subr.mxu0 %v5482
  %5539 = vmatpush1.msra.mxu0 %v5481
  %5540 = vmatprep.subr.mxu0 %v5478
  %5541 = vmatpush1.msra.mxu0 %v5477
  %5542 = vmatprep.subr.mxu0 %v5474
  %5543 = vmatpush1.msra.mxu0 %v5473
  %5544 = vmatprep.subr.mxu0 %v5470
  %5545 = vmatpush1.msra.mxu0 %v5469
  %5546 = vmatprep.subr.mxu0 %v5466
  %5547 = vmatpush1.msra.mxu0 %v5465
  %5548 = vmatprep.subr.mxu0 %v5462
  %5549 = vmatpush1.msra.mxu0 %v5461
  %5550 = vmatprep.subr.mxu0 %v5458
  %5551 = vmatpush1.msra.mxu0 %v5457
  %5552 = vmatprep.subr.mxu0 %v5454
  %5553 = vmatpush1.msra.mxu0 %v5453
  %5554 = vmatprep.subr.mxu0 %v5450
  %5555 = vmatpush1.msra.mxu0 %v5449
  %5556 = vmatprep.subr.mxu0 %v5446
  %5557 = vmatpush1.msra.mxu0 %v5445
  %5558 = vmatprep.subr.mxu0 %v5442
  %5559 = vmatpush1.msra.mxu0 %v5441
  %5560 = vmatprep.subr.mxu0 0.0
  %5561 = vmatpush2.msra.mxu0 0.0
  %5562 = vmatprep.subr.mxu0 0.0
  %5563 = vmatpush2.msra.mxu0 0.0
  %5564 = vmatprep.subr.mxu0 0.0
  %5565 = vmatpush2.msra.mxu0 0.0
  %5566 = vmatprep.subr.mxu0 0.0
  %5567 = vmatpush2.msra.mxu0 0.0
  %5568 = vmatprep.subr.mxu0 0.0
  %5569 = vmatpush2.msra.mxu0 0.0
  %5570 = vmatprep.subr.mxu0 0.0
  %5571 = vmatpush2.msra.mxu0 0.0
  %5572 = vmatprep.subr.mxu0 0.0
  %5573 = vmatpush2.msra.mxu0 0.0
  %5574 = vmatprep.subr.mxu0 0.0
  %5575 = vmatpush2.msra.mxu0 0.0
  %5576 = vmatprep.subr.mxu0 0.0
  %5577 = vmatpush2.msra.mxu0 0.0
  %5578 = vmatprep.subr.mxu0 0.0
  %5579 = vmatpush2.msra.mxu0 0.0
  %5580 = vmatprep.subr.mxu0 0.0
  %5581 = vmatpush2.msra.mxu0 0.0
  %5582 = vmatprep.subr.mxu0 0.0
  %5583 = vmatpush2.msra.mxu0 0.0
  %5584 = vmatprep.subr.mxu0 0.0
  %5585 = vmatpush2.msra.mxu0 0.0
  %5586 = vmatprep.subr.mxu0 0.0
  %5587 = vmatpush2.msra.mxu0 0.0
  %5588 = vmatprep.subr.mxu0 0.0
  %5589 = vmatpush2.msra.mxu0 0.0
  %5590 = vmatprep.subr.mxu0 0.0
  %5591 = vmatpush2.msra.mxu0 0.0
  %5592 = vmatprep.mubr.f32.mxu0 0.0
  %5593 = vmatmul.mubr.f32.gmra.mxu0 %v5432
  %v5594 = vpop.f32.mrf.mxu0
  %v5595 = vadd.f32 %v5511, %v5594
  %v5596 = vpop.f32.mrf.mxu0
  %v5597 = vadd.f32 %v5515, %v5596
  %5598 = vmatprep.mubr.f32.mxu0 0.0
  %5599 = vmatmul.mubr.f32.gmra.mxu0 %v5433
  %v5600 = vpop.f32.mrf.mxu0
  %v5601 = vadd.f32 %v5511, %v5600
  %v5602 = vpop.f32.mrf.mxu0
  %v5603 = vadd.f32 %v5515, %v5602
  %5604 = vmatprep.mubr.f32.mxu0 0.0
  %5605 = vmatmul.mubr.f32.gmra.mxu0 %v5434
  %v5606 = vpop.f32.mrf.mxu0
  %v5607 = vadd.f32 %v5511, %v5606
  %v5608 = vpop.f32.mrf.mxu0
  %v5609 = vadd.f32 %v5515, %v5608
  %5610 = vmatprep.mubr.f32.mxu0 0.0
  %5611 = vmatmul.mubr.f32.gmra.mxu0 %v5435
  %v5612 = vpop.f32.mrf.mxu0
  %v5613 = vadd.f32 %v5511, %v5612
  %v5614 = vpop.f32.mrf.mxu0
  %v5615 = vadd.f32 %v5515, %v5614
  %5616 = vmatprep.mubr.f32.mxu0 0.0
  %5617 = vmatmul.mubr.f32.gmra.mxu0 %v5436
  %v5618 = vpop.f32.mrf.mxu0
  %v5619 = vadd.f32 %v5511, %v5618
  %v5620 = vpop.f32.mrf.mxu0
  %v5621 = vadd.f32 %v5515, %v5620
  %5622 = vmatprep.mubr.f32.mxu0 0.0
  %5623 = vmatmul.mubr.f32.gmra.mxu0 %v5437
  %v5624 = vpop.f32.mrf.mxu0
  %v5625 = vadd.f32 %v5511, %v5624
  %v5626 = vpop.f32.mrf.mxu0
  %v5627 = vadd.f32 %v5515, %v5626
  %5628 = vmatprep.mubr.f32.mxu0 0.0
  %5629 = vmatmul.mubr.f32.gmra.mxu0 %v5438
  %v5630 = vpop.f32.mrf.mxu0
  %v5631 = vadd.f32 %v5511, %v5630
  %v5632 = vpop.f32.mrf.mxu0
  %v5633 = vadd.f32 %v5515, %v5632
  %5634 = vmatprep.mubr.f32.mxu0 0.0
  %5635 = vmatmul.mubr.f32.gmra.mxu0 %v5439
  %v5636 = vpop.f32.mrf.mxu0
  %v5637 = vadd.f32 %v5511, %v5636
  %v5638 = vpop.f32.mrf.mxu0
  %v5639 = vadd.f32 %v5515, %v5638
  %5640 = vdwg.mxu0
  %5641 = vmatprep.subr.mxu0 %v5504
  %5642 = vmatpush1.msra.mxu0 %v5503
  %5643 = vmatprep.subr.mxu0 %v5500
  %5644 = vmatpush1.msra.mxu0 %v5499
  %5645 = vmatprep.subr.mxu0 %v5496
  %5646 = vmatpush1.msra.mxu0 %v5495
  %5647 = vmatprep.subr.mxu0 %v5492
  %5648 = vmatpush1.msra.mxu0 %v5491
  %5649 = vmatprep.subr.mxu0 %v5488
  %5650 = vmatpush1.msra.mxu0 %v5487
  %5651 = vmatprep.subr.mxu0 %v5484
  %5652 = vmatpush1.msra.mxu0 %v5483
  %5653 = vmatprep.subr.mxu0 %v5480
  %5654 = vmatpush1.msra.mxu0 %v5479
  %5655 = vmatprep.subr.mxu0 %v5476
  %5656 = vmatpush1.msra.mxu0 %v5475
  %5657 = vmatprep.subr.mxu0 %v5472
  %5658 = vmatpush1.msra.mxu0 %v5471
  %5659 = vmatprep.subr.mxu0 %v5468
  %5660 = vmatpush1.msra.mxu0 %v5467
  %5661 = vmatprep.subr.mxu0 %v5464
  %5662 = vmatpush1.msra.mxu0 %v5463
  %5663 = vmatprep.subr.mxu0 %v5460
  %5664 = vmatpush1.msra.mxu0 %v5459
  %5665 = vmatprep.subr.mxu0 %v5456
  %5666 = vmatpush1.msra.mxu0 %v5455
  %5667 = vmatprep.subr.mxu0 %v5452
  %5668 = vmatpush1.msra.mxu0 %v5451
  %5669 = vmatprep.subr.mxu0 %v5448
  %5670 = vmatpush1.msra.mxu0 %v5447
  %5671 = vmatprep.subr.mxu0 %v5444
  %5672 = vmatpush1.msra.mxu0 %v5443
  %5673 = vmatprep.subr.mxu0 0.0
  %5674 = vmatpush2.msra.mxu0 0.0
  %5675 = vmatprep.subr.mxu0 0.0
  %5676 = vmatpush2.msra.mxu0 0.0
  %5677 = vmatprep.subr.mxu0 0.0
  %5678 = vmatpush2.msra.mxu0 0.0
  %5679 = vmatprep.subr.mxu0 0.0
  %5680 = vmatpush2.msra.mxu0 0.0
  %5681 = vmatprep.subr.mxu0 0.0
  %5682 = vmatpush2.msra.mxu0 0.0
  %5683 = vmatprep.subr.mxu0 0.0
  %5684 = vmatpush2.msra.mxu0 0.0
  %5685 = vmatprep.subr.mxu0 0.0
  %5686 = vmatpush2.msra.mxu0 0.0
  %5687 = vmatprep.subr.mxu0 0.0
  %5688 = vmatpush2.msra.mxu0 0.0
  %5689 = vmatprep.subr.mxu0 0.0
  %5690 = vmatpush2.msra.mxu0 0.0
  %5691 = vmatprep.subr.mxu0 0.0
  %5692 = vmatpush2.msra.mxu0 0.0
  %5693 = vmatprep.subr.mxu0 0.0
  %5694 = vmatpush2.msra.mxu0 0.0
  %5695 = vmatprep.subr.mxu0 0.0
  %5696 = vmatpush2.msra.mxu0 0.0
  %5697 = vmatprep.subr.mxu0 0.0
  %5698 = vmatpush2.msra.mxu0 0.0
  %5699 = vmatprep.subr.mxu0 0.0
  %5700 = vmatpush2.msra.mxu0 0.0
  %5701 = vmatprep.subr.mxu0 0.0
  %5702 = vmatpush2.msra.mxu0 0.0
  %5703 = vmatprep.subr.mxu0 0.0
  %5704 = vmatpush2.msra.mxu0 0.0
  %5705 = vmatprep.mubr.f32.mxu0 0.0
  %5706 = vmatmul.mubr.f32.gmra.mxu0 %v5432
  %v5707 = vpop.f32.mrf.mxu0
  %v5708 = vadd.f32 %v5519, %v5707
  %v5709 = vpop.f32.mrf.mxu0
  %v5710 = vadd.f32 %v5523, %v5709
  %5711 = vmatprep.mubr.f32.mxu0 0.0
  %5712 = vmatmul.mubr.f32.gmra.mxu0 %v5433
  %v5713 = vpop.f32.mrf.mxu0
  %v5714 = vadd.f32 %v5519, %v5713
  %v5715 = vpop.f32.mrf.mxu0
  %v5716 = vadd.f32 %v5523, %v5715
  %5717 = vmatprep.mubr.f32.mxu0 0.0
  %5718 = vmatmul.mubr.f32.gmra.mxu0 %v5434
  %v5719 = vpop.f32.mrf.mxu0
  %v5720 = vadd.f32 %v5519, %v5719
  %v5721 = vpop.f32.mrf.mxu0
  %v5722 = vadd.f32 %v5523, %v5721
  %5723 = vmatprep.mubr.f32.mxu0 0.0
  %5724 = vmatmul.mubr.f32.gmra.mxu0 %v5435
  %v5725 = vpop.f32.mrf.mxu0
  %v5726 = vadd.f32 %v5519, %v5725
  %v5727 = vpop.f32.mrf.mxu0
  %v5728 = vadd.f32 %v5523, %v5727
  %5729 = vmatprep.mubr.f32.mxu0 0.0
  %5730 = vmatmul.mubr.f32.gmra.mxu0 %v5436
  %v5731 = vpop.f32.mrf.mxu0
  %v5732 = vadd.f32 %v5519, %v5731
  %v5733 = vpop.f32.mrf.mxu0
  %v5734 = vadd.f32 %v5523, %v5733
  %5735 = vmatprep.mubr.f32.mxu0 0.0
  %5736 = vmatmul.mubr.f32.gmra.mxu0 %v5437
  %v5737 = vpop.f32.mrf.mxu0
  %v5738 = vadd.f32 %v5519, %v5737
  %v5739 = vpop.f32.mrf.mxu0
  %v5740 = vadd.f32 %v5523, %v5739
  %5741 = vmatprep.mubr.f32.mxu0 0.0
  %5742 = vmatmul.mubr.f32.gmra.mxu0 %v5438
  %v5743 = vpop.f32.mrf.mxu0
  %v5744 = vadd.f32 %v5519, %v5743
  %v5745 = vpop.f32.mrf.mxu0
  %v5746 = vadd.f32 %v5523, %v5745
  %5747 = vmatprep.mubr.f32.mxu0 0.0
  %5748 = vmatmul.mubr.f32.gmra.mxu0 %v5439
  %v5749 = vpop.f32.mrf.mxu0
  %v5750 = vadd.f32 %v5519, %v5749
  %v5751 = vpop.f32.mrf.mxu0
  %v5752 = vadd.f32 %v5523, %v5751
  %5753 = vdwg.mxu0
  %5754 = vst [vmem:[#allocation5] sm:$0xff] %v5595
  %5755 = vst [vmem:[#allocation5 + $0x8] sm:$0xff] %v5597
  %5756 = vst [vmem:[#allocation5 + $0x10] sm:$0xff] %v5708
  %5757 = vst [vmem:[#allocation5 + $0x18] sm:$0xff] %v5710
  %5758 = vst [vmem:[#allocation5 + $0x20] sm:$0xff] %v5601
  %5759 = vst [vmem:[#allocation5 + $0x28] sm:$0xff] %v5603
  %5760 = vst [vmem:[#allocation5 + $0x30] sm:$0xff] %v5714
  %5761 = vst [vmem:[#allocation5 + $0x38] sm:$0xff] %v5716
  %5762 = vst [vmem:[#allocation5 + $0x40] sm:$0xff] %v5607
  %5763 = vst [vmem:[#allocation5 + $0x48] sm:$0xff] %v5609
  %5764 = vst [vmem:[#allocation5 + $0x50] sm:$0xff] %v5720
  %5765 = vst [vmem:[#allocation5 + $0x58] sm:$0xff] %v5722
  %5766 = vst [vmem:[#allocation5 + $0x60] sm:$0xff] %v5613
  %5767 = vst [vmem:[#allocation5 + $0x68] sm:$0xff] %v5615
  %5768 = vst [vmem:[#allocation5 + $0x70] sm:$0xff] %v5726
  %5769 = vst [vmem:[#allocation5 + $0x78] sm:$0xff] %v5728
  %5770 = vst [vmem:[#allocation5 + $0x80] sm:$0xff] %v5619
  %5771 = vst [vmem:[#allocation5 + $0x88] sm:$0xff] %v5621
  %5772 = vst [vmem:[#allocation5 + $0x90] sm:$0xff] %v5732
  %5773 = vst [vmem:[#allocation5 + $0x98] sm:$0xff] %v5734
  %5774 = vst [vmem:[#allocation5 + $0xa0] sm:$0xff] %v5625
  %5775 = vst [vmem:[#allocation5 + $0xa8] sm:$0xff] %v5627
  %5776 = vst [vmem:[#allocation5 + $0xb0] sm:$0xff] %v5738
  %5777 = vst [vmem:[#allocation5 + $0xb8] sm:$0xff] %v5740
  %5778 = vst [vmem:[#allocation5 + $0xc0] sm:$0xff] %v5631
  %5779 = vst [vmem:[#allocation5 + $0xc8] sm:$0xff] %v5633
  %5780 = vst [vmem:[#allocation5 + $0xd0] sm:$0xff] %v5744
  %5781 = vst [vmem:[#allocation5 + $0xd8] sm:$0xff] %v5746
  %5782 = vst [vmem:[#allocation5 + $0xe0] sm:$0xff] %v5637
  %5783 = vst [vmem:[#allocation5 + $0xe8] sm:$0xff] %v5639
  %5784 = vst [vmem:[#allocation5 + $0xf0] sm:$0xff] %v5750
  %5785 = vst [vmem:[#allocation5 + $0xf8] sm:$0xff] %v5752
  %5786 = vst [vmem:[#allocation2] sm:$0xff] 0.0
  %5787 = vst [vmem:[#allocation3] sm:$0xff] 0.0
  %s5788 = scalar_lea.vmem %s2, 1536
  %v5789 = vld [vmem:[%s5788] sm:$0xff]
  %v5790 = vld [vmem:[%s5788 + $0x8] sm:$0xff]
  %v5791 = vld [vmem:[%s5788 + $0x10] sm:$0xff]
  %v5792 = vld [vmem:[%s5788 + $0x18] sm:$0xff]
  %v5793 = vld [vmem:[%s5788 + $0x20] sm:$0xff]
  %v5794 = vld [vmem:[%s5788 + $0x28] sm:$0xff]
  %v5795 = vld [vmem:[%s5788 + $0x30] sm:$0xff]
  %v5796 = vld [vmem:[%s5788 + $0x38] sm:$0xff]
  %v5797 = vld [vmem:[%s5788 + $0x40] sm:$0xff]
  %v5798 = vld [vmem:[%s5788 + $0x48] sm:$0xff]
  %v5799 = vld [vmem:[%s5788 + $0x50] sm:$0xff]
  %v5800 = vld [vmem:[%s5788 + $0x58] sm:$0xff]
  %v5801 = vld [vmem:[%s5788 + $0x60] sm:$0xff]
  %v5802 = vld [vmem:[%s5788 + $0x68] sm:$0xff]
  %v5803 = vld [vmem:[%s5788 + $0x70] sm:$0xff]
  %v5804 = vld [vmem:[%s5788 + $0x78] sm:$0xff]
  %v5805 = vld [vmem:[%s5788 + $0x80] sm:$0xff]
  %v5806 = vld [vmem:[%s5788 + $0x88] sm:$0xff]
  %v5807 = vld [vmem:[%s5788 + $0x90] sm:$0xff]
  %v5808 = vld [vmem:[%s5788 + $0x98] sm:$0xff]
  %v5809 = vld [vmem:[%s5788 + $0xa0] sm:$0xff]
  %v5810 = vld [vmem:[%s5788 + $0xa8] sm:$0xff]
  %v5811 = vld [vmem:[%s5788 + $0xb0] sm:$0xff]
  %v5812 = vld [vmem:[%s5788 + $0xb8] sm:$0xff]
  %v5813 = vld [vmem:[%s5788 + $0xc0] sm:$0xff]
  %v5814 = vld [vmem:[%s5788 + $0xc8] sm:$0xff]
  %v5815 = vld [vmem:[%s5788 + $0xd0] sm:$0xff]
  %v5816 = vld [vmem:[%s5788 + $0xd8] sm:$0xff]
  %v5817 = vld [vmem:[%s5788 + $0xe0] sm:$0xff]
  %v5818 = vld [vmem:[%s5788 + $0xe8] sm:$0xff]
  %v5819 = vld [vmem:[%s5788 + $0xf0] sm:$0xff]
  %v5820 = vld [vmem:[%s5788 + $0xf8] sm:$0xff]
  %v5821 = vld [vmem:[%s5788 + $0x100] sm:$0xff]
  %v5822 = vld [vmem:[%s5788 + $0x108] sm:$0xff]
  %v5823 = vld [vmem:[%s5788 + $0x110] sm:$0xff]
  %v5824 = vld [vmem:[%s5788 + $0x118] sm:$0xff]
  %v5825 = vld [vmem:[%s5788 + $0x120] sm:$0xff]
  %v5826 = vld [vmem:[%s5788 + $0x128] sm:$0xff]
  %v5827 = vld [vmem:[%s5788 + $0x130] sm:$0xff]
  %v5828 = vld [vmem:[%s5788 + $0x138] sm:$0xff]
  %v5829 = vld [vmem:[%s5788 + $0x140] sm:$0xff]
  %v5830 = vld [vmem:[%s5788 + $0x148] sm:$0xff]
  %v5831 = vld [vmem:[%s5788 + $0x150] sm:$0xff]
  %v5832 = vld [vmem:[%s5788 + $0x158] sm:$0xff]
  %v5833 = vld [vmem:[%s5788 + $0x160] sm:$0xff]
  %v5834 = vld [vmem:[%s5788 + $0x168] sm:$0xff]
  %v5835 = vld [vmem:[%s5788 + $0x170] sm:$0xff]
  %v5836 = vld [vmem:[%s5788 + $0x178] sm:$0xff]
  %v5837 = vld [vmem:[%s5788 + $0x180] sm:$0xff]
  %v5838 = vld [vmem:[%s5788 + $0x188] sm:$0xff]
  %v5839 = vld [vmem:[%s5788 + $0x190] sm:$0xff]
  %v5840 = vld [vmem:[%s5788 + $0x198] sm:$0xff]
  %v5841 = vld [vmem:[%s5788 + $0x1a0] sm:$0xff]
  %v5842 = vld [vmem:[%s5788 + $0x1a8] sm:$0xff]
  %v5843 = vld [vmem:[%s5788 + $0x1b0] sm:$0xff]
  %v5844 = vld [vmem:[%s5788 + $0x1b8] sm:$0xff]
  %v5845 = vld [vmem:[%s5788 + $0x1c0] sm:$0xff]
  %v5846 = vld [vmem:[%s5788 + $0x1c8] sm:$0xff]
  %v5847 = vld [vmem:[%s5788 + $0x1d0] sm:$0xff]
  %v5848 = vld [vmem:[%s5788 + $0x1d8] sm:$0xff]
  %v5849 = vld [vmem:[%s5788 + $0x1e0] sm:$0xff]
  %v5850 = vld [vmem:[%s5788 + $0x1e8] sm:$0xff]
  %v5851 = vld [vmem:[%s5788 + $0x1f0] sm:$0xff]
  %v5852 = vld [vmem:[%s5788 + $0x1f8] sm:$0xff]
  %v5853 = vld [vmem:[#allocation5] sm:$0xff]
  %v5854 = vld [vmem:[#allocation5 + $0x8] sm:$0xff]
  %v5855 = vld [vmem:[#allocation5 + $0x10] sm:$0xff]
  %v5856 = vld [vmem:[#allocation5 + $0x18] sm:$0xff]
  %v5857 = vld [vmem:[#allocation2] sm:$0xff]
  %5858 = vmatprep.subr.mxu0 %v5850
  %5859 = vmatpush1.msra.mxu0 %v5849
  %5860 = vmatprep.subr.mxu0 %v5846
  %5861 = vmatpush1.msra.mxu0 %v5845
  %5862 = vmatprep.subr.mxu0 %v5842
  %5863 = vmatpush1.msra.mxu0 %v5841
  %5864 = vmatprep.subr.mxu0 %v5838
  %5865 = vmatpush1.msra.mxu0 %v5837
  %5866 = vmatprep.subr.mxu0 %v5834
  %5867 = vmatpush1.msra.mxu0 %v5833
  %5868 = vmatprep.subr.mxu0 %v5830
  %5869 = vmatpush1.msra.mxu0 %v5829
  %5870 = vmatprep.subr.mxu0 %v5826
  %5871 = vmatpush1.msra.mxu0 %v5825
  %5872 = vmatprep.subr.mxu0 %v5822
  %5873 = vmatpush1.msra.mxu0 %v5821
  %5874 = vmatprep.subr.mxu0 %v5818
  %5875 = vmatpush1.msra.mxu0 %v5817
  %5876 = vmatprep.subr.mxu0 %v5814
  %5877 = vmatpush1.msra.mxu0 %v5813
  %5878 = vmatprep.subr.mxu0 %v5810
  %5879 = vmatpush1.msra.mxu0 %v5809
  %5880 = vmatprep.subr.mxu0 %v5806
  %5881 = vmatpush1.msra.mxu0 %v5805
  %5882 = vmatprep.subr.mxu0 %v5802
  %5883 = vmatpush1.msra.mxu0 %v5801
  %5884 = vmatprep.subr.mxu0 %v5798
  %5885 = vmatpush1.msra.mxu0 %v5797
  %5886 = vmatprep.subr.mxu0 %v5794
  %5887 = vmatpush1.msra.mxu0 %v5793
  %5888 = vmatprep.subr.mxu0 %v5790
  %5889 = vmatpush1.msra.mxu0 %v5789
  %5890 = vmatprep.subr.mxu0 0.0
  %5891 = vmatpush2.msra.mxu0 0.0
  %5892 = vmatprep.subr.mxu0 0.0
  %5893 = vmatpush2.msra.mxu0 0.0
  %5894 = vmatprep.subr.mxu0 0.0
  %5895 = vmatpush2.msra.mxu0 0.0
  %5896 = vmatprep.subr.mxu0 0.0
  %5897 = vmatpush2.msra.mxu0 0.0
  %5898 = vmatprep.subr.mxu0 0.0
  %5899 = vmatpush2.msra.mxu0 0.0
  %5900 = vmatprep.subr.mxu0 0.0
  %5901 = vmatpush2.msra.mxu0 0.0
  %5902 = vmatprep.subr.mxu0 0.0
  %5903 = vmatpush2.msra.mxu0 0.0
  %5904 = vmatprep.subr.mxu0 0.0
  %5905 = vmatpush2.msra.mxu0 0.0
  %5906 = vmatprep.subr.mxu0 0.0
  %5907 = vmatpush2.msra.mxu0 0.0
  %5908 = vmatprep.subr.mxu0 0.0
  %5909 = vmatpush2.msra.mxu0 0.0
  %5910 = vmatprep.subr.mxu0 0.0
  %5911 = vmatpush2.msra.mxu0 0.0
  %5912 = vmatprep.subr.mxu0 0.0
  %5913 = vmatpush2.msra.mxu0 0.0
  %5914 = vmatprep.subr.mxu0 0.0
  %5915 = vmatpush2.msra.mxu0 0.0
  %5916 = vmatprep.subr.mxu0 0.0
  %5917 = vmatpush2.msra.mxu0 0.0
  %5918 = vmatprep.subr.mxu0 0.0
  %5919 = vmatpush2.msra.mxu0 0.0
  %5920 = vmatprep.subr.mxu0 0.0
  %5921 = vmatpush2.msra.mxu0 0.0
  %5922 = vmatprep.mubr.f32.mxu0 0.0
  %5923 = vmatmul.mubr.f32.gmra.mxu0 %v5857
  %v5924 = vpop.f32.mrf.mxu0
  %v5925 = vadd.f32 0.0, %v5924
  %v5926 = vpop.f32.mrf.mxu0
  %v5927 = vadd.f32 0.0, %v5926
  %5928 = vdwg.mxu0
  %5929 = vmatprep.subr.mxu0 %v5852
  %5930 = vmatpush1.msra.mxu0 %v5851
  %5931 = vmatprep.subr.mxu0 %v5848
  %5932 = vmatpush1.msra.mxu0 %v5847
  %5933 = vmatprep.subr.mxu0 %v5844
  %5934 = vmatpush1.msra.mxu0 %v5843
  %5935 = vmatprep.subr.mxu0 %v5840
  %5936 = vmatpush1.msra.mxu0 %v5839
  %5937 = vmatprep.subr.mxu0 %v5836
  %5938 = vmatpush1.msra.mxu0 %v5835
  %5939 = vmatprep.subr.mxu0 %v5832
  %5940 = vmatpush1.msra.mxu0 %v5831
  %5941 = vmatprep.subr.mxu0 %v5828
  %5942 = vmatpush1.msra.mxu0 %v5827
  %5943 = vmatprep.subr.mxu0 %v5824
  %5944 = vmatpush1.msra.mxu0 %v5823
  %5945 = vmatprep.subr.mxu0 %v5820
  %5946 = vmatpush1.msra.mxu0 %v5819
  %5947 = vmatprep.subr.mxu0 %v5816
  %5948 = vmatpush1.msra.mxu0 %v5815
  %5949 = vmatprep.subr.mxu0 %v5812
  %5950 = vmatpush1.msra.mxu0 %v5811
  %5951 = vmatprep.subr.mxu0 %v5808
  %5952 = vmatpush1.msra.mxu0 %v5807
  %5953 = vmatprep.subr.mxu0 %v5804
  %5954 = vmatpush1.msra.mxu0 %v5803
  %5955 = vmatprep.subr.mxu0 %v5800
  %5956 = vmatpush1.msra.mxu0 %v5799
  %5957 = vmatprep.subr.mxu0 %v5796
  %5958 = vmatpush1.msra.mxu0 %v5795
  %5959 = vmatprep.subr.mxu0 %v5792
  %5960 = vmatpush1.msra.mxu0 %v5791
  %5961 = vmatprep.subr.mxu0 0.0
  %5962 = vmatpush2.msra.mxu0 0.0
  %5963 = vmatprep.subr.mxu0 0.0
  %5964 = vmatpush2.msra.mxu0 0.0
  %5965 = vmatprep.subr.mxu0 0.0
  %5966 = vmatpush2.msra.mxu0 0.0
  %5967 = vmatprep.subr.mxu0 0.0
  %5968 = vmatpush2.msra.mxu0 0.0
  %5969 = vmatprep.subr.mxu0 0.0
  %5970 = vmatpush2.msra.mxu0 0.0
  %5971 = vmatprep.subr.mxu0 0.0
  %5972 = vmatpush2.msra.mxu0 0.0
  %5973 = vmatprep.subr.mxu0 0.0
  %5974 = vmatpush2.msra.mxu0 0.0
  %5975 = vmatprep.subr.mxu0 0.0
  %5976 = vmatpush2.msra.mxu0 0.0
  %5977 = vmatprep.subr.mxu0 0.0
  %5978 = vmatpush2.msra.mxu0 0.0
  %5979 = vmatprep.subr.mxu0 0.0
  %5980 = vmatpush2.msra.mxu0 0.0
  %5981 = vmatprep.subr.mxu0 0.0
  %5982 = vmatpush2.msra.mxu0 0.0
  %5983 = vmatprep.subr.mxu0 0.0
  %5984 = vmatpush2.msra.mxu0 0.0
  %5985 = vmatprep.subr.mxu0 0.0
  %5986 = vmatpush2.msra.mxu0 0.0
  %5987 = vmatprep.subr.mxu0 0.0
  %5988 = vmatpush2.msra.mxu0 0.0
  %5989 = vmatprep.subr.mxu0 0.0
  %5990 = vmatpush2.msra.mxu0 0.0
  %5991 = vmatprep.subr.mxu0 0.0
  %5992 = vmatpush2.msra.mxu0 0.0
  %5993 = vmatprep.mubr.f32.mxu0 0.0
  %5994 = vmatmul.mubr.f32.gmra.mxu0 %v5857
  %v5995 = vpop.f32.mrf.mxu0
  %v5996 = vadd.f32 0.0, %v5995
  %v5997 = vpop.f32.mrf.mxu0
  %v5998 = vadd.f32 0.0, %v5997
  %5999 = vdwg.mxu0
  %v6000 = vadd.f32 %v5853, %v5925
  %v6001 = vadd.f32 %v5854, %v5927
  %v6002 = vadd.f32 %v5855, %v5996
  %v6003 = vadd.f32 %v5856, %v5998
  %v6004 = vxor.u32 %v6000, 2147483648
  %v6005 = vmul.f32 %v6004, 1.442695
  %v6006 = vpow.pop %v6005
  %v6007 = vadd.f32 %v6006, 1.0
  %v6008 = vrcp.pop %v6007
  %v6009 = vmul.f32 1.0, %v6008
  %v6010 = vxor.u32 %v6001, 2147483648
  %v6011 = vmul.f32 %v6010, 1.442695
  %v6012 = vpow.pop %v6011
  %v6013 = vadd.f32 %v6012, 1.0
  %v6014 = vrcp.pop %v6013
  %v6015 = vmul.f32 1.0, %v6014
  %v6016 = vtanh.pop %v6002
  %v6017 = vxor.u32 %v6003, 2147483648
  %v6018 = vmul.f32 %v6017, 1.442695
  %v6019 = vpow.pop %v6018
  %v6020 = vadd.f32 %v6019, 1.0
  %v6021 = vrcp.pop %v6020
  %v6022 = vmul.f32 1.0, %v6021
  %v6023 = vld [vmem:[#allocation3] sm:$0xff]
  %v6024 = vmul.f32 %v6015, %v6023
  %v6025 = vmul.f32 %v6009, %v6016
  %v6026 = vadd.f32 %v6024, %v6025
  %v6027 = vtanh.pop %v6026
  %v6028 = vmul.f32 %v6022, %v6027
  %6029 = vst [vmem:[#allocation3] sm:$0xff] %v6026
  %6030 = vst [vmem:[#allocation2] sm:$0xff] %v6028
  %6031 = vst [vmem:[%s4] sm:$0xff] %v6028
  %v6032 = vld [vmem:[%s614] sm:$0xff]
  %v6033 = vld [vmem:[%s614 + $0x8] sm:$0xff]
  %v6034 = vld [vmem:[%s614 + $0x10] sm:$0xff]
  %v6035 = vld [vmem:[%s614 + $0x18] sm:$0xff]
  %v6036 = vld [vmem:[#allocation2] sm:$0xff]
  %6037 = vmatprep.subr.mxu0 %v5850
  %6038 = vmatpush1.msra.mxu0 %v5849
  %6039 = vmatprep.subr.mxu0 %v5846
  %6040 = vmatpush1.msra.mxu0 %v5845
  %6041 = vmatprep.subr.mxu0 %v5842
  %6042 = vmatpush1.msra.mxu0 %v5841
  %6043 = vmatprep.subr.mxu0 %v5838
  %6044 = vmatpush1.msra.mxu0 %v5837
  %6045 = vmatprep.subr.mxu0 %v5834
  %6046 = vmatpush1.msra.mxu0 %v5833
  %6047 = vmatprep.subr.mxu0 %v5830
  %6048 = vmatpush1.msra.mxu0 %v5829
  %6049 = vmatprep.subr.mxu0 %v5826
  %6050 = vmatpush1.msra.mxu0 %v5825
  %6051 = vmatprep.subr.mxu0 %v5822
  %6052 = vmatpush1.msra.mxu0 %v5821
  %6053 = vmatprep.subr.mxu0 %v5818
  %6054 = vmatpush1.msra.mxu0 %v5817
  %6055 = vmatprep.subr.mxu0 %v5814
  %6056 = vmatpush1.msra.mxu0 %v5813
  %6057 = vmatprep.subr.mxu0 %v5810
  %6058 = vmatpush1.msra.mxu0 %v5809
  %6059 = vmatprep.subr.mxu0 %v5806
  %6060 = vmatpush1.msra.mxu0 %v5805
  %6061 = vmatprep.subr.mxu0 %v5802
  %6062 = vmatpush1.msra.mxu0 %v5801
  %6063 = vmatprep.subr.mxu0 %v5798
  %6064 = vmatpush1.msra.mxu0 %v5797
  %6065 = vmatprep.subr.mxu0 %v5794
  %6066 = vmatpush1.msra.mxu0 %v5793
  %6067 = vmatprep.subr.mxu0 %v5790
  %6068 = vmatpush1.msra.mxu0 %v5789
  %6069 = vmatprep.subr.mxu0 0.0
  %6070 = vmatpush2.msra.mxu0 0.0
  %6071 = vmatprep.subr.mxu0 0.0
  %6072 = vmatpush2.msra.mxu0 0.0
  %6073 = vmatprep.subr.mxu0 0.0
  %6074 = vmatpush2.msra.mxu0 0.0
  %6075 = vmatprep.subr.mxu0 0.0
  %6076 = vmatpush2.msra.mxu0 0.0
  %6077 = vmatprep.subr.mxu0 0.0
  %6078 = vmatpush2.msra.mxu0 0.0
  %6079 = vmatprep.subr.mxu0 0.0
  %6080 = vmatpush2.msra.mxu0 0.0
  %6081 = vmatprep.subr.mxu0 0.0
  %6082 = vmatpush2.msra.mxu0 0.0
  %6083 = vmatprep.subr.mxu0 0.0
  %6084 = vmatpush2.msra.mxu0 0.0
  %6085 = vmatprep.subr.mxu0 0.0
  %6086 = vmatpush2.msra.mxu0 0.0
  %6087 = vmatprep.subr.mxu0 0.0
  %6088 = vmatpush2.msra.mxu0 0.0
  %6089 = vmatprep.subr.mxu0 0.0
  %6090 = vmatpush2.msra.mxu0 0.0
  %6091 = vmatprep.subr.mxu0 0.0
  %6092 = vmatpush2.msra.mxu0 0.0
  %6093 = vmatprep.subr.mxu0 0.0
  %6094 = vmatpush2.msra.mxu0 0.0
  %6095 = vmatprep.subr.mxu0 0.0
  %6096 = vmatpush2.msra.mxu0 0.0
  %6097 = vmatprep.subr.mxu0 0.0
  %6098 = vmatpush2.msra.mxu0 0.0
  %6099 = vmatprep.subr.mxu0 0.0
  %6100 = vmatpush2.msra.mxu0 0.0
  %6101 = vmatprep.mubr.f32.mxu0 0.0
  %6102 = vmatmul.mubr.f32.gmra.mxu0 %v6036
  %v6103 = vpop.f32.mrf.mxu0
  %v6104 = vadd.f32 0.0, %v6103
  %v6105 = vpop.f32.mrf.mxu0
  %v6106 = vadd.f32 0.0, %v6105
  %6107 = vdwg.mxu0
  %6108 = vmatprep.subr.mxu0 %v5852
  %6109 = vmatpush1.msra.mxu0 %v5851
  %6110 = vmatprep.subr.mxu0 %v5848
  %6111 = vmatpush1.msra.mxu0 %v5847
  %6112 = vmatprep.subr.mxu0 %v5844
  %6113 = vmatpush1.msra.mxu0 %v5843
  %6114 = vmatprep.subr.mxu0 %v5840
  %6115 = vmatpush1.msra.mxu0 %v5839
  %6116 = vmatprep.subr.mxu0 %v5836
  %6117 = vmatpush1.msra.mxu0 %v5835
  %6118 = vmatprep.subr.mxu0 %v5832
  %6119 = vmatpush1.msra.mxu0 %v5831
  %6120 = vmatprep.subr.mxu0 %v5828
  %6121 = vmatpush1.msra.mxu0 %v5827
  %6122 = vmatprep.subr.mxu0 %v5824
  %6123 = vmatpush1.msra.mxu0 %v5823
  %6124 = vmatprep.subr.mxu0 %v5820
  %6125 = vmatpush1.msra.mxu0 %v5819
  %6126 = vmatprep.subr.mxu0 %v5816
  %6127 = vmatpush1.msra.mxu0 %v5815
  %6128 = vmatprep.subr.mxu0 %v5812
  %6129 = vmatpush1.msra.mxu0 %v5811
  %6130 = vmatprep.subr.mxu0 %v5808
  %6131 = vmatpush1.msra.mxu0 %v5807
  %6132 = vmatprep.subr.mxu0 %v5804
  %6133 = vmatpush1.msra.mxu0 %v5803
  %6134 = vmatprep.subr.mxu0 %v5800
  %6135 = vmatpush1.msra.mxu0 %v5799
  %6136 = vmatprep.subr.mxu0 %v5796
  %6137 = vmatpush1.msra.mxu0 %v5795
  %6138 = vmatprep.subr.mxu0 %v5792
  %6139 = vmatpush1.msra.mxu0 %v5791
  %6140 = vmatprep.subr.mxu0 0.0
  %6141 = vmatpush2.msra.mxu0 0.0
  %6142 = vmatprep.subr.mxu0 0.0
  %6143 = vmatpush2.msra.mxu0 0.0
  %6144 = vmatprep.subr.mxu0 0.0
  %6145 = vmatpush2.msra.mxu0 0.0
  %6146 = vmatprep.subr.mxu0 0.0
  %6147 = vmatpush2.msra.mxu0 0.0
  %6148 = vmatprep.subr.mxu0 0.0
  %6149 = vmatpush2.msra.mxu0 0.0
  %6150 = vmatprep.subr.mxu0 0.0
  %6151 = vmatpush2.msra.mxu0 0.0
  %6152 = vmatprep.subr.mxu0 0.0
  %6153 = vmatpush2.msra.mxu0 0.0
  %6154 = vmatprep.subr.mxu0 0.0
  %6155 = vmatpush2.msra.mxu0 0.0
  %6156 = vmatprep.subr.mxu0 0.0
  %6157 = vmatpush2.msra.mxu0 0.0
  %6158 = vmatprep.subr.mxu0 0.0
  %6159 = vmatpush2.msra.mxu0 0.0
  %6160 = vmatprep.subr.mxu0 0.0
  %6161 = vmatpush2.msra.mxu0 0.0
  %6162 = vmatprep.subr.mxu0 0.0
  %6163 = vmatpush2.msra.mxu0 0.0
  %6164 = vmatprep.subr.mxu0 0.0
  %6165 = vmatpush2.msra.mxu0 0.0
  %6166 = vmatprep.subr.mxu0 0.0
  %6167 = vmatpush2.msra.mxu0 0.0
  %6168 = vmatprep.subr.mxu0 0.0
  %6169 = vmatpush2.msra.mxu0 0.0
  %6170 = vmatprep.subr.mxu0 0.0
  %6171 = vmatpush2.msra.mxu0 0.0
  %6172 = vmatprep.mubr.f32.mxu0 0.0
  %6173 = vmatmul.mubr.f32.gmra.mxu0 %v6036
  %v6174 = vpop.f32.mrf.mxu0
  %v6175 = vadd.f32 0.0, %v6174
  %v6176 = vpop.f32.mrf.mxu0
  %v6177 = vadd.f32 0.0, %v6176
  %6178 = vdwg.mxu0
  %v6179 = vadd.f32 %v6032, %v6104
  %v6180 = vadd.f32 %v6033, %v6106
  %v6181 = vadd.f32 %v6034, %v6175
  %v6182 = vadd.f32 %v6035, %v6177
  %v6183 = vxor.u32 %v6179, 2147483648
  %v6184 = vmul.f32 %v6183, 1.442695
  %v6185 = vpow.pop %v6184
  %v6186 = vadd.f32 %v6185, 1.0
  %v6187 = vrcp.pop %v6186
  %v6188 = vmul.f32 1.0, %v6187
  %v6189 = vxor.u32 %v6180, 2147483648
  %v6190 = vmul.f32 %v6189, 1.442695
  %v6191 = vpow.pop %v6190
  %v6192 = vadd.f32 %v6191, 1.0
  %v6193 = vrcp.pop %v6192
  %v6194 = vmul.f32 1.0, %v6193
  %v6195 = vtanh.pop %v6181
  %v6196 = vxor.u32 %v6182, 2147483648
  %v6197 = vmul.f32 %v6196, 1.442695
  %v6198 = vpow.pop %v6197
  %v6199 = vadd.f32 %v6198, 1.0
  %v6200 = vrcp.pop %v6199
  %v6201 = vmul.f32 1.0, %v6200
  %v6202 = vld [vmem:[#allocation3] sm:$0xff]
  %v6203 = vmul.f32 %v6194, %v6202
  %v6204 = vmul.f32 %v6188, %v6195
  %v6205 = vadd.f32 %v6203, %v6204
  %v6206 = vtanh.pop %v6205
  %v6207 = vmul.f32 %v6201, %v6206
  %6208 = vst [vmem:[#allocation3] sm:$0xff] %v6205
  %6209 = vst [vmem:[#allocation2] sm:$0xff] %v6207
  %s6210 = scalar_lea.vmem %s4, 8
  %6211 = vst [vmem:[%s6210] sm:$0xff] %v6207
  %v6212 = vld [vmem:[%s795] sm:$0xff]
  %v6213 = vld [vmem:[%s795 + $0x8] sm:$0xff]
  %v6214 = vld [vmem:[%s795 + $0x10] sm:$0xff]
  %v6215 = vld [vmem:[%s795 + $0x18] sm:$0xff]
  %v6216 = vld [vmem:[#allocation2] sm:$0xff]
  %6217 = vmatprep.subr.mxu0 %v5850
  %6218 = vmatpush1.msra.mxu0 %v5849
  %6219 = vmatprep.subr.mxu0 %v5846
  %6220 = vmatpush1.msra.mxu0 %v5845
  %6221 = vmatprep.subr.mxu0 %v5842
  %6222 = vmatpush1.msra.mxu0 %v5841
  %6223 = vmatprep.subr.mxu0 %v5838
  %6224 = vmatpush1.msra.mxu0 %v5837
  %6225 = vmatprep.subr.mxu0 %v5834
  %6226 = vmatpush1.msra.mxu0 %v5833
  %6227 = vmatprep.subr.mxu0 %v5830
  %6228 = vmatpush1.msra.mxu0 %v5829
  %6229 = vmatprep.subr.mxu0 %v5826
  %6230 = vmatpush1.msra.mxu0 %v5825
  %6231 = vmatprep.subr.mxu0 %v5822
  %6232 = vmatpush1.msra.mxu0 %v5821
  %6233 = vmatprep.subr.mxu0 %v5818
  %6234 = vmatpush1.msra.mxu0 %v5817
  %6235 = vmatprep.subr.mxu0 %v5814
  %6236 = vmatpush1.msra.mxu0 %v5813
  %6237 = vmatprep.subr.mxu0 %v5810
  %6238 = vmatpush1.msra.mxu0 %v5809
  %6239 = vmatprep.subr.mxu0 %v5806
  %6240 = vmatpush1.msra.mxu0 %v5805
  %6241 = vmatprep.subr.mxu0 %v5802
  %6242 = vmatpush1.msra.mxu0 %v5801
  %6243 = vmatprep.subr.mxu0 %v5798
  %6244 = vmatpush1.msra.mxu0 %v5797
  %6245 = vmatprep.subr.mxu0 %v5794
  %6246 = vmatpush1.msra.mxu0 %v5793
  %6247 = vmatprep.subr.mxu0 %v5790
  %6248 = vmatpush1.msra.mxu0 %v5789
  %6249 = vmatprep.subr.mxu0 0.0
  %6250 = vmatpush2.msra.mxu0 0.0
  %6251 = vmatprep.subr.mxu0 0.0
  %6252 = vmatpush2.msra.mxu0 0.0
  %6253 = vmatprep.subr.mxu0 0.0
  %6254 = vmatpush2.msra.mxu0 0.0
  %6255 = vmatprep.subr.mxu0 0.0
  %6256 = vmatpush2.msra.mxu0 0.0
  %6257 = vmatprep.subr.mxu0 0.0
  %6258 = vmatpush2.msra.mxu0 0.0
  %6259 = vmatprep.subr.mxu0 0.0
  %6260 = vmatpush2.msra.mxu0 0.0
  %6261 = vmatprep.subr.mxu0 0.0
  %6262 = vmatpush2.msra.mxu0 0.0
  %6263 = vmatprep.subr.mxu0 0.0
  %6264 = vmatpush2.msra.mxu0 0.0
  %6265 = vmatprep.subr.mxu0 0.0
  %6266 = vmatpush2.msra.mxu0 0.0
  %6267 = vmatprep.subr.mxu0 0.0
  %6268 = vmatpush2.msra.mxu0 0.0
  %6269 = vmatprep.subr.mxu0 0.0
  %6270 = vmatpush2.msra.mxu0 0.0
  %6271 = vmatprep.subr.mxu0 0.0
  %6272 = vmatpush2.msra.mxu0 0.0
  %6273 = vmatprep.subr.mxu0 0.0
  %6274 = vmatpush2.msra.mxu0 0.0
  %6275 = vmatprep.subr.mxu0 0.0
  %6276 = vmatpush2.msra.mxu0 0.0
  %6277 = vmatprep.subr.mxu0 0.0
  %6278 = vmatpush2.msra.mxu0 0.0
  %6279 = vmatprep.subr.mxu0 0.0
  %6280 = vmatpush2.msra.mxu0 0.0
  %6281 = vmatprep.mubr.f32.mxu0 0.0
  %6282 = vmatmul.mubr.f32.gmra.mxu0 %v6216
  %v6283 = vpop.f32.mrf.mxu0
  %v6284 = vadd.f32 0.0, %v6283
  %v6285 = vpop.f32.mrf.mxu0
  %v6286 = vadd.f32 0.0, %v6285
  %6287 = vdwg.mxu0
  %6288 = vmatprep.subr.mxu0 %v5852
  %6289 = vmatpush1.msra.mxu0 %v5851
  %6290 = vmatprep.subr.mxu0 %v5848
  %6291 = vmatpush1.msra.mxu0 %v5847
  %6292 = vmatprep.subr.mxu0 %v5844
  %6293 = vmatpush1.msra.mxu0 %v5843
  %6294 = vmatprep.subr.mxu0 %v5840
  %6295 = vmatpush1.msra.mxu0 %v5839
  %6296 = vmatprep.subr.mxu0 %v5836
  %6297 = vmatpush1.msra.mxu0 %v5835
  %6298 = vmatprep.subr.mxu0 %v5832
  %6299 = vmatpush1.msra.mxu0 %v5831
  %6300 = vmatprep.subr.mxu0 %v5828
  %6301 = vmatpush1.msra.mxu0 %v5827
  %6302 = vmatprep.subr.mxu0 %v5824
  %6303 = vmatpush1.msra.mxu0 %v5823
  %6304 = vmatprep.subr.mxu0 %v5820
  %6305 = vmatpush1.msra.mxu0 %v5819
  %6306 = vmatprep.subr.mxu0 %v5816
  %6307 = vmatpush1.msra.mxu0 %v5815
  %6308 = vmatprep.subr.mxu0 %v5812
  %6309 = vmatpush1.msra.mxu0 %v5811
  %6310 = vmatprep.subr.mxu0 %v5808
  %6311 = vmatpush1.msra.mxu0 %v5807
  %6312 = vmatprep.subr.mxu0 %v5804
  %6313 = vmatpush1.msra.mxu0 %v5803
  %6314 = vmatprep.subr.mxu0 %v5800
  %6315 = vmatpush1.msra.mxu0 %v5799
  %6316 = vmatprep.subr.mxu0 %v5796
  %6317 = vmatpush1.msra.mxu0 %v5795
  %6318 = vmatprep.subr.mxu0 %v5792
  %6319 = vmatpush1.msra.mxu0 %v5791
  %6320 = vmatprep.subr.mxu0 0.0
  %6321 = vmatpush2.msra.mxu0 0.0
  %6322 = vmatprep.subr.mxu0 0.0
  %6323 = vmatpush2.msra.mxu0 0.0
  %6324 = vmatprep.subr.mxu0 0.0
  %6325 = vmatpush2.msra.mxu0 0.0
  %6326 = vmatprep.subr.mxu0 0.0
  %6327 = vmatpush2.msra.mxu0 0.0
  %6328 = vmatprep.subr.mxu0 0.0
  %6329 = vmatpush2.msra.mxu0 0.0
  %6330 = vmatprep.subr.mxu0 0.0
  %6331 = vmatpush2.msra.mxu0 0.0
  %6332 = vmatprep.subr.mxu0 0.0
  %6333 = vmatpush2.msra.mxu0 0.0
  %6334 = vmatprep.subr.mxu0 0.0
  %6335 = vmatpush2.msra.mxu0 0.0
  %6336 = vmatprep.subr.mxu0 0.0
  %6337 = vmatpush2.msra.mxu0 0.0
  %6338 = vmatprep.subr.mxu0 0.0
  %6339 = vmatpush2.msra.mxu0 0.0
  %6340 = vmatprep.subr.mxu0 0.0
  %6341 = vmatpush2.msra.mxu0 0.0
  %6342 = vmatprep.subr.mxu0 0.0
  %6343 = vmatpush2.msra.mxu0 0.0
  %6344 = vmatprep.subr.mxu0 0.0
  %6345 = vmatpush2.msra.mxu0 0.0
  %6346 = vmatprep.subr.mxu0 0.0
  %6347 = vmatpush2.msra.mxu0 0.0
  %6348 = vmatprep.subr.mxu0 0.0
  %6349 = vmatpush2.msra.mxu0 0.0
  %6350 = vmatprep.subr.mxu0 0.0
  %6351 = vmatpush2.msra.mxu0 0.0
  %6352 = vmatprep.mubr.f32.mxu0 0.0
  %6353 = vmatmul.mubr.f32.gmra.mxu0 %v6216
  %v6354 = vpop.f32.mrf.mxu0
  %v6355 = vadd.f32 0.0, %v6354
  %v6356 = vpop.f32.mrf.mxu0
  %v6357 = vadd.f32 0.0, %v6356
  %6358 = vdwg.mxu0
  %v6359 = vadd.f32 %v6212, %v6284
  %v6360 = vadd.f32 %v6213, %v6286
  %v6361 = vadd.f32 %v6214, %v6355
  %v6362 = vadd.f32 %v6215, %v6357
  %v6363 = vxor.u32 %v6359, 2147483648
  %v6364 = vmul.f32 %v6363, 1.442695
  %v6365 = vpow.pop %v6364
  %v6366 = vadd.f32 %v6365, 1.0
  %v6367 = vrcp.pop %v6366
  %v6368 = vmul.f32 1.0, %v6367
  %v6369 = vxor.u32 %v6360, 2147483648
  %v6370 = vmul.f32 %v6369, 1.442695
  %v6371 = vpow.pop %v6370
  %v6372 = vadd.f32 %v6371, 1.0
  %v6373 = vrcp.pop %v6372
  %v6374 = vmul.f32 1.0, %v6373
  %v6375 = vtanh.pop %v6361
  %v6376 = vxor.u32 %v6362, 2147483648
  %v6377 = vmul.f32 %v6376, 1.442695
  %v6378 = vpow.pop %v6377
  %v6379 = vadd.f32 %v6378, 1.0
  %v6380 = vrcp.pop %v6379
  %v6381 = vmul.f32 1.0, %v6380
  %v6382 = vld [vmem:[#allocation3] sm:$0xff]
  %v6383 = vmul.f32 %v6374, %v6382
  %v6384 = vmul.f32 %v6368, %v6375
  %v6385 = vadd.f32 %v6383, %v6384
  %v6386 = vtanh.pop %v6385
  %v6387 = vmul.f32 %v6381, %v6386
  %6388 = vst [vmem:[#allocation3] sm:$0xff] %v6385
  %6389 = vst [vmem:[#allocation2] sm:$0xff] %v6387
  %s6390 = scalar_lea.vmem %s4, 16
  %6391 = vst [vmem:[%s6390] sm:$0xff] %v6387
  %v6392 = vld [vmem:[%s976] sm:$0xff]
  %v6393 = vld [vmem:[%s976 + $0x8] sm:$0xff]
  %v6394 = vld [vmem:[%s976 + $0x10] sm:$0xff]
  %v6395 = vld [vmem:[%s976 + $0x18] sm:$0xff]
  %v6396 = vld [vmem:[#allocation2] sm:$0xff]
  %6397 = vmatprep.subr.mxu0 %v5850
  %6398 = vmatpush1.msra.mxu0 %v5849
  %6399 = vmatprep.subr.mxu0 %v5846
  %6400 = vmatpush1.msra.mxu0 %v5845
  %6401 = vmatprep.subr.mxu0 %v5842
  %6402 = vmatpush1.msra.mxu0 %v5841
  %6403 = vmatprep.subr.mxu0 %v5838
  %6404 = vmatpush1.msra.mxu0 %v5837
  %6405 = vmatprep.subr.mxu0 %v5834
  %6406 = vmatpush1.msra.mxu0 %v5833
  %6407 = vmatprep.subr.mxu0 %v5830
  %6408 = vmatpush1.msra.mxu0 %v5829
  %6409 = vmatprep.subr.mxu0 %v5826
  %6410 = vmatpush1.msra.mxu0 %v5825
  %6411 = vmatprep.subr.mxu0 %v5822
  %6412 = vmatpush1.msra.mxu0 %v5821
  %6413 = vmatprep.subr.mxu0 %v5818
  %6414 = vmatpush1.msra.mxu0 %v5817
  %6415 = vmatprep.subr.mxu0 %v5814
  %6416 = vmatpush1.msra.mxu0 %v5813
  %6417 = vmatprep.subr.mxu0 %v5810
  %6418 = vmatpush1.msra.mxu0 %v5809
  %6419 = vmatprep.subr.mxu0 %v5806
  %6420 = vmatpush1.msra.mxu0 %v5805
  %6421 = vmatprep.subr.mxu0 %v5802
  %6422 = vmatpush1.msra.mxu0 %v5801
  %6423 = vmatprep.subr.mxu0 %v5798
  %6424 = vmatpush1.msra.mxu0 %v5797
  %6425 = vmatprep.subr.mxu0 %v5794
  %6426 = vmatpush1.msra.mxu0 %v5793
  %6427 = vmatprep.subr.mxu0 %v5790
  %6428 = vmatpush1.msra.mxu0 %v5789
  %6429 = vmatprep.subr.mxu0 0.0
  %6430 = vmatpush2.msra.mxu0 0.0
  %6431 = vmatprep.subr.mxu0 0.0
  %6432 = vmatpush2.msra.mxu0 0.0
  %6433 = vmatprep.subr.mxu0 0.0
  %6434 = vmatpush2.msra.mxu0 0.0
  %6435 = vmatprep.subr.mxu0 0.0
  %6436 = vmatpush2.msra.mxu0 0.0
  %6437 = vmatprep.subr.mxu0 0.0
  %6438 = vmatpush2.msra.mxu0 0.0
  %6439 = vmatprep.subr.mxu0 0.0
  %6440 = vmatpush2.msra.mxu0 0.0
  %6441 = vmatprep.subr.mxu0 0.0
  %6442 = vmatpush2.msra.mxu0 0.0
  %6443 = vmatprep.subr.mxu0 0.0
  %6444 = vmatpush2.msra.mxu0 0.0
  %6445 = vmatprep.subr.mxu0 0.0
  %6446 = vmatpush2.msra.mxu0 0.0
  %6447 = vmatprep.subr.mxu0 0.0
  %6448 = vmatpush2.msra.mxu0 0.0
  %6449 = vmatprep.subr.mxu0 0.0
  %6450 = vmatpush2.msra.mxu0 0.0
  %6451 = vmatprep.subr.mxu0 0.0
  %6452 = vmatpush2.msra.mxu0 0.0
  %6453 = vmatprep.subr.mxu0 0.0
  %6454 = vmatpush2.msra.mxu0 0.0
  %6455 = vmatprep.subr.mxu0 0.0
  %6456 = vmatpush2.msra.mxu0 0.0
  %6457 = vmatprep.subr.mxu0 0.0
  %6458 = vmatpush2.msra.mxu0 0.0
  %6459 = vmatprep.subr.mxu0 0.0
  %6460 = vmatpush2.msra.mxu0 0.0
  %6461 = vmatprep.mubr.f32.mxu0 0.0
  %6462 = vmatmul.mubr.f32.gmra.mxu0 %v6396
  %v6463 = vpop.f32.mrf.mxu0
  %v6464 = vadd.f32 0.0, %v6463
  %v6465 = vpop.f32.mrf.mxu0
  %v6466 = vadd.f32 0.0, %v6465
  %6467 = vdwg.mxu0
  %6468 = vmatprep.subr.mxu0 %v5852
  %6469 = vmatpush1.msra.mxu0 %v5851
  %6470 = vmatprep.subr.mxu0 %v5848
  %6471 = vmatpush1.msra.mxu0 %v5847
  %6472 = vmatprep.subr.mxu0 %v5844
  %6473 = vmatpush1.msra.mxu0 %v5843
  %6474 = vmatprep.subr.mxu0 %v5840
  %6475 = vmatpush1.msra.mxu0 %v5839
  %6476 = vmatprep.subr.mxu0 %v5836
  %6477 = vmatpush1.msra.mxu0 %v5835
  %6478 = vmatprep.subr.mxu0 %v5832
  %6479 = vmatpush1.msra.mxu0 %v5831
  %6480 = vmatprep.subr.mxu0 %v5828
  %6481 = vmatpush1.msra.mxu0 %v5827
  %6482 = vmatprep.subr.mxu0 %v5824
  %6483 = vmatpush1.msra.mxu0 %v5823
  %6484 = vmatprep.subr.mxu0 %v5820
  %6485 = vmatpush1.msra.mxu0 %v5819
  %6486 = vmatprep.subr.mxu0 %v5816
  %6487 = vmatpush1.msra.mxu0 %v5815
  %6488 = vmatprep.subr.mxu0 %v5812
  %6489 = vmatpush1.msra.mxu0 %v5811
  %6490 = vmatprep.subr.mxu0 %v5808
  %6491 = vmatpush1.msra.mxu0 %v5807
  %6492 = vmatprep.subr.mxu0 %v5804
  %6493 = vmatpush1.msra.mxu0 %v5803
  %6494 = vmatprep.subr.mxu0 %v5800
  %6495 = vmatpush1.msra.mxu0 %v5799
  %6496 = vmatprep.subr.mxu0 %v5796
  %6497 = vmatpush1.msra.mxu0 %v5795
  %6498 = vmatprep.subr.mxu0 %v5792
  %6499 = vmatpush1.msra.mxu0 %v5791
  %6500 = vmatprep.subr.mxu0 0.0
  %6501 = vmatpush2.msra.mxu0 0.0
  %6502 = vmatprep.subr.mxu0 0.0
  %6503 = vmatpush2.msra.mxu0 0.0
  %6504 = vmatprep.subr.mxu0 0.0
  %6505 = vmatpush2.msra.mxu0 0.0
  %6506 = vmatprep.subr.mxu0 0.0
  %6507 = vmatpush2.msra.mxu0 0.0
  %6508 = vmatprep.subr.mxu0 0.0
  %6509 = vmatpush2.msra.mxu0 0.0
  %6510 = vmatprep.subr.mxu0 0.0
  %6511 = vmatpush2.msra.mxu0 0.0
  %6512 = vmatprep.subr.mxu0 0.0
  %6513 = vmatpush2.msra.mxu0 0.0
  %6514 = vmatprep.subr.mxu0 0.0
  %6515 = vmatpush2.msra.mxu0 0.0
  %6516 = vmatprep.subr.mxu0 0.0
  %6517 = vmatpush2.msra.mxu0 0.0
  %6518 = vmatprep.subr.mxu0 0.0
  %6519 = vmatpush2.msra.mxu0 0.0
  %6520 = vmatprep.subr.mxu0 0.0
  %6521 = vmatpush2.msra.mxu0 0.0
  %6522 = vmatprep.subr.mxu0 0.0
  %6523 = vmatpush2.msra.mxu0 0.0
  %6524 = vmatprep.subr.mxu0 0.0
  %6525 = vmatpush2.msra.mxu0 0.0
  %6526 = vmatprep.subr.mxu0 0.0
  %6527 = vmatpush2.msra.mxu0 0.0
  %6528 = vmatprep.subr.mxu0 0.0
  %6529 = vmatpush2.msra.mxu0 0.0
  %6530 = vmatprep.subr.mxu0 0.0
  %6531 = vmatpush2.msra.mxu0 0.0
  %6532 = vmatprep.mubr.f32.mxu0 0.0
  %6533 = vmatmul.mubr.f32.gmra.mxu0 %v6396
  %v6534 = vpop.f32.mrf.mxu0
  %v6535 = vadd.f32 0.0, %v6534
  %v6536 = vpop.f32.mrf.mxu0
  %v6537 = vadd.f32 0.0, %v6536
  %6538 = vdwg.mxu0
  %v6539 = vadd.f32 %v6392, %v6464
  %v6540 = vadd.f32 %v6393, %v6466
  %v6541 = vadd.f32 %v6394, %v6535
  %v6542 = vadd.f32 %v6395, %v6537
  %v6543 = vxor.u32 %v6539, 2147483648
  %v6544 = vmul.f32 %v6543, 1.442695
  %v6545 = vpow.pop %v6544
  %v6546 = vadd.f32 %v6545, 1.0
  %v6547 = vrcp.pop %v6546
  %v6548 = vmul.f32 1.0, %v6547
  %v6549 = vxor.u32 %v6540, 2147483648
  %v6550 = vmul.f32 %v6549, 1.442695
  %v6551 = vpow.pop %v6550
  %v6552 = vadd.f32 %v6551, 1.0
  %v6553 = vrcp.pop %v6552
  %v6554 = vmul.f32 1.0, %v6553
  %v6555 = vtanh.pop %v6541
  %v6556 = vxor.u32 %v6542, 2147483648
  %v6557 = vmul.f32 %v6556, 1.442695
  %v6558 = vpow.pop %v6557
  %v6559 = vadd.f32 %v6558, 1.0
  %v6560 = vrcp.pop %v6559
  %v6561 = vmul.f32 1.0, %v6560
  %v6562 = vld [vmem:[#allocation3] sm:$0xff]
  %v6563 = vmul.f32 %v6554, %v6562
  %v6564 = vmul.f32 %v6548, %v6555
  %v6565 = vadd.f32 %v6563, %v6564
  %v6566 = vtanh.pop %v6565
  %v6567 = vmul.f32 %v6561, %v6566
  %6568 = vst [vmem:[#allocation3] sm:$0xff] %v6565
  %6569 = vst [vmem:[#allocation2] sm:$0xff] %v6567
  %s6570 = scalar_lea.vmem %s4, 24
  %6571 = vst [vmem:[%s6570] sm:$0xff] %v6567
  %v6572 = vld [vmem:[%s1157] sm:$0xff]
  %v6573 = vld [vmem:[%s1157 + $0x8] sm:$0xff]
  %v6574 = vld [vmem:[%s1157 + $0x10] sm:$0xff]
  %v6575 = vld [vmem:[%s1157 + $0x18] sm:$0xff]
  %v6576 = vld [vmem:[#allocation2] sm:$0xff]
  %6577 = vmatprep.subr.mxu0 %v5850
  %6578 = vmatpush1.msra.mxu0 %v5849
  %6579 = vmatprep.subr.mxu0 %v5846
  %6580 = vmatpush1.msra.mxu0 %v5845
  %6581 = vmatprep.subr.mxu0 %v5842
  %6582 = vmatpush1.msra.mxu0 %v5841
  %6583 = vmatprep.subr.mxu0 %v5838
  %6584 = vmatpush1.msra.mxu0 %v5837
  %6585 = vmatprep.subr.mxu0 %v5834
  %6586 = vmatpush1.msra.mxu0 %v5833
  %6587 = vmatprep.subr.mxu0 %v5830
  %6588 = vmatpush1.msra.mxu0 %v5829
  %6589 = vmatprep.subr.mxu0 %v5826
  %6590 = vmatpush1.msra.mxu0 %v5825
  %6591 = vmatprep.subr.mxu0 %v5822
  %6592 = vmatpush1.msra.mxu0 %v5821
  %6593 = vmatprep.subr.mxu0 %v5818
  %6594 = vmatpush1.msra.mxu0 %v5817
  %6595 = vmatprep.subr.mxu0 %v5814
  %6596 = vmatpush1.msra.mxu0 %v5813
  %6597 = vmatprep.subr.mxu0 %v5810
  %6598 = vmatpush1.msra.mxu0 %v5809
  %6599 = vmatprep.subr.mxu0 %v5806
  %6600 = vmatpush1.msra.mxu0 %v5805
  %6601 = vmatprep.subr.mxu0 %v5802
  %6602 = vmatpush1.msra.mxu0 %v5801
  %6603 = vmatprep.subr.mxu0 %v5798
  %6604 = vmatpush1.msra.mxu0 %v5797
  %6605 = vmatprep.subr.mxu0 %v5794
  %6606 = vmatpush1.msra.mxu0 %v5793
  %6607 = vmatprep.subr.mxu0 %v5790
  %6608 = vmatpush1.msra.mxu0 %v5789
  %6609 = vmatprep.subr.mxu0 0.0
  %6610 = vmatpush2.msra.mxu0 0.0
  %6611 = vmatprep.subr.mxu0 0.0
  %6612 = vmatpush2.msra.mxu0 0.0
  %6613 = vmatprep.subr.mxu0 0.0
  %6614 = vmatpush2.msra.mxu0 0.0
  %6615 = vmatprep.subr.mxu0 0.0
  %6616 = vmatpush2.msra.mxu0 0.0
  %6617 = vmatprep.subr.mxu0 0.0
  %6618 = vmatpush2.msra.mxu0 0.0
  %6619 = vmatprep.subr.mxu0 0.0
  %6620 = vmatpush2.msra.mxu0 0.0
  %6621 = vmatprep.subr.mxu0 0.0
  %6622 = vmatpush2.msra.mxu0 0.0
  %6623 = vmatprep.subr.mxu0 0.0
  %6624 = vmatpush2.msra.mxu0 0.0
  %6625 = vmatprep.subr.mxu0 0.0
  %6626 = vmatpush2.msra.mxu0 0.0
  %6627 = vmatprep.subr.mxu0 0.0
  %6628 = vmatpush2.msra.mxu0 0.0
  %6629 = vmatprep.subr.mxu0 0.0
  %6630 = vmatpush2.msra.mxu0 0.0
  %6631 = vmatprep.subr.mxu0 0.0
  %6632 = vmatpush2.msra.mxu0 0.0
  %6633 = vmatprep.subr.mxu0 0.0
  %6634 = vmatpush2.msra.mxu0 0.0
  %6635 = vmatprep.subr.mxu0 0.0
  %6636 = vmatpush2.msra.mxu0 0.0
  %6637 = vmatprep.subr.mxu0 0.0
  %6638 = vmatpush2.msra.mxu0 0.0
  %6639 = vmatprep.subr.mxu0 0.0
  %6640 = vmatpush2.msra.mxu0 0.0
  %6641 = vmatprep.mubr.f32.mxu0 0.0
  %6642 = vmatmul.mubr.f32.gmra.mxu0 %v6576
  %v6643 = vpop.f32.mrf.mxu0
  %v6644 = vadd.f32 0.0, %v6643
  %v6645 = vpop.f32.mrf.mxu0
  %v6646 = vadd.f32 0.0, %v6645
  %6647 = vdwg.mxu0
  %6648 = vmatprep.subr.mxu0 %v5852
  %6649 = vmatpush1.msra.mxu0 %v5851
  %6650 = vmatprep.subr.mxu0 %v5848
  %6651 = vmatpush1.msra.mxu0 %v5847
  %6652 = vmatprep.subr.mxu0 %v5844
  %6653 = vmatpush1.msra.mxu0 %v5843
  %6654 = vmatprep.subr.mxu0 %v5840
  %6655 = vmatpush1.msra.mxu0 %v5839
  %6656 = vmatprep.subr.mxu0 %v5836
  %6657 = vmatpush1.msra.mxu0 %v5835
  %6658 = vmatprep.subr.mxu0 %v5832
  %6659 = vmatpush1.msra.mxu0 %v5831
  %6660 = vmatprep.subr.mxu0 %v5828
  %6661 = vmatpush1.msra.mxu0 %v5827
  %6662 = vmatprep.subr.mxu0 %v5824
  %6663 = vmatpush1.msra.mxu0 %v5823
  %6664 = vmatprep.subr.mxu0 %v5820
  %6665 = vmatpush1.msra.mxu0 %v5819
  %6666 = vmatprep.subr.mxu0 %v5816
  %6667 = vmatpush1.msra.mxu0 %v5815
  %6668 = vmatprep.subr.mxu0 %v5812
  %6669 = vmatpush1.msra.mxu0 %v5811
  %6670 = vmatprep.subr.mxu0 %v5808
  %6671 = vmatpush1.msra.mxu0 %v5807
  %6672 = vmatprep.subr.mxu0 %v5804
  %6673 = vmatpush1.msra.mxu0 %v5803
  %6674 = vmatprep.subr.mxu0 %v5800
  %6675 = vmatpush1.msra.mxu0 %v5799
  %6676 = vmatprep.subr.mxu0 %v5796
  %6677 = vmatpush1.msra.mxu0 %v5795
  %6678 = vmatprep.subr.mxu0 %v5792
  %6679 = vmatpush1.msra.mxu0 %v5791
  %6680 = vmatprep.subr.mxu0 0.0
  %6681 = vmatpush2.msra.mxu0 0.0
  %6682 = vmatprep.subr.mxu0 0.0
  %6683 = vmatpush2.msra.mxu0 0.0
  %6684 = vmatprep.subr.mxu0 0.0
  %6685 = vmatpush2.msra.mxu0 0.0
  %6686 = vmatprep.subr.mxu0 0.0
  %6687 = vmatpush2.msra.mxu0 0.0
  %6688 = vmatprep.subr.mxu0 0.0
  %6689 = vmatpush2.msra.mxu0 0.0
  %6690 = vmatprep.subr.mxu0 0.0
  %6691 = vmatpush2.msra.mxu0 0.0
  %6692 = vmatprep.subr.mxu0 0.0
  %6693 = vmatpush2.msra.mxu0 0.0
  %6694 = vmatprep.subr.mxu0 0.0
  %6695 = vmatpush2.msra.mxu0 0.0
  %6696 = vmatprep.subr.mxu0 0.0
  %6697 = vmatpush2.msra.mxu0 0.0
  %6698 = vmatprep.subr.mxu0 0.0
  %6699 = vmatpush2.msra.mxu0 0.0
  %6700 = vmatprep.subr.mxu0 0.0
  %6701 = vmatpush2.msra.mxu0 0.0
  %6702 = vmatprep.subr.mxu0 0.0
  %6703 = vmatpush2.msra.mxu0 0.0
  %6704 = vmatprep.subr.mxu0 0.0
  %6705 = vmatpush2.msra.mxu0 0.0
  %6706 = vmatprep.subr.mxu0 0.0
  %6707 = vmatpush2.msra.mxu0 0.0
  %6708 = vmatprep.subr.mxu0 0.0
  %6709 = vmatpush2.msra.mxu0 0.0
  %6710 = vmatprep.subr.mxu0 0.0
  %6711 = vmatpush2.msra.mxu0 0.0
  %6712 = vmatprep.mubr.f32.mxu0 0.0
  %6713 = vmatmul.mubr.f32.gmra.mxu0 %v6576
  %v6714 = vpop.f32.mrf.mxu0
  %v6715 = vadd.f32 0.0, %v6714
  %v6716 = vpop.f32.mrf.mxu0
  %v6717 = vadd.f32 0.0, %v6716
  %6718 = vdwg.mxu0
  %v6719 = vadd.f32 %v6572, %v6644
  %v6720 = vadd.f32 %v6573, %v6646
  %v6721 = vadd.f32 %v6574, %v6715
  %v6722 = vadd.f32 %v6575, %v6717
  %v6723 = vxor.u32 %v6719, 2147483648
  %v6724 = vmul.f32 %v6723, 1.442695
  %v6725 = vpow.pop %v6724
  %v6726 = vadd.f32 %v6725, 1.0
  %v6727 = vrcp.pop %v6726
  %v6728 = vmul.f32 1.0, %v6727
  %v6729 = vxor.u32 %v6720, 2147483648
  %v6730 = vmul.f32 %v6729, 1.442695
  %v6731 = vpow.pop %v6730
  %v6732 = vadd.f32 %v6731, 1.0
  %v6733 = vrcp.pop %v6732
  %v6734 = vmul.f32 1.0, %v6733
  %v6735 = vtanh.pop %v6721
  %v6736 = vxor.u32 %v6722, 2147483648
  %v6737 = vmul.f32 %v6736, 1.442695
  %v6738 = vpow.pop %v6737
  %v6739 = vadd.f32 %v6738, 1.0
  %v6740 = vrcp.pop %v6739
  %v6741 = vmul.f32 1.0, %v6740
  %v6742 = vld [vmem:[#allocation3] sm:$0xff]
  %v6743 = vmul.f32 %v6734, %v6742
  %v6744 = vmul.f32 %v6728, %v6735
  %v6745 = vadd.f32 %v6743, %v6744
  %v6746 = vtanh.pop %v6745
  %v6747 = vmul.f32 %v6741, %v6746
  %6748 = vst [vmem:[#allocation3] sm:$0xff] %v6745
  %6749 = vst [vmem:[#allocation2] sm:$0xff] %v6747
  %s6750 = scalar_lea.vmem %s4, 32
  %6751 = vst [vmem:[%s6750] sm:$0xff] %v6747
  %v6752 = vld [vmem:[%s1338] sm:$0xff]
  %v6753 = vld [vmem:[%s1338 + $0x8] sm:$0xff]
  %v6754 = vld [vmem:[%s1338 + $0x10] sm:$0xff]
  %v6755 = vld [vmem:[%s1338 + $0x18] sm:$0xff]
  %v6756 = vld [vmem:[#allocation2] sm:$0xff]
  %6757 = vmatprep.subr.mxu0 %v5850
  %6758 = vmatpush1.msra.mxu0 %v5849
  %6759 = vmatprep.subr.mxu0 %v5846
  %6760 = vmatpush1.msra.mxu0 %v5845
  %6761 = vmatprep.subr.mxu0 %v5842
  %6762 = vmatpush1.msra.mxu0 %v5841
  %6763 = vmatprep.subr.mxu0 %v5838
  %6764 = vmatpush1.msra.mxu0 %v5837
  %6765 = vmatprep.subr.mxu0 %v5834
  %6766 = vmatpush1.msra.mxu0 %v5833
  %6767 = vmatprep.subr.mxu0 %v5830
  %6768 = vmatpush1.msra.mxu0 %v5829
  %6769 = vmatprep.subr.mxu0 %v5826
  %6770 = vmatpush1.msra.mxu0 %v5825
  %6771 = vmatprep.subr.mxu0 %v5822
  %6772 = vmatpush1.msra.mxu0 %v5821
  %6773 = vmatprep.subr.mxu0 %v5818
  %6774 = vmatpush1.msra.mxu0 %v5817
  %6775 = vmatprep.subr.mxu0 %v5814
  %6776 = vmatpush1.msra.mxu0 %v5813
  %6777 = vmatprep.subr.mxu0 %v5810
  %6778 = vmatpush1.msra.mxu0 %v5809
  %6779 = vmatprep.subr.mxu0 %v5806
  %6780 = vmatpush1.msra.mxu0 %v5805
  %6781 = vmatprep.subr.mxu0 %v5802
  %6782 = vmatpush1.msra.mxu0 %v5801
  %6783 = vmatprep.subr.mxu0 %v5798
  %6784 = vmatpush1.msra.mxu0 %v5797
  %6785 = vmatprep.subr.mxu0 %v5794
  %6786 = vmatpush1.msra.mxu0 %v5793
  %6787 = vmatprep.subr.mxu0 %v5790
  %6788 = vmatpush1.msra.mxu0 %v5789
  %6789 = vmatprep.subr.mxu0 0.0
  %6790 = vmatpush2.msra.mxu0 0.0
  %6791 = vmatprep.subr.mxu0 0.0
  %6792 = vmatpush2.msra.mxu0 0.0
  %6793 = vmatprep.subr.mxu0 0.0
  %6794 = vmatpush2.msra.mxu0 0.0
  %6795 = vmatprep.subr.mxu0 0.0
  %6796 = vmatpush2.msra.mxu0 0.0
  %6797 = vmatprep.subr.mxu0 0.0
  %6798 = vmatpush2.msra.mxu0 0.0
  %6799 = vmatprep.subr.mxu0 0.0
  %6800 = vmatpush2.msra.mxu0 0.0
  %6801 = vmatprep.subr.mxu0 0.0
  %6802 = vmatpush2.msra.mxu0 0.0
  %6803 = vmatprep.subr.mxu0 0.0
  %6804 = vmatpush2.msra.mxu0 0.0
  %6805 = vmatprep.subr.mxu0 0.0
  %6806 = vmatpush2.msra.mxu0 0.0
  %6807 = vmatprep.subr.mxu0 0.0
  %6808 = vmatpush2.msra.mxu0 0.0
  %6809 = vmatprep.subr.mxu0 0.0
  %6810 = vmatpush2.msra.mxu0 0.0
  %6811 = vmatprep.subr.mxu0 0.0
  %6812 = vmatpush2.msra.mxu0 0.0
  %6813 = vmatprep.subr.mxu0 0.0
  %6814 = vmatpush2.msra.mxu0 0.0
  %6815 = vmatprep.subr.mxu0 0.0
  %6816 = vmatpush2.msra.mxu0 0.0
  %6817 = vmatprep.subr.mxu0 0.0
  %6818 = vmatpush2.msra.mxu0 0.0
  %6819 = vmatprep.subr.mxu0 0.0
  %6820 = vmatpush2.msra.mxu0 0.0
  %6821 = vmatprep.mubr.f32.mxu0 0.0
  %6822 = vmatmul.mubr.f32.gmra.mxu0 %v6756
  %v6823 = vpop.f32.mrf.mxu0
  %v6824 = vadd.f32 0.0, %v6823
  %v6825 = vpop.f32.mrf.mxu0
  %v6826 = vadd.f32 0.0, %v6825
  %6827 = vdwg.mxu0
  %6828 = vmatprep.subr.mxu0 %v5852
  %6829 = vmatpush1.msra.mxu0 %v5851
  %6830 = vmatprep.subr.mxu0 %v5848
  %6831 = vmatpush1.msra.mxu0 %v5847
  %6832 = vmatprep.subr.mxu0 %v5844
  %6833 = vmatpush1.msra.mxu0 %v5843
  %6834 = vmatprep.subr.mxu0 %v5840
  %6835 = vmatpush1.msra.mxu0 %v5839
  %6836 = vmatprep.subr.mxu0 %v5836
  %6837 = vmatpush1.msra.mxu0 %v5835
  %6838 = vmatprep.subr.mxu0 %v5832
  %6839 = vmatpush1.msra.mxu0 %v5831
  %6840 = vmatprep.subr.mxu0 %v5828
  %6841 = vmatpush1.msra.mxu0 %v5827
  %6842 = vmatprep.subr.mxu0 %v5824
  %6843 = vmatpush1.msra.mxu0 %v5823
  %6844 = vmatprep.subr.mxu0 %v5820
  %6845 = vmatpush1.msra.mxu0 %v5819
  %6846 = vmatprep.subr.mxu0 %v5816
  %6847 = vmatpush1.msra.mxu0 %v5815
  %6848 = vmatprep.subr.mxu0 %v5812
  %6849 = vmatpush1.msra.mxu0 %v5811
  %6850 = vmatprep.subr.mxu0 %v5808
  %6851 = vmatpush1.msra.mxu0 %v5807
  %6852 = vmatprep.subr.mxu0 %v5804
  %6853 = vmatpush1.msra.mxu0 %v5803
  %6854 = vmatprep.subr.mxu0 %v5800
  %6855 = vmatpush1.msra.mxu0 %v5799
  %6856 = vmatprep.subr.mxu0 %v5796
  %6857 = vmatpush1.msra.mxu0 %v5795
  %6858 = vmatprep.subr.mxu0 %v5792
  %6859 = vmatpush1.msra.mxu0 %v5791
  %6860 = vmatprep.subr.mxu0 0.0
  %6861 = vmatpush2.msra.mxu0 0.0
  %6862 = vmatprep.subr.mxu0 0.0
  %6863 = vmatpush2.msra.mxu0 0.0
  %6864 = vmatprep.subr.mxu0 0.0
  %6865 = vmatpush2.msra.mxu0 0.0
  %6866 = vmatprep.subr.mxu0 0.0
  %6867 = vmatpush2.msra.mxu0 0.0
  %6868 = vmatprep.subr.mxu0 0.0
  %6869 = vmatpush2.msra.mxu0 0.0
  %6870 = vmatprep.subr.mxu0 0.0
  %6871 = vmatpush2.msra.mxu0 0.0
  %6872 = vmatprep.subr.mxu0 0.0
  %6873 = vmatpush2.msra.mxu0 0.0
  %6874 = vmatprep.subr.mxu0 0.0
  %6875 = vmatpush2.msra.mxu0 0.0
  %6876 = vmatprep.subr.mxu0 0.0
  %6877 = vmatpush2.msra.mxu0 0.0
  %6878 = vmatprep.subr.mxu0 0.0
  %6879 = vmatpush2.msra.mxu0 0.0
  %6880 = vmatprep.subr.mxu0 0.0
  %6881 = vmatpush2.msra.mxu0 0.0
  %6882 = vmatprep.subr.mxu0 0.0
  %6883 = vmatpush2.msra.mxu0 0.0
  %6884 = vmatprep.subr.mxu0 0.0
  %6885 = vmatpush2.msra.mxu0 0.0
  %6886 = vmatprep.subr.mxu0 0.0
  %6887 = vmatpush2.msra.mxu0 0.0
  %6888 = vmatprep.subr.mxu0 0.0
  %6889 = vmatpush2.msra.mxu0 0.0
  %6890 = vmatprep.subr.mxu0 0.0
  %6891 = vmatpush2.msra.mxu0 0.0
  %6892 = vmatprep.mubr.f32.mxu0 0.0
  %6893 = vmatmul.mubr.f32.gmra.mxu0 %v6756
  %v6894 = vpop.f32.mrf.mxu0
  %v6895 = vadd.f32 0.0, %v6894
  %v6896 = vpop.f32.mrf.mxu0
  %v6897 = vadd.f32 0.0, %v6896
  %6898 = vdwg.mxu0
  %v6899 = vadd.f32 %v6752, %v6824
  %v6900 = vadd.f32 %v6753, %v6826
  %v6901 = vadd.f32 %v6754, %v6895
  %v6902 = vadd.f32 %v6755, %v6897
  %v6903 = vxor.u32 %v6899, 2147483648
  %v6904 = vmul.f32 %v6903, 1.442695
  %v6905 = vpow.pop %v6904
  %v6906 = vadd.f32 %v6905, 1.0
  %v6907 = vrcp.pop %v6906
  %v6908 = vmul.f32 1.0, %v6907
  %v6909 = vxor.u32 %v6900, 2147483648
  %v6910 = vmul.f32 %v6909, 1.442695
  %v6911 = vpow.pop %v6910
  %v6912 = vadd.f32 %v6911, 1.0
  %v6913 = vrcp.pop %v6912
  %v6914 = vmul.f32 1.0, %v6913
  %v6915 = vtanh.pop %v6901
  %v6916 = vxor.u32 %v6902, 2147483648
  %v6917 = vmul.f32 %v6916, 1.442695
  %v6918 = vpow.pop %v6917
  %v6919 = vadd.f32 %v6918, 1.0
  %v6920 = vrcp.pop %v6919
  %v6921 = vmul.f32 1.0, %v6920
  %v6922 = vld [vmem:[#allocation3] sm:$0xff]
  %v6923 = vmul.f32 %v6914, %v6922
  %v6924 = vmul.f32 %v6908, %v6915
  %v6925 = vadd.f32 %v6923, %v6924
  %v6926 = vtanh.pop %v6925
  %v6927 = vmul.f32 %v6921, %v6926
  %6928 = vst [vmem:[#allocation3] sm:$0xff] %v6925
  %6929 = vst [vmem:[#allocation2] sm:$0xff] %v6927
  %s6930 = scalar_lea.vmem %s4, 40
  %6931 = vst [vmem:[%s6930] sm:$0xff] %v6927
  %v6932 = vld [vmem:[%s1519] sm:$0xff]
  %v6933 = vld [vmem:[%s1519 + $0x8] sm:$0xff]
  %v6934 = vld [vmem:[%s1519 + $0x10] sm:$0xff]
  %v6935 = vld [vmem:[%s1519 + $0x18] sm:$0xff]
  %v6936 = vld [vmem:[#allocation2] sm:$0xff]
  %6937 = vmatprep.subr.mxu0 %v5850
  %6938 = vmatpush1.msra.mxu0 %v5849
  %6939 = vmatprep.subr.mxu0 %v5846
  %6940 = vmatpush1.msra.mxu0 %v5845
  %6941 = vmatprep.subr.mxu0 %v5842
  %6942 = vmatpush1.msra.mxu0 %v5841
  %6943 = vmatprep.subr.mxu0 %v5838
  %6944 = vmatpush1.msra.mxu0 %v5837
  %6945 = vmatprep.subr.mxu0 %v5834
  %6946 = vmatpush1.msra.mxu0 %v5833
  %6947 = vmatprep.subr.mxu0 %v5830
  %6948 = vmatpush1.msra.mxu0 %v5829
  %6949 = vmatprep.subr.mxu0 %v5826
  %6950 = vmatpush1.msra.mxu0 %v5825
  %6951 = vmatprep.subr.mxu0 %v5822
  %6952 = vmatpush1.msra.mxu0 %v5821
  %6953 = vmatprep.subr.mxu0 %v5818
  %6954 = vmatpush1.msra.mxu0 %v5817
  %6955 = vmatprep.subr.mxu0 %v5814
  %6956 = vmatpush1.msra.mxu0 %v5813
  %6957 = vmatprep.subr.mxu0 %v5810
  %6958 = vmatpush1.msra.mxu0 %v5809
  %6959 = vmatprep.subr.mxu0 %v5806
  %6960 = vmatpush1.msra.mxu0 %v5805
  %6961 = vmatprep.subr.mxu0 %v5802
  %6962 = vmatpush1.msra.mxu0 %v5801
  %6963 = vmatprep.subr.mxu0 %v5798
  %6964 = vmatpush1.msra.mxu0 %v5797
  %6965 = vmatprep.subr.mxu0 %v5794
  %6966 = vmatpush1.msra.mxu0 %v5793
  %6967 = vmatprep.subr.mxu0 %v5790
  %6968 = vmatpush1.msra.mxu0 %v5789
  %6969 = vmatprep.subr.mxu0 0.0
  %6970 = vmatpush2.msra.mxu0 0.0
  %6971 = vmatprep.subr.mxu0 0.0
  %6972 = vmatpush2.msra.mxu0 0.0
  %6973 = vmatprep.subr.mxu0 0.0
  %6974 = vmatpush2.msra.mxu0 0.0
  %6975 = vmatprep.subr.mxu0 0.0
  %6976 = vmatpush2.msra.mxu0 0.0
  %6977 = vmatprep.subr.mxu0 0.0
  %6978 = vmatpush2.msra.mxu0 0.0
  %6979 = vmatprep.subr.mxu0 0.0
  %6980 = vmatpush2.msra.mxu0 0.0
  %6981 = vmatprep.subr.mxu0 0.0
  %6982 = vmatpush2.msra.mxu0 0.0
  %6983 = vmatprep.subr.mxu0 0.0
  %6984 = vmatpush2.msra.mxu0 0.0
  %6985 = vmatprep.subr.mxu0 0.0
  %6986 = vmatpush2.msra.mxu0 0.0
  %6987 = vmatprep.subr.mxu0 0.0
  %6988 = vmatpush2.msra.mxu0 0.0
  %6989 = vmatprep.subr.mxu0 0.0
  %6990 = vmatpush2.msra.mxu0 0.0
  %6991 = vmatprep.subr.mxu0 0.0
  %6992 = vmatpush2.msra.mxu0 0.0
  %6993 = vmatprep.subr.mxu0 0.0
  %6994 = vmatpush2.msra.mxu0 0.0
  %6995 = vmatprep.subr.mxu0 0.0
  %6996 = vmatpush2.msra.mxu0 0.0
  %6997 = vmatprep.subr.mxu0 0.0
  %6998 = vmatpush2.msra.mxu0 0.0
  %6999 = vmatprep.subr.mxu0 0.0
  %7000 = vmatpush2.msra.mxu0 0.0
  %7001 = vmatprep.mubr.f32.mxu0 0.0
  %7002 = vmatmul.mubr.f32.gmra.mxu0 %v6936
  %v7003 = vpop.f32.mrf.mxu0
  %v7004 = vadd.f32 0.0, %v7003
  %v7005 = vpop.f32.mrf.mxu0
  %v7006 = vadd.f32 0.0, %v7005
  %7007 = vdwg.mxu0
  %7008 = vmatprep.subr.mxu0 %v5852
  %7009 = vmatpush1.msra.mxu0 %v5851
  %7010 = vmatprep.subr.mxu0 %v5848
  %7011 = vmatpush1.msra.mxu0 %v5847
  %7012 = vmatprep.subr.mxu0 %v5844
  %7013 = vmatpush1.msra.mxu0 %v5843
  %7014 = vmatprep.subr.mxu0 %v5840
  %7015 = vmatpush1.msra.mxu0 %v5839
  %7016 = vmatprep.subr.mxu0 %v5836
  %7017 = vmatpush1.msra.mxu0 %v5835
  %7018 = vmatprep.subr.mxu0 %v5832
  %7019 = vmatpush1.msra.mxu0 %v5831
  %7020 = vmatprep.subr.mxu0 %v5828
  %7021 = vmatpush1.msra.mxu0 %v5827
  %7022 = vmatprep.subr.mxu0 %v5824
  %7023 = vmatpush1.msra.mxu0 %v5823
  %7024 = vmatprep.subr.mxu0 %v5820
  %7025 = vmatpush1.msra.mxu0 %v5819
  %7026 = vmatprep.subr.mxu0 %v5816
  %7027 = vmatpush1.msra.mxu0 %v5815
  %7028 = vmatprep.subr.mxu0 %v5812
  %7029 = vmatpush1.msra.mxu0 %v5811
  %7030 = vmatprep.subr.mxu0 %v5808
  %7031 = vmatpush1.msra.mxu0 %v5807
  %7032 = vmatprep.subr.mxu0 %v5804
  %7033 = vmatpush1.msra.mxu0 %v5803
  %7034 = vmatprep.subr.mxu0 %v5800
  %7035 = vmatpush1.msra.mxu0 %v5799
  %7036 = vmatprep.subr.mxu0 %v5796
  %7037 = vmatpush1.msra.mxu0 %v5795
  %7038 = vmatprep.subr.mxu0 %v5792
  %7039 = vmatpush1.msra.mxu0 %v5791
  %7040 = vmatprep.subr.mxu0 0.0
  %7041 = vmatpush2.msra.mxu0 0.0
  %7042 = vmatprep.subr.mxu0 0.0
  %7043 = vmatpush2.msra.mxu0 0.0
  %7044 = vmatprep.subr.mxu0 0.0
  %7045 = vmatpush2.msra.mxu0 0.0
  %7046 = vmatprep.subr.mxu0 0.0
  %7047 = vmatpush2.msra.mxu0 0.0
  %7048 = vmatprep.subr.mxu0 0.0
  %7049 = vmatpush2.msra.mxu0 0.0
  %7050 = vmatprep.subr.mxu0 0.0
  %7051 = vmatpush2.msra.mxu0 0.0
  %7052 = vmatprep.subr.mxu0 0.0
  %7053 = vmatpush2.msra.mxu0 0.0
  %7054 = vmatprep.subr.mxu0 0.0
  %7055 = vmatpush2.msra.mxu0 0.0
  %7056 = vmatprep.subr.mxu0 0.0
  %7057 = vmatpush2.msra.mxu0 0.0
  %7058 = vmatprep.subr.mxu0 0.0
  %7059 = vmatpush2.msra.mxu0 0.0
  %7060 = vmatprep.subr.mxu0 0.0
  %7061 = vmatpush2.msra.mxu0 0.0
  %7062 = vmatprep.subr.mxu0 0.0
  %7063 = vmatpush2.msra.mxu0 0.0
  %7064 = vmatprep.subr.mxu0 0.0
  %7065 = vmatpush2.msra.mxu0 0.0
  %7066 = vmatprep.subr.mxu0 0.0
  %7067 = vmatpush2.msra.mxu0 0.0
  %7068 = vmatprep.subr.mxu0 0.0
  %7069 = vmatpush2.msra.mxu0 0.0
  %7070 = vmatprep.subr.mxu0 0.0
  %7071 = vmatpush2.msra.mxu0 0.0
  %7072 = vmatprep.mubr.f32.mxu0 0.0
  %7073 = vmatmul.mubr.f32.gmra.mxu0 %v6936
  %v7074 = vpop.f32.mrf.mxu0
  %v7075 = vadd.f32 0.0, %v7074
  %v7076 = vpop.f32.mrf.mxu0
  %v7077 = vadd.f32 0.0, %v7076
  %7078 = vdwg.mxu0
  %v7079 = vadd.f32 %v6932, %v7004
  %v7080 = vadd.f32 %v6933, %v7006
  %v7081 = vadd.f32 %v6934, %v7075
  %v7082 = vadd.f32 %v6935, %v7077
  %v7083 = vxor.u32 %v7079, 2147483648
  %v7084 = vmul.f32 %v7083, 1.442695
  %v7085 = vpow.pop %v7084
  %v7086 = vadd.f32 %v7085, 1.0
  %v7087 = vrcp.pop %v7086
  %v7088 = vmul.f32 1.0, %v7087
  %v7089 = vxor.u32 %v7080, 2147483648
  %v7090 = vmul.f32 %v7089, 1.442695
  %v7091 = vpow.pop %v7090
  %v7092 = vadd.f32 %v7091, 1.0
  %v7093 = vrcp.pop %v7092
  %v7094 = vmul.f32 1.0, %v7093
  %v7095 = vtanh.pop %v7081
  %v7096 = vxor.u32 %v7082, 2147483648
  %v7097 = vmul.f32 %v7096, 1.442695
  %v7098 = vpow.pop %v7097
  %v7099 = vadd.f32 %v7098, 1.0
  %v7100 = vrcp.pop %v7099
  %v7101 = vmul.f32 1.0, %v7100
  %v7102 = vld [vmem:[#allocation3] sm:$0xff]
  %v7103 = vmul.f32 %v7094, %v7102
  %v7104 = vmul.f32 %v7088, %v7095
  %v7105 = vadd.f32 %v7103, %v7104
  %v7106 = vtanh.pop %v7105
  %v7107 = vmul.f32 %v7101, %v7106
  %7108 = vst [vmem:[#allocation3] sm:$0xff] %v7105
  %7109 = vst [vmem:[#allocation2] sm:$0xff] %v7107
  %s7110 = scalar_lea.vmem %s4, 48
  %7111 = vst [vmem:[%s7110] sm:$0xff] %v7107
  %v7112 = vld [vmem:[%s1700] sm:$0xff]
  %v7113 = vld [vmem:[%s1700 + $0x8] sm:$0xff]
  %v7114 = vld [vmem:[%s1700 + $0x10] sm:$0xff]
  %v7115 = vld [vmem:[%s1700 + $0x18] sm:$0xff]
  %v7116 = vld [vmem:[#allocation2] sm:$0xff]
  %7117 = vmatprep.subr.mxu0 %v5850
  %7118 = vmatpush1.msra.mxu0 %v5849
  %7119 = vmatprep.subr.mxu0 %v5846
  %7120 = vmatpush1.msra.mxu0 %v5845
  %7121 = vmatprep.subr.mxu0 %v5842
  %7122 = vmatpush1.msra.mxu0 %v5841
  %7123 = vmatprep.subr.mxu0 %v5838
  %7124 = vmatpush1.msra.mxu0 %v5837
  %7125 = vmatprep.subr.mxu0 %v5834
  %7126 = vmatpush1.msra.mxu0 %v5833
  %7127 = vmatprep.subr.mxu0 %v5830
  %7128 = vmatpush1.msra.mxu0 %v5829
  %7129 = vmatprep.subr.mxu0 %v5826
  %7130 = vmatpush1.msra.mxu0 %v5825
  %7131 = vmatprep.subr.mxu0 %v5822
  %7132 = vmatpush1.msra.mxu0 %v5821
  %7133 = vmatprep.subr.mxu0 %v5818
  %7134 = vmatpush1.msra.mxu0 %v5817
  %7135 = vmatprep.subr.mxu0 %v5814
  %7136 = vmatpush1.msra.mxu0 %v5813
  %7137 = vmatprep.subr.mxu0 %v5810
  %7138 = vmatpush1.msra.mxu0 %v5809
  %7139 = vmatprep.subr.mxu0 %v5806
  %7140 = vmatpush1.msra.mxu0 %v5805
  %7141 = vmatprep.subr.mxu0 %v5802
  %7142 = vmatpush1.msra.mxu0 %v5801
  %7143 = vmatprep.subr.mxu0 %v5798
  %7144 = vmatpush1.msra.mxu0 %v5797
  %7145 = vmatprep.subr.mxu0 %v5794
  %7146 = vmatpush1.msra.mxu0 %v5793
  %7147 = vmatprep.subr.mxu0 %v5790
  %7148 = vmatpush1.msra.mxu0 %v5789
  %7149 = vmatprep.subr.mxu0 0.0
  %7150 = vmatpush2.msra.mxu0 0.0
  %7151 = vmatprep.subr.mxu0 0.0
  %7152 = vmatpush2.msra.mxu0 0.0
  %7153 = vmatprep.subr.mxu0 0.0
  %7154 = vmatpush2.msra.mxu0 0.0
  %7155 = vmatprep.subr.mxu0 0.0
  %7156 = vmatpush2.msra.mxu0 0.0
  %7157 = vmatprep.subr.mxu0 0.0
  %7158 = vmatpush2.msra.mxu0 0.0
  %7159 = vmatprep.subr.mxu0 0.0
  %7160 = vmatpush2.msra.mxu0 0.0
  %7161 = vmatprep.subr.mxu0 0.0
  %7162 = vmatpush2.msra.mxu0 0.0
  %7163 = vmatprep.subr.mxu0 0.0
  %7164 = vmatpush2.msra.mxu0 0.0
  %7165 = vmatprep.subr.mxu0 0.0
  %7166 = vmatpush2.msra.mxu0 0.0
  %7167 = vmatprep.subr.mxu0 0.0
  %7168 = vmatpush2.msra.mxu0 0.0
  %7169 = vmatprep.subr.mxu0 0.0
  %7170 = vmatpush2.msra.mxu0 0.0
  %7171 = vmatprep.subr.mxu0 0.0
  %7172 = vmatpush2.msra.mxu0 0.0
  %7173 = vmatprep.subr.mxu0 0.0
  %7174 = vmatpush2.msra.mxu0 0.0
  %7175 = vmatprep.subr.mxu0 0.0
  %7176 = vmatpush2.msra.mxu0 0.0
  %7177 = vmatprep.subr.mxu0 0.0
  %7178 = vmatpush2.msra.mxu0 0.0
  %7179 = vmatprep.subr.mxu0 0.0
  %7180 = vmatpush2.msra.mxu0 0.0
  %7181 = vmatprep.mubr.f32.mxu0 0.0
  %7182 = vmatmul.mubr.f32.gmra.mxu0 %v7116
  %v7183 = vpop.f32.mrf.mxu0
  %v7184 = vadd.f32 0.0, %v7183
  %v7185 = vpop.f32.mrf.mxu0
  %v7186 = vadd.f32 0.0, %v7185
  %7187 = vdwg.mxu0
  %7188 = vmatprep.subr.mxu0 %v5852
  %7189 = vmatpush1.msra.mxu0 %v5851
  %7190 = vmatprep.subr.mxu0 %v5848
  %7191 = vmatpush1.msra.mxu0 %v5847
  %7192 = vmatprep.subr.mxu0 %v5844
  %7193 = vmatpush1.msra.mxu0 %v5843
  %7194 = vmatprep.subr.mxu0 %v5840
  %7195 = vmatpush1.msra.mxu0 %v5839
  %7196 = vmatprep.subr.mxu0 %v5836
  %7197 = vmatpush1.msra.mxu0 %v5835
  %7198 = vmatprep.subr.mxu0 %v5832
  %7199 = vmatpush1.msra.mxu0 %v5831
  %7200 = vmatprep.subr.mxu0 %v5828
  %7201 = vmatpush1.msra.mxu0 %v5827
  %7202 = vmatprep.subr.mxu0 %v5824
  %7203 = vmatpush1.msra.mxu0 %v5823
  %7204 = vmatprep.subr.mxu0 %v5820
  %7205 = vmatpush1.msra.mxu0 %v5819
  %7206 = vmatprep.subr.mxu0 %v5816
  %7207 = vmatpush1.msra.mxu0 %v5815
  %7208 = vmatprep.subr.mxu0 %v5812
  %7209 = vmatpush1.msra.mxu0 %v5811
  %7210 = vmatprep.subr.mxu0 %v5808
  %7211 = vmatpush1.msra.mxu0 %v5807
  %7212 = vmatprep.subr.mxu0 %v5804
  %7213 = vmatpush1.msra.mxu0 %v5803
  %7214 = vmatprep.subr.mxu0 %v5800
  %7215 = vmatpush1.msra.mxu0 %v5799
  %7216 = vmatprep.subr.mxu0 %v5796
  %7217 = vmatpush1.msra.mxu0 %v5795
  %7218 = vmatprep.subr.mxu0 %v5792
  %7219 = vmatpush1.msra.mxu0 %v5791
  %7220 = vmatprep.subr.mxu0 0.0
  %7221 = vmatpush2.msra.mxu0 0.0
  %7222 = vmatprep.subr.mxu0 0.0
  %7223 = vmatpush2.msra.mxu0 0.0
  %7224 = vmatprep.subr.mxu0 0.0
  %7225 = vmatpush2.msra.mxu0 0.0
  %7226 = vmatprep.subr.mxu0 0.0
  %7227 = vmatpush2.msra.mxu0 0.0
  %7228 = vmatprep.subr.mxu0 0.0
  %7229 = vmatpush2.msra.mxu0 0.0
  %7230 = vmatprep.subr.mxu0 0.0
  %7231 = vmatpush2.msra.mxu0 0.0
  %7232 = vmatprep.subr.mxu0 0.0
  %7233 = vmatpush2.msra.mxu0 0.0
  %7234 = vmatprep.subr.mxu0 0.0
  %7235 = vmatpush2.msra.mxu0 0.0
  %7236 = vmatprep.subr.mxu0 0.0
  %7237 = vmatpush2.msra.mxu0 0.0
  %7238 = vmatprep.subr.mxu0 0.0
  %7239 = vmatpush2.msra.mxu0 0.0
  %7240 = vmatprep.subr.mxu0 0.0
  %7241 = vmatpush2.msra.mxu0 0.0
  %7242 = vmatprep.subr.mxu0 0.0
  %7243 = vmatpush2.msra.mxu0 0.0
  %7244 = vmatprep.subr.mxu0 0.0
  %7245 = vmatpush2.msra.mxu0 0.0
  %7246 = vmatprep.subr.mxu0 0.0
  %7247 = vmatpush2.msra.mxu0 0.0
  %7248 = vmatprep.subr.mxu0 0.0
  %7249 = vmatpush2.msra.mxu0 0.0
  %7250 = vmatprep.subr.mxu0 0.0
  %7251 = vmatpush2.msra.mxu0 0.0
  %7252 = vmatprep.mubr.f32.mxu0 0.0
  %7253 = vmatmul.mubr.f32.gmra.mxu0 %v7116
  %v7254 = vpop.f32.mrf.mxu0
  %v7255 = vadd.f32 0.0, %v7254
  %v7256 = vpop.f32.mrf.mxu0
  %v7257 = vadd.f32 0.0, %v7256
  %7258 = vdwg.mxu0
  %v7259 = vadd.f32 %v7112, %v7184
  %v7260 = vadd.f32 %v7113, %v7186
  %v7261 = vadd.f32 %v7114, %v7255
  %v7262 = vadd.f32 %v7115, %v7257
  %v7263 = vxor.u32 %v7259, 2147483648
  %v7264 = vmul.f32 %v7263, 1.442695
  %v7265 = vpow.pop %v7264
  %v7266 = vadd.f32 %v7265, 1.0
  %v7267 = vrcp.pop %v7266
  %v7268 = vmul.f32 1.0, %v7267
  %v7269 = vxor.u32 %v7260, 2147483648
  %v7270 = vmul.f32 %v7269, 1.442695
  %v7271 = vpow.pop %v7270
  %v7272 = vadd.f32 %v7271, 1.0
  %v7273 = vrcp.pop %v7272
  %v7274 = vmul.f32 1.0, %v7273
  %v7275 = vtanh.pop %v7261
  %v7276 = vxor.u32 %v7262, 2147483648
  %v7277 = vmul.f32 %v7276, 1.442695
  %v7278 = vpow.pop %v7277
  %v7279 = vadd.f32 %v7278, 1.0
  %v7280 = vrcp.pop %v7279
  %v7281 = vmul.f32 1.0, %v7280
  %v7282 = vld [vmem:[#allocation3] sm:$0xff]
  %v7283 = vmul.f32 %v7274, %v7282
  %v7284 = vmul.f32 %v7268, %v7275
  %v7285 = vadd.f32 %v7283, %v7284
  %v7286 = vtanh.pop %v7285
  %v7287 = vmul.f32 %v7281, %v7286
  %7288 = vst [vmem:[#allocation3] sm:$0xff] %v7285
  %7289 = vst [vmem:[#allocation2] sm:$0xff] %v7287
  %s7290 = scalar_lea.vmem %s4, 56
  %7291 = vst [vmem:[%s7290] sm:$0xff] %v7287
  // Predicated region
  $region18: #{lstm_autoencoder_forward.1} parent=0 // pred_check
    _
  $region19: #{lstm_autoencoder_forward.1} parent=0 // pred_check_branch
    %7293 = sbr.rel (0) target = $region21
  $region20: #{lstm_autoencoder_forward.1} parent=0 // pred_region
    _
  $region21: #{lstm_autoencoder_forward.1} parent=0 // pred_fallthru
    _
  // Predicated region
  $region22: #{lstm_autoencoder_forward.1} parent=0 // pred_check
    _
  $region23: #{lstm_autoencoder_forward.1} parent=0 // pred_check_branch
    %7295 = sbr.rel (0) target = $region25
  $region24: #{lstm_autoencoder_forward.1} parent=0 // pred_region
    _
  $region25: #{lstm_autoencoder_forward.1} parent=0 // pred_fallthru
    _

</llo_original>
